<compile_context>
chip_gen: v7x
topology: tpu7x:2x2x1
jax: 0.10.0
libtpu: 0.0.40
codegen_flags: <defaults>
</compile_context>

<pallas_src>
import jax
import jax.numpy as jnp
from jax.experimental import pallas as pl
from jax.experimental.pallas import tpu as pltpu

BN_EPS = 1e-5
LEAKY_SLOPE = 0.01          # PyTorch F.leaky_relu default
SEQ_LEN = 514

_POOL_SCR_ROWS = 488        # largest conv output length (conv1: 514 - 27 + 1)
_POOL_SCR_LANES = 16        # >= max channel count (10)


def _leaky(v):
    return jnp.where(v > 0, v, LEAKY_SLOPE * v)


def _conv_lrelu_pool(x, w_ref, b_ref, ksize, pool_scr):
    """Conv1d(valid, stride 1) + LeakyReLU + MaxPool1d(2,2).

    x: (L, Cin) value (length on sublanes), w_ref: (K*Cin, Cout), b_ref: (1, Cout).
    Returns (floor((L-K+1)/2), Cout).
    """
    L, cin = x.shape
    cout = w_ref.shape[1]
    lout = L - ksize + 1

    # im2col: stack the K shifted slices along lanes -> ONE matmul per layer
    # (contraction dim K*Cin) instead of K tiny MXU pushes.
    stacked = jnp.concatenate([x[k:k + lout, :] for k in range(ksize)], axis=1)  # (lout, K*Cin)
    h = jnp.dot(stacked, w_ref[...], preferred_element_type=jnp.float32) + b_ref[...]
    h = _leaky(h)

    # MaxPool1d(kernel=2, stride=2) along length: direct pairwise max via stride-2
    # sublane reads from VMEM scratch (floor semantics: only 2*p rows are read).
    p = lout // 2
    pool_scr[0:lout, 0:cout] = h
    even = pool_scr[pl.ds(0, p, 2), :]          # rows 0, 2, ..., 2p-2
    odd = pool_scr[pl.ds(1, p, 2), :]           # rows 1, 3, ..., 2p-1
    return jnp.maximum(even, odd)[:, 0:cout]    # (p, cout)


def net1_kernel(x_ref, bn_s_ref, bn_b_ref,
                w1_ref, b1_ref, w2_ref, b2_ref, w3_ref, b3_ref, w4_ref, b4_ref,
                l1w_ref, l1b_ref, l2w_ref, l2b_ref, l3w_ref, l3b_ref,
                out_ref, pool_scr):
    # One batch element per grid step.
    xb = x_ref[0]                                   # (514, 1)
    xb = xb * bn_s_ref[...] + bn_b_ref[...]         # folded eval-mode BatchNorm1d(514)

    h = _conv_lrelu_pool(xb, w1_ref, b1_ref, 27, pool_scr)   # (244, 5)
    h = _conv_lrelu_pool(h, w2_ref, b2_ref, 15, pool_scr)    # (115, 10)
    h = _conv_lrelu_pool(h, w3_ref, b3_ref, 4, pool_scr)     # (56, 10)
    h = _conv_lrelu_pool(h, w4_ref, b4_ref, 3, pool_scr)     # (27, 10)

    # Flatten + Linear(270, 30): build a lane-dense (1, 270) row (length-major; the
    # channel-major torch.flatten order is absorbed into the pre-permuted l1 weight),
    # then a single dot per linear layer.
    hrow = jnp.concatenate([h[l:l + 1, :] for l in range(h.shape[0])], axis=1)       # (1, 270)
    z = _leaky(jnp.dot(hrow, l1w_ref[...], preferred_element_type=jnp.float32)
               + l1b_ref[...])                                                       # (1, 30)
    z = _leaky(jnp.dot(z, l2w_ref[...], preferred_element_type=jnp.float32)
               + l2b_ref[...])                                                       # (1, 10)
    z = jnp.dot(z, l3w_ref[...], preferred_element_type=jnp.float32) + l3b_ref[...]  # (1, 2)

    # Softmax over the class dim; single (1, 2) store per grid step.
    m = jnp.max(z, axis=-1, keepdims=True)
    e = jnp.exp(z - m)
    out_ref[0] = e / jnp.sum(e, axis=-1, keepdims=True)


_PARAM_ORDER = ("bn_scale", "bn_shift",
                "w1", "b1", "w2", "b2", "w3", "b3", "w4", "b4",
                "l1w", "l1b", "l2w", "l2b", "l3w", "l3b")


def net1_forward(x, params):
    """x: (B, 1, 514) NCL float32 -> (B, 2) softmax probabilities."""
    B = x.shape[0]
    xt = jnp.transpose(x, (0, 2, 1))    # (B, 514, 1): length on sublanes, Cin on lanes

    def _const_spec(arr):
        nd = arr.ndim
        return pl.BlockSpec(arr.shape, lambda b, _nd=nd: (0,) * _nd)

    in_specs = [pl.BlockSpec((1, SEQ_LEN, 1), lambda b: (b, 0, 0))]
    in_specs += [_const_spec(params[k]) for k in _PARAM_ORDER]

    out = pl.pallas_call(
        net1_kernel,
        grid=(B,),
        out_shape=jax.ShapeDtypeStruct((B, 1, 2), jnp.float32),
        in_specs=in_specs,
        out_specs=pl.BlockSpec((1, 1, 2), lambda b: (b, 0, 0)),
        scratch_shapes=[pltpu.VMEM((_POOL_SCR_ROWS, _POOL_SCR_LANES), jnp.float32)],
        compiler_params=pltpu.CompilerParams(dimension_semantics=("parallel",)),
    )(xt, *[params[k] for k in _PARAM_ORDER])
    return out.reshape(B, 2)


def init_params(key):
    ks = jax.random.split(key, 14)

    def xavier_normal_conv(k, cout, cin, ksz):
        fan_in, fan_out = cin * ksz, cout * ksz
        std = (2.0 / (fan_in + fan_out)) ** 0.5
        return std * jax.random.normal(k, (cout, cin, ksz), jnp.float32)

    def uniform(k, shape, bound):
        return jax.random.uniform(k, shape, jnp.float32, -bound, bound)

    # Conv weights (PyTorch layout (Cout, Cin, K)), xavier-normal as in Net1.__init__.
    w1 = xavier_normal_conv(ks[0], 5, 1, 27)
    b1 = uniform(ks[1], (5,), (1 * 27) ** -0.5)
    w2 = xavier_normal_conv(ks[2], 10, 5, 15)
    b2 = uniform(ks[3], (10,), (5 * 15) ** -0.5)
    w3 = xavier_normal_conv(ks[4], 10, 10, 4)
    b3 = uniform(ks[5], (10,), (10 * 4) ** -0.5)
    w4 = xavier_normal_conv(ks[6], 10, 10, 3)
    b4 = uniform(ks[7], (10,), (10 * 3) ** -0.5)

    # Linear weights (PyTorch layout (out, in)) with default-like uniform init.
    l1w = uniform(ks[8], (30, 270), 270 ** -0.5)
    l1b = uniform(ks[9], (30,), 270 ** -0.5)
    l2w = uniform(ks[10], (10, 30), 30 ** -0.5)
    l2b = uniform(ks[11], (10,), 30 ** -0.5)
    l3w = uniform(ks[12], (2, 10), 10 ** -0.5)
    l3b = uniform(ks[13], (2,), 10 ** -0.5)

    # BatchNorm1d(514), eval mode with default running stats, folded to (scale, shift).
    gamma = jnp.ones((SEQ_LEN,), jnp.float32)
    beta = jnp.zeros((SEQ_LEN,), jnp.float32)
    r_mean = jnp.zeros((SEQ_LEN,), jnp.float32)
    r_var = jnp.ones((SEQ_LEN,), jnp.float32)
    bn_scale = gamma * jax.lax.rsqrt(r_var + BN_EPS)
    bn_shift = beta - r_mean * bn_scale

    def conv_w(w):
        # torch (Cout, Cin, K) -> (K*Cin, Cout); row index = k*Cin + ci, matching the
        # im2col lane-stacking order in the kernel.
        cout, cin, ksz = w.shape
        return jnp.transpose(w, (2, 1, 0)).reshape(ksz * cin, cout)

    params = {
        "bn_scale": bn_scale.reshape(SEQ_LEN, 1),
        "bn_shift": bn_shift.reshape(SEQ_LEN, 1),
        "w1": conv_w(w1), "b1": b1.reshape(1, 5),
        "w2": conv_w(w2), "b2": b2.reshape(1, 10),
        "w3": conv_w(w3), "b3": b3.reshape(1, 10),
        "w4": conv_w(w4), "b4": b4.reshape(1, 10),
        # Linear(270,30): torch (30, 270) -> (270, 30) with row index l*10 + c so it
        # matches the kernel's length-major flatten of the (27, 10) feature map
        # (equivalent to torch's channel-major flatten of (10, 27)).
        "l1w": jnp.transpose(l1w.reshape(30, 10, 27), (2, 1, 0)).reshape(270, 30),
        "l1b": l1b.reshape(1, 30),
        "l2w": l2w.T, "l2b": l2b.reshape(1, 10),
        "l3w": l3w.T, "l3b": l3b.reshape(1, 2),
    }
    return params


if __name__ == "__main__":
    key = jax.random.PRNGKey(0)
    pkey, xkey = jax.random.split(key)
    params = init_params(pkey)

    # Input implied by the module: (batch, 1, 514); small batch of 2.
    x = jax.random.normal(xkey, (2, 1, SEQ_LEN), jnp.float32)

    y = net1_forward(x, params)
    y = jax.block_until_ready(y)

    assert y.shape == (2, 2), y.shape
    assert bool(jnp.all(jnp.isfinite(y))), "non-finite outputs"
    assert bool(jnp.allclose(jnp.sum(y, axis=1), 1.0, atol=1e-4)), "softmax rows must sum to 1"
    print("KERNEL_OK")
</pallas_src>

<mosaic_0001>
module attributes {stable_mosaic.version = 11 : i64} {
  func.func @net1_kernel(%arg0: i32, %arg1: memref<1x514x1xf32, #tpu.memory_space<vmem>>, %arg2: memref<514x1xf32, #tpu.memory_space<vmem>>, %arg3: memref<514x1xf32, #tpu.memory_space<vmem>>, %arg4: memref<27x5xf32, #tpu.memory_space<vmem>>, %arg5: memref<1x5xf32, #tpu.memory_space<vmem>>, %arg6: memref<75x10xf32, #tpu.memory_space<vmem>>, %arg7: memref<1x10xf32, #tpu.memory_space<vmem>>, %arg8: memref<40x10xf32, #tpu.memory_space<vmem>>, %arg9: memref<1x10xf32, #tpu.memory_space<vmem>>, %arg10: memref<30x10xf32, #tpu.memory_space<vmem>>, %arg11: memref<1x10xf32, #tpu.memory_space<vmem>>, %arg12: memref<270x30xf32, #tpu.memory_space<vmem>>, %arg13: memref<1x30xf32, #tpu.memory_space<vmem>>, %arg14: memref<30x10xf32, #tpu.memory_space<vmem>>, %arg15: memref<1x10xf32, #tpu.memory_space<vmem>>, %arg16: memref<10x2xf32, #tpu.memory_space<vmem>>, %arg17: memref<1x2xf32, #tpu.memory_space<vmem>>, %arg18: memref<1x1x2xf32, #tpu.memory_space<vmem>>, %arg19: memref<488x16xf32, #tpu.memory_space<vmem>>) attributes {dimension_semantics = [#tpu.dimension_semantics<parallel>], iteration_bounds = array<i64: 2>, scalar_prefetch = 0 : i64, scratch_operands = 1 : i64, tpu.core_type = #tpu.core_type<tc>, window_params = [{transform_indices = @transform_0, window_bounds = array<i64: 1, 514, 1>}, {pipeline_mode = #tpu.pipeline_mode<synchronous>, transform_indices = @transform_1, window_bounds = array<i64: 514, 1>}, {pipeline_mode = #tpu.pipeline_mode<synchronous>, transform_indices = @transform_2, window_bounds = array<i64: 514, 1>}, {pipeline_mode = #tpu.pipeline_mode<synchronous>, transform_indices = @transform_3, window_bounds = array<i64: 27, 5>}, {pipeline_mode = #tpu.pipeline_mode<synchronous>, transform_indices = @transform_4, window_bounds = array<i64: 1, 5>}, {pipeline_mode = #tpu.pipeline_mode<synchronous>, transform_indices = @transform_5, window_bounds = array<i64: 75, 10>}, {pipeline_mode = #tpu.pipeline_mode<synchronous>, transform_indices = @transform_6, window_bounds = array<i64: 1, 10>}, {pipeline_mode = #tpu.pipeline_mode<synchronous>, transform_indices = @transform_7, window_bounds = array<i64: 40, 10>}, {pipeline_mode = #tpu.pipeline_mode<synchronous>, transform_indices = @transform_8, window_bounds = array<i64: 1, 10>}, {pipeline_mode = #tpu.pipeline_mode<synchronous>, transform_indices = @transform_9, window_bounds = array<i64: 30, 10>}, {pipeline_mode = #tpu.pipeline_mode<synchronous>, transform_indices = @transform_10, window_bounds = array<i64: 1, 10>}, {pipeline_mode = #tpu.pipeline_mode<synchronous>, transform_indices = @transform_11, window_bounds = array<i64: 270, 30>}, {pipeline_mode = #tpu.pipeline_mode<synchronous>, transform_indices = @transform_12, window_bounds = array<i64: 1, 30>}, {pipeline_mode = #tpu.pipeline_mode<synchronous>, transform_indices = @transform_13, window_bounds = array<i64: 30, 10>}, {pipeline_mode = #tpu.pipeline_mode<synchronous>, transform_indices = @transform_14, window_bounds = array<i64: 1, 10>}, {pipeline_mode = #tpu.pipeline_mode<synchronous>, transform_indices = @transform_15, window_bounds = array<i64: 10, 2>}, {pipeline_mode = #tpu.pipeline_mode<synchronous>, transform_indices = @transform_16, window_bounds = array<i64: 1, 2>}, {transform_indices = @transform_17, window_bounds = array<i64: 1, 1, 2>}]} {
    %c0 = arith.constant 0 : index
    %c0_0 = arith.constant 0 : index
    %c0_1 = arith.constant 0 : index
    %0 = vector.load %arg1[%c0, %c0_0, %c0_1] : memref<1x514x1xf32, #tpu.memory_space<vmem>>, vector<1x514x1xf32>
    %1 = vector.shape_cast %0 : vector<1x514x1xf32> to vector<514x1xf32>
    %c0_2 = arith.constant 0 : index
    %c0_3 = arith.constant 0 : index
    %2 = vector.load %arg2[%c0_2, %c0_3] : memref<514x1xf32, #tpu.memory_space<vmem>>, vector<514x1xf32>
    %3 = arith.mulf %1, %2 : vector<514x1xf32>
    %c0_4 = arith.constant 0 : index
    %c0_5 = arith.constant 0 : index
    %4 = vector.load %arg3[%c0_4, %c0_5] : memref<514x1xf32, #tpu.memory_space<vmem>>, vector<514x1xf32>
    %5 = arith.addf %3, %4 : vector<514x1xf32>
    %6 = vector.extract_strided_slice %5 {offsets = [0, 0], sizes = [488, 1], strides = [1, 1]} : vector<514x1xf32> to vector<488x1xf32>
    %7 = vector.extract_strided_slice %5 {offsets = [1, 0], sizes = [488, 1], strides = [1, 1]} : vector<514x1xf32> to vector<488x1xf32>
    %8 = vector.extract_strided_slice %5 {offsets = [2, 0], sizes = [488, 1], strides = [1, 1]} : vector<514x1xf32> to vector<488x1xf32>
    %9 = vector.extract_strided_slice %5 {offsets = [3, 0], sizes = [488, 1], strides = [1, 1]} : vector<514x1xf32> to vector<488x1xf32>
    %10 = vector.extract_strided_slice %5 {offsets = [4, 0], sizes = [488, 1], strides = [1, 1]} : vector<514x1xf32> to vector<488x1xf32>
    %11 = vector.extract_strided_slice %5 {offsets = [5, 0], sizes = [488, 1], strides = [1, 1]} : vector<514x1xf32> to vector<488x1xf32>
    %12 = vector.extract_strided_slice %5 {offsets = [6, 0], sizes = [488, 1], strides = [1, 1]} : vector<514x1xf32> to vector<488x1xf32>
    %13 = vector.extract_strided_slice %5 {offsets = [7, 0], sizes = [488, 1], strides = [1, 1]} : vector<514x1xf32> to vector<488x1xf32>
    %14 = vector.extract_strided_slice %5 {offsets = [8, 0], sizes = [488, 1], strides = [1, 1]} : vector<514x1xf32> to vector<488x1xf32>
    %15 = vector.extract_strided_slice %5 {offsets = [9, 0], sizes = [488, 1], strides = [1, 1]} : vector<514x1xf32> to vector<488x1xf32>
    %16 = vector.extract_strided_slice %5 {offsets = [10, 0], sizes = [488, 1], strides = [1, 1]} : vector<514x1xf32> to vector<488x1xf32>
    %17 = vector.extract_strided_slice %5 {offsets = [11, 0], sizes = [488, 1], strides = [1, 1]} : vector<514x1xf32> to vector<488x1xf32>
    %18 = vector.extract_strided_slice %5 {offsets = [12, 0], sizes = [488, 1], strides = [1, 1]} : vector<514x1xf32> to vector<488x1xf32>
    %19 = vector.extract_strided_slice %5 {offsets = [13, 0], sizes = [488, 1], strides = [1, 1]} : vector<514x1xf32> to vector<488x1xf32>
    %20 = vector.extract_strided_slice %5 {offsets = [14, 0], sizes = [488, 1], strides = [1, 1]} : vector<514x1xf32> to vector<488x1xf32>
    %21 = vector.extract_strided_slice %5 {offsets = [15, 0], sizes = [488, 1], strides = [1, 1]} : vector<514x1xf32> to vector<488x1xf32>
    %22 = vector.extract_strided_slice %5 {offsets = [16, 0], sizes = [488, 1], strides = [1, 1]} : vector<514x1xf32> to vector<488x1xf32>
    %23 = vector.extract_strided_slice %5 {offsets = [17, 0], sizes = [488, 1], strides = [1, 1]} : vector<514x1xf32> to vector<488x1xf32>
    %24 = vector.extract_strided_slice %5 {offsets = [18, 0], sizes = [488, 1], strides = [1, 1]} : vector<514x1xf32> to vector<488x1xf32>
    %25 = vector.extract_strided_slice %5 {offsets = [19, 0], sizes = [488, 1], strides = [1, 1]} : vector<514x1xf32> to vector<488x1xf32>
    %26 = vector.extract_strided_slice %5 {offsets = [20, 0], sizes = [488, 1], strides = [1, 1]} : vector<514x1xf32> to vector<488x1xf32>
    %27 = vector.extract_strided_slice %5 {offsets = [21, 0], sizes = [488, 1], strides = [1, 1]} : vector<514x1xf32> to vector<488x1xf32>
    %28 = vector.extract_strided_slice %5 {offsets = [22, 0], sizes = [488, 1], strides = [1, 1]} : vector<514x1xf32> to vector<488x1xf32>
    %29 = vector.extract_strided_slice %5 {offsets = [23, 0], sizes = [488, 1], strides = [1, 1]} : vector<514x1xf32> to vector<488x1xf32>
    %30 = vector.extract_strided_slice %5 {offsets = [24, 0], sizes = [488, 1], strides = [1, 1]} : vector<514x1xf32> to vector<488x1xf32>
    %31 = vector.extract_strided_slice %5 {offsets = [25, 0], sizes = [488, 1], strides = [1, 1]} : vector<514x1xf32> to vector<488x1xf32>
    %32 = vector.extract_strided_slice %5 {offsets = [26, 0], sizes = [488, 1], strides = [1, 1]} : vector<514x1xf32> to vector<488x1xf32>
    %33 = tpu.concatenate %6, %7, %8, %9, %10, %11, %12, %13, %14, %15, %16, %17, %18, %19, %20, %21 in 1 : vector<488x1xf32>, vector<488x1xf32>, vector<488x1xf32>, vector<488x1xf32>, vector<488x1xf32>, vector<488x1xf32>, vector<488x1xf32>, vector<488x1xf32>, vector<488x1xf32>, vector<488x1xf32>, vector<488x1xf32>, vector<488x1xf32>, vector<488x1xf32>, vector<488x1xf32>, vector<488x1xf32>, vector<488x1xf32> -> vector<488x16xf32>
    %34 = tpu.concatenate %22, %23, %24, %25, %26, %27, %28, %29, %30, %31, %32 in 1 : vector<488x1xf32>, vector<488x1xf32>, vector<488x1xf32>, vector<488x1xf32>, vector<488x1xf32>, vector<488x1xf32>, vector<488x1xf32>, vector<488x1xf32>, vector<488x1xf32>, vector<488x1xf32>, vector<488x1xf32> -> vector<488x11xf32>
    %35 = tpu.concatenate %33, %34 in 1 : vector<488x16xf32>, vector<488x11xf32> -> vector<488x27xf32>
    %c0_6 = arith.constant 0 : index
    %c0_7 = arith.constant 0 : index
    %36 = vector.load %arg4[%c0_6, %c0_7] : memref<27x5xf32, #tpu.memory_space<vmem>>, vector<27x5xf32>
    %cst = arith.constant dense<0.000000e+00> : vector<488x5xf32>
    %37 = tpu.matmul %35, %36, %cst {dimension_numbers = #tpu.dot_dimension_numbers<[1], [0], [0], [1], [0, 0, 1, 1], [], []>} : vector<488x27xf32>, vector<27x5xf32>, vector<488x5xf32> -> vector<488x5xf32>
    %c0_8 = arith.constant 0 : index
    %c0_9 = arith.constant 0 : index
    %38 = vector.load %arg5[%c0_8, %c0_9] : memref<1x5xf32, #tpu.memory_space<vmem>>, vector<1x5xf32>
    %39 = vector.broadcast %38 : vector<1x5xf32> to vector<488x5xf32>
    %40 = arith.addf %37, %39 : vector<488x5xf32>
    %cst_10 = arith.constant 0.000000e+00 : f32
    %41 = vector.broadcast %cst_10 : f32 to vector<488x5xf32>
    %42 = arith.cmpf ogt, %40, %41 : vector<488x5xf32>
    %cst_11 = arith.constant 0.00999999977 : f32
    %43 = vector.broadcast %cst_11 : f32 to vector<488x5xf32>
    %44 = arith.mulf %43, %40 : vector<488x5xf32>
    %45 = arith.select %42, %40, %44 : vector<488x5xi1>, vector<488x5xf32>
    %c0_12 = arith.constant 0 : index
    %c0_13 = arith.constant 0 : index
    %46 = vector.load %arg19[%c0_12, %c0_13] : memref<488x16xf32, #tpu.memory_space<vmem>>, vector<488x5xf32>
    tpu.vector_store %arg19[%c0_12, %c0_13], %45 {strides = array<i32>} : memref<488x16xf32, #tpu.memory_space<vmem>>, vector<488x5xf32>,
    %c0_14 = arith.constant 0 : index
    %c0_15 = arith.constant 0 : index
    %47 = tpu.strided_load %arg19[%c0_14, %c0_15] {strides = array<i32: 2, 1>} : memref<488x16xf32, #tpu.memory_space<vmem>>, vector<244x16xf32>
    %c1 = arith.constant 1 : index
    %c0_16 = arith.constant 0 : index
    %48 = tpu.strided_load %arg19[%c1, %c0_16] {strides = array<i32: 2, 1>} : memref<488x16xf32, #tpu.memory_space<vmem>>, vector<244x16xf32>
    %49 = arith.maximumf %47, %48 : vector<244x16xf32>
    %50 = vector.extract_strided_slice %49 {offsets = [0, 0], sizes = [244, 5], strides = [1, 1]} : vector<244x16xf32> to vector<244x5xf32>
    %51 = vector.extract_strided_slice %50 {offsets = [0, 0], sizes = [230, 5], strides = [1, 1]} : vector<244x5xf32> to vector<230x5xf32>
    %52 = vector.extract_strided_slice %50 {offsets = [1, 0], sizes = [230, 5], strides = [1, 1]} : vector<244x5xf32> to vector<230x5xf32>
    %53 = vector.extract_strided_slice %50 {offsets = [2, 0], sizes = [230, 5], strides = [1, 1]} : vector<244x5xf32> to vector<230x5xf32>
    %54 = vector.extract_strided_slice %50 {offsets = [3, 0], sizes = [230, 5], strides = [1, 1]} : vector<244x5xf32> to vector<230x5xf32>
    %55 = vector.extract_strided_slice %50 {offsets = [4, 0], sizes = [230, 5], strides = [1, 1]} : vector<244x5xf32> to vector<230x5xf32>
    %56 = vector.extract_strided_slice %50 {offsets = [5, 0], sizes = [230, 5], strides = [1, 1]} : vector<244x5xf32> to vector<230x5xf32>
    %57 = vector.extract_strided_slice %50 {offsets = [6, 0], sizes = [230, 5], strides = [1, 1]} : vector<244x5xf32> to vector<230x5xf32>
    %58 = vector.extract_strided_slice %50 {offsets = [7, 0], sizes = [230, 5], strides = [1, 1]} : vector<244x5xf32> to vector<230x5xf32>
    %59 = vector.extract_strided_slice %50 {offsets = [8, 0], sizes = [230, 5], strides = [1, 1]} : vector<244x5xf32> to vector<230x5xf32>
    %60 = vector.extract_strided_slice %50 {offsets = [9, 0], sizes = [230, 5], strides = [1, 1]} : vector<244x5xf32> to vector<230x5xf32>
    %61 = vector.extract_strided_slice %50 {offsets = [10, 0], sizes = [230, 5], strides = [1, 1]} : vector<244x5xf32> to vector<230x5xf32>
    %62 = vector.extract_strided_slice %50 {offsets = [11, 0], sizes = [230, 5], strides = [1, 1]} : vector<244x5xf32> to vector<230x5xf32>
    %63 = vector.extract_strided_slice %50 {offsets = [12, 0], sizes = [230, 5], strides = [1, 1]} : vector<244x5xf32> to vector<230x5xf32>
    %64 = vector.extract_strided_slice %50 {offsets = [13, 0], sizes = [230, 5], strides = [1, 1]} : vector<244x5xf32> to vector<230x5xf32>
    %65 = vector.extract_strided_slice %50 {offsets = [14, 0], sizes = [230, 5], strides = [1, 1]} : vector<244x5xf32> to vector<230x5xf32>
    %66 = tpu.concatenate %51, %52, %53, %54, %55, %56, %57, %58, %59, %60, %61, %62, %63, %64, %65 in 1 : vector<230x5xf32>, vector<230x5xf32>, vector<230x5xf32>, vector<230x5xf32>, vector<230x5xf32>, vector<230x5xf32>, vector<230x5xf32>, vector<230x5xf32>, vector<230x5xf32>, vector<230x5xf32>, vector<230x5xf32>, vector<230x5xf32>, vector<230x5xf32>, vector<230x5xf32>, vector<230x5xf32> -> vector<230x75xf32>
    %c0_17 = arith.constant 0 : index
    %c0_18 = arith.constant 0 : index
    %67 = vector.load %arg6[%c0_17, %c0_18] : memref<75x10xf32, #tpu.memory_space<vmem>>, vector<75x10xf32>
    %cst_19 = arith.constant dense<0.000000e+00> : vector<230x10xf32>
    %68 = tpu.matmul %66, %67, %cst_19 {dimension_numbers = #tpu.dot_dimension_numbers<[1], [0], [0], [1], [0, 0, 1, 1], [], []>} : vector<230x75xf32>, vector<75x10xf32>, vector<230x10xf32> -> vector<230x10xf32>
    %c0_20 = arith.constant 0 : index
    %c0_21 = arith.constant 0 : index
    %69 = vector.load %arg7[%c0_20, %c0_21] : memref<1x10xf32, #tpu.memory_space<vmem>>, vector<1x10xf32>
    %70 = vector.broadcast %69 : vector<1x10xf32> to vector<230x10xf32>
    %71 = arith.addf %68, %70 : vector<230x10xf32>
    %cst_22 = arith.constant 0.000000e+00 : f32
    %72 = vector.broadcast %cst_22 : f32 to vector<230x10xf32>
    %73 = arith.cmpf ogt, %71, %72 : vector<230x10xf32>
    %cst_23 = arith.constant 0.00999999977 : f32
    %74 = vector.broadcast %cst_23 : f32 to vector<230x10xf32>
    %75 = arith.mulf %74, %71 : vector<230x10xf32>
    %76 = arith.select %73, %71, %75 : vector<230x10xi1>, vector<230x10xf32>
    %c0_24 = arith.constant 0 : index
    %c0_25 = arith.constant 0 : index
    %77 = vector.load %arg19[%c0_24, %c0_25] : memref<488x16xf32, #tpu.memory_space<vmem>>, vector<230x10xf32>
    tpu.vector_store %arg19[%c0_24, %c0_25], %76 {strides = array<i32>} : memref<488x16xf32, #tpu.memory_space<vmem>>, vector<230x10xf32>,
    %c0_26 = arith.constant 0 : index
    %c0_27 = arith.constant 0 : index
    %78 = tpu.strided_load %arg19[%c0_26, %c0_27] {strides = array<i32: 2, 1>} : memref<488x16xf32, #tpu.memory_space<vmem>>, vector<115x16xf32>
    %c1_28 = arith.constant 1 : index
    %c0_29 = arith.constant 0 : index
    %79 = tpu.strided_load %arg19[%c1_28, %c0_29] {strides = array<i32: 2, 1>} : memref<488x16xf32, #tpu.memory_space<vmem>>, vector<115x16xf32>
    %80 = arith.maximumf %78, %79 : vector<115x16xf32>
    %81 = vector.extract_strided_slice %80 {offsets = [0, 0], sizes = [115, 10], strides = [1, 1]} : vector<115x16xf32> to vector<115x10xf32>
    %82 = vector.extract_strided_slice %81 {offsets = [0, 0], sizes = [112, 10], strides = [1, 1]} : vector<115x10xf32> to vector<112x10xf32>
    %83 = vector.extract_strided_slice %81 {offsets = [1, 0], sizes = [112, 10], strides = [1, 1]} : vector<115x10xf32> to vector<112x10xf32>
    %84 = vector.extract_strided_slice %81 {offsets = [2, 0], sizes = [112, 10], strides = [1, 1]} : vector<115x10xf32> to vector<112x10xf32>
    %85 = vector.extract_strided_slice %81 {offsets = [3, 0], sizes = [112, 10], strides = [1, 1]} : vector<115x10xf32> to vector<112x10xf32>
    %86 = tpu.concatenate %82, %83, %84, %85 in 1 : vector<112x10xf32>, vector<112x10xf32>, vector<112x10xf32>, vector<112x10xf32> -> vector<112x40xf32>
    %c0_30 = arith.constant 0 : index
    %c0_31 = arith.constant 0 : index
    %87 = vector.load %arg8[%c0_30, %c0_31] : memref<40x10xf32, #tpu.memory_space<vmem>>, vector<40x10xf32>
    %cst_32 = arith.constant dense<0.000000e+00> : vector<112x10xf32>
    %88 = tpu.matmul %86, %87, %cst_32 {dimension_numbers = #tpu.dot_dimension_numbers<[1], [0], [0], [1], [0, 0, 1, 1], [], []>} : vector<112x40xf32>, vector<40x10xf32>, vector<112x10xf32> -> vector<112x10xf32>
    %c0_33 = arith.constant 0 : index
    %c0_34 = arith.constant 0 : index
    %89 = vector.load %arg9[%c0_33, %c0_34] : memref<1x10xf32, #tpu.memory_space<vmem>>, vector<1x10xf32>
    %90 = vector.broadcast %89 : vector<1x10xf32> to vector<112x10xf32>
    %91 = arith.addf %88, %90 : vector<112x10xf32>
    %cst_35 = arith.constant 0.000000e+00 : f32
    %92 = vector.broadcast %cst_35 : f32 to vector<112x10xf32>
    %93 = arith.cmpf ogt, %91, %92 : vector<112x10xf32>
    %cst_36 = arith.constant 0.00999999977 : f32
    %94 = vector.broadcast %cst_36 : f32 to vector<112x10xf32>
    %95 = arith.mulf %94, %91 : vector<112x10xf32>
    %96 = arith.select %93, %91, %95 : vector<112x10xi1>, vector<112x10xf32>
    %c0_37 = arith.constant 0 : index
    %c0_38 = arith.constant 0 : index
    %97 = vector.load %arg19[%c0_37, %c0_38] : memref<488x16xf32, #tpu.memory_space<vmem>>, vector<112x10xf32>
    tpu.vector_store %arg19[%c0_37, %c0_38], %96 {strides = array<i32>} : memref<488x16xf32, #tpu.memory_space<vmem>>, vector<112x10xf32>,
    %c0_39 = arith.constant 0 : index
    %c0_40 = arith.constant 0 : index
    %98 = tpu.strided_load %arg19[%c0_39, %c0_40] {strides = array<i32: 2, 1>} : memref<488x16xf32, #tpu.memory_space<vmem>>, vector<56x16xf32>
    %c1_41 = arith.constant 1 : index
    %c0_42 = arith.constant 0 : index
    %99 = tpu.strided_load %arg19[%c1_41, %c0_42] {strides = array<i32: 2, 1>} : memref<488x16xf32, #tpu.memory_space<vmem>>, vector<56x16xf32>
    %100 = arith.maximumf %98, %99 : vector<56x16xf32>
    %101 = vector.extract_strided_slice %100 {offsets = [0, 0], sizes = [56, 10], strides = [1, 1]} : vector<56x16xf32> to vector<56x10xf32>
    %102 = vector.extract_strided_slice %101 {offsets = [0, 0], sizes = [54, 10], strides = [1, 1]} : vector<56x10xf32> to vector<54x10xf32>
    %103 = vector.extract_strided_slice %101 {offsets = [1, 0], sizes = [54, 10], strides = [1, 1]} : vector<56x10xf32> to vector<54x10xf32>
    %104 = vector.extract_strided_slice %101 {offsets = [2, 0], sizes = [54, 10], strides = [1, 1]} : vector<56x10xf32> to vector<54x10xf32>
    %105 = tpu.concatenate %102, %103, %104 in 1 : vector<54x10xf32>, vector<54x10xf32>, vector<54x10xf32> -> vector<54x30xf32>
    %c0_43 = arith.constant 0 : index
    %c0_44 = arith.constant 0 : index
    %106 = vector.load %arg10[%c0_43, %c0_44] : memref<30x10xf32, #tpu.memory_space<vmem>>, vector<30x10xf32>
    %cst_45 = arith.constant dense<0.000000e+00> : vector<54x10xf32>
    %107 = tpu.matmul %105, %106, %cst_45 {dimension_numbers = #tpu.dot_dimension_numbers<[1], [0], [0], [1], [0, 0, 1, 1], [], []>} : vector<54x30xf32>, vector<30x10xf32>, vector<54x10xf32> -> vector<54x10xf32>
    %c0_46 = arith.constant 0 : index
    %c0_47 = arith.constant 0 : index
    %108 = vector.load %arg11[%c0_46, %c0_47] : memref<1x10xf32, #tpu.memory_space<vmem>>, vector<1x10xf32>
    %109 = vector.broadcast %108 : vector<1x10xf32> to vector<54x10xf32>
    %110 = arith.addf %107, %109 : vector<54x10xf32>
    %cst_48 = arith.constant 0.000000e+00 : f32
    %111 = vector.broadcast %cst_48 : f32 to vector<54x10xf32>
    %112 = arith.cmpf ogt, %110, %111 : vector<54x10xf32>
    %cst_49 = arith.constant 0.00999999977 : f32
    %113 = vector.broadcast %cst_49 : f32 to vector<54x10xf32>
    %114 = arith.mulf %113, %110 : vector<54x10xf32>
    %115 = arith.select %112, %110, %114 : vector<54x10xi1>, vector<54x10xf32>
    %c0_50 = arith.constant 0 : index
    %c0_51 = arith.constant 0 : index
    %116 = vector.load %arg19[%c0_50, %c0_51] : memref<488x16xf32, #tpu.memory_space<vmem>>, vector<54x10xf32>
    tpu.vector_store %arg19[%c0_50, %c0_51], %115 {strides = array<i32>} : memref<488x16xf32, #tpu.memory_space<vmem>>, vector<54x10xf32>,
    %c0_52 = arith.constant 0 : index
    %c0_53 = arith.constant 0 : index
    %117 = tpu.strided_load %arg19[%c0_52, %c0_53] {strides = array<i32: 2, 1>} : memref<488x16xf32, #tpu.memory_space<vmem>>, vector<27x16xf32>
    %c1_54 = arith.constant 1 : index
    %c0_55 = arith.constant 0 : index
    %118 = tpu.strided_load %arg19[%c1_54, %c0_55] {strides = array<i32: 2, 1>} : memref<488x16xf32, #tpu.memory_space<vmem>>, vector<27x16xf32>
    %119 = arith.maximumf %117, %118 : vector<27x16xf32>
    %120 = vector.extract_strided_slice %119 {offsets = [0, 0], sizes = [27, 10], strides = [1, 1]} : vector<27x16xf32> to vector<27x10xf32>
    %121 = vector.extract_strided_slice %120 {offsets = [0, 0], sizes = [1, 10], strides = [1, 1]} : vector<27x10xf32> to vector<1x10xf32>
    %122 = vector.extract_strided_slice %120 {offsets = [1, 0], sizes = [1, 10], strides = [1, 1]} : vector<27x10xf32> to vector<1x10xf32>
    %123 = vector.extract_strided_slice %120 {offsets = [2, 0], sizes = [1, 10], strides = [1, 1]} : vector<27x10xf32> to vector<1x10xf32>
    %124 = vector.extract_strided_slice %120 {offsets = [3, 0], sizes = [1, 10], strides = [1, 1]} : vector<27x10xf32> to vector<1x10xf32>
    %125 = vector.extract_strided_slice %120 {offsets = [4, 0], sizes = [1, 10], strides = [1, 1]} : vector<27x10xf32> to vector<1x10xf32>
    %126 = vector.extract_strided_slice %120 {offsets = [5, 0], sizes = [1, 10], strides = [1, 1]} : vector<27x10xf32> to vector<1x10xf32>
    %127 = vector.extract_strided_slice %120 {offsets = [6, 0], sizes = [1, 10], strides = [1, 1]} : vector<27x10xf32> to vector<1x10xf32>
    %128 = vector.extract_strided_slice %120 {offsets = [7, 0], sizes = [1, 10], strides = [1, 1]} : vector<27x10xf32> to vector<1x10xf32>
    %129 = vector.extract_strided_slice %120 {offsets = [8, 0], sizes = [1, 10], strides = [1, 1]} : vector<27x10xf32> to vector<1x10xf32>
    %130 = vector.extract_strided_slice %120 {offsets = [9, 0], sizes = [1, 10], strides = [1, 1]} : vector<27x10xf32> to vector<1x10xf32>
    %131 = vector.extract_strided_slice %120 {offsets = [10, 0], sizes = [1, 10], strides = [1, 1]} : vector<27x10xf32> to vector<1x10xf32>
    %132 = vector.extract_strided_slice %120 {offsets = [11, 0], sizes = [1, 10], strides = [1, 1]} : vector<27x10xf32> to vector<1x10xf32>
    %133 = vector.extract_strided_slice %120 {offsets = [12, 0], sizes = [1, 10], strides = [1, 1]} : vector<27x10xf32> to vector<1x10xf32>
    %134 = vector.extract_strided_slice %120 {offsets = [13, 0], sizes = [1, 10], strides = [1, 1]} : vector<27x10xf32> to vector<1x10xf32>
    %135 = vector.extract_strided_slice %120 {offsets = [14, 0], sizes = [1, 10], strides = [1, 1]} : vector<27x10xf32> to vector<1x10xf32>
    %136 = vector.extract_strided_slice %120 {offsets = [15, 0], sizes = [1, 10], strides = [1, 1]} : vector<27x10xf32> to vector<1x10xf32>
    %137 = vector.extract_strided_slice %120 {offsets = [16, 0], sizes = [1, 10], strides = [1, 1]} : vector<27x10xf32> to vector<1x10xf32>
    %138 = vector.extract_strided_slice %120 {offsets = [17, 0], sizes = [1, 10], strides = [1, 1]} : vector<27x10xf32> to vector<1x10xf32>
    %139 = vector.extract_strided_slice %120 {offsets = [18, 0], sizes = [1, 10], strides = [1, 1]} : vector<27x10xf32> to vector<1x10xf32>
    %140 = vector.extract_strided_slice %120 {offsets = [19, 0], sizes = [1, 10], strides = [1, 1]} : vector<27x10xf32> to vector<1x10xf32>
    %141 = vector.extract_strided_slice %120 {offsets = [20, 0], sizes = [1, 10], strides = [1, 1]} : vector<27x10xf32> to vector<1x10xf32>
    %142 = vector.extract_strided_slice %120 {offsets = [21, 0], sizes = [1, 10], strides = [1, 1]} : vector<27x10xf32> to vector<1x10xf32>
    %143 = vector.extract_strided_slice %120 {offsets = [22, 0], sizes = [1, 10], strides = [1, 1]} : vector<27x10xf32> to vector<1x10xf32>
    %144 = vector.extract_strided_slice %120 {offsets = [23, 0], sizes = [1, 10], strides = [1, 1]} : vector<27x10xf32> to vector<1x10xf32>
    %145 = vector.extract_strided_slice %120 {offsets = [24, 0], sizes = [1, 10], strides = [1, 1]} : vector<27x10xf32> to vector<1x10xf32>
    %146 = vector.extract_strided_slice %120 {offsets = [25, 0], sizes = [1, 10], strides = [1, 1]} : vector<27x10xf32> to vector<1x10xf32>
    %147 = vector.extract_strided_slice %120 {offsets = [26, 0], sizes = [1, 10], strides = [1, 1]} : vector<27x10xf32> to vector<1x10xf32>
    %148 = tpu.concatenate %121, %122, %123, %124, %125, %126, %127, %128, %129, %130, %131, %132, %133, %134, %135, %136 in 1 : vector<1x10xf32>, vector<1x10xf32>, vector<1x10xf32>, vector<1x10xf32>, vector<1x10xf32>, vector<1x10xf32>, vector<1x10xf32>, vector<1x10xf32>, vector<1x10xf32>, vector<1x10xf32>, vector<1x10xf32>, vector<1x10xf32>, vector<1x10xf32>, vector<1x10xf32>, vector<1x10xf32>, vector<1x10xf32> -> vector<1x160xf32>
    %149 = tpu.concatenate %137, %138, %139, %140, %141, %142, %143, %144, %145, %146, %147 in 1 : vector<1x10xf32>, vector<1x10xf32>, vector<1x10xf32>, vector<1x10xf32>, vector<1x10xf32>, vector<1x10xf32>, vector<1x10xf32>, vector<1x10xf32>, vector<1x10xf32>, vector<1x10xf32>, vector<1x10xf32> -> vector<1x110xf32>
    %150 = tpu.concatenate %148, %149 in 1 : vector<1x160xf32>, vector<1x110xf32> -> vector<1x270xf32>
    %c0_56 = arith.constant 0 : index
    %c0_57 = arith.constant 0 : index
    %151 = vector.load %arg12[%c0_56, %c0_57] : memref<270x30xf32, #tpu.memory_space<vmem>>, vector<270x30xf32>
    %cst_58 = arith.constant dense<0.000000e+00> : vector<1x30xf32>
    %152 = tpu.matmul %150, %151, %cst_58 {dimension_numbers = #tpu.dot_dimension_numbers<[1], [0], [0], [1], [0, 0, 1, 1], [], []>} : vector<1x270xf32>, vector<270x30xf32>, vector<1x30xf32> -> vector<1x30xf32>
    %c0_59 = arith.constant 0 : index
    %c0_60 = arith.constant 0 : index
    %153 = vector.load %arg13[%c0_59, %c0_60] : memref<1x30xf32, #tpu.memory_space<vmem>>, vector<1x30xf32>
    %154 = arith.addf %152, %153 : vector<1x30xf32>
    %cst_61 = arith.constant 0.000000e+00 : f32
    %155 = vector.broadcast %cst_61 : f32 to vector<1x30xf32>
    %156 = arith.cmpf ogt, %154, %155 : vector<1x30xf32>
    %cst_62 = arith.constant 0.00999999977 : f32
    %157 = vector.broadcast %cst_62 : f32 to vector<1x30xf32>
    %158 = arith.mulf %157, %154 : vector<1x30xf32>
    %159 = arith.select %156, %154, %158 : vector<1x30xi1>, vector<1x30xf32>
    %c0_63 = arith.constant 0 : index
    %c0_64 = arith.constant 0 : index
    %160 = vector.load %arg14[%c0_63, %c0_64] : memref<30x10xf32, #tpu.memory_space<vmem>>, vector<30x10xf32>
    %cst_65 = arith.constant dense<0.000000e+00> : vector<1x10xf32>
    %161 = tpu.matmul %159, %160, %cst_65 {dimension_numbers = #tpu.dot_dimension_numbers<[1], [0], [0], [1], [0, 0, 1, 1], [], []>} : vector<1x30xf32>, vector<30x10xf32>, vector<1x10xf32> -> vector<1x10xf32>
    %c0_66 = arith.constant 0 : index
    %c0_67 = arith.constant 0 : index
    %162 = vector.load %arg15[%c0_66, %c0_67] : memref<1x10xf32, #tpu.memory_space<vmem>>, vector<1x10xf32>
    %163 = arith.addf %161, %162 : vector<1x10xf32>
    %cst_68 = arith.constant 0.000000e+00 : f32
    %164 = vector.broadcast %cst_68 : f32 to vector<1x10xf32>
    %165 = arith.cmpf ogt, %163, %164 : vector<1x10xf32>
    %cst_69 = arith.constant 0.00999999977 : f32
    %166 = vector.broadcast %cst_69 : f32 to vector<1x10xf32>
    %167 = arith.mulf %166, %163 : vector<1x10xf32>
    %168 = arith.select %165, %163, %167 : vector<1x10xi1>, vector<1x10xf32>
    %c0_70 = arith.constant 0 : index
    %c0_71 = arith.constant 0 : index
    %169 = vector.load %arg16[%c0_70, %c0_71] : memref<10x2xf32, #tpu.memory_space<vmem>>, vector<10x2xf32>
    %cst_72 = arith.constant dense<0.000000e+00> : vector<1x2xf32>
    %170 = tpu.matmul %168, %169, %cst_72 {dimension_numbers = #tpu.dot_dimension_numbers<[1], [0], [0], [1], [0, 0, 1, 1], [], []>} : vector<1x10xf32>, vector<10x2xf32>, vector<1x2xf32> -> vector<1x2xf32>
    %c0_73 = arith.constant 0 : index
    %c0_74 = arith.constant 0 : index
    %171 = vector.load %arg17[%c0_73, %c0_74] : memref<1x2xf32, #tpu.memory_space<vmem>>, vector<1x2xf32>
    %172 = arith.addf %170, %171 : vector<1x2xf32>
    %cst_75 = arith.constant dense<0xFF800000> : vector<1xf32>
    %173 = vector.multi_reduction <maximumf>, %172, %cst_75 [1] : vector<1x2xf32> to vector<1xf32>
    %174 = vector.shape_cast %173 : vector<1xf32> to vector<1x1xf32>
    %175 = vector.broadcast %174 : vector<1x1xf32> to vector<1x2xf32>
    %176 = arith.subf %172, %175 : vector<1x2xf32>
    %177 = math.exp %176 : vector<1x2xf32>
    %cst_76 = arith.constant dense<0.000000e+00> : vector<1xf32>
    %178 = vector.multi_reduction <add>, %177, %cst_76 [1] : vector<1x2xf32> to vector<1xf32>
    %179 = vector.shape_cast %178 : vector<1xf32> to vector<1x1xf32>
    %180 = vector.broadcast %179 : vector<1x1xf32> to vector<1x2xf32>
    %181 = arith.divf %177, %180 : vector<1x2xf32>
    %c0_77 = arith.constant 0 : index
    %c0_78 = arith.constant 0 : index
    %c0_79 = arith.constant 0 : index
    %182 = vector.load %arg18[%c0_77, %c0_78, %c0_79] : memref<1x1x2xf32, #tpu.memory_space<vmem>>, vector<1x1x2xf32>
    %183 = vector.shape_cast %182 : vector<1x1x2xf32> to vector<1x2xf32>
    %184 = vector.shape_cast %181 : vector<1x2xf32> to vector<1x1x2xf32>
    tpu.vector_store %arg18[%c0_77, %c0_78, %c0_79], %184 {strides = array<i32>} : memref<1x1x2xf32, #tpu.memory_space<vmem>>, vector<1x1x2xf32>,
    return
  }
  func.func @transform_0(%arg0: i32) -> (i32, i32, i32) {
    %c0_i32 = arith.constant 0 : i32
    %c0_i32_0 = arith.constant 0 : i32
    %c0_i32_1 = arith.constant 0 : i32
    return %arg0, %c0_i32, %c0_i32_0 : i32, i32, i32
  }
  func.func @transform_1(%arg0: i32) -> (i32, i32) {
    %c0_i32 = arith.constant 0 : i32
    %c0_i32_0 = arith.constant 0 : i32
    %c0_i32_1 = arith.constant 0 : i32
    return %c0_i32, %c0_i32_0 : i32, i32
  }
  func.func @transform_2(%arg0: i32) -> (i32, i32) {
    %c0_i32 = arith.constant 0 : i32
    %c0_i32_0 = arith.constant 0 : i32
    %c0_i32_1 = arith.constant 0 : i32
    return %c0_i32, %c0_i32_0 : i32, i32
  }
  func.func @transform_3(%arg0: i32) -> (i32, i32) {
    %c0_i32 = arith.constant 0 : i32
    %c0_i32_0 = arith.constant 0 : i32
    %c0_i32_1 = arith.constant 0 : i32
    return %c0_i32, %c0_i32_0 : i32, i32
  }
  func.func @transform_4(%arg0: i32) -> (i32, i32) {
    %c0_i32 = arith.constant 0 : i32
    %c0_i32_0 = arith.constant 0 : i32
    %c0_i32_1 = arith.constant 0 : i32
    return %c0_i32, %c0_i32_0 : i32, i32
  }
  func.func @transform_5(%arg0: i32) -> (i32, i32) {
    %c0_i32 = arith.constant 0 : i32
    %c0_i32_0 = arith.constant 0 : i32
    %c0_i32_1 = arith.constant 0 : i32
    return %c0_i32, %c0_i32_0 : i32, i32
  }
  func.func @transform_6(%arg0: i32) -> (i32, i32) {
    %c0_i32 = arith.constant 0 : i32
    %c0_i32_0 = arith.constant 0 : i32
    %c0_i32_1 = arith.constant 0 : i32
    return %c0_i32, %c0_i32_0 : i32, i32
  }
  func.func @transform_7(%arg0: i32) -> (i32, i32) {
    %c0_i32 = arith.constant 0 : i32
    %c0_i32_0 = arith.constant 0 : i32
    %c0_i32_1 = arith.constant 0 : i32
    return %c0_i32, %c0_i32_0 : i32, i32
  }
  func.func @transform_8(%arg0: i32) -> (i32, i32) {
    %c0_i32 = arith.constant 0 : i32
    %c0_i32_0 = arith.constant 0 : i32
    %c0_i32_1 = arith.constant 0 : i32
    return %c0_i32, %c0_i32_0 : i32, i32
  }
  func.func @transform_9(%arg0: i32) -> (i32, i32) {
    %c0_i32 = arith.constant 0 : i32
    %c0_i32_0 = arith.constant 0 : i32
    %c0_i32_1 = arith.constant 0 : i32
    return %c0_i32, %c0_i32_0 : i32, i32
  }
  func.func @transform_10(%arg0: i32) -> (i32, i32) {
    %c0_i32 = arith.constant 0 : i32
    %c0_i32_0 = arith.constant 0 : i32
    %c0_i32_1 = arith.constant 0 : i32
    return %c0_i32, %c0_i32_0 : i32, i32
  }
  func.func @transform_11(%arg0: i32) -> (i32, i32) {
    %c0_i32 = arith.constant 0 : i32
    %c0_i32_0 = arith.constant 0 : i32
    %c0_i32_1 = arith.constant 0 : i32
    return %c0_i32, %c0_i32_0 : i32, i32
  }
  func.func @transform_12(%arg0: i32) -> (i32, i32) {
    %c0_i32 = arith.constant 0 : i32
    %c0_i32_0 = arith.constant 0 : i32
    %c0_i32_1 = arith.constant 0 : i32
    return %c0_i32, %c0_i32_0 : i32, i32
  }
  func.func @transform_13(%arg0: i32) -> (i32, i32) {
    %c0_i32 = arith.constant 0 : i32
    %c0_i32_0 = arith.constant 0 : i32
    %c0_i32_1 = arith.constant 0 : i32
    return %c0_i32, %c0_i32_0 : i32, i32
  }
  func.func @transform_14(%arg0: i32) -> (i32, i32) {
    %c0_i32 = arith.constant 0 : i32
    %c0_i32_0 = arith.constant 0 : i32
    %c0_i32_1 = arith.constant 0 : i32
    return %c0_i32, %c0_i32_0 : i32, i32
  }
  func.func @transform_15(%arg0: i32) -> (i32, i32) {
    %c0_i32 = arith.constant 0 : i32
    %c0_i32_0 = arith.constant 0 : i32
    %c0_i32_1 = arith.constant 0 : i32
    return %c0_i32, %c0_i32_0 : i32, i32
  }
  func.func @transform_16(%arg0: i32) -> (i32, i32) {
    %c0_i32 = arith.constant 0 : i32
    %c0_i32_0 = arith.constant 0 : i32
    %c0_i32_1 = arith.constant 0 : i32
    return %c0_i32, %c0_i32_0 : i32, i32
  }
  func.func @transform_17(%arg0: i32) -> (i32, i32, i32) {
    %c0_i32 = arith.constant 0 : i32
    %c0_i32_0 = arith.constant 0 : i32
    %c0_i32_1 = arith.constant 0 : i32
    return %arg0, %c0_i32, %c0_i32_0 : i32, i32, i32
  }
}

</mosaic_0001>

<llo_original>
// kernel: tpu_custom_call.1
$region0: #{tpu_custom_call.1}
  #allocation0 [shape = 'u32[]', space=smem, size = 0x4, offset = 0x4, fixed_abs, tag = 'smem constant byte address 0x4 - core index']
  #allocation1 [shape = 'u32[144,128]{1,0:T(1,128)}', space=vmem, size = 0x12000, scoped, tag = 'internal scratch']
  #allocation2 [shape = 'f32[488,16]{1,0:T(8,128)}', space=vmem, size = 0x3d000, scoped, tag = 'scratch operand']
  %s0 = inlined_call_operand.vmem [shape: f32[2,514,1], index: 0, kind: input, shape index: {}]
  %s1 = inlined_call_operand.vmem [shape: f32[514,1], index: 1, kind: input, shape index: {}]
  %s2 = inlined_call_operand.vmem [shape: f32[514,1], index: 2, kind: input, shape index: {}]
  %s3 = inlined_call_operand.vmem [shape: f32[27,5], index: 3, kind: input, shape index: {}]
  %s4 = inlined_call_operand.vmem [shape: f32[1,5], index: 4, kind: input, shape index: {}]
  %s5 = inlined_call_operand.vmem [shape: f32[75,10], index: 5, kind: input, shape index: {}]
  %s6 = inlined_call_operand.vmem [shape: f32[1,10], index: 6, kind: input, shape index: {}]
  %s7 = inlined_call_operand.vmem [shape: f32[40,10], index: 7, kind: input, shape index: {}]
  %s8 = inlined_call_operand.vmem [shape: f32[1,10], index: 8, kind: input, shape index: {}]
  %s9 = inlined_call_operand.vmem [shape: f32[30,10], index: 9, kind: input, shape index: {}]
  %s10 = inlined_call_operand.vmem [shape: f32[1,10], index: 10, kind: input, shape index: {}]
  %s11 = inlined_call_operand.vmem [shape: f32[270,30], index: 11, kind: input, shape index: {}]
  %s12 = inlined_call_operand.vmem [shape: f32[1,30], index: 12, kind: input, shape index: {}]
  %s13 = inlined_call_operand.vmem [shape: f32[30,10], index: 13, kind: input, shape index: {}]
  %s14 = inlined_call_operand.vmem [shape: f32[1,10], index: 14, kind: input, shape index: {}]
  %s15 = inlined_call_operand.vmem [shape: f32[10,2], index: 15, kind: input, shape index: {}]
  %s16 = inlined_call_operand.vmem [shape: f32[1,2], index: 16, kind: input, shape index: {}]
  %s17 = inlined_call_operand.hbm [shape: f32[2,1,2], index: 17, kind: output, shape index: {}]
  %s18 = sld [smem:[#allocation0]]
  $region101: #{tpu_custom_call.1} parent=0
    _
  %s20 = ssub.s32 1, %s18
  %s21 = scalar_select 0, %s20, %s18
  $region1: #{tpu_custom_call.1} parent=0
    #allocation3 [shape = 'u8[1024]{0}', space=vmem, size = 0x400, scoped, tag = 'output window, operand 0']
    #allocation4 [shape = 's32[2]{0}', space=sflag, size = 0x8, scoped, tag = 'scoped memory for tpu_custom_call.1']
    %22 = vsyncpa [#allocation4], 0
    %s23 = scalar_lea.sflag [#allocation4], 1
    %24 = vsyncpa %s23, 0
    loop: start=0, step=1, limit=4
    $region2: #{tpu_custom_call.1} parent=1 // loop_pre_header
      _
    $region3: #{tpu_custom_call.1} parent=1 // loop_header
      %s26 = sphi 0, %s30
      %p27 = scmp.ge.s32.totalorder %s26, 4
      %s36 = sphi 0, %s38
      %s39 = sphi 0, %s36
      %s40 = sphi 0, %s39
      %s56 = sphi 0, %s40
      %s60 = sphi 0, %s60
      %s62 = sphi 0, %s60
      %s63 = sphi 0, %s62
      %s77 = sphi 0, %s63
      %s81 = sphi 0, %s81
      %s83 = sphi 0, %s81
      %s84 = sphi 0, %s83
      %s98 = sphi 0, %s84
      %s102 = sphi 0, %s102
      %s104 = sphi 0, %s102
      %s105 = sphi 0, %s104
      %s119 = sphi 0, %s105
      %s123 = sphi 0, %s123
      %s125 = sphi 0, %s123
      %s126 = sphi 0, %s125
      %s140 = sphi 0, %s126
      %s144 = sphi 0, %s144
      %s146 = sphi 0, %s144
      %s147 = sphi 0, %s146
      %s161 = sphi 0, %s147
      %s165 = sphi 0, %s165
      %s167 = sphi 0, %s165
      %s168 = sphi 0, %s167
      %s182 = sphi 0, %s168
      %s186 = sphi 0, %s186
      %s188 = sphi 0, %s186
      %s189 = sphi 0, %s188
      %s203 = sphi 0, %s189
      %s207 = sphi 0, %s207
      %s209 = sphi 0, %s207
      %s210 = sphi 0, %s209
      %s224 = sphi 0, %s210
      %s228 = sphi 0, %s228
      %s230 = sphi 0, %s228
      %s231 = sphi 0, %s230
      %s245 = sphi 0, %s231
      %s249 = sphi 0, %s249
      %s251 = sphi 0, %s249
      %s252 = sphi 0, %s251
      %s266 = sphi 0, %s252
      %s270 = sphi 0, %s270
      %s272 = sphi 0, %s270
      %s273 = sphi 0, %s272
      %s287 = sphi 0, %s273
      %s291 = sphi 0, %s291
      %s293 = sphi 0, %s291
      %s294 = sphi 0, %s293
      %s308 = sphi 0, %s294
      %s312 = sphi 0, %s312
      %s314 = sphi 0, %s312
      %s315 = sphi 0, %s314
      %s329 = sphi 0, %s315
      %s333 = sphi 0, %s333
      %s335 = sphi 0, %s333
      %s336 = sphi 0, %s335
      %s350 = sphi 0, %s336
      %s354 = sphi 0, %s354
      %s356 = sphi 0, %s354
      %s357 = sphi 0, %s356
      %s371 = sphi 0, %s357
      %s375 = sphi 0, %s375
      %s377 = sphi 0, %s375
      %s378 = sphi 0, %s377
      %s392 = sphi 0, %s378
      %s398 = sphi 0, %s400
      %s401 = sphi 0, %s398
      %s402 = sphi 0, %s401
      %s418 = sphi 0, %s402
    $region4: #{tpu_custom_call.1} parent=1 // loop_header_branch
      %29 = sbr.rel (%p27) target = $region8
    $region5: #{tpu_custom_call.1} parent=1 // loop_body
      %s31 = ssub.s32 %s26, 1
      %s32 = ssub.s32 %s26, 2
      %s33 = sadd.s32 %s26, 1
      %s34 = ssub.s32 %s26, %s33
      %p35 = scmp.eq.s32.totalorder %s34, 0
      %s37 = sadd.s32 %s36, 1
      %s38 = scalar_select %p35, %s36, %s37
      %p41 = pneg %p35
      %p42 = scmp.eq.s32.totalorder %s26, 1
      %p43 = por %p41, %p42
      %p44 = scmp.ne.s32.totalorder %s36, %s39
      %p45 = scmp.eq.s32.totalorder %s26, 0
      %p46 = por %p44, %p45
      %p47 = scmp.ne.s32.totalorder %s36, %s39
      %p48 = scmp.eq.s32.totalorder %s31, 1
      %p49 = por %p47, %p48
      %p50 = scmp.ne.s32.totalorder %s39, %s40
      %p51 = scmp.eq.s32.totalorder %s31, 0
      %p52 = por %p50, %p51
      %p53 = scmp.ne.s32.totalorder %s39, %s40
      %p54 = scmp.eq.s32.totalorder %s32, 1
      %p55 = por %p53, %p54
      %p57 = scmp.ne.s32.totalorder %s40, %s56
      %p58 = scmp.eq.s32.totalorder %s32, 0
      %p59 = por %p57, %p58
      %s61 = sadd.s32 %s60, 1
      %p64 = scmp.eq.s32.totalorder %s26, 1
      %p65 = scmp.ne.s32.totalorder %s60, %s62
      %p66 = scmp.eq.s32.totalorder %s26, 0
      %p67 = por %p65, %p66
      %p68 = scmp.ne.s32.totalorder %s60, %s62
      %p69 = scmp.eq.s32.totalorder %s31, 1
      %p70 = por %p68, %p69
      %p71 = scmp.ne.s32.totalorder %s62, %s63
      %p72 = scmp.eq.s32.totalorder %s31, 0
      %p73 = por %p71, %p72
      %p74 = scmp.ne.s32.totalorder %s62, %s63
      %p75 = scmp.eq.s32.totalorder %s32, 1
      %p76 = por %p74, %p75
      %p78 = scmp.ne.s32.totalorder %s63, %s77
      %p79 = scmp.eq.s32.totalorder %s32, 0
      %p80 = por %p78, %p79
      %s82 = sadd.s32 %s81, 1
      %p85 = scmp.eq.s32.totalorder %s26, 1
      %p86 = scmp.ne.s32.totalorder %s81, %s83
      %p87 = scmp.eq.s32.totalorder %s26, 0
      %p88 = por %p86, %p87
      %p89 = scmp.ne.s32.totalorder %s81, %s83
      %p90 = scmp.eq.s32.totalorder %s31, 1
      %p91 = por %p89, %p90
      %p92 = scmp.ne.s32.totalorder %s83, %s84
      %p93 = scmp.eq.s32.totalorder %s31, 0
      %p94 = por %p92, %p93
      %p95 = scmp.ne.s32.totalorder %s83, %s84
      %p96 = scmp.eq.s32.totalorder %s32, 1
      %p97 = por %p95, %p96
      %p99 = scmp.ne.s32.totalorder %s84, %s98
      %p100 = scmp.eq.s32.totalorder %s32, 0
      %p101 = por %p99, %p100
      %s103 = sadd.s32 %s102, 1
      %p106 = scmp.eq.s32.totalorder %s26, 1
      %p107 = scmp.ne.s32.totalorder %s102, %s104
      %p108 = scmp.eq.s32.totalorder %s26, 0
      %p109 = por %p107, %p108
      %p110 = scmp.ne.s32.totalorder %s102, %s104
      %p111 = scmp.eq.s32.totalorder %s31, 1
      %p112 = por %p110, %p111
      %p113 = scmp.ne.s32.totalorder %s104, %s105
      %p114 = scmp.eq.s32.totalorder %s31, 0
      %p115 = por %p113, %p114
      %p116 = scmp.ne.s32.totalorder %s104, %s105
      %p117 = scmp.eq.s32.totalorder %s32, 1
      %p118 = por %p116, %p117
      %p120 = scmp.ne.s32.totalorder %s105, %s119
      %p121 = scmp.eq.s32.totalorder %s32, 0
      %p122 = por %p120, %p121
      %s124 = sadd.s32 %s123, 1
      %p127 = scmp.eq.s32.totalorder %s26, 1
      %p128 = scmp.ne.s32.totalorder %s123, %s125
      %p129 = scmp.eq.s32.totalorder %s26, 0
      %p130 = por %p128, %p129
      %p131 = scmp.ne.s32.totalorder %s123, %s125
      %p132 = scmp.eq.s32.totalorder %s31, 1
      %p133 = por %p131, %p132
      %p134 = scmp.ne.s32.totalorder %s125, %s126
      %p135 = scmp.eq.s32.totalorder %s31, 0
      %p136 = por %p134, %p135
      %p137 = scmp.ne.s32.totalorder %s125, %s126
      %p138 = scmp.eq.s32.totalorder %s32, 1
      %p139 = por %p137, %p138
      %p141 = scmp.ne.s32.totalorder %s126, %s140
      %p142 = scmp.eq.s32.totalorder %s32, 0
      %p143 = por %p141, %p142
      %s145 = sadd.s32 %s144, 1
      %p148 = scmp.eq.s32.totalorder %s26, 1
      %p149 = scmp.ne.s32.totalorder %s144, %s146
      %p150 = scmp.eq.s32.totalorder %s26, 0
      %p151 = por %p149, %p150
      %p152 = scmp.ne.s32.totalorder %s144, %s146
      %p153 = scmp.eq.s32.totalorder %s31, 1
      %p154 = por %p152, %p153
      %p155 = scmp.ne.s32.totalorder %s146, %s147
      %p156 = scmp.eq.s32.totalorder %s31, 0
      %p157 = por %p155, %p156
      %p158 = scmp.ne.s32.totalorder %s146, %s147
      %p159 = scmp.eq.s32.totalorder %s32, 1
      %p160 = por %p158, %p159
      %p162 = scmp.ne.s32.totalorder %s147, %s161
      %p163 = scmp.eq.s32.totalorder %s32, 0
      %p164 = por %p162, %p163
      %s166 = sadd.s32 %s165, 1
      %p169 = scmp.eq.s32.totalorder %s26, 1
      %p170 = scmp.ne.s32.totalorder %s165, %s167
      %p171 = scmp.eq.s32.totalorder %s26, 0
      %p172 = por %p170, %p171
      %p173 = scmp.ne.s32.totalorder %s165, %s167
      %p174 = scmp.eq.s32.totalorder %s31, 1
      %p175 = por %p173, %p174
      %p176 = scmp.ne.s32.totalorder %s167, %s168
      %p177 = scmp.eq.s32.totalorder %s31, 0
      %p178 = por %p176, %p177
      %p179 = scmp.ne.s32.totalorder %s167, %s168
      %p180 = scmp.eq.s32.totalorder %s32, 1
      %p181 = por %p179, %p180
      %p183 = scmp.ne.s32.totalorder %s168, %s182
      %p184 = scmp.eq.s32.totalorder %s32, 0
      %p185 = por %p183, %p184
      %s187 = sadd.s32 %s186, 1
      %p190 = scmp.eq.s32.totalorder %s26, 1
      %p191 = scmp.ne.s32.totalorder %s186, %s188
      %p192 = scmp.eq.s32.totalorder %s26, 0
      %p193 = por %p191, %p192
      %p194 = scmp.ne.s32.totalorder %s186, %s188
      %p195 = scmp.eq.s32.totalorder %s31, 1
      %p196 = por %p194, %p195
      %p197 = scmp.ne.s32.totalorder %s188, %s189
      %p198 = scmp.eq.s32.totalorder %s31, 0
      %p199 = por %p197, %p198
      %p200 = scmp.ne.s32.totalorder %s188, %s189
      %p201 = scmp.eq.s32.totalorder %s32, 1
      %p202 = por %p200, %p201
      %p204 = scmp.ne.s32.totalorder %s189, %s203
      %p205 = scmp.eq.s32.totalorder %s32, 0
      %p206 = por %p204, %p205
      %s208 = sadd.s32 %s207, 1
      %p211 = scmp.eq.s32.totalorder %s26, 1
      %p212 = scmp.ne.s32.totalorder %s207, %s209
      %p213 = scmp.eq.s32.totalorder %s26, 0
      %p214 = por %p212, %p213
      %p215 = scmp.ne.s32.totalorder %s207, %s209
      %p216 = scmp.eq.s32.totalorder %s31, 1
      %p217 = por %p215, %p216
      %p218 = scmp.ne.s32.totalorder %s209, %s210
      %p219 = scmp.eq.s32.totalorder %s31, 0
      %p220 = por %p218, %p219
      %p221 = scmp.ne.s32.totalorder %s209, %s210
      %p222 = scmp.eq.s32.totalorder %s32, 1
      %p223 = por %p221, %p222
      %p225 = scmp.ne.s32.totalorder %s210, %s224
      %p226 = scmp.eq.s32.totalorder %s32, 0
      %p227 = por %p225, %p226
      %s229 = sadd.s32 %s228, 1
      %p232 = scmp.eq.s32.totalorder %s26, 1
      %p233 = scmp.ne.s32.totalorder %s228, %s230
      %p234 = scmp.eq.s32.totalorder %s26, 0
      %p235 = por %p233, %p234
      %p236 = scmp.ne.s32.totalorder %s228, %s230
      %p237 = scmp.eq.s32.totalorder %s31, 1
      %p238 = por %p236, %p237
      %p239 = scmp.ne.s32.totalorder %s230, %s231
      %p240 = scmp.eq.s32.totalorder %s31, 0
      %p241 = por %p239, %p240
      %p242 = scmp.ne.s32.totalorder %s230, %s231
      %p243 = scmp.eq.s32.totalorder %s32, 1
      %p244 = por %p242, %p243
      %p246 = scmp.ne.s32.totalorder %s231, %s245
      %p247 = scmp.eq.s32.totalorder %s32, 0
      %p248 = por %p246, %p247
      %s250 = sadd.s32 %s249, 1
      %p253 = scmp.eq.s32.totalorder %s26, 1
      %p254 = scmp.ne.s32.totalorder %s249, %s251
      %p255 = scmp.eq.s32.totalorder %s26, 0
      %p256 = por %p254, %p255
      %p257 = scmp.ne.s32.totalorder %s249, %s251
      %p258 = scmp.eq.s32.totalorder %s31, 1
      %p259 = por %p257, %p258
      %p260 = scmp.ne.s32.totalorder %s251, %s252
      %p261 = scmp.eq.s32.totalorder %s31, 0
      %p262 = por %p260, %p261
      %p263 = scmp.ne.s32.totalorder %s251, %s252
      %p264 = scmp.eq.s32.totalorder %s32, 1
      %p265 = por %p263, %p264
      %p267 = scmp.ne.s32.totalorder %s252, %s266
      %p268 = scmp.eq.s32.totalorder %s32, 0
      %p269 = por %p267, %p268
      %s271 = sadd.s32 %s270, 1
      %p274 = scmp.eq.s32.totalorder %s26, 1
      %p275 = scmp.ne.s32.totalorder %s270, %s272
      %p276 = scmp.eq.s32.totalorder %s26, 0
      %p277 = por %p275, %p276
      %p278 = scmp.ne.s32.totalorder %s270, %s272
      %p279 = scmp.eq.s32.totalorder %s31, 1
      %p280 = por %p278, %p279
      %p281 = scmp.ne.s32.totalorder %s272, %s273
      %p282 = scmp.eq.s32.totalorder %s31, 0
      %p283 = por %p281, %p282
      %p284 = scmp.ne.s32.totalorder %s272, %s273
      %p285 = scmp.eq.s32.totalorder %s32, 1
      %p286 = por %p284, %p285
      %p288 = scmp.ne.s32.totalorder %s273, %s287
      %p289 = scmp.eq.s32.totalorder %s32, 0
      %p290 = por %p288, %p289
      %s292 = sadd.s32 %s291, 1
      %p295 = scmp.eq.s32.totalorder %s26, 1
      %p296 = scmp.ne.s32.totalorder %s291, %s293
      %p297 = scmp.eq.s32.totalorder %s26, 0
      %p298 = por %p296, %p297
      %p299 = scmp.ne.s32.totalorder %s291, %s293
      %p300 = scmp.eq.s32.totalorder %s31, 1
      %p301 = por %p299, %p300
      %p302 = scmp.ne.s32.totalorder %s293, %s294
      %p303 = scmp.eq.s32.totalorder %s31, 0
      %p304 = por %p302, %p303
      %p305 = scmp.ne.s32.totalorder %s293, %s294
      %p306 = scmp.eq.s32.totalorder %s32, 1
      %p307 = por %p305, %p306
      %p309 = scmp.ne.s32.totalorder %s294, %s308
      %p310 = scmp.eq.s32.totalorder %s32, 0
      %p311 = por %p309, %p310
      %s313 = sadd.s32 %s312, 1
      %p316 = scmp.eq.s32.totalorder %s26, 1
      %p317 = scmp.ne.s32.totalorder %s312, %s314
      %p318 = scmp.eq.s32.totalorder %s26, 0
      %p319 = por %p317, %p318
      %p320 = scmp.ne.s32.totalorder %s312, %s314
      %p321 = scmp.eq.s32.totalorder %s31, 1
      %p322 = por %p320, %p321
      %p323 = scmp.ne.s32.totalorder %s314, %s315
      %p324 = scmp.eq.s32.totalorder %s31, 0
      %p325 = por %p323, %p324
      %p326 = scmp.ne.s32.totalorder %s314, %s315
      %p327 = scmp.eq.s32.totalorder %s32, 1
      %p328 = por %p326, %p327
      %p330 = scmp.ne.s32.totalorder %s315, %s329
      %p331 = scmp.eq.s32.totalorder %s32, 0
      %p332 = por %p330, %p331
      %s334 = sadd.s32 %s333, 1
      %p337 = scmp.eq.s32.totalorder %s26, 1
      %p338 = scmp.ne.s32.totalorder %s333, %s335
      %p339 = scmp.eq.s32.totalorder %s26, 0
      %p340 = por %p338, %p339
      %p341 = scmp.ne.s32.totalorder %s333, %s335
      %p342 = scmp.eq.s32.totalorder %s31, 1
      %p343 = por %p341, %p342
      %p344 = scmp.ne.s32.totalorder %s335, %s336
      %p345 = scmp.eq.s32.totalorder %s31, 0
      %p346 = por %p344, %p345
      %p347 = scmp.ne.s32.totalorder %s335, %s336
      %p348 = scmp.eq.s32.totalorder %s32, 1
      %p349 = por %p347, %p348
      %p351 = scmp.ne.s32.totalorder %s336, %s350
      %p352 = scmp.eq.s32.totalorder %s32, 0
      %p353 = por %p351, %p352
      %s355 = sadd.s32 %s354, 1
      %p358 = scmp.eq.s32.totalorder %s26, 1
      %p359 = scmp.ne.s32.totalorder %s354, %s356
      %p360 = scmp.eq.s32.totalorder %s26, 0
      %p361 = por %p359, %p360
      %p362 = scmp.ne.s32.totalorder %s354, %s356
      %p363 = scmp.eq.s32.totalorder %s31, 1
      %p364 = por %p362, %p363
      %p365 = scmp.ne.s32.totalorder %s356, %s357
      %p366 = scmp.eq.s32.totalorder %s31, 0
      %p367 = por %p365, %p366
      %p368 = scmp.ne.s32.totalorder %s356, %s357
      %p369 = scmp.eq.s32.totalorder %s32, 1
      %p370 = por %p368, %p369
      %p372 = scmp.ne.s32.totalorder %s357, %s371
      %p373 = scmp.eq.s32.totalorder %s32, 0
      %p374 = por %p372, %p373
      %s376 = sadd.s32 %s375, 1
      %p379 = scmp.eq.s32.totalorder %s26, 1
      %p380 = scmp.ne.s32.totalorder %s375, %s377
      %p381 = scmp.eq.s32.totalorder %s26, 0
      %p382 = por %p380, %p381
      %p383 = scmp.ne.s32.totalorder %s375, %s377
      %p384 = scmp.eq.s32.totalorder %s31, 1
      %p385 = por %p383, %p384
      %p386 = scmp.ne.s32.totalorder %s377, %s378
      %p387 = scmp.eq.s32.totalorder %s31, 0
      %p388 = por %p386, %p387
      %p389 = scmp.ne.s32.totalorder %s377, %s378
      %p390 = scmp.eq.s32.totalorder %s32, 1
      %p391 = por %p389, %p390
      %p393 = scmp.ne.s32.totalorder %s378, %s392
      %p394 = scmp.eq.s32.totalorder %s32, 0
      %p395 = por %p393, %p394
      %s396 = ssub.s32 %s26, %s33
      %p397 = scmp.eq.s32.totalorder %s396, 0
      %s399 = sadd.s32 %s398, 1
      %s400 = scalar_select %p397, %s398, %s399
      %p403 = pneg %p397
      %p404 = scmp.eq.s32.totalorder %s26, 1
      %p405 = por %p403, %p404
      %p406 = scmp.ne.s32.totalorder %s398, %s401
      %p407 = scmp.eq.s32.totalorder %s26, 0
      %p408 = por %p406, %p407
      %p409 = scmp.ne.s32.totalorder %s398, %s401
      %p410 = scmp.eq.s32.totalorder %s31, 1
      %p411 = por %p409, %p410
      %p412 = scmp.ne.s32.totalorder %s401, %s402
      %p413 = scmp.eq.s32.totalorder %s31, 0
      %p414 = por %p412, %p413
      %p415 = scmp.ne.s32.totalorder %s401, %s402
      %p416 = scmp.eq.s32.totalorder %s32, 1
      %p417 = por %p415, %p416
      %p419 = scmp.ne.s32.totalorder %s402, %s418
      %p420 = scmp.eq.s32.totalorder %s32, 0
      %p421 = por %p419, %p420
      %p422 = scmp.le.s32.totalorder 1, %s26
      %p423 = scmp.lt.s32.totalorder %s26, 3
      %p424 = pnand %p422, %p423
      %p425 = pneg %p424
      // Predicated region
      $region9: #{tpu_custom_call.1} parent=5 // pred_check
        _
      $region10: #{tpu_custom_call.1} parent=5 // pred_check_branch
        %427 = sbr.rel (%p424) target = $region12
      $region11: #{tpu_custom_call.1} parent=5 // pred_region
        %s428 = ssub.s32 %s26, 1
        // Predicated region
        $region13: #{tpu_custom_call.1} parent=11 // pred_check
          %p429 = pneg %p73
        $region14: #{tpu_custom_call.1} parent=11 // pred_check_branch
          %431 = sbr.rel (%p429) target = $region16
        $region15: #{tpu_custom_call.1} parent=11 // pred_region
          _
        $region16: #{tpu_custom_call.1} parent=11 // pred_fallthru
          _
        // Predicated region
        $region17: #{tpu_custom_call.1} parent=11 // pred_check
          %p432 = pneg %p94
        $region18: #{tpu_custom_call.1} parent=11 // pred_check_branch
          %434 = sbr.rel (%p432) target = $region20
        $region19: #{tpu_custom_call.1} parent=11 // pred_region
          _
        $region20: #{tpu_custom_call.1} parent=11 // pred_fallthru
          _
        // Predicated region
        $region21: #{tpu_custom_call.1} parent=11 // pred_check
          %p435 = pneg %p115
        $region22: #{tpu_custom_call.1} parent=11 // pred_check_branch
          %437 = sbr.rel (%p435) target = $region24
        $region23: #{tpu_custom_call.1} parent=11 // pred_region
          _
        $region24: #{tpu_custom_call.1} parent=11 // pred_fallthru
          _
        // Predicated region
        $region25: #{tpu_custom_call.1} parent=11 // pred_check
          %p438 = pneg %p136
        $region26: #{tpu_custom_call.1} parent=11 // pred_check_branch
          %440 = sbr.rel (%p438) target = $region28
        $region27: #{tpu_custom_call.1} parent=11 // pred_region
          _
        $region28: #{tpu_custom_call.1} parent=11 // pred_fallthru
          _
        // Predicated region
        $region29: #{tpu_custom_call.1} parent=11 // pred_check
          %p441 = pneg %p157
        $region30: #{tpu_custom_call.1} parent=11 // pred_check_branch
          %443 = sbr.rel (%p441) target = $region32
        $region31: #{tpu_custom_call.1} parent=11 // pred_region
          _
        $region32: #{tpu_custom_call.1} parent=11 // pred_fallthru
          _
        // Predicated region
        $region33: #{tpu_custom_call.1} parent=11 // pred_check
          %p444 = pneg %p178
        $region34: #{tpu_custom_call.1} parent=11 // pred_check_branch
          %446 = sbr.rel (%p444) target = $region36
        $region35: #{tpu_custom_call.1} parent=11 // pred_region
          _
        $region36: #{tpu_custom_call.1} parent=11 // pred_fallthru
          _
        // Predicated region
        $region37: #{tpu_custom_call.1} parent=11 // pred_check
          %p447 = pneg %p199
        $region38: #{tpu_custom_call.1} parent=11 // pred_check_branch
          %449 = sbr.rel (%p447) target = $region40
        $region39: #{tpu_custom_call.1} parent=11 // pred_region
          _
        $region40: #{tpu_custom_call.1} parent=11 // pred_fallthru
          _
        // Predicated region
        $region41: #{tpu_custom_call.1} parent=11 // pred_check
          %p450 = pneg %p220
        $region42: #{tpu_custom_call.1} parent=11 // pred_check_branch
          %452 = sbr.rel (%p450) target = $region44
        $region43: #{tpu_custom_call.1} parent=11 // pred_region
          _
        $region44: #{tpu_custom_call.1} parent=11 // pred_fallthru
          _
        // Predicated region
        $region45: #{tpu_custom_call.1} parent=11 // pred_check
          %p453 = pneg %p241
        $region46: #{tpu_custom_call.1} parent=11 // pred_check_branch
          %455 = sbr.rel (%p453) target = $region48
        $region47: #{tpu_custom_call.1} parent=11 // pred_region
          _
        $region48: #{tpu_custom_call.1} parent=11 // pred_fallthru
          _
        // Predicated region
        $region49: #{tpu_custom_call.1} parent=11 // pred_check
          %p456 = pneg %p262
        $region50: #{tpu_custom_call.1} parent=11 // pred_check_branch
          %458 = sbr.rel (%p456) target = $region52
        $region51: #{tpu_custom_call.1} parent=11 // pred_region
          _
        $region52: #{tpu_custom_call.1} parent=11 // pred_fallthru
          _
        // Predicated region
        $region53: #{tpu_custom_call.1} parent=11 // pred_check
          %p459 = pneg %p283
        $region54: #{tpu_custom_call.1} parent=11 // pred_check_branch
          %461 = sbr.rel (%p459) target = $region56
        $region55: #{tpu_custom_call.1} parent=11 // pred_region
          _
        $region56: #{tpu_custom_call.1} parent=11 // pred_fallthru
          _
        // Predicated region
        $region57: #{tpu_custom_call.1} parent=11 // pred_check
          %p462 = pneg %p304
        $region58: #{tpu_custom_call.1} parent=11 // pred_check_branch
          %464 = sbr.rel (%p462) target = $region60
        $region59: #{tpu_custom_call.1} parent=11 // pred_region
          _
        $region60: #{tpu_custom_call.1} parent=11 // pred_fallthru
          _
        // Predicated region
        $region61: #{tpu_custom_call.1} parent=11 // pred_check
          %p465 = pneg %p325
        $region62: #{tpu_custom_call.1} parent=11 // pred_check_branch
          %467 = sbr.rel (%p465) target = $region64
        $region63: #{tpu_custom_call.1} parent=11 // pred_region
          _
        $region64: #{tpu_custom_call.1} parent=11 // pred_fallthru
          _
        // Predicated region
        $region65: #{tpu_custom_call.1} parent=11 // pred_check
          %p468 = pneg %p346
        $region66: #{tpu_custom_call.1} parent=11 // pred_check_branch
          %470 = sbr.rel (%p468) target = $region68
        $region67: #{tpu_custom_call.1} parent=11 // pred_region
          _
        $region68: #{tpu_custom_call.1} parent=11 // pred_fallthru
          _
        // Predicated region
        $region69: #{tpu_custom_call.1} parent=11 // pred_check
          %p471 = pneg %p367
        $region70: #{tpu_custom_call.1} parent=11 // pred_check_branch
          %473 = sbr.rel (%p471) target = $region72
        $region71: #{tpu_custom_call.1} parent=11 // pred_region
          _
        $region72: #{tpu_custom_call.1} parent=11 // pred_fallthru
          _
        // Predicated region
        $region73: #{tpu_custom_call.1} parent=11 // pred_check
          %p474 = pneg %p388
        $region74: #{tpu_custom_call.1} parent=11 // pred_check_branch
          %476 = sbr.rel (%p474) target = $region76
        $region75: #{tpu_custom_call.1} parent=11 // pred_region
          _
        $region76: #{tpu_custom_call.1} parent=11 // pred_fallthru
          _
      $region12: #{tpu_custom_call.1} parent=5 // pred_fallthru
        _
      %p477 = scmp.lt.s32.totalorder %s26, 2
      // Predicated region
      $region77: #{tpu_custom_call.1} parent=5 // pred_check
        %p478 = pneg %p477
      $region78: #{tpu_custom_call.1} parent=5 // pred_check_branch
        %480 = sbr.rel (%p478) target = $region80
      $region79: #{tpu_custom_call.1} parent=5 // pred_region
        // Predicated region
        $region81: #{tpu_custom_call.1} parent=79 // pred_check
          %p481 = pneg %p46
        $region82: #{tpu_custom_call.1} parent=79 // pred_check_branch
          %483 = sbr.rel (%p481) target = $region84
        $region83: #{tpu_custom_call.1} parent=79 // pred_region
          %p484 = scmp.lt.s32.totalorder %s26, 1
          %s485 = scalar_select %p484, %s26, 1
          %s486 = smul.addr %s485, 65
          %s487 = smul.addr %s486, 8
          %s488 = scalar_lea.vmem %s0, %s487
        $region84: #{tpu_custom_call.1} parent=79 // pred_fallthru
          _
      $region80: #{tpu_custom_call.1} parent=5 // pred_fallthru
        _
      %p489 = scmp.le.s32.totalorder 1, %s26
      %p490 = scmp.lt.s32.totalorder %s26, 3
      %p491 = pnand %p489, %p490
      %p492 = pneg %p491
      // Predicated region
      $region85: #{tpu_custom_call.1} parent=5 // pred_check
        _
      $region86: #{tpu_custom_call.1} parent=5 // pred_check_branch
        %494 = sbr.rel (%p491) target = $region88
      $region87: #{tpu_custom_call.1} parent=5 // pred_region
        %s495 = ssub.s32 %s26, 1
        %p496 = scmp.lt.s32.totalorder %s31, 1
        %s497 = scalar_select %p496, %s31, 1
        %s498 = smul.addr %s497, 65
        %s499 = smul.addr %s498, 8
        %s500 = scalar_lea.vmem %s0, %s499
        %p501 = pneg %p52
        %p502 = pneg %p49
        %p503 = pneg %p73
        %p504 = pneg %p70
        %p505 = pneg %p94
        %p506 = pneg %p91
        %p507 = pneg %p115
        %p508 = pneg %p112
        %p509 = pneg %p136
        %p510 = pneg %p133
        %p511 = pneg %p157
        %p512 = pneg %p154
        %p513 = pneg %p178
        %p514 = pneg %p175
        %p515 = pneg %p199
        %p516 = pneg %p196
        %p517 = pneg %p220
        %p518 = pneg %p217
        %p519 = pneg %p241
        %p520 = pneg %p238
        %p521 = pneg %p262
        %p522 = pneg %p259
        %p523 = pneg %p283
        %p524 = pneg %p280
        %p525 = pneg %p304
        %p526 = pneg %p301
        %p527 = pneg %p325
        %p528 = pneg %p322
        %p529 = pneg %p346
        %p530 = pneg %p343
        %p531 = pneg %p367
        %p532 = pneg %p364
        %p533 = pneg %p388
        %p534 = pneg %p385
        %p535 = pneg %p414
        %p536 = pneg %p411
        %s537 = sand.u32 %s401, 1
        %s538 = scalar_lea.sflag [#allocation4], %s537
        %s539 = sand.u32 %s401, 1
        %s540 = scalar_lea.vmem [#allocation3], %s539
        %p541 = scmp.lt.s32.totalorder %s31, 1
        %s542 = scalar_select %p541, %s31, 1
        %s543 = smul.addr %s542, 65
        %s544 = smul.addr %s543, 8
        %s545 = scalar_lea.vmem %s0, %s544
        %v546 = vld [vmem:[%s545] sm:$0xff]
        %v547 = vld [vmem:[%s545 + $0x8] sm:$0xff]
        %v548 = vld [vmem:[%s545 + $0x10] sm:$0xff]
        %v549 = vld [vmem:[%s545 + $0x18] sm:$0xff]
        %v550 = vld [vmem:[%s545 + $0x20] sm:$0xff]
        %v551 = vld [vmem:[%s545 + $0x28] sm:$0xff]
        %v552 = vld [vmem:[%s545 + $0x30] sm:$0xff]
        %v553 = vld [vmem:[%s545 + $0x38] sm:$0xff]
        %v554 = vld [vmem:[%s545 + $0x40] sm:$0xff]
        %v555 = vld [vmem:[%s545 + $0x48] sm:$0xff]
        %v556 = vld [vmem:[%s545 + $0x50] sm:$0xff]
        %v557 = vld [vmem:[%s545 + $0x58] sm:$0xff]
        %v558 = vld [vmem:[%s545 + $0x60] sm:$0xff]
        %v559 = vld [vmem:[%s545 + $0x68] sm:$0xff]
        %v560 = vld [vmem:[%s545 + $0x70] sm:$0xff]
        %v561 = vld [vmem:[%s545 + $0x78] sm:$0xff]
        %v562 = vld [vmem:[%s545 + $0x80] sm:$0xff]
        %v563 = vld [vmem:[%s545 + $0x88] sm:$0xff]
        %v564 = vld [vmem:[%s545 + $0x90] sm:$0xff]
        %v565 = vld [vmem:[%s545 + $0x98] sm:$0xff]
        %v566 = vld [vmem:[%s545 + $0xa0] sm:$0xff]
        %v567 = vld [vmem:[%s545 + $0xa8] sm:$0xff]
        %v568 = vld [vmem:[%s545 + $0xb0] sm:$0xff]
        %v569 = vld [vmem:[%s545 + $0xb8] sm:$0xff]
        %v570 = vld [vmem:[%s545 + $0xc0] sm:$0xff]
        %v571 = vld [vmem:[%s545 + $0xc8] sm:$0xff]
        %v572 = vld [vmem:[%s545 + $0xd0] sm:$0xff]
        %v573 = vld [vmem:[%s545 + $0xd8] sm:$0xff]
        %v574 = vld [vmem:[%s545 + $0xe0] sm:$0xff]
        %v575 = vld [vmem:[%s545 + $0xe8] sm:$0xff]
        %v576 = vld [vmem:[%s545 + $0xf0] sm:$0xff]
        %v577 = vld [vmem:[%s545 + $0xf8] sm:$0xff]
        %v578 = vld [vmem:[%s545 + $0x100] sm:$0xff]
        %v579 = vld [vmem:[%s545 + $0x108] sm:$0xff]
        %v580 = vld [vmem:[%s545 + $0x110] sm:$0xff]
        %v581 = vld [vmem:[%s545 + $0x118] sm:$0xff]
        %v582 = vld [vmem:[%s545 + $0x120] sm:$0xff]
        %v583 = vld [vmem:[%s545 + $0x128] sm:$0xff]
        %v584 = vld [vmem:[%s545 + $0x130] sm:$0xff]
        %v585 = vld [vmem:[%s545 + $0x138] sm:$0xff]
        %v586 = vld [vmem:[%s545 + $0x140] sm:$0xff]
        %v587 = vld [vmem:[%s545 + $0x148] sm:$0xff]
        %v588 = vld [vmem:[%s545 + $0x150] sm:$0xff]
        %v589 = vld [vmem:[%s545 + $0x158] sm:$0xff]
        %v590 = vld [vmem:[%s545 + $0x160] sm:$0xff]
        %v591 = vld [vmem:[%s545 + $0x168] sm:$0xff]
        %v592 = vld [vmem:[%s545 + $0x170] sm:$0xff]
        %v593 = vld [vmem:[%s545 + $0x178] sm:$0xff]
        %v594 = vld [vmem:[%s545 + $0x180] sm:$0xff]
        %v595 = vld [vmem:[%s545 + $0x188] sm:$0xff]
        %v596 = vld [vmem:[%s545 + $0x190] sm:$0xff]
        %v597 = vld [vmem:[%s545 + $0x198] sm:$0xff]
        %v598 = vld [vmem:[%s545 + $0x1a0] sm:$0xff]
        %v599 = vld [vmem:[%s545 + $0x1a8] sm:$0xff]
        %v600 = vld [vmem:[%s545 + $0x1b0] sm:$0xff]
        %v601 = vld [vmem:[%s545 + $0x1b8] sm:$0xff]
        %v602 = vld [vmem:[%s545 + $0x1c0] sm:$0xff]
        %v603 = vld [vmem:[%s545 + $0x1c8] sm:$0xff]
        %v604 = vld [vmem:[%s545 + $0x1d0] sm:$0xff]
        %v605 = vld [vmem:[%s545 + $0x1d8] sm:$0xff]
        %v606 = vld [vmem:[%s545 + $0x1e0] sm:$0xff]
        %v607 = vld [vmem:[%s545 + $0x1e8] sm:$0xff]
        %v608 = vld [vmem:[%s545 + $0x1f0] sm:$0xff]
        %v609 = vld [vmem:[%s545 + $0x1f8] sm:$0xff]
        %v610 = vld [vmem:[%s545 + $0x200] sm:$0x3]
        %v611 = vld [vmem:[%s1] sm:$0xff]
        %v612 = vld [vmem:[%s1 + $0x8] sm:$0xff]
        %v613 = vld [vmem:[%s1 + $0x10] sm:$0xff]
        %v614 = vld [vmem:[%s1 + $0x18] sm:$0xff]
        %v615 = vld [vmem:[%s1 + $0x20] sm:$0xff]
        %v616 = vld [vmem:[%s1 + $0x28] sm:$0xff]
        %v617 = vld [vmem:[%s1 + $0x30] sm:$0xff]
        %v618 = vld [vmem:[%s1 + $0x38] sm:$0xff]
        %v619 = vld [vmem:[%s1 + $0x40] sm:$0xff]
        %v620 = vld [vmem:[%s1 + $0x48] sm:$0xff]
        %v621 = vld [vmem:[%s1 + $0x50] sm:$0xff]
        %v622 = vld [vmem:[%s1 + $0x58] sm:$0xff]
        %v623 = vld [vmem:[%s1 + $0x60] sm:$0xff]
        %v624 = vld [vmem:[%s1 + $0x68] sm:$0xff]
        %v625 = vld [vmem:[%s1 + $0x70] sm:$0xff]
        %v626 = vld [vmem:[%s1 + $0x78] sm:$0xff]
        %v627 = vld [vmem:[%s1 + $0x80] sm:$0xff]
        %v628 = vld [vmem:[%s1 + $0x88] sm:$0xff]
        %v629 = vld [vmem:[%s1 + $0x90] sm:$0xff]
        %v630 = vld [vmem:[%s1 + $0x98] sm:$0xff]
        %v631 = vld [vmem:[%s1 + $0xa0] sm:$0xff]
        %v632 = vld [vmem:[%s1 + $0xa8] sm:$0xff]
        %v633 = vld [vmem:[%s1 + $0xb0] sm:$0xff]
        %v634 = vld [vmem:[%s1 + $0xb8] sm:$0xff]
        %v635 = vld [vmem:[%s1 + $0xc0] sm:$0xff]
        %v636 = vld [vmem:[%s1 + $0xc8] sm:$0xff]
        %v637 = vld [vmem:[%s1 + $0xd0] sm:$0xff]
        %v638 = vld [vmem:[%s1 + $0xd8] sm:$0xff]
        %v639 = vld [vmem:[%s1 + $0xe0] sm:$0xff]
        %v640 = vld [vmem:[%s1 + $0xe8] sm:$0xff]
        %v641 = vld [vmem:[%s1 + $0xf0] sm:$0xff]
        %v642 = vld [vmem:[%s1 + $0xf8] sm:$0xff]
        %v643 = vld [vmem:[%s1 + $0x100] sm:$0xff]
        %v644 = vld [vmem:[%s1 + $0x108] sm:$0xff]
        %v645 = vld [vmem:[%s1 + $0x110] sm:$0xff]
        %v646 = vld [vmem:[%s1 + $0x118] sm:$0xff]
        %v647 = vld [vmem:[%s1 + $0x120] sm:$0xff]
        %v648 = vld [vmem:[%s1 + $0x128] sm:$0xff]
        %v649 = vld [vmem:[%s1 + $0x130] sm:$0xff]
        %v650 = vld [vmem:[%s1 + $0x138] sm:$0xff]
        %v651 = vld [vmem:[%s1 + $0x140] sm:$0xff]
        %v652 = vld [vmem:[%s1 + $0x148] sm:$0xff]
        %v653 = vld [vmem:[%s1 + $0x150] sm:$0xff]
        %v654 = vld [vmem:[%s1 + $0x158] sm:$0xff]
        %v655 = vld [vmem:[%s1 + $0x160] sm:$0xff]
        %v656 = vld [vmem:[%s1 + $0x168] sm:$0xff]
        %v657 = vld [vmem:[%s1 + $0x170] sm:$0xff]
        %v658 = vld [vmem:[%s1 + $0x178] sm:$0xff]
        %v659 = vld [vmem:[%s1 + $0x180] sm:$0xff]
        %v660 = vld [vmem:[%s1 + $0x188] sm:$0xff]
        %v661 = vld [vmem:[%s1 + $0x190] sm:$0xff]
        %v662 = vld [vmem:[%s1 + $0x198] sm:$0xff]
        %v663 = vld [vmem:[%s1 + $0x1a0] sm:$0xff]
        %v664 = vld [vmem:[%s1 + $0x1a8] sm:$0xff]
        %v665 = vld [vmem:[%s1 + $0x1b0] sm:$0xff]
        %v666 = vld [vmem:[%s1 + $0x1b8] sm:$0xff]
        %v667 = vld [vmem:[%s1 + $0x1c0] sm:$0xff]
        %v668 = vld [vmem:[%s1 + $0x1c8] sm:$0xff]
        %v669 = vld [vmem:[%s1 + $0x1d0] sm:$0xff]
        %v670 = vld [vmem:[%s1 + $0x1d8] sm:$0xff]
        %v671 = vld [vmem:[%s1 + $0x1e0] sm:$0xff]
        %v672 = vld [vmem:[%s1 + $0x1e8] sm:$0xff]
        %v673 = vld [vmem:[%s1 + $0x1f0] sm:$0xff]
        %v674 = vld [vmem:[%s1 + $0x1f8] sm:$0xff]
        %v675 = vld [vmem:[%s1 + $0x200] sm:$0x3]
        %v676 = vmul.f32 %v546, %v611
        %v677 = vmul.f32 %v547, %v612
        %v678 = vmul.f32 %v548, %v613
        %v679 = vmul.f32 %v549, %v614
        %v680 = vmul.f32 %v550, %v615
        %v681 = vmul.f32 %v551, %v616
        %v682 = vmul.f32 %v552, %v617
        %v683 = vmul.f32 %v553, %v618
        %v684 = vmul.f32 %v554, %v619
        %v685 = vmul.f32 %v555, %v620
        %v686 = vmul.f32 %v556, %v621
        %v687 = vmul.f32 %v557, %v622
        %v688 = vmul.f32 %v558, %v623
        %v689 = vmul.f32 %v559, %v624
        %v690 = vmul.f32 %v560, %v625
        %v691 = vmul.f32 %v561, %v626
        %v692 = vmul.f32 %v562, %v627
        %v693 = vmul.f32 %v563, %v628
        %v694 = vmul.f32 %v564, %v629
        %v695 = vmul.f32 %v565, %v630
        %v696 = vmul.f32 %v566, %v631
        %v697 = vmul.f32 %v567, %v632
        %v698 = vmul.f32 %v568, %v633
        %v699 = vmul.f32 %v569, %v634
        %v700 = vmul.f32 %v570, %v635
        %v701 = vmul.f32 %v571, %v636
        %v702 = vmul.f32 %v572, %v637
        %v703 = vmul.f32 %v573, %v638
        %v704 = vmul.f32 %v574, %v639
        %v705 = vmul.f32 %v575, %v640
        %v706 = vmul.f32 %v576, %v641
        %v707 = vmul.f32 %v577, %v642
        %v708 = vmul.f32 %v578, %v643
        %v709 = vmul.f32 %v579, %v644
        %v710 = vmul.f32 %v580, %v645
        %v711 = vmul.f32 %v581, %v646
        %v712 = vmul.f32 %v582, %v647
        %v713 = vmul.f32 %v583, %v648
        %v714 = vmul.f32 %v584, %v649
        %v715 = vmul.f32 %v585, %v650
        %v716 = vmul.f32 %v586, %v651
        %v717 = vmul.f32 %v587, %v652
        %v718 = vmul.f32 %v588, %v653
        %v719 = vmul.f32 %v589, %v654
        %v720 = vmul.f32 %v590, %v655
        %v721 = vmul.f32 %v591, %v656
        %v722 = vmul.f32 %v592, %v657
        %v723 = vmul.f32 %v593, %v658
        %v724 = vmul.f32 %v594, %v659
        %v725 = vmul.f32 %v595, %v660
        %v726 = vmul.f32 %v596, %v661
        %v727 = vmul.f32 %v597, %v662
        %v728 = vmul.f32 %v598, %v663
        %v729 = vmul.f32 %v599, %v664
        %v730 = vmul.f32 %v600, %v665
        %v731 = vmul.f32 %v601, %v666
        %v732 = vmul.f32 %v602, %v667
        %v733 = vmul.f32 %v603, %v668
        %v734 = vmul.f32 %v604, %v669
        %v735 = vmul.f32 %v605, %v670
        %v736 = vmul.f32 %v606, %v671
        %v737 = vmul.f32 %v607, %v672
        %v738 = vmul.f32 %v608, %v673
        %v739 = vmul.f32 %v609, %v674
        %v740 = vmul.f32 %v610, %v675
        %v741 = vld [vmem:[%s2] sm:$0xff]
        %v742 = vld [vmem:[%s2 + $0x8] sm:$0xff]
        %v743 = vld [vmem:[%s2 + $0x10] sm:$0xff]
        %v744 = vld [vmem:[%s2 + $0x18] sm:$0xff]
        %v745 = vld [vmem:[%s2 + $0x20] sm:$0xff]
        %v746 = vld [vmem:[%s2 + $0x28] sm:$0xff]
        %v747 = vld [vmem:[%s2 + $0x30] sm:$0xff]
        %v748 = vld [vmem:[%s2 + $0x38] sm:$0xff]
        %v749 = vld [vmem:[%s2 + $0x40] sm:$0xff]
        %v750 = vld [vmem:[%s2 + $0x48] sm:$0xff]
        %v751 = vld [vmem:[%s2 + $0x50] sm:$0xff]
        %v752 = vld [vmem:[%s2 + $0x58] sm:$0xff]
        %v753 = vld [vmem:[%s2 + $0x60] sm:$0xff]
        %v754 = vld [vmem:[%s2 + $0x68] sm:$0xff]
        %v755 = vld [vmem:[%s2 + $0x70] sm:$0xff]
        %v756 = vld [vmem:[%s2 + $0x78] sm:$0xff]
        %v757 = vld [vmem:[%s2 + $0x80] sm:$0xff]
        %v758 = vld [vmem:[%s2 + $0x88] sm:$0xff]
        %v759 = vld [vmem:[%s2 + $0x90] sm:$0xff]
        %v760 = vld [vmem:[%s2 + $0x98] sm:$0xff]
        %v761 = vld [vmem:[%s2 + $0xa0] sm:$0xff]
        %v762 = vld [vmem:[%s2 + $0xa8] sm:$0xff]
        %v763 = vld [vmem:[%s2 + $0xb0] sm:$0xff]
        %v764 = vld [vmem:[%s2 + $0xb8] sm:$0xff]
        %v765 = vld [vmem:[%s2 + $0xc0] sm:$0xff]
        %v766 = vld [vmem:[%s2 + $0xc8] sm:$0xff]
        %v767 = vld [vmem:[%s2 + $0xd0] sm:$0xff]
        %v768 = vld [vmem:[%s2 + $0xd8] sm:$0xff]
        %v769 = vld [vmem:[%s2 + $0xe0] sm:$0xff]
        %v770 = vld [vmem:[%s2 + $0xe8] sm:$0xff]
        %v771 = vld [vmem:[%s2 + $0xf0] sm:$0xff]
        %v772 = vld [vmem:[%s2 + $0xf8] sm:$0xff]
        %v773 = vld [vmem:[%s2 + $0x100] sm:$0xff]
        %v774 = vld [vmem:[%s2 + $0x108] sm:$0xff]
        %v775 = vld [vmem:[%s2 + $0x110] sm:$0xff]
        %v776 = vld [vmem:[%s2 + $0x118] sm:$0xff]
        %v777 = vld [vmem:[%s2 + $0x120] sm:$0xff]
        %v778 = vld [vmem:[%s2 + $0x128] sm:$0xff]
        %v779 = vld [vmem:[%s2 + $0x130] sm:$0xff]
        %v780 = vld [vmem:[%s2 + $0x138] sm:$0xff]
        %v781 = vld [vmem:[%s2 + $0x140] sm:$0xff]
        %v782 = vld [vmem:[%s2 + $0x148] sm:$0xff]
        %v783 = vld [vmem:[%s2 + $0x150] sm:$0xff]
        %v784 = vld [vmem:[%s2 + $0x158] sm:$0xff]
        %v785 = vld [vmem:[%s2 + $0x160] sm:$0xff]
        %v786 = vld [vmem:[%s2 + $0x168] sm:$0xff]
        %v787 = vld [vmem:[%s2 + $0x170] sm:$0xff]
        %v788 = vld [vmem:[%s2 + $0x178] sm:$0xff]
        %v789 = vld [vmem:[%s2 + $0x180] sm:$0xff]
        %v790 = vld [vmem:[%s2 + $0x188] sm:$0xff]
        %v791 = vld [vmem:[%s2 + $0x190] sm:$0xff]
        %v792 = vld [vmem:[%s2 + $0x198] sm:$0xff]
        %v793 = vld [vmem:[%s2 + $0x1a0] sm:$0xff]
        %v794 = vld [vmem:[%s2 + $0x1a8] sm:$0xff]
        %v795 = vld [vmem:[%s2 + $0x1b0] sm:$0xff]
        %v796 = vld [vmem:[%s2 + $0x1b8] sm:$0xff]
        %v797 = vld [vmem:[%s2 + $0x1c0] sm:$0xff]
        %v798 = vld [vmem:[%s2 + $0x1c8] sm:$0xff]
        %v799 = vld [vmem:[%s2 + $0x1d0] sm:$0xff]
        %v800 = vld [vmem:[%s2 + $0x1d8] sm:$0xff]
        %v801 = vld [vmem:[%s2 + $0x1e0] sm:$0xff]
        %v802 = vld [vmem:[%s2 + $0x1e8] sm:$0xff]
        %v803 = vld [vmem:[%s2 + $0x1f0] sm:$0xff]
        %v804 = vld [vmem:[%s2 + $0x1f8] sm:$0xff]
        %v805 = vld [vmem:[%s2 + $0x200] sm:$0x3]
        %v806 = vadd.f32 %v676, %v741
        %v807 = vadd.f32 %v677, %v742
        %v808 = vadd.f32 %v678, %v743
        %v809 = vadd.f32 %v679, %v744
        %v810 = vadd.f32 %v680, %v745
        %v811 = vadd.f32 %v681, %v746
        %v812 = vadd.f32 %v682, %v747
        %v813 = vadd.f32 %v683, %v748
        %v814 = vadd.f32 %v684, %v749
        %v815 = vadd.f32 %v685, %v750
        %v816 = vadd.f32 %v686, %v751
        %v817 = vadd.f32 %v687, %v752
        %v818 = vadd.f32 %v688, %v753
        %v819 = vadd.f32 %v689, %v754
        %v820 = vadd.f32 %v690, %v755
        %v821 = vadd.f32 %v691, %v756
        %v822 = vadd.f32 %v692, %v757
        %v823 = vadd.f32 %v693, %v758
        %v824 = vadd.f32 %v694, %v759
        %v825 = vadd.f32 %v695, %v760
        %v826 = vadd.f32 %v696, %v761
        %v827 = vadd.f32 %v697, %v762
        %v828 = vadd.f32 %v698, %v763
        %v829 = vadd.f32 %v699, %v764
        %v830 = vadd.f32 %v700, %v765
        %v831 = vadd.f32 %v701, %v766
        %v832 = vadd.f32 %v702, %v767
        %v833 = vadd.f32 %v703, %v768
        %v834 = vadd.f32 %v704, %v769
        %v835 = vadd.f32 %v705, %v770
        %v836 = vadd.f32 %v706, %v771
        %v837 = vadd.f32 %v707, %v772
        %v838 = vadd.f32 %v708, %v773
        %v839 = vadd.f32 %v709, %v774
        %v840 = vadd.f32 %v710, %v775
        %v841 = vadd.f32 %v711, %v776
        %v842 = vadd.f32 %v712, %v777
        %v843 = vadd.f32 %v713, %v778
        %v844 = vadd.f32 %v714, %v779
        %v845 = vadd.f32 %v715, %v780
        %v846 = vadd.f32 %v716, %v781
        %v847 = vadd.f32 %v717, %v782
        %v848 = vadd.f32 %v718, %v783
        %v849 = vadd.f32 %v719, %v784
        %v850 = vadd.f32 %v720, %v785
        %v851 = vadd.f32 %v721, %v786
        %v852 = vadd.f32 %v722, %v787
        %v853 = vadd.f32 %v723, %v788
        %v854 = vadd.f32 %v724, %v789
        %v855 = vadd.f32 %v725, %v790
        %v856 = vadd.f32 %v726, %v791
        %v857 = vadd.f32 %v727, %v792
        %v858 = vadd.f32 %v728, %v793
        %v859 = vadd.f32 %v729, %v794
        %v860 = vadd.f32 %v730, %v795
        %v861 = vadd.f32 %v731, %v796
        %v862 = vadd.f32 %v732, %v797
        %v863 = vadd.f32 %v733, %v798
        %v864 = vadd.f32 %v734, %v799
        %v865 = vadd.f32 %v735, %v800
        %v866 = vadd.f32 %v736, %v801
        %v867 = vadd.f32 %v737, %v802
        %v868 = vadd.f32 %v738, %v803
        %v869 = vadd.f32 %v739, %v804
        %v870 = vadd.f32 %v740, %v805
        %vm933 = vcmask 1046528
        %v934 = vrot.slane %v806, 1
        %v935 = vrot.slane %v807, 1
        %v936 = vsel %vm933, %v934, %v935
        %v937 = vrot.slane %v808, 1
        %v938 = vsel %vm933, %v935, %v937
        %v939 = vrot.slane %v809, 1
        %v940 = vsel %vm933, %v937, %v939
        %v941 = vrot.slane %v810, 1
        %v942 = vsel %vm933, %v939, %v941
        %v943 = vrot.slane %v811, 1
        %v944 = vsel %vm933, %v941, %v943
        %v945 = vrot.slane %v812, 1
        %v946 = vsel %vm933, %v943, %v945
        %v947 = vrot.slane %v813, 1
        %v948 = vsel %vm933, %v945, %v947
        %v949 = vrot.slane %v814, 1
        %v950 = vsel %vm933, %v947, %v949
        %v951 = vrot.slane %v815, 1
        %v952 = vsel %vm933, %v949, %v951
        %v953 = vrot.slane %v816, 1
        %v954 = vsel %vm933, %v951, %v953
        %v955 = vrot.slane %v817, 1
        %v956 = vsel %vm933, %v953, %v955
        %v957 = vrot.slane %v818, 1
        %v958 = vsel %vm933, %v955, %v957
        %v959 = vrot.slane %v819, 1
        %v960 = vsel %vm933, %v957, %v959
        %v961 = vrot.slane %v820, 1
        %v962 = vsel %vm933, %v959, %v961
        %v963 = vrot.slane %v821, 1
        %v964 = vsel %vm933, %v961, %v963
        %v965 = vrot.slane %v822, 1
        %v966 = vsel %vm933, %v963, %v965
        %v967 = vrot.slane %v823, 1
        %v968 = vsel %vm933, %v965, %v967
        %v969 = vrot.slane %v824, 1
        %v970 = vsel %vm933, %v967, %v969
        %v971 = vrot.slane %v825, 1
        %v972 = vsel %vm933, %v969, %v971
        %v973 = vrot.slane %v826, 1
        %v974 = vsel %vm933, %v971, %v973
        %v975 = vrot.slane %v827, 1
        %v976 = vsel %vm933, %v973, %v975
        %v977 = vrot.slane %v828, 1
        %v978 = vsel %vm933, %v975, %v977
        %v979 = vrot.slane %v829, 1
        %v980 = vsel %vm933, %v977, %v979
        %v981 = vrot.slane %v830, 1
        %v982 = vsel %vm933, %v979, %v981
        %v983 = vrot.slane %v831, 1
        %v984 = vsel %vm933, %v981, %v983
        %v985 = vrot.slane %v832, 1
        %v986 = vsel %vm933, %v983, %v985
        %v987 = vrot.slane %v833, 1
        %v988 = vsel %vm933, %v985, %v987
        %v989 = vrot.slane %v834, 1
        %v990 = vsel %vm933, %v987, %v989
        %v991 = vrot.slane %v835, 1
        %v992 = vsel %vm933, %v989, %v991
        %v993 = vrot.slane %v836, 1
        %v994 = vsel %vm933, %v991, %v993
        %v995 = vrot.slane %v837, 1
        %v996 = vsel %vm933, %v993, %v995
        %v997 = vrot.slane %v838, 1
        %v998 = vsel %vm933, %v995, %v997
        %v999 = vrot.slane %v839, 1
        %v1000 = vsel %vm933, %v997, %v999
        %v1001 = vrot.slane %v840, 1
        %v1002 = vsel %vm933, %v999, %v1001
        %v1003 = vrot.slane %v841, 1
        %v1004 = vsel %vm933, %v1001, %v1003
        %v1005 = vrot.slane %v842, 1
        %v1006 = vsel %vm933, %v1003, %v1005
        %v1007 = vrot.slane %v843, 1
        %v1008 = vsel %vm933, %v1005, %v1007
        %v1009 = vrot.slane %v844, 1
        %v1010 = vsel %vm933, %v1007, %v1009
        %v1011 = vrot.slane %v845, 1
        %v1012 = vsel %vm933, %v1009, %v1011
        %v1013 = vrot.slane %v846, 1
        %v1014 = vsel %vm933, %v1011, %v1013
        %v1015 = vrot.slane %v847, 1
        %v1016 = vsel %vm933, %v1013, %v1015
        %v1017 = vrot.slane %v848, 1
        %v1018 = vsel %vm933, %v1015, %v1017
        %v1019 = vrot.slane %v849, 1
        %v1020 = vsel %vm933, %v1017, %v1019
        %v1021 = vrot.slane %v850, 1
        %v1022 = vsel %vm933, %v1019, %v1021
        %v1023 = vrot.slane %v851, 1
        %v1024 = vsel %vm933, %v1021, %v1023
        %v1025 = vrot.slane %v852, 1
        %v1026 = vsel %vm933, %v1023, %v1025
        %v1027 = vrot.slane %v853, 1
        %v1028 = vsel %vm933, %v1025, %v1027
        %v1029 = vrot.slane %v854, 1
        %v1030 = vsel %vm933, %v1027, %v1029
        %v1031 = vrot.slane %v855, 1
        %v1032 = vsel %vm933, %v1029, %v1031
        %v1033 = vrot.slane %v856, 1
        %v1034 = vsel %vm933, %v1031, %v1033
        %v1035 = vrot.slane %v857, 1
        %v1036 = vsel %vm933, %v1033, %v1035
        %v1037 = vrot.slane %v858, 1
        %v1038 = vsel %vm933, %v1035, %v1037
        %v1039 = vrot.slane %v859, 1
        %v1040 = vsel %vm933, %v1037, %v1039
        %v1041 = vrot.slane %v860, 1
        %v1042 = vsel %vm933, %v1039, %v1041
        %v1043 = vrot.slane %v861, 1
        %v1044 = vsel %vm933, %v1041, %v1043
        %v1045 = vrot.slane %v862, 1
        %v1046 = vsel %vm933, %v1043, %v1045
        %v1047 = vrot.slane %v863, 1
        %v1048 = vsel %vm933, %v1045, %v1047
        %v1049 = vrot.slane %v864, 1
        %v1050 = vsel %vm933, %v1047, %v1049
        %v1051 = vrot.slane %v865, 1
        %v1052 = vsel %vm933, %v1049, %v1051
        %v1053 = vrot.slane %v866, 1
        %v1054 = vsel %vm933, %v1051, %v1053
        %v1055 = vrot.slane %v867, 1
        %v1056 = vsel %vm933, %v1053, %v1055
        %1057 = vrot.lane.b32.xlu0 %v936, 1
        %v1058 = vpop.permute.xlu0 %1057
        %1059 = vrot.lane.b32.xlu0 %v938, 1
        %v1060 = vpop.permute.xlu0 %1059
        %1061 = vrot.lane.b32.xlu0 %v940, 1
        %v1062 = vpop.permute.xlu0 %1061
        %1063 = vrot.lane.b32.xlu0 %v942, 1
        %v1064 = vpop.permute.xlu0 %1063
        %1065 = vrot.lane.b32.xlu0 %v944, 1
        %v1066 = vpop.permute.xlu0 %1065
        %1067 = vrot.lane.b32.xlu0 %v946, 1
        %v1068 = vpop.permute.xlu0 %1067
        %1069 = vrot.lane.b32.xlu0 %v948, 1
        %v1070 = vpop.permute.xlu0 %1069
        %1071 = vrot.lane.b32.xlu0 %v950, 1
        %v1072 = vpop.permute.xlu0 %1071
        %1073 = vrot.lane.b32.xlu0 %v952, 1
        %v1074 = vpop.permute.xlu0 %1073
        %1075 = vrot.lane.b32.xlu0 %v954, 1
        %v1076 = vpop.permute.xlu0 %1075
        %1077 = vrot.lane.b32.xlu0 %v956, 1
        %v1078 = vpop.permute.xlu0 %1077
        %1079 = vrot.lane.b32.xlu0 %v958, 1
        %v1080 = vpop.permute.xlu0 %1079
        %1081 = vrot.lane.b32.xlu0 %v960, 1
        %v1082 = vpop.permute.xlu0 %1081
        %1083 = vrot.lane.b32.xlu0 %v962, 1
        %v1084 = vpop.permute.xlu0 %1083
        %1085 = vrot.lane.b32.xlu0 %v964, 1
        %v1086 = vpop.permute.xlu0 %1085
        %1087 = vrot.lane.b32.xlu0 %v966, 1
        %v1088 = vpop.permute.xlu0 %1087
        %1089 = vrot.lane.b32.xlu0 %v968, 1
        %v1090 = vpop.permute.xlu0 %1089
        %1091 = vrot.lane.b32.xlu0 %v970, 1
        %v1092 = vpop.permute.xlu0 %1091
        %1093 = vrot.lane.b32.xlu0 %v972, 1
        %v1094 = vpop.permute.xlu0 %1093
        %1095 = vrot.lane.b32.xlu0 %v974, 1
        %v1096 = vpop.permute.xlu0 %1095
        %1097 = vrot.lane.b32.xlu0 %v976, 1
        %v1098 = vpop.permute.xlu0 %1097
        %1099 = vrot.lane.b32.xlu0 %v978, 1
        %v1100 = vpop.permute.xlu0 %1099
        %1101 = vrot.lane.b32.xlu0 %v980, 1
        %v1102 = vpop.permute.xlu0 %1101
        %1103 = vrot.lane.b32.xlu0 %v982, 1
        %v1104 = vpop.permute.xlu0 %1103
        %1105 = vrot.lane.b32.xlu0 %v984, 1
        %v1106 = vpop.permute.xlu0 %1105
        %1107 = vrot.lane.b32.xlu0 %v986, 1
        %v1108 = vpop.permute.xlu0 %1107
        %1109 = vrot.lane.b32.xlu0 %v988, 1
        %v1110 = vpop.permute.xlu0 %1109
        %1111 = vrot.lane.b32.xlu0 %v990, 1
        %v1112 = vpop.permute.xlu0 %1111
        %1113 = vrot.lane.b32.xlu0 %v992, 1
        %v1114 = vpop.permute.xlu0 %1113
        %1115 = vrot.lane.b32.xlu0 %v994, 1
        %v1116 = vpop.permute.xlu0 %1115
        %1117 = vrot.lane.b32.xlu0 %v996, 1
        %v1118 = vpop.permute.xlu0 %1117
        %1119 = vrot.lane.b32.xlu0 %v998, 1
        %v1120 = vpop.permute.xlu0 %1119
        %1121 = vrot.lane.b32.xlu0 %v1000, 1
        %v1122 = vpop.permute.xlu0 %1121
        %1123 = vrot.lane.b32.xlu0 %v1002, 1
        %v1124 = vpop.permute.xlu0 %1123
        %1125 = vrot.lane.b32.xlu0 %v1004, 1
        %v1126 = vpop.permute.xlu0 %1125
        %1127 = vrot.lane.b32.xlu0 %v1006, 1
        %v1128 = vpop.permute.xlu0 %1127
        %1129 = vrot.lane.b32.xlu0 %v1008, 1
        %v1130 = vpop.permute.xlu0 %1129
        %1131 = vrot.lane.b32.xlu0 %v1010, 1
        %v1132 = vpop.permute.xlu0 %1131
        %1133 = vrot.lane.b32.xlu0 %v1012, 1
        %v1134 = vpop.permute.xlu0 %1133
        %1135 = vrot.lane.b32.xlu0 %v1014, 1
        %v1136 = vpop.permute.xlu0 %1135
        %1137 = vrot.lane.b32.xlu0 %v1016, 1
        %v1138 = vpop.permute.xlu0 %1137
        %1139 = vrot.lane.b32.xlu0 %v1018, 1
        %v1140 = vpop.permute.xlu0 %1139
        %1141 = vrot.lane.b32.xlu0 %v1020, 1
        %v1142 = vpop.permute.xlu0 %1141
        %1143 = vrot.lane.b32.xlu0 %v1022, 1
        %v1144 = vpop.permute.xlu0 %1143
        %1145 = vrot.lane.b32.xlu0 %v1024, 1
        %v1146 = vpop.permute.xlu0 %1145
        %1147 = vrot.lane.b32.xlu0 %v1026, 1
        %v1148 = vpop.permute.xlu0 %1147
        %1149 = vrot.lane.b32.xlu0 %v1028, 1
        %v1150 = vpop.permute.xlu0 %1149
        %1151 = vrot.lane.b32.xlu0 %v1030, 1
        %v1152 = vpop.permute.xlu0 %1151
        %1153 = vrot.lane.b32.xlu0 %v1032, 1
        %v1154 = vpop.permute.xlu0 %1153
        %1155 = vrot.lane.b32.xlu0 %v1034, 1
        %v1156 = vpop.permute.xlu0 %1155
        %1157 = vrot.lane.b32.xlu0 %v1036, 1
        %v1158 = vpop.permute.xlu0 %1157
        %1159 = vrot.lane.b32.xlu0 %v1038, 1
        %v1160 = vpop.permute.xlu0 %1159
        %1161 = vrot.lane.b32.xlu0 %v1040, 1
        %v1162 = vpop.permute.xlu0 %1161
        %1163 = vrot.lane.b32.xlu0 %v1042, 1
        %v1164 = vpop.permute.xlu0 %1163
        %1165 = vrot.lane.b32.xlu0 %v1044, 1
        %v1166 = vpop.permute.xlu0 %1165
        %1167 = vrot.lane.b32.xlu0 %v1046, 1
        %v1168 = vpop.permute.xlu0 %1167
        %1169 = vrot.lane.b32.xlu0 %v1048, 1
        %v1170 = vpop.permute.xlu0 %1169
        %1171 = vrot.lane.b32.xlu0 %v1050, 1
        %v1172 = vpop.permute.xlu0 %1171
        %1173 = vrot.lane.b32.xlu0 %v1052, 1
        %v1174 = vpop.permute.xlu0 %1173
        %1175 = vrot.lane.b32.xlu0 %v1054, 1
        %v1176 = vpop.permute.xlu0 %1175
        %1177 = vrot.lane.b32.xlu0 %v1056, 1
        %v1178 = vpop.permute.xlu0 %1177
        %vm1240 = vcmask 1045504
        %v1241 = vrot.slane %v806, 2
        %v1242 = vrot.slane %v807, 2
        %v1243 = vsel %vm1240, %v1241, %v1242
        %v1244 = vrot.slane %v808, 2
        %v1245 = vsel %vm1240, %v1242, %v1244
        %v1246 = vrot.slane %v809, 2
        %v1247 = vsel %vm1240, %v1244, %v1246
        %v1248 = vrot.slane %v810, 2
        %v1249 = vsel %vm1240, %v1246, %v1248
        %v1250 = vrot.slane %v811, 2
        %v1251 = vsel %vm1240, %v1248, %v1250
        %v1252 = vrot.slane %v812, 2
        %v1253 = vsel %vm1240, %v1250, %v1252
        %v1254 = vrot.slane %v813, 2
        %v1255 = vsel %vm1240, %v1252, %v1254
        %v1256 = vrot.slane %v814, 2
        %v1257 = vsel %vm1240, %v1254, %v1256
        %v1258 = vrot.slane %v815, 2
        %v1259 = vsel %vm1240, %v1256, %v1258
        %v1260 = vrot.slane %v816, 2
        %v1261 = vsel %vm1240, %v1258, %v1260
        %v1262 = vrot.slane %v817, 2
        %v1263 = vsel %vm1240, %v1260, %v1262
        %v1264 = vrot.slane %v818, 2
        %v1265 = vsel %vm1240, %v1262, %v1264
        %v1266 = vrot.slane %v819, 2
        %v1267 = vsel %vm1240, %v1264, %v1266
        %v1268 = vrot.slane %v820, 2
        %v1269 = vsel %vm1240, %v1266, %v1268
        %v1270 = vrot.slane %v821, 2
        %v1271 = vsel %vm1240, %v1268, %v1270
        %v1272 = vrot.slane %v822, 2
        %v1273 = vsel %vm1240, %v1270, %v1272
        %v1274 = vrot.slane %v823, 2
        %v1275 = vsel %vm1240, %v1272, %v1274
        %v1276 = vrot.slane %v824, 2
        %v1277 = vsel %vm1240, %v1274, %v1276
        %v1278 = vrot.slane %v825, 2
        %v1279 = vsel %vm1240, %v1276, %v1278
        %v1280 = vrot.slane %v826, 2
        %v1281 = vsel %vm1240, %v1278, %v1280
        %v1282 = vrot.slane %v827, 2
        %v1283 = vsel %vm1240, %v1280, %v1282
        %v1284 = vrot.slane %v828, 2
        %v1285 = vsel %vm1240, %v1282, %v1284
        %v1286 = vrot.slane %v829, 2
        %v1287 = vsel %vm1240, %v1284, %v1286
        %v1288 = vrot.slane %v830, 2
        %v1289 = vsel %vm1240, %v1286, %v1288
        %v1290 = vrot.slane %v831, 2
        %v1291 = vsel %vm1240, %v1288, %v1290
        %v1292 = vrot.slane %v832, 2
        %v1293 = vsel %vm1240, %v1290, %v1292
        %v1294 = vrot.slane %v833, 2
        %v1295 = vsel %vm1240, %v1292, %v1294
        %v1296 = vrot.slane %v834, 2
        %v1297 = vsel %vm1240, %v1294, %v1296
        %v1298 = vrot.slane %v835, 2
        %v1299 = vsel %vm1240, %v1296, %v1298
        %v1300 = vrot.slane %v836, 2
        %v1301 = vsel %vm1240, %v1298, %v1300
        %v1302 = vrot.slane %v837, 2
        %v1303 = vsel %vm1240, %v1300, %v1302
        %v1304 = vrot.slane %v838, 2
        %v1305 = vsel %vm1240, %v1302, %v1304
        %v1306 = vrot.slane %v839, 2
        %v1307 = vsel %vm1240, %v1304, %v1306
        %v1308 = vrot.slane %v840, 2
        %v1309 = vsel %vm1240, %v1306, %v1308
        %v1310 = vrot.slane %v841, 2
        %v1311 = vsel %vm1240, %v1308, %v1310
        %v1312 = vrot.slane %v842, 2
        %v1313 = vsel %vm1240, %v1310, %v1312
        %v1314 = vrot.slane %v843, 2
        %v1315 = vsel %vm1240, %v1312, %v1314
        %v1316 = vrot.slane %v844, 2
        %v1317 = vsel %vm1240, %v1314, %v1316
        %v1318 = vrot.slane %v845, 2
        %v1319 = vsel %vm1240, %v1316, %v1318
        %v1320 = vrot.slane %v846, 2
        %v1321 = vsel %vm1240, %v1318, %v1320
        %v1322 = vrot.slane %v847, 2
        %v1323 = vsel %vm1240, %v1320, %v1322
        %v1324 = vrot.slane %v848, 2
        %v1325 = vsel %vm1240, %v1322, %v1324
        %v1326 = vrot.slane %v849, 2
        %v1327 = vsel %vm1240, %v1324, %v1326
        %v1328 = vrot.slane %v850, 2
        %v1329 = vsel %vm1240, %v1326, %v1328
        %v1330 = vrot.slane %v851, 2
        %v1331 = vsel %vm1240, %v1328, %v1330
        %v1332 = vrot.slane %v852, 2
        %v1333 = vsel %vm1240, %v1330, %v1332
        %v1334 = vrot.slane %v853, 2
        %v1335 = vsel %vm1240, %v1332, %v1334
        %v1336 = vrot.slane %v854, 2
        %v1337 = vsel %vm1240, %v1334, %v1336
        %v1338 = vrot.slane %v855, 2
        %v1339 = vsel %vm1240, %v1336, %v1338
        %v1340 = vrot.slane %v856, 2
        %v1341 = vsel %vm1240, %v1338, %v1340
        %v1342 = vrot.slane %v857, 2
        %v1343 = vsel %vm1240, %v1340, %v1342
        %v1344 = vrot.slane %v858, 2
        %v1345 = vsel %vm1240, %v1342, %v1344
        %v1346 = vrot.slane %v859, 2
        %v1347 = vsel %vm1240, %v1344, %v1346
        %v1348 = vrot.slane %v860, 2
        %v1349 = vsel %vm1240, %v1346, %v1348
        %v1350 = vrot.slane %v861, 2
        %v1351 = vsel %vm1240, %v1348, %v1350
        %v1352 = vrot.slane %v862, 2
        %v1353 = vsel %vm1240, %v1350, %v1352
        %v1354 = vrot.slane %v863, 2
        %v1355 = vsel %vm1240, %v1352, %v1354
        %v1356 = vrot.slane %v864, 2
        %v1357 = vsel %vm1240, %v1354, %v1356
        %v1358 = vrot.slane %v865, 2
        %v1359 = vsel %vm1240, %v1356, %v1358
        %v1360 = vrot.slane %v866, 2
        %v1361 = vsel %vm1240, %v1358, %v1360
        %v1362 = vrot.slane %v867, 2
        %v1363 = vsel %vm1240, %v1360, %v1362
        %1364 = vrot.lane.b32.xlu0 %v1243, 2
        %v1365 = vpop.permute.xlu0 %1364
        %1366 = vrot.lane.b32.xlu0 %v1245, 2
        %v1367 = vpop.permute.xlu0 %1366
        %1368 = vrot.lane.b32.xlu0 %v1247, 2
        %v1369 = vpop.permute.xlu0 %1368
        %1370 = vrot.lane.b32.xlu0 %v1249, 2
        %v1371 = vpop.permute.xlu0 %1370
        %1372 = vrot.lane.b32.xlu0 %v1251, 2
        %v1373 = vpop.permute.xlu0 %1372
        %1374 = vrot.lane.b32.xlu0 %v1253, 2
        %v1375 = vpop.permute.xlu0 %1374
        %1376 = vrot.lane.b32.xlu0 %v1255, 2
        %v1377 = vpop.permute.xlu0 %1376
        %1378 = vrot.lane.b32.xlu0 %v1257, 2
        %v1379 = vpop.permute.xlu0 %1378
        %1380 = vrot.lane.b32.xlu0 %v1259, 2
        %v1381 = vpop.permute.xlu0 %1380
        %1382 = vrot.lane.b32.xlu0 %v1261, 2
        %v1383 = vpop.permute.xlu0 %1382
        %1384 = vrot.lane.b32.xlu0 %v1263, 2
        %v1385 = vpop.permute.xlu0 %1384
        %1386 = vrot.lane.b32.xlu0 %v1265, 2
        %v1387 = vpop.permute.xlu0 %1386
        %1388 = vrot.lane.b32.xlu0 %v1267, 2
        %v1389 = vpop.permute.xlu0 %1388
        %1390 = vrot.lane.b32.xlu0 %v1269, 2
        %v1391 = vpop.permute.xlu0 %1390
        %1392 = vrot.lane.b32.xlu0 %v1271, 2
        %v1393 = vpop.permute.xlu0 %1392
        %1394 = vrot.lane.b32.xlu0 %v1273, 2
        %v1395 = vpop.permute.xlu0 %1394
        %1396 = vrot.lane.b32.xlu0 %v1275, 2
        %v1397 = vpop.permute.xlu0 %1396
        %1398 = vrot.lane.b32.xlu0 %v1277, 2
        %v1399 = vpop.permute.xlu0 %1398
        %1400 = vrot.lane.b32.xlu0 %v1279, 2
        %v1401 = vpop.permute.xlu0 %1400
        %1402 = vrot.lane.b32.xlu0 %v1281, 2
        %v1403 = vpop.permute.xlu0 %1402
        %1404 = vrot.lane.b32.xlu0 %v1283, 2
        %v1405 = vpop.permute.xlu0 %1404
        %1406 = vrot.lane.b32.xlu0 %v1285, 2
        %v1407 = vpop.permute.xlu0 %1406
        %1408 = vrot.lane.b32.xlu0 %v1287, 2
        %v1409 = vpop.permute.xlu0 %1408
        %1410 = vrot.lane.b32.xlu0 %v1289, 2
        %v1411 = vpop.permute.xlu0 %1410
        %1412 = vrot.lane.b32.xlu0 %v1291, 2
        %v1413 = vpop.permute.xlu0 %1412
        %1414 = vrot.lane.b32.xlu0 %v1293, 2
        %v1415 = vpop.permute.xlu0 %1414
        %1416 = vrot.lane.b32.xlu0 %v1295, 2
        %v1417 = vpop.permute.xlu0 %1416
        %1418 = vrot.lane.b32.xlu0 %v1297, 2
        %v1419 = vpop.permute.xlu0 %1418
        %1420 = vrot.lane.b32.xlu0 %v1299, 2
        %v1421 = vpop.permute.xlu0 %1420
        %1422 = vrot.lane.b32.xlu0 %v1301, 2
        %v1423 = vpop.permute.xlu0 %1422
        %1424 = vrot.lane.b32.xlu0 %v1303, 2
        %v1425 = vpop.permute.xlu0 %1424
        %1426 = vrot.lane.b32.xlu0 %v1305, 2
        %v1427 = vpop.permute.xlu0 %1426
        %1428 = vrot.lane.b32.xlu0 %v1307, 2
        %v1429 = vpop.permute.xlu0 %1428
        %1430 = vrot.lane.b32.xlu0 %v1309, 2
        %v1431 = vpop.permute.xlu0 %1430
        %1432 = vrot.lane.b32.xlu0 %v1311, 2
        %v1433 = vpop.permute.xlu0 %1432
        %1434 = vrot.lane.b32.xlu0 %v1313, 2
        %v1435 = vpop.permute.xlu0 %1434
        %1436 = vrot.lane.b32.xlu0 %v1315, 2
        %v1437 = vpop.permute.xlu0 %1436
        %1438 = vrot.lane.b32.xlu0 %v1317, 2
        %v1439 = vpop.permute.xlu0 %1438
        %1440 = vrot.lane.b32.xlu0 %v1319, 2
        %v1441 = vpop.permute.xlu0 %1440
        %1442 = vrot.lane.b32.xlu0 %v1321, 2
        %v1443 = vpop.permute.xlu0 %1442
        %1444 = vrot.lane.b32.xlu0 %v1323, 2
        %v1445 = vpop.permute.xlu0 %1444
        %1446 = vrot.lane.b32.xlu0 %v1325, 2
        %v1447 = vpop.permute.xlu0 %1446
        %1448 = vrot.lane.b32.xlu0 %v1327, 2
        %v1449 = vpop.permute.xlu0 %1448
        %1450 = vrot.lane.b32.xlu0 %v1329, 2
        %v1451 = vpop.permute.xlu0 %1450
        %1452 = vrot.lane.b32.xlu0 %v1331, 2
        %v1453 = vpop.permute.xlu0 %1452
        %1454 = vrot.lane.b32.xlu0 %v1333, 2
        %v1455 = vpop.permute.xlu0 %1454
        %1456 = vrot.lane.b32.xlu0 %v1335, 2
        %v1457 = vpop.permute.xlu0 %1456
        %1458 = vrot.lane.b32.xlu0 %v1337, 2
        %v1459 = vpop.permute.xlu0 %1458
        %1460 = vrot.lane.b32.xlu0 %v1339, 2
        %v1461 = vpop.permute.xlu0 %1460
        %1462 = vrot.lane.b32.xlu0 %v1341, 2
        %v1463 = vpop.permute.xlu0 %1462
        %1464 = vrot.lane.b32.xlu0 %v1343, 2
        %v1465 = vpop.permute.xlu0 %1464
        %1466 = vrot.lane.b32.xlu0 %v1345, 2
        %v1467 = vpop.permute.xlu0 %1466
        %1468 = vrot.lane.b32.xlu0 %v1347, 2
        %v1469 = vpop.permute.xlu0 %1468
        %1470 = vrot.lane.b32.xlu0 %v1349, 2
        %v1471 = vpop.permute.xlu0 %1470
        %1472 = vrot.lane.b32.xlu0 %v1351, 2
        %v1473 = vpop.permute.xlu0 %1472
        %1474 = vrot.lane.b32.xlu0 %v1353, 2
        %v1475 = vpop.permute.xlu0 %1474
        %1476 = vrot.lane.b32.xlu0 %v1355, 2
        %v1477 = vpop.permute.xlu0 %1476
        %1478 = vrot.lane.b32.xlu0 %v1357, 2
        %v1479 = vpop.permute.xlu0 %1478
        %1480 = vrot.lane.b32.xlu0 %v1359, 2
        %v1481 = vpop.permute.xlu0 %1480
        %1482 = vrot.lane.b32.xlu0 %v1361, 2
        %v1483 = vpop.permute.xlu0 %1482
        %1484 = vrot.lane.b32.xlu0 %v1363, 2
        %v1485 = vpop.permute.xlu0 %1484
        %vm1547 = vcmask 1044480
        %v1548 = vrot.slane %v806, 3
        %v1549 = vrot.slane %v807, 3
        %v1550 = vsel %vm1547, %v1548, %v1549
        %v1551 = vrot.slane %v808, 3
        %v1552 = vsel %vm1547, %v1549, %v1551
        %v1553 = vrot.slane %v809, 3
        %v1554 = vsel %vm1547, %v1551, %v1553
        %v1555 = vrot.slane %v810, 3
        %v1556 = vsel %vm1547, %v1553, %v1555
        %v1557 = vrot.slane %v811, 3
        %v1558 = vsel %vm1547, %v1555, %v1557
        %v1559 = vrot.slane %v812, 3
        %v1560 = vsel %vm1547, %v1557, %v1559
        %v1561 = vrot.slane %v813, 3
        %v1562 = vsel %vm1547, %v1559, %v1561
        %v1563 = vrot.slane %v814, 3
        %v1564 = vsel %vm1547, %v1561, %v1563
        %v1565 = vrot.slane %v815, 3
        %v1566 = vsel %vm1547, %v1563, %v1565
        %v1567 = vrot.slane %v816, 3
        %v1568 = vsel %vm1547, %v1565, %v1567
        %v1569 = vrot.slane %v817, 3
        %v1570 = vsel %vm1547, %v1567, %v1569
        %v1571 = vrot.slane %v818, 3
        %v1572 = vsel %vm1547, %v1569, %v1571
        %v1573 = vrot.slane %v819, 3
        %v1574 = vsel %vm1547, %v1571, %v1573
        %v1575 = vrot.slane %v820, 3
        %v1576 = vsel %vm1547, %v1573, %v1575
        %v1577 = vrot.slane %v821, 3
        %v1578 = vsel %vm1547, %v1575, %v1577
        %v1579 = vrot.slane %v822, 3
        %v1580 = vsel %vm1547, %v1577, %v1579
        %v1581 = vrot.slane %v823, 3
        %v1582 = vsel %vm1547, %v1579, %v1581
        %v1583 = vrot.slane %v824, 3
        %v1584 = vsel %vm1547, %v1581, %v1583
        %v1585 = vrot.slane %v825, 3
        %v1586 = vsel %vm1547, %v1583, %v1585
        %v1587 = vrot.slane %v826, 3
        %v1588 = vsel %vm1547, %v1585, %v1587
        %v1589 = vrot.slane %v827, 3
        %v1590 = vsel %vm1547, %v1587, %v1589
        %v1591 = vrot.slane %v828, 3
        %v1592 = vsel %vm1547, %v1589, %v1591
        %v1593 = vrot.slane %v829, 3
        %v1594 = vsel %vm1547, %v1591, %v1593
        %v1595 = vrot.slane %v830, 3
        %v1596 = vsel %vm1547, %v1593, %v1595
        %v1597 = vrot.slane %v831, 3
        %v1598 = vsel %vm1547, %v1595, %v1597
        %v1599 = vrot.slane %v832, 3
        %v1600 = vsel %vm1547, %v1597, %v1599
        %v1601 = vrot.slane %v833, 3
        %v1602 = vsel %vm1547, %v1599, %v1601
        %v1603 = vrot.slane %v834, 3
        %v1604 = vsel %vm1547, %v1601, %v1603
        %v1605 = vrot.slane %v835, 3
        %v1606 = vsel %vm1547, %v1603, %v1605
        %v1607 = vrot.slane %v836, 3
        %v1608 = vsel %vm1547, %v1605, %v1607
        %v1609 = vrot.slane %v837, 3
        %v1610 = vsel %vm1547, %v1607, %v1609
        %v1611 = vrot.slane %v838, 3
        %v1612 = vsel %vm1547, %v1609, %v1611
        %v1613 = vrot.slane %v839, 3
        %v1614 = vsel %vm1547, %v1611, %v1613
        %v1615 = vrot.slane %v840, 3
        %v1616 = vsel %vm1547, %v1613, %v1615
        %v1617 = vrot.slane %v841, 3
        %v1618 = vsel %vm1547, %v1615, %v1617
        %v1619 = vrot.slane %v842, 3
        %v1620 = vsel %vm1547, %v1617, %v1619
        %v1621 = vrot.slane %v843, 3
        %v1622 = vsel %vm1547, %v1619, %v1621
        %v1623 = vrot.slane %v844, 3
        %v1624 = vsel %vm1547, %v1621, %v1623
        %v1625 = vrot.slane %v845, 3
        %v1626 = vsel %vm1547, %v1623, %v1625
        %v1627 = vrot.slane %v846, 3
        %v1628 = vsel %vm1547, %v1625, %v1627
        %v1629 = vrot.slane %v847, 3
        %v1630 = vsel %vm1547, %v1627, %v1629
        %v1631 = vrot.slane %v848, 3
        %v1632 = vsel %vm1547, %v1629, %v1631
        %v1633 = vrot.slane %v849, 3
        %v1634 = vsel %vm1547, %v1631, %v1633
        %v1635 = vrot.slane %v850, 3
        %v1636 = vsel %vm1547, %v1633, %v1635
        %v1637 = vrot.slane %v851, 3
        %v1638 = vsel %vm1547, %v1635, %v1637
        %v1639 = vrot.slane %v852, 3
        %v1640 = vsel %vm1547, %v1637, %v1639
        %v1641 = vrot.slane %v853, 3
        %v1642 = vsel %vm1547, %v1639, %v1641
        %v1643 = vrot.slane %v854, 3
        %v1644 = vsel %vm1547, %v1641, %v1643
        %v1645 = vrot.slane %v855, 3
        %v1646 = vsel %vm1547, %v1643, %v1645
        %v1647 = vrot.slane %v856, 3
        %v1648 = vsel %vm1547, %v1645, %v1647
        %v1649 = vrot.slane %v857, 3
        %v1650 = vsel %vm1547, %v1647, %v1649
        %v1651 = vrot.slane %v858, 3
        %v1652 = vsel %vm1547, %v1649, %v1651
        %v1653 = vrot.slane %v859, 3
        %v1654 = vsel %vm1547, %v1651, %v1653
        %v1655 = vrot.slane %v860, 3
        %v1656 = vsel %vm1547, %v1653, %v1655
        %v1657 = vrot.slane %v861, 3
        %v1658 = vsel %vm1547, %v1655, %v1657
        %v1659 = vrot.slane %v862, 3
        %v1660 = vsel %vm1547, %v1657, %v1659
        %v1661 = vrot.slane %v863, 3
        %v1662 = vsel %vm1547, %v1659, %v1661
        %v1663 = vrot.slane %v864, 3
        %v1664 = vsel %vm1547, %v1661, %v1663
        %v1665 = vrot.slane %v865, 3
        %v1666 = vsel %vm1547, %v1663, %v1665
        %v1667 = vrot.slane %v866, 3
        %v1668 = vsel %vm1547, %v1665, %v1667
        %v1669 = vrot.slane %v867, 3
        %v1670 = vsel %vm1547, %v1667, %v1669
        %1671 = vrot.lane.b32.xlu0 %v1550, 3
        %v1672 = vpop.permute.xlu0 %1671
        %1673 = vrot.lane.b32.xlu0 %v1552, 3
        %v1674 = vpop.permute.xlu0 %1673
        %1675 = vrot.lane.b32.xlu0 %v1554, 3
        %v1676 = vpop.permute.xlu0 %1675
        %1677 = vrot.lane.b32.xlu0 %v1556, 3
        %v1678 = vpop.permute.xlu0 %1677
        %1679 = vrot.lane.b32.xlu0 %v1558, 3
        %v1680 = vpop.permute.xlu0 %1679
        %1681 = vrot.lane.b32.xlu0 %v1560, 3
        %v1682 = vpop.permute.xlu0 %1681
        %1683 = vrot.lane.b32.xlu0 %v1562, 3
        %v1684 = vpop.permute.xlu0 %1683
        %1685 = vrot.lane.b32.xlu0 %v1564, 3
        %v1686 = vpop.permute.xlu0 %1685
        %1687 = vrot.lane.b32.xlu0 %v1566, 3
        %v1688 = vpop.permute.xlu0 %1687
        %1689 = vrot.lane.b32.xlu0 %v1568, 3
        %v1690 = vpop.permute.xlu0 %1689
        %1691 = vrot.lane.b32.xlu0 %v1570, 3
        %v1692 = vpop.permute.xlu0 %1691
        %1693 = vrot.lane.b32.xlu0 %v1572, 3
        %v1694 = vpop.permute.xlu0 %1693
        %1695 = vrot.lane.b32.xlu0 %v1574, 3
        %v1696 = vpop.permute.xlu0 %1695
        %1697 = vrot.lane.b32.xlu0 %v1576, 3
        %v1698 = vpop.permute.xlu0 %1697
        %1699 = vrot.lane.b32.xlu0 %v1578, 3
        %v1700 = vpop.permute.xlu0 %1699
        %1701 = vrot.lane.b32.xlu0 %v1580, 3
        %v1702 = vpop.permute.xlu0 %1701
        %1703 = vrot.lane.b32.xlu0 %v1582, 3
        %v1704 = vpop.permute.xlu0 %1703
        %1705 = vrot.lane.b32.xlu0 %v1584, 3
        %v1706 = vpop.permute.xlu0 %1705
        %1707 = vrot.lane.b32.xlu0 %v1586, 3
        %v1708 = vpop.permute.xlu0 %1707
        %1709 = vrot.lane.b32.xlu0 %v1588, 3
        %v1710 = vpop.permute.xlu0 %1709
        %1711 = vrot.lane.b32.xlu0 %v1590, 3
        %v1712 = vpop.permute.xlu0 %1711
        %1713 = vrot.lane.b32.xlu0 %v1592, 3
        %v1714 = vpop.permute.xlu0 %1713
        %1715 = vrot.lane.b32.xlu0 %v1594, 3
        %v1716 = vpop.permute.xlu0 %1715
        %1717 = vrot.lane.b32.xlu0 %v1596, 3
        %v1718 = vpop.permute.xlu0 %1717
        %1719 = vrot.lane.b32.xlu0 %v1598, 3
        %v1720 = vpop.permute.xlu0 %1719
        %1721 = vrot.lane.b32.xlu0 %v1600, 3
        %v1722 = vpop.permute.xlu0 %1721
        %1723 = vrot.lane.b32.xlu0 %v1602, 3
        %v1724 = vpop.permute.xlu0 %1723
        %1725 = vrot.lane.b32.xlu0 %v1604, 3
        %v1726 = vpop.permute.xlu0 %1725
        %1727 = vrot.lane.b32.xlu0 %v1606, 3
        %v1728 = vpop.permute.xlu0 %1727
        %1729 = vrot.lane.b32.xlu0 %v1608, 3
        %v1730 = vpop.permute.xlu0 %1729
        %1731 = vrot.lane.b32.xlu0 %v1610, 3
        %v1732 = vpop.permute.xlu0 %1731
        %1733 = vrot.lane.b32.xlu0 %v1612, 3
        %v1734 = vpop.permute.xlu0 %1733
        %1735 = vrot.lane.b32.xlu0 %v1614, 3
        %v1736 = vpop.permute.xlu0 %1735
        %1737 = vrot.lane.b32.xlu0 %v1616, 3
        %v1738 = vpop.permute.xlu0 %1737
        %1739 = vrot.lane.b32.xlu0 %v1618, 3
        %v1740 = vpop.permute.xlu0 %1739
        %1741 = vrot.lane.b32.xlu0 %v1620, 3
        %v1742 = vpop.permute.xlu0 %1741
        %1743 = vrot.lane.b32.xlu0 %v1622, 3
        %v1744 = vpop.permute.xlu0 %1743
        %1745 = vrot.lane.b32.xlu0 %v1624, 3
        %v1746 = vpop.permute.xlu0 %1745
        %1747 = vrot.lane.b32.xlu0 %v1626, 3
        %v1748 = vpop.permute.xlu0 %1747
        %1749 = vrot.lane.b32.xlu0 %v1628, 3
        %v1750 = vpop.permute.xlu0 %1749
        %1751 = vrot.lane.b32.xlu0 %v1630, 3
        %v1752 = vpop.permute.xlu0 %1751
        %1753 = vrot.lane.b32.xlu0 %v1632, 3
        %v1754 = vpop.permute.xlu0 %1753
        %1755 = vrot.lane.b32.xlu0 %v1634, 3
        %v1756 = vpop.permute.xlu0 %1755
        %1757 = vrot.lane.b32.xlu0 %v1636, 3
        %v1758 = vpop.permute.xlu0 %1757
        %1759 = vrot.lane.b32.xlu0 %v1638, 3
        %v1760 = vpop.permute.xlu0 %1759
        %1761 = vrot.lane.b32.xlu0 %v1640, 3
        %v1762 = vpop.permute.xlu0 %1761
        %1763 = vrot.lane.b32.xlu0 %v1642, 3
        %v1764 = vpop.permute.xlu0 %1763
        %1765 = vrot.lane.b32.xlu0 %v1644, 3
        %v1766 = vpop.permute.xlu0 %1765
        %1767 = vrot.lane.b32.xlu0 %v1646, 3
        %v1768 = vpop.permute.xlu0 %1767
        %1769 = vrot.lane.b32.xlu0 %v1648, 3
        %v1770 = vpop.permute.xlu0 %1769
        %1771 = vrot.lane.b32.xlu0 %v1650, 3
        %v1772 = vpop.permute.xlu0 %1771
        %1773 = vrot.lane.b32.xlu0 %v1652, 3
        %v1774 = vpop.permute.xlu0 %1773
        %1775 = vrot.lane.b32.xlu0 %v1654, 3
        %v1776 = vpop.permute.xlu0 %1775
        %1777 = vrot.lane.b32.xlu0 %v1656, 3
        %v1778 = vpop.permute.xlu0 %1777
        %1779 = vrot.lane.b32.xlu0 %v1658, 3
        %v1780 = vpop.permute.xlu0 %1779
        %1781 = vrot.lane.b32.xlu0 %v1660, 3
        %v1782 = vpop.permute.xlu0 %1781
        %1783 = vrot.lane.b32.xlu0 %v1662, 3
        %v1784 = vpop.permute.xlu0 %1783
        %1785 = vrot.lane.b32.xlu0 %v1664, 3
        %v1786 = vpop.permute.xlu0 %1785
        %1787 = vrot.lane.b32.xlu0 %v1666, 3
        %v1788 = vpop.permute.xlu0 %1787
        %1789 = vrot.lane.b32.xlu0 %v1668, 3
        %v1790 = vpop.permute.xlu0 %1789
        %1791 = vrot.lane.b32.xlu0 %v1670, 3
        %v1792 = vpop.permute.xlu0 %1791
        %vm1854 = vcmask 1043456
        %v1855 = vrot.slane %v806, 4
        %v1856 = vrot.slane %v807, 4
        %v1857 = vsel %vm1854, %v1855, %v1856
        %v1858 = vrot.slane %v808, 4
        %v1859 = vsel %vm1854, %v1856, %v1858
        %v1860 = vrot.slane %v809, 4
        %v1861 = vsel %vm1854, %v1858, %v1860
        %v1862 = vrot.slane %v810, 4
        %v1863 = vsel %vm1854, %v1860, %v1862
        %v1864 = vrot.slane %v811, 4
        %v1865 = vsel %vm1854, %v1862, %v1864
        %v1866 = vrot.slane %v812, 4
        %v1867 = vsel %vm1854, %v1864, %v1866
        %v1868 = vrot.slane %v813, 4
        %v1869 = vsel %vm1854, %v1866, %v1868
        %v1870 = vrot.slane %v814, 4
        %v1871 = vsel %vm1854, %v1868, %v1870
        %v1872 = vrot.slane %v815, 4
        %v1873 = vsel %vm1854, %v1870, %v1872
        %v1874 = vrot.slane %v816, 4
        %v1875 = vsel %vm1854, %v1872, %v1874
        %v1876 = vrot.slane %v817, 4
        %v1877 = vsel %vm1854, %v1874, %v1876
        %v1878 = vrot.slane %v818, 4
        %v1879 = vsel %vm1854, %v1876, %v1878
        %v1880 = vrot.slane %v819, 4
        %v1881 = vsel %vm1854, %v1878, %v1880
        %v1882 = vrot.slane %v820, 4
        %v1883 = vsel %vm1854, %v1880, %v1882
        %v1884 = vrot.slane %v821, 4
        %v1885 = vsel %vm1854, %v1882, %v1884
        %v1886 = vrot.slane %v822, 4
        %v1887 = vsel %vm1854, %v1884, %v1886
        %v1888 = vrot.slane %v823, 4
        %v1889 = vsel %vm1854, %v1886, %v1888
        %v1890 = vrot.slane %v824, 4
        %v1891 = vsel %vm1854, %v1888, %v1890
        %v1892 = vrot.slane %v825, 4
        %v1893 = vsel %vm1854, %v1890, %v1892
        %v1894 = vrot.slane %v826, 4
        %v1895 = vsel %vm1854, %v1892, %v1894
        %v1896 = vrot.slane %v827, 4
        %v1897 = vsel %vm1854, %v1894, %v1896
        %v1898 = vrot.slane %v828, 4
        %v1899 = vsel %vm1854, %v1896, %v1898
        %v1900 = vrot.slane %v829, 4
        %v1901 = vsel %vm1854, %v1898, %v1900
        %v1902 = vrot.slane %v830, 4
        %v1903 = vsel %vm1854, %v1900, %v1902
        %v1904 = vrot.slane %v831, 4
        %v1905 = vsel %vm1854, %v1902, %v1904
        %v1906 = vrot.slane %v832, 4
        %v1907 = vsel %vm1854, %v1904, %v1906
        %v1908 = vrot.slane %v833, 4
        %v1909 = vsel %vm1854, %v1906, %v1908
        %v1910 = vrot.slane %v834, 4
        %v1911 = vsel %vm1854, %v1908, %v1910
        %v1912 = vrot.slane %v835, 4
        %v1913 = vsel %vm1854, %v1910, %v1912
        %v1914 = vrot.slane %v836, 4
        %v1915 = vsel %vm1854, %v1912, %v1914
        %v1916 = vrot.slane %v837, 4
        %v1917 = vsel %vm1854, %v1914, %v1916
        %v1918 = vrot.slane %v838, 4
        %v1919 = vsel %vm1854, %v1916, %v1918
        %v1920 = vrot.slane %v839, 4
        %v1921 = vsel %vm1854, %v1918, %v1920
        %v1922 = vrot.slane %v840, 4
        %v1923 = vsel %vm1854, %v1920, %v1922
        %v1924 = vrot.slane %v841, 4
        %v1925 = vsel %vm1854, %v1922, %v1924
        %v1926 = vrot.slane %v842, 4
        %v1927 = vsel %vm1854, %v1924, %v1926
        %v1928 = vrot.slane %v843, 4
        %v1929 = vsel %vm1854, %v1926, %v1928
        %v1930 = vrot.slane %v844, 4
        %v1931 = vsel %vm1854, %v1928, %v1930
        %v1932 = vrot.slane %v845, 4
        %v1933 = vsel %vm1854, %v1930, %v1932
        %v1934 = vrot.slane %v846, 4
        %v1935 = vsel %vm1854, %v1932, %v1934
        %v1936 = vrot.slane %v847, 4
        %v1937 = vsel %vm1854, %v1934, %v1936
        %v1938 = vrot.slane %v848, 4
        %v1939 = vsel %vm1854, %v1936, %v1938
        %v1940 = vrot.slane %v849, 4
        %v1941 = vsel %vm1854, %v1938, %v1940
        %v1942 = vrot.slane %v850, 4
        %v1943 = vsel %vm1854, %v1940, %v1942
        %v1944 = vrot.slane %v851, 4
        %v1945 = vsel %vm1854, %v1942, %v1944
        %v1946 = vrot.slane %v852, 4
        %v1947 = vsel %vm1854, %v1944, %v1946
        %v1948 = vrot.slane %v853, 4
        %v1949 = vsel %vm1854, %v1946, %v1948
        %v1950 = vrot.slane %v854, 4
        %v1951 = vsel %vm1854, %v1948, %v1950
        %v1952 = vrot.slane %v855, 4
        %v1953 = vsel %vm1854, %v1950, %v1952
        %v1954 = vrot.slane %v856, 4
        %v1955 = vsel %vm1854, %v1952, %v1954
        %v1956 = vrot.slane %v857, 4
        %v1957 = vsel %vm1854, %v1954, %v1956
        %v1958 = vrot.slane %v858, 4
        %v1959 = vsel %vm1854, %v1956, %v1958
        %v1960 = vrot.slane %v859, 4
        %v1961 = vsel %vm1854, %v1958, %v1960
        %v1962 = vrot.slane %v860, 4
        %v1963 = vsel %vm1854, %v1960, %v1962
        %v1964 = vrot.slane %v861, 4
        %v1965 = vsel %vm1854, %v1962, %v1964
        %v1966 = vrot.slane %v862, 4
        %v1967 = vsel %vm1854, %v1964, %v1966
        %v1968 = vrot.slane %v863, 4
        %v1969 = vsel %vm1854, %v1966, %v1968
        %v1970 = vrot.slane %v864, 4
        %v1971 = vsel %vm1854, %v1968, %v1970
        %v1972 = vrot.slane %v865, 4
        %v1973 = vsel %vm1854, %v1970, %v1972
        %v1974 = vrot.slane %v866, 4
        %v1975 = vsel %vm1854, %v1972, %v1974
        %v1976 = vrot.slane %v867, 4
        %v1977 = vsel %vm1854, %v1974, %v1976
        %1978 = vrot.lane.b32.xlu0 %v1857, 4
        %v1979 = vpop.permute.xlu0 %1978
        %1980 = vrot.lane.b32.xlu0 %v1859, 4
        %v1981 = vpop.permute.xlu0 %1980
        %1982 = vrot.lane.b32.xlu0 %v1861, 4
        %v1983 = vpop.permute.xlu0 %1982
        %1984 = vrot.lane.b32.xlu0 %v1863, 4
        %v1985 = vpop.permute.xlu0 %1984
        %1986 = vrot.lane.b32.xlu0 %v1865, 4
        %v1987 = vpop.permute.xlu0 %1986
        %1988 = vrot.lane.b32.xlu0 %v1867, 4
        %v1989 = vpop.permute.xlu0 %1988
        %1990 = vrot.lane.b32.xlu0 %v1869, 4
        %v1991 = vpop.permute.xlu0 %1990
        %1992 = vrot.lane.b32.xlu0 %v1871, 4
        %v1993 = vpop.permute.xlu0 %1992
        %1994 = vrot.lane.b32.xlu0 %v1873, 4
        %v1995 = vpop.permute.xlu0 %1994
        %1996 = vrot.lane.b32.xlu0 %v1875, 4
        %v1997 = vpop.permute.xlu0 %1996
        %1998 = vrot.lane.b32.xlu0 %v1877, 4
        %v1999 = vpop.permute.xlu0 %1998
        %2000 = vrot.lane.b32.xlu0 %v1879, 4
        %v2001 = vpop.permute.xlu0 %2000
        %2002 = vrot.lane.b32.xlu0 %v1881, 4
        %v2003 = vpop.permute.xlu0 %2002
        %2004 = vrot.lane.b32.xlu0 %v1883, 4
        %v2005 = vpop.permute.xlu0 %2004
        %2006 = vrot.lane.b32.xlu0 %v1885, 4
        %v2007 = vpop.permute.xlu0 %2006
        %2008 = vrot.lane.b32.xlu0 %v1887, 4
        %v2009 = vpop.permute.xlu0 %2008
        %2010 = vrot.lane.b32.xlu0 %v1889, 4
        %v2011 = vpop.permute.xlu0 %2010
        %2012 = vrot.lane.b32.xlu0 %v1891, 4
        %v2013 = vpop.permute.xlu0 %2012
        %2014 = vrot.lane.b32.xlu0 %v1893, 4
        %v2015 = vpop.permute.xlu0 %2014
        %2016 = vrot.lane.b32.xlu0 %v1895, 4
        %v2017 = vpop.permute.xlu0 %2016
        %2018 = vrot.lane.b32.xlu0 %v1897, 4
        %v2019 = vpop.permute.xlu0 %2018
        %2020 = vrot.lane.b32.xlu0 %v1899, 4
        %v2021 = vpop.permute.xlu0 %2020
        %2022 = vrot.lane.b32.xlu0 %v1901, 4
        %v2023 = vpop.permute.xlu0 %2022
        %2024 = vrot.lane.b32.xlu0 %v1903, 4
        %v2025 = vpop.permute.xlu0 %2024
        %2026 = vrot.lane.b32.xlu0 %v1905, 4
        %v2027 = vpop.permute.xlu0 %2026
        %2028 = vrot.lane.b32.xlu0 %v1907, 4
        %v2029 = vpop.permute.xlu0 %2028
        %2030 = vrot.lane.b32.xlu0 %v1909, 4
        %v2031 = vpop.permute.xlu0 %2030
        %2032 = vrot.lane.b32.xlu0 %v1911, 4
        %v2033 = vpop.permute.xlu0 %2032
        %2034 = vrot.lane.b32.xlu0 %v1913, 4
        %v2035 = vpop.permute.xlu0 %2034
        %2036 = vrot.lane.b32.xlu0 %v1915, 4
        %v2037 = vpop.permute.xlu0 %2036
        %2038 = vrot.lane.b32.xlu0 %v1917, 4
        %v2039 = vpop.permute.xlu0 %2038
        %2040 = vrot.lane.b32.xlu0 %v1919, 4
        %v2041 = vpop.permute.xlu0 %2040
        %2042 = vrot.lane.b32.xlu0 %v1921, 4
        %v2043 = vpop.permute.xlu0 %2042
        %2044 = vrot.lane.b32.xlu0 %v1923, 4
        %v2045 = vpop.permute.xlu0 %2044
        %2046 = vrot.lane.b32.xlu0 %v1925, 4
        %v2047 = vpop.permute.xlu0 %2046
        %2048 = vrot.lane.b32.xlu0 %v1927, 4
        %v2049 = vpop.permute.xlu0 %2048
        %2050 = vrot.lane.b32.xlu0 %v1929, 4
        %v2051 = vpop.permute.xlu0 %2050
        %2052 = vrot.lane.b32.xlu0 %v1931, 4
        %v2053 = vpop.permute.xlu0 %2052
        %2054 = vrot.lane.b32.xlu0 %v1933, 4
        %v2055 = vpop.permute.xlu0 %2054
        %2056 = vrot.lane.b32.xlu0 %v1935, 4
        %v2057 = vpop.permute.xlu0 %2056
        %2058 = vrot.lane.b32.xlu0 %v1937, 4
        %v2059 = vpop.permute.xlu0 %2058
        %2060 = vrot.lane.b32.xlu0 %v1939, 4
        %v2061 = vpop.permute.xlu0 %2060
        %2062 = vrot.lane.b32.xlu0 %v1941, 4
        %v2063 = vpop.permute.xlu0 %2062
        %2064 = vrot.lane.b32.xlu0 %v1943, 4
        %v2065 = vpop.permute.xlu0 %2064
        %2066 = vrot.lane.b32.xlu0 %v1945, 4
        %v2067 = vpop.permute.xlu0 %2066
        %2068 = vrot.lane.b32.xlu0 %v1947, 4
        %v2069 = vpop.permute.xlu0 %2068
        %2070 = vrot.lane.b32.xlu0 %v1949, 4
        %v2071 = vpop.permute.xlu0 %2070
        %2072 = vrot.lane.b32.xlu0 %v1951, 4
        %v2073 = vpop.permute.xlu0 %2072
        %2074 = vrot.lane.b32.xlu0 %v1953, 4
        %v2075 = vpop.permute.xlu0 %2074
        %2076 = vrot.lane.b32.xlu0 %v1955, 4
        %v2077 = vpop.permute.xlu0 %2076
        %2078 = vrot.lane.b32.xlu0 %v1957, 4
        %v2079 = vpop.permute.xlu0 %2078
        %2080 = vrot.lane.b32.xlu0 %v1959, 4
        %v2081 = vpop.permute.xlu0 %2080
        %2082 = vrot.lane.b32.xlu0 %v1961, 4
        %v2083 = vpop.permute.xlu0 %2082
        %2084 = vrot.lane.b32.xlu0 %v1963, 4
        %v2085 = vpop.permute.xlu0 %2084
        %2086 = vrot.lane.b32.xlu0 %v1965, 4
        %v2087 = vpop.permute.xlu0 %2086
        %2088 = vrot.lane.b32.xlu0 %v1967, 4
        %v2089 = vpop.permute.xlu0 %2088
        %2090 = vrot.lane.b32.xlu0 %v1969, 4
        %v2091 = vpop.permute.xlu0 %2090
        %2092 = vrot.lane.b32.xlu0 %v1971, 4
        %v2093 = vpop.permute.xlu0 %2092
        %2094 = vrot.lane.b32.xlu0 %v1973, 4
        %v2095 = vpop.permute.xlu0 %2094
        %2096 = vrot.lane.b32.xlu0 %v1975, 4
        %v2097 = vpop.permute.xlu0 %2096
        %2098 = vrot.lane.b32.xlu0 %v1977, 4
        %v2099 = vpop.permute.xlu0 %2098
        %vm2161 = vcmask 1042432
        %v2162 = vrot.slane %v806, 5
        %v2163 = vrot.slane %v807, 5
        %v2164 = vsel %vm2161, %v2162, %v2163
        %v2165 = vrot.slane %v808, 5
        %v2166 = vsel %vm2161, %v2163, %v2165
        %v2167 = vrot.slane %v809, 5
        %v2168 = vsel %vm2161, %v2165, %v2167
        %v2169 = vrot.slane %v810, 5
        %v2170 = vsel %vm2161, %v2167, %v2169
        %v2171 = vrot.slane %v811, 5
        %v2172 = vsel %vm2161, %v2169, %v2171
        %v2173 = vrot.slane %v812, 5
        %v2174 = vsel %vm2161, %v2171, %v2173
        %v2175 = vrot.slane %v813, 5
        %v2176 = vsel %vm2161, %v2173, %v2175
        %v2177 = vrot.slane %v814, 5
        %v2178 = vsel %vm2161, %v2175, %v2177
        %v2179 = vrot.slane %v815, 5
        %v2180 = vsel %vm2161, %v2177, %v2179
        %v2181 = vrot.slane %v816, 5
        %v2182 = vsel %vm2161, %v2179, %v2181
        %v2183 = vrot.slane %v817, 5
        %v2184 = vsel %vm2161, %v2181, %v2183
        %v2185 = vrot.slane %v818, 5
        %v2186 = vsel %vm2161, %v2183, %v2185
        %v2187 = vrot.slane %v819, 5
        %v2188 = vsel %vm2161, %v2185, %v2187
        %v2189 = vrot.slane %v820, 5
        %v2190 = vsel %vm2161, %v2187, %v2189
        %v2191 = vrot.slane %v821, 5
        %v2192 = vsel %vm2161, %v2189, %v2191
        %v2193 = vrot.slane %v822, 5
        %v2194 = vsel %vm2161, %v2191, %v2193
        %v2195 = vrot.slane %v823, 5
        %v2196 = vsel %vm2161, %v2193, %v2195
        %v2197 = vrot.slane %v824, 5
        %v2198 = vsel %vm2161, %v2195, %v2197
        %v2199 = vrot.slane %v825, 5
        %v2200 = vsel %vm2161, %v2197, %v2199
        %v2201 = vrot.slane %v826, 5
        %v2202 = vsel %vm2161, %v2199, %v2201
        %v2203 = vrot.slane %v827, 5
        %v2204 = vsel %vm2161, %v2201, %v2203
        %v2205 = vrot.slane %v828, 5
        %v2206 = vsel %vm2161, %v2203, %v2205
        %v2207 = vrot.slane %v829, 5
        %v2208 = vsel %vm2161, %v2205, %v2207
        %v2209 = vrot.slane %v830, 5
        %v2210 = vsel %vm2161, %v2207, %v2209
        %v2211 = vrot.slane %v831, 5
        %v2212 = vsel %vm2161, %v2209, %v2211
        %v2213 = vrot.slane %v832, 5
        %v2214 = vsel %vm2161, %v2211, %v2213
        %v2215 = vrot.slane %v833, 5
        %v2216 = vsel %vm2161, %v2213, %v2215
        %v2217 = vrot.slane %v834, 5
        %v2218 = vsel %vm2161, %v2215, %v2217
        %v2219 = vrot.slane %v835, 5
        %v2220 = vsel %vm2161, %v2217, %v2219
        %v2221 = vrot.slane %v836, 5
        %v2222 = vsel %vm2161, %v2219, %v2221
        %v2223 = vrot.slane %v837, 5
        %v2224 = vsel %vm2161, %v2221, %v2223
        %v2225 = vrot.slane %v838, 5
        %v2226 = vsel %vm2161, %v2223, %v2225
        %v2227 = vrot.slane %v839, 5
        %v2228 = vsel %vm2161, %v2225, %v2227
        %v2229 = vrot.slane %v840, 5
        %v2230 = vsel %vm2161, %v2227, %v2229
        %v2231 = vrot.slane %v841, 5
        %v2232 = vsel %vm2161, %v2229, %v2231
        %v2233 = vrot.slane %v842, 5
        %v2234 = vsel %vm2161, %v2231, %v2233
        %v2235 = vrot.slane %v843, 5
        %v2236 = vsel %vm2161, %v2233, %v2235
        %v2237 = vrot.slane %v844, 5
        %v2238 = vsel %vm2161, %v2235, %v2237
        %v2239 = vrot.slane %v845, 5
        %v2240 = vsel %vm2161, %v2237, %v2239
        %v2241 = vrot.slane %v846, 5
        %v2242 = vsel %vm2161, %v2239, %v2241
        %v2243 = vrot.slane %v847, 5
        %v2244 = vsel %vm2161, %v2241, %v2243
        %v2245 = vrot.slane %v848, 5
        %v2246 = vsel %vm2161, %v2243, %v2245
        %v2247 = vrot.slane %v849, 5
        %v2248 = vsel %vm2161, %v2245, %v2247
        %v2249 = vrot.slane %v850, 5
        %v2250 = vsel %vm2161, %v2247, %v2249
        %v2251 = vrot.slane %v851, 5
        %v2252 = vsel %vm2161, %v2249, %v2251
        %v2253 = vrot.slane %v852, 5
        %v2254 = vsel %vm2161, %v2251, %v2253
        %v2255 = vrot.slane %v853, 5
        %v2256 = vsel %vm2161, %v2253, %v2255
        %v2257 = vrot.slane %v854, 5
        %v2258 = vsel %vm2161, %v2255, %v2257
        %v2259 = vrot.slane %v855, 5
        %v2260 = vsel %vm2161, %v2257, %v2259
        %v2261 = vrot.slane %v856, 5
        %v2262 = vsel %vm2161, %v2259, %v2261
        %v2263 = vrot.slane %v857, 5
        %v2264 = vsel %vm2161, %v2261, %v2263
        %v2265 = vrot.slane %v858, 5
        %v2266 = vsel %vm2161, %v2263, %v2265
        %v2267 = vrot.slane %v859, 5
        %v2268 = vsel %vm2161, %v2265, %v2267
        %v2269 = vrot.slane %v860, 5
        %v2270 = vsel %vm2161, %v2267, %v2269
        %v2271 = vrot.slane %v861, 5
        %v2272 = vsel %vm2161, %v2269, %v2271
        %v2273 = vrot.slane %v862, 5
        %v2274 = vsel %vm2161, %v2271, %v2273
        %v2275 = vrot.slane %v863, 5
        %v2276 = vsel %vm2161, %v2273, %v2275
        %v2277 = vrot.slane %v864, 5
        %v2278 = vsel %vm2161, %v2275, %v2277
        %v2279 = vrot.slane %v865, 5
        %v2280 = vsel %vm2161, %v2277, %v2279
        %v2281 = vrot.slane %v866, 5
        %v2282 = vsel %vm2161, %v2279, %v2281
        %v2283 = vrot.slane %v867, 5
        %v2284 = vsel %vm2161, %v2281, %v2283
        %2285 = vrot.lane.b32.xlu0 %v2164, 5
        %v2286 = vpop.permute.xlu0 %2285
        %2287 = vrot.lane.b32.xlu0 %v2166, 5
        %v2288 = vpop.permute.xlu0 %2287
        %2289 = vrot.lane.b32.xlu0 %v2168, 5
        %v2290 = vpop.permute.xlu0 %2289
        %2291 = vrot.lane.b32.xlu0 %v2170, 5
        %v2292 = vpop.permute.xlu0 %2291
        %2293 = vrot.lane.b32.xlu0 %v2172, 5
        %v2294 = vpop.permute.xlu0 %2293
        %2295 = vrot.lane.b32.xlu0 %v2174, 5
        %v2296 = vpop.permute.xlu0 %2295
        %2297 = vrot.lane.b32.xlu0 %v2176, 5
        %v2298 = vpop.permute.xlu0 %2297
        %2299 = vrot.lane.b32.xlu0 %v2178, 5
        %v2300 = vpop.permute.xlu0 %2299
        %2301 = vrot.lane.b32.xlu0 %v2180, 5
        %v2302 = vpop.permute.xlu0 %2301
        %2303 = vrot.lane.b32.xlu0 %v2182, 5
        %v2304 = vpop.permute.xlu0 %2303
        %2305 = vrot.lane.b32.xlu0 %v2184, 5
        %v2306 = vpop.permute.xlu0 %2305
        %2307 = vrot.lane.b32.xlu0 %v2186, 5
        %v2308 = vpop.permute.xlu0 %2307
        %2309 = vrot.lane.b32.xlu0 %v2188, 5
        %v2310 = vpop.permute.xlu0 %2309
        %2311 = vrot.lane.b32.xlu0 %v2190, 5
        %v2312 = vpop.permute.xlu0 %2311
        %2313 = vrot.lane.b32.xlu0 %v2192, 5
        %v2314 = vpop.permute.xlu0 %2313
        %2315 = vrot.lane.b32.xlu0 %v2194, 5
        %v2316 = vpop.permute.xlu0 %2315
        %2317 = vrot.lane.b32.xlu0 %v2196, 5
        %v2318 = vpop.permute.xlu0 %2317
        %2319 = vrot.lane.b32.xlu0 %v2198, 5
        %v2320 = vpop.permute.xlu0 %2319
        %2321 = vrot.lane.b32.xlu0 %v2200, 5
        %v2322 = vpop.permute.xlu0 %2321
        %2323 = vrot.lane.b32.xlu0 %v2202, 5
        %v2324 = vpop.permute.xlu0 %2323
        %2325 = vrot.lane.b32.xlu0 %v2204, 5
        %v2326 = vpop.permute.xlu0 %2325
        %2327 = vrot.lane.b32.xlu0 %v2206, 5
        %v2328 = vpop.permute.xlu0 %2327
        %2329 = vrot.lane.b32.xlu0 %v2208, 5
        %v2330 = vpop.permute.xlu0 %2329
        %2331 = vrot.lane.b32.xlu0 %v2210, 5
        %v2332 = vpop.permute.xlu0 %2331
        %2333 = vrot.lane.b32.xlu0 %v2212, 5
        %v2334 = vpop.permute.xlu0 %2333
        %2335 = vrot.lane.b32.xlu0 %v2214, 5
        %v2336 = vpop.permute.xlu0 %2335
        %2337 = vrot.lane.b32.xlu0 %v2216, 5
        %v2338 = vpop.permute.xlu0 %2337
        %2339 = vrot.lane.b32.xlu0 %v2218, 5
        %v2340 = vpop.permute.xlu0 %2339
        %2341 = vrot.lane.b32.xlu0 %v2220, 5
        %v2342 = vpop.permute.xlu0 %2341
        %2343 = vrot.lane.b32.xlu0 %v2222, 5
        %v2344 = vpop.permute.xlu0 %2343
        %2345 = vrot.lane.b32.xlu0 %v2224, 5
        %v2346 = vpop.permute.xlu0 %2345
        %2347 = vrot.lane.b32.xlu0 %v2226, 5
        %v2348 = vpop.permute.xlu0 %2347
        %2349 = vrot.lane.b32.xlu0 %v2228, 5
        %v2350 = vpop.permute.xlu0 %2349
        %2351 = vrot.lane.b32.xlu0 %v2230, 5
        %v2352 = vpop.permute.xlu0 %2351
        %2353 = vrot.lane.b32.xlu0 %v2232, 5
        %v2354 = vpop.permute.xlu0 %2353
        %2355 = vrot.lane.b32.xlu0 %v2234, 5
        %v2356 = vpop.permute.xlu0 %2355
        %2357 = vrot.lane.b32.xlu0 %v2236, 5
        %v2358 = vpop.permute.xlu0 %2357
        %2359 = vrot.lane.b32.xlu0 %v2238, 5
        %v2360 = vpop.permute.xlu0 %2359
        %2361 = vrot.lane.b32.xlu0 %v2240, 5
        %v2362 = vpop.permute.xlu0 %2361
        %2363 = vrot.lane.b32.xlu0 %v2242, 5
        %v2364 = vpop.permute.xlu0 %2363
        %2365 = vrot.lane.b32.xlu0 %v2244, 5
        %v2366 = vpop.permute.xlu0 %2365
        %2367 = vrot.lane.b32.xlu0 %v2246, 5
        %v2368 = vpop.permute.xlu0 %2367
        %2369 = vrot.lane.b32.xlu0 %v2248, 5
        %v2370 = vpop.permute.xlu0 %2369
        %2371 = vrot.lane.b32.xlu0 %v2250, 5
        %v2372 = vpop.permute.xlu0 %2371
        %2373 = vrot.lane.b32.xlu0 %v2252, 5
        %v2374 = vpop.permute.xlu0 %2373
        %2375 = vrot.lane.b32.xlu0 %v2254, 5
        %v2376 = vpop.permute.xlu0 %2375
        %2377 = vrot.lane.b32.xlu0 %v2256, 5
        %v2378 = vpop.permute.xlu0 %2377
        %2379 = vrot.lane.b32.xlu0 %v2258, 5
        %v2380 = vpop.permute.xlu0 %2379
        %2381 = vrot.lane.b32.xlu0 %v2260, 5
        %v2382 = vpop.permute.xlu0 %2381
        %2383 = vrot.lane.b32.xlu0 %v2262, 5
        %v2384 = vpop.permute.xlu0 %2383
        %2385 = vrot.lane.b32.xlu0 %v2264, 5
        %v2386 = vpop.permute.xlu0 %2385
        %2387 = vrot.lane.b32.xlu0 %v2266, 5
        %v2388 = vpop.permute.xlu0 %2387
        %2389 = vrot.lane.b32.xlu0 %v2268, 5
        %v2390 = vpop.permute.xlu0 %2389
        %2391 = vrot.lane.b32.xlu0 %v2270, 5
        %v2392 = vpop.permute.xlu0 %2391
        %2393 = vrot.lane.b32.xlu0 %v2272, 5
        %v2394 = vpop.permute.xlu0 %2393
        %2395 = vrot.lane.b32.xlu0 %v2274, 5
        %v2396 = vpop.permute.xlu0 %2395
        %2397 = vrot.lane.b32.xlu0 %v2276, 5
        %v2398 = vpop.permute.xlu0 %2397
        %2399 = vrot.lane.b32.xlu0 %v2278, 5
        %v2400 = vpop.permute.xlu0 %2399
        %2401 = vrot.lane.b32.xlu0 %v2280, 5
        %v2402 = vpop.permute.xlu0 %2401
        %2403 = vrot.lane.b32.xlu0 %v2282, 5
        %v2404 = vpop.permute.xlu0 %2403
        %2405 = vrot.lane.b32.xlu0 %v2284, 5
        %v2406 = vpop.permute.xlu0 %2405
        %vm2468 = vcmask 1041408
        %v2469 = vrot.slane %v806, 6
        %v2470 = vrot.slane %v807, 6
        %v2471 = vsel %vm2468, %v2469, %v2470
        %v2472 = vrot.slane %v808, 6
        %v2473 = vsel %vm2468, %v2470, %v2472
        %v2474 = vrot.slane %v809, 6
        %v2475 = vsel %vm2468, %v2472, %v2474
        %v2476 = vrot.slane %v810, 6
        %v2477 = vsel %vm2468, %v2474, %v2476
        %v2478 = vrot.slane %v811, 6
        %v2479 = vsel %vm2468, %v2476, %v2478
        %v2480 = vrot.slane %v812, 6
        %v2481 = vsel %vm2468, %v2478, %v2480
        %v2482 = vrot.slane %v813, 6
        %v2483 = vsel %vm2468, %v2480, %v2482
        %v2484 = vrot.slane %v814, 6
        %v2485 = vsel %vm2468, %v2482, %v2484
        %v2486 = vrot.slane %v815, 6
        %v2487 = vsel %vm2468, %v2484, %v2486
        %v2488 = vrot.slane %v816, 6
        %v2489 = vsel %vm2468, %v2486, %v2488
        %v2490 = vrot.slane %v817, 6
        %v2491 = vsel %vm2468, %v2488, %v2490
        %v2492 = vrot.slane %v818, 6
        %v2493 = vsel %vm2468, %v2490, %v2492
        %v2494 = vrot.slane %v819, 6
        %v2495 = vsel %vm2468, %v2492, %v2494
        %v2496 = vrot.slane %v820, 6
        %v2497 = vsel %vm2468, %v2494, %v2496
        %v2498 = vrot.slane %v821, 6
        %v2499 = vsel %vm2468, %v2496, %v2498
        %v2500 = vrot.slane %v822, 6
        %v2501 = vsel %vm2468, %v2498, %v2500
        %v2502 = vrot.slane %v823, 6
        %v2503 = vsel %vm2468, %v2500, %v2502
        %v2504 = vrot.slane %v824, 6
        %v2505 = vsel %vm2468, %v2502, %v2504
        %v2506 = vrot.slane %v825, 6
        %v2507 = vsel %vm2468, %v2504, %v2506
        %v2508 = vrot.slane %v826, 6
        %v2509 = vsel %vm2468, %v2506, %v2508
        %v2510 = vrot.slane %v827, 6
        %v2511 = vsel %vm2468, %v2508, %v2510
        %v2512 = vrot.slane %v828, 6
        %v2513 = vsel %vm2468, %v2510, %v2512
        %v2514 = vrot.slane %v829, 6
        %v2515 = vsel %vm2468, %v2512, %v2514
        %v2516 = vrot.slane %v830, 6
        %v2517 = vsel %vm2468, %v2514, %v2516
        %v2518 = vrot.slane %v831, 6
        %v2519 = vsel %vm2468, %v2516, %v2518
        %v2520 = vrot.slane %v832, 6
        %v2521 = vsel %vm2468, %v2518, %v2520
        %v2522 = vrot.slane %v833, 6
        %v2523 = vsel %vm2468, %v2520, %v2522
        %v2524 = vrot.slane %v834, 6
        %v2525 = vsel %vm2468, %v2522, %v2524
        %v2526 = vrot.slane %v835, 6
        %v2527 = vsel %vm2468, %v2524, %v2526
        %v2528 = vrot.slane %v836, 6
        %v2529 = vsel %vm2468, %v2526, %v2528
        %v2530 = vrot.slane %v837, 6
        %v2531 = vsel %vm2468, %v2528, %v2530
        %v2532 = vrot.slane %v838, 6
        %v2533 = vsel %vm2468, %v2530, %v2532
        %v2534 = vrot.slane %v839, 6
        %v2535 = vsel %vm2468, %v2532, %v2534
        %v2536 = vrot.slane %v840, 6
        %v2537 = vsel %vm2468, %v2534, %v2536
        %v2538 = vrot.slane %v841, 6
        %v2539 = vsel %vm2468, %v2536, %v2538
        %v2540 = vrot.slane %v842, 6
        %v2541 = vsel %vm2468, %v2538, %v2540
        %v2542 = vrot.slane %v843, 6
        %v2543 = vsel %vm2468, %v2540, %v2542
        %v2544 = vrot.slane %v844, 6
        %v2545 = vsel %vm2468, %v2542, %v2544
        %v2546 = vrot.slane %v845, 6
        %v2547 = vsel %vm2468, %v2544, %v2546
        %v2548 = vrot.slane %v846, 6
        %v2549 = vsel %vm2468, %v2546, %v2548
        %v2550 = vrot.slane %v847, 6
        %v2551 = vsel %vm2468, %v2548, %v2550
        %v2552 = vrot.slane %v848, 6
        %v2553 = vsel %vm2468, %v2550, %v2552
        %v2554 = vrot.slane %v849, 6
        %v2555 = vsel %vm2468, %v2552, %v2554
        %v2556 = vrot.slane %v850, 6
        %v2557 = vsel %vm2468, %v2554, %v2556
        %v2558 = vrot.slane %v851, 6
        %v2559 = vsel %vm2468, %v2556, %v2558
        %v2560 = vrot.slane %v852, 6
        %v2561 = vsel %vm2468, %v2558, %v2560
        %v2562 = vrot.slane %v853, 6
        %v2563 = vsel %vm2468, %v2560, %v2562
        %v2564 = vrot.slane %v854, 6
        %v2565 = vsel %vm2468, %v2562, %v2564
        %v2566 = vrot.slane %v855, 6
        %v2567 = vsel %vm2468, %v2564, %v2566
        %v2568 = vrot.slane %v856, 6
        %v2569 = vsel %vm2468, %v2566, %v2568
        %v2570 = vrot.slane %v857, 6
        %v2571 = vsel %vm2468, %v2568, %v2570
        %v2572 = vrot.slane %v858, 6
        %v2573 = vsel %vm2468, %v2570, %v2572
        %v2574 = vrot.slane %v859, 6
        %v2575 = vsel %vm2468, %v2572, %v2574
        %v2576 = vrot.slane %v860, 6
        %v2577 = vsel %vm2468, %v2574, %v2576
        %v2578 = vrot.slane %v861, 6
        %v2579 = vsel %vm2468, %v2576, %v2578
        %v2580 = vrot.slane %v862, 6
        %v2581 = vsel %vm2468, %v2578, %v2580
        %v2582 = vrot.slane %v863, 6
        %v2583 = vsel %vm2468, %v2580, %v2582
        %v2584 = vrot.slane %v864, 6
        %v2585 = vsel %vm2468, %v2582, %v2584
        %v2586 = vrot.slane %v865, 6
        %v2587 = vsel %vm2468, %v2584, %v2586
        %v2588 = vrot.slane %v866, 6
        %v2589 = vsel %vm2468, %v2586, %v2588
        %v2590 = vrot.slane %v867, 6
        %v2591 = vsel %vm2468, %v2588, %v2590
        %2592 = vrot.lane.b32.xlu0 %v2471, 6
        %v2593 = vpop.permute.xlu0 %2592
        %2594 = vrot.lane.b32.xlu0 %v2473, 6
        %v2595 = vpop.permute.xlu0 %2594
        %2596 = vrot.lane.b32.xlu0 %v2475, 6
        %v2597 = vpop.permute.xlu0 %2596
        %2598 = vrot.lane.b32.xlu0 %v2477, 6
        %v2599 = vpop.permute.xlu0 %2598
        %2600 = vrot.lane.b32.xlu0 %v2479, 6
        %v2601 = vpop.permute.xlu0 %2600
        %2602 = vrot.lane.b32.xlu0 %v2481, 6
        %v2603 = vpop.permute.xlu0 %2602
        %2604 = vrot.lane.b32.xlu0 %v2483, 6
        %v2605 = vpop.permute.xlu0 %2604
        %2606 = vrot.lane.b32.xlu0 %v2485, 6
        %v2607 = vpop.permute.xlu0 %2606
        %2608 = vrot.lane.b32.xlu0 %v2487, 6
        %v2609 = vpop.permute.xlu0 %2608
        %2610 = vrot.lane.b32.xlu0 %v2489, 6
        %v2611 = vpop.permute.xlu0 %2610
        %2612 = vrot.lane.b32.xlu0 %v2491, 6
        %v2613 = vpop.permute.xlu0 %2612
        %2614 = vrot.lane.b32.xlu0 %v2493, 6
        %v2615 = vpop.permute.xlu0 %2614
        %2616 = vrot.lane.b32.xlu0 %v2495, 6
        %v2617 = vpop.permute.xlu0 %2616
        %2618 = vrot.lane.b32.xlu0 %v2497, 6
        %v2619 = vpop.permute.xlu0 %2618
        %2620 = vrot.lane.b32.xlu0 %v2499, 6
        %v2621 = vpop.permute.xlu0 %2620
        %2622 = vrot.lane.b32.xlu0 %v2501, 6
        %v2623 = vpop.permute.xlu0 %2622
        %2624 = vrot.lane.b32.xlu0 %v2503, 6
        %v2625 = vpop.permute.xlu0 %2624
        %2626 = vrot.lane.b32.xlu0 %v2505, 6
        %v2627 = vpop.permute.xlu0 %2626
        %2628 = vrot.lane.b32.xlu0 %v2507, 6
        %v2629 = vpop.permute.xlu0 %2628
        %2630 = vrot.lane.b32.xlu0 %v2509, 6
        %v2631 = vpop.permute.xlu0 %2630
        %2632 = vrot.lane.b32.xlu0 %v2511, 6
        %v2633 = vpop.permute.xlu0 %2632
        %2634 = vrot.lane.b32.xlu0 %v2513, 6
        %v2635 = vpop.permute.xlu0 %2634
        %2636 = vrot.lane.b32.xlu0 %v2515, 6
        %v2637 = vpop.permute.xlu0 %2636
        %2638 = vrot.lane.b32.xlu0 %v2517, 6
        %v2639 = vpop.permute.xlu0 %2638
        %2640 = vrot.lane.b32.xlu0 %v2519, 6
        %v2641 = vpop.permute.xlu0 %2640
        %2642 = vrot.lane.b32.xlu0 %v2521, 6
        %v2643 = vpop.permute.xlu0 %2642
        %2644 = vrot.lane.b32.xlu0 %v2523, 6
        %v2645 = vpop.permute.xlu0 %2644
        %2646 = vrot.lane.b32.xlu0 %v2525, 6
        %v2647 = vpop.permute.xlu0 %2646
        %2648 = vrot.lane.b32.xlu0 %v2527, 6
        %v2649 = vpop.permute.xlu0 %2648
        %2650 = vrot.lane.b32.xlu0 %v2529, 6
        %v2651 = vpop.permute.xlu0 %2650
        %2652 = vrot.lane.b32.xlu0 %v2531, 6
        %v2653 = vpop.permute.xlu0 %2652
        %2654 = vrot.lane.b32.xlu0 %v2533, 6
        %v2655 = vpop.permute.xlu0 %2654
        %2656 = vrot.lane.b32.xlu0 %v2535, 6
        %v2657 = vpop.permute.xlu0 %2656
        %2658 = vrot.lane.b32.xlu0 %v2537, 6
        %v2659 = vpop.permute.xlu0 %2658
        %2660 = vrot.lane.b32.xlu0 %v2539, 6
        %v2661 = vpop.permute.xlu0 %2660
        %2662 = vrot.lane.b32.xlu0 %v2541, 6
        %v2663 = vpop.permute.xlu0 %2662
        %2664 = vrot.lane.b32.xlu0 %v2543, 6
        %v2665 = vpop.permute.xlu0 %2664
        %2666 = vrot.lane.b32.xlu0 %v2545, 6
        %v2667 = vpop.permute.xlu0 %2666
        %2668 = vrot.lane.b32.xlu0 %v2547, 6
        %v2669 = vpop.permute.xlu0 %2668
        %2670 = vrot.lane.b32.xlu0 %v2549, 6
        %v2671 = vpop.permute.xlu0 %2670
        %2672 = vrot.lane.b32.xlu0 %v2551, 6
        %v2673 = vpop.permute.xlu0 %2672
        %2674 = vrot.lane.b32.xlu0 %v2553, 6
        %v2675 = vpop.permute.xlu0 %2674
        %2676 = vrot.lane.b32.xlu0 %v2555, 6
        %v2677 = vpop.permute.xlu0 %2676
        %2678 = vrot.lane.b32.xlu0 %v2557, 6
        %v2679 = vpop.permute.xlu0 %2678
        %2680 = vrot.lane.b32.xlu0 %v2559, 6
        %v2681 = vpop.permute.xlu0 %2680
        %2682 = vrot.lane.b32.xlu0 %v2561, 6
        %v2683 = vpop.permute.xlu0 %2682
        %2684 = vrot.lane.b32.xlu0 %v2563, 6
        %v2685 = vpop.permute.xlu0 %2684
        %2686 = vrot.lane.b32.xlu0 %v2565, 6
        %v2687 = vpop.permute.xlu0 %2686
        %2688 = vrot.lane.b32.xlu0 %v2567, 6
        %v2689 = vpop.permute.xlu0 %2688
        %2690 = vrot.lane.b32.xlu0 %v2569, 6
        %v2691 = vpop.permute.xlu0 %2690
        %2692 = vrot.lane.b32.xlu0 %v2571, 6
        %v2693 = vpop.permute.xlu0 %2692
        %2694 = vrot.lane.b32.xlu0 %v2573, 6
        %v2695 = vpop.permute.xlu0 %2694
        %2696 = vrot.lane.b32.xlu0 %v2575, 6
        %v2697 = vpop.permute.xlu0 %2696
        %2698 = vrot.lane.b32.xlu0 %v2577, 6
        %v2699 = vpop.permute.xlu0 %2698
        %2700 = vrot.lane.b32.xlu0 %v2579, 6
        %v2701 = vpop.permute.xlu0 %2700
        %2702 = vrot.lane.b32.xlu0 %v2581, 6
        %v2703 = vpop.permute.xlu0 %2702
        %2704 = vrot.lane.b32.xlu0 %v2583, 6
        %v2705 = vpop.permute.xlu0 %2704
        %2706 = vrot.lane.b32.xlu0 %v2585, 6
        %v2707 = vpop.permute.xlu0 %2706
        %2708 = vrot.lane.b32.xlu0 %v2587, 6
        %v2709 = vpop.permute.xlu0 %2708
        %2710 = vrot.lane.b32.xlu0 %v2589, 6
        %v2711 = vpop.permute.xlu0 %2710
        %2712 = vrot.lane.b32.xlu0 %v2591, 6
        %v2713 = vpop.permute.xlu0 %2712
        %vm2775 = vcmask 1040384
        %v2776 = vrot.slane %v806, 7
        %v2777 = vrot.slane %v807, 7
        %v2778 = vsel %vm2775, %v2776, %v2777
        %v2779 = vrot.slane %v808, 7
        %v2780 = vsel %vm2775, %v2777, %v2779
        %v2781 = vrot.slane %v809, 7
        %v2782 = vsel %vm2775, %v2779, %v2781
        %v2783 = vrot.slane %v810, 7
        %v2784 = vsel %vm2775, %v2781, %v2783
        %v2785 = vrot.slane %v811, 7
        %v2786 = vsel %vm2775, %v2783, %v2785
        %v2787 = vrot.slane %v812, 7
        %v2788 = vsel %vm2775, %v2785, %v2787
        %v2789 = vrot.slane %v813, 7
        %v2790 = vsel %vm2775, %v2787, %v2789
        %v2791 = vrot.slane %v814, 7
        %v2792 = vsel %vm2775, %v2789, %v2791
        %v2793 = vrot.slane %v815, 7
        %v2794 = vsel %vm2775, %v2791, %v2793
        %v2795 = vrot.slane %v816, 7
        %v2796 = vsel %vm2775, %v2793, %v2795
        %v2797 = vrot.slane %v817, 7
        %v2798 = vsel %vm2775, %v2795, %v2797
        %v2799 = vrot.slane %v818, 7
        %v2800 = vsel %vm2775, %v2797, %v2799
        %v2801 = vrot.slane %v819, 7
        %v2802 = vsel %vm2775, %v2799, %v2801
        %v2803 = vrot.slane %v820, 7
        %v2804 = vsel %vm2775, %v2801, %v2803
        %v2805 = vrot.slane %v821, 7
        %v2806 = vsel %vm2775, %v2803, %v2805
        %v2807 = vrot.slane %v822, 7
        %v2808 = vsel %vm2775, %v2805, %v2807
        %v2809 = vrot.slane %v823, 7
        %v2810 = vsel %vm2775, %v2807, %v2809
        %v2811 = vrot.slane %v824, 7
        %v2812 = vsel %vm2775, %v2809, %v2811
        %v2813 = vrot.slane %v825, 7
        %v2814 = vsel %vm2775, %v2811, %v2813
        %v2815 = vrot.slane %v826, 7
        %v2816 = vsel %vm2775, %v2813, %v2815
        %v2817 = vrot.slane %v827, 7
        %v2818 = vsel %vm2775, %v2815, %v2817
        %v2819 = vrot.slane %v828, 7
        %v2820 = vsel %vm2775, %v2817, %v2819
        %v2821 = vrot.slane %v829, 7
        %v2822 = vsel %vm2775, %v2819, %v2821
        %v2823 = vrot.slane %v830, 7
        %v2824 = vsel %vm2775, %v2821, %v2823
        %v2825 = vrot.slane %v831, 7
        %v2826 = vsel %vm2775, %v2823, %v2825
        %v2827 = vrot.slane %v832, 7
        %v2828 = vsel %vm2775, %v2825, %v2827
        %v2829 = vrot.slane %v833, 7
        %v2830 = vsel %vm2775, %v2827, %v2829
        %v2831 = vrot.slane %v834, 7
        %v2832 = vsel %vm2775, %v2829, %v2831
        %v2833 = vrot.slane %v835, 7
        %v2834 = vsel %vm2775, %v2831, %v2833
        %v2835 = vrot.slane %v836, 7
        %v2836 = vsel %vm2775, %v2833, %v2835
        %v2837 = vrot.slane %v837, 7
        %v2838 = vsel %vm2775, %v2835, %v2837
        %v2839 = vrot.slane %v838, 7
        %v2840 = vsel %vm2775, %v2837, %v2839
        %v2841 = vrot.slane %v839, 7
        %v2842 = vsel %vm2775, %v2839, %v2841
        %v2843 = vrot.slane %v840, 7
        %v2844 = vsel %vm2775, %v2841, %v2843
        %v2845 = vrot.slane %v841, 7
        %v2846 = vsel %vm2775, %v2843, %v2845
        %v2847 = vrot.slane %v842, 7
        %v2848 = vsel %vm2775, %v2845, %v2847
        %v2849 = vrot.slane %v843, 7
        %v2850 = vsel %vm2775, %v2847, %v2849
        %v2851 = vrot.slane %v844, 7
        %v2852 = vsel %vm2775, %v2849, %v2851
        %v2853 = vrot.slane %v845, 7
        %v2854 = vsel %vm2775, %v2851, %v2853
        %v2855 = vrot.slane %v846, 7
        %v2856 = vsel %vm2775, %v2853, %v2855
        %v2857 = vrot.slane %v847, 7
        %v2858 = vsel %vm2775, %v2855, %v2857
        %v2859 = vrot.slane %v848, 7
        %v2860 = vsel %vm2775, %v2857, %v2859
        %v2861 = vrot.slane %v849, 7
        %v2862 = vsel %vm2775, %v2859, %v2861
        %v2863 = vrot.slane %v850, 7
        %v2864 = vsel %vm2775, %v2861, %v2863
        %v2865 = vrot.slane %v851, 7
        %v2866 = vsel %vm2775, %v2863, %v2865
        %v2867 = vrot.slane %v852, 7
        %v2868 = vsel %vm2775, %v2865, %v2867
        %v2869 = vrot.slane %v853, 7
        %v2870 = vsel %vm2775, %v2867, %v2869
        %v2871 = vrot.slane %v854, 7
        %v2872 = vsel %vm2775, %v2869, %v2871
        %v2873 = vrot.slane %v855, 7
        %v2874 = vsel %vm2775, %v2871, %v2873
        %v2875 = vrot.slane %v856, 7
        %v2876 = vsel %vm2775, %v2873, %v2875
        %v2877 = vrot.slane %v857, 7
        %v2878 = vsel %vm2775, %v2875, %v2877
        %v2879 = vrot.slane %v858, 7
        %v2880 = vsel %vm2775, %v2877, %v2879
        %v2881 = vrot.slane %v859, 7
        %v2882 = vsel %vm2775, %v2879, %v2881
        %v2883 = vrot.slane %v860, 7
        %v2884 = vsel %vm2775, %v2881, %v2883
        %v2885 = vrot.slane %v861, 7
        %v2886 = vsel %vm2775, %v2883, %v2885
        %v2887 = vrot.slane %v862, 7
        %v2888 = vsel %vm2775, %v2885, %v2887
        %v2889 = vrot.slane %v863, 7
        %v2890 = vsel %vm2775, %v2887, %v2889
        %v2891 = vrot.slane %v864, 7
        %v2892 = vsel %vm2775, %v2889, %v2891
        %v2893 = vrot.slane %v865, 7
        %v2894 = vsel %vm2775, %v2891, %v2893
        %v2895 = vrot.slane %v866, 7
        %v2896 = vsel %vm2775, %v2893, %v2895
        %v2897 = vrot.slane %v867, 7
        %v2898 = vsel %vm2775, %v2895, %v2897
        %2899 = vrot.lane.b32.xlu0 %v2778, 7
        %v2900 = vpop.permute.xlu0 %2899
        %2901 = vrot.lane.b32.xlu0 %v2780, 7
        %v2902 = vpop.permute.xlu0 %2901
        %2903 = vrot.lane.b32.xlu0 %v2782, 7
        %v2904 = vpop.permute.xlu0 %2903
        %2905 = vrot.lane.b32.xlu0 %v2784, 7
        %v2906 = vpop.permute.xlu0 %2905
        %2907 = vrot.lane.b32.xlu0 %v2786, 7
        %v2908 = vpop.permute.xlu0 %2907
        %2909 = vrot.lane.b32.xlu0 %v2788, 7
        %v2910 = vpop.permute.xlu0 %2909
        %2911 = vrot.lane.b32.xlu0 %v2790, 7
        %v2912 = vpop.permute.xlu0 %2911
        %2913 = vrot.lane.b32.xlu0 %v2792, 7
        %v2914 = vpop.permute.xlu0 %2913
        %2915 = vrot.lane.b32.xlu0 %v2794, 7
        %v2916 = vpop.permute.xlu0 %2915
        %2917 = vrot.lane.b32.xlu0 %v2796, 7
        %v2918 = vpop.permute.xlu0 %2917
        %2919 = vrot.lane.b32.xlu0 %v2798, 7
        %v2920 = vpop.permute.xlu0 %2919
        %2921 = vrot.lane.b32.xlu0 %v2800, 7
        %v2922 = vpop.permute.xlu0 %2921
        %2923 = vrot.lane.b32.xlu0 %v2802, 7
        %v2924 = vpop.permute.xlu0 %2923
        %2925 = vrot.lane.b32.xlu0 %v2804, 7
        %v2926 = vpop.permute.xlu0 %2925
        %2927 = vrot.lane.b32.xlu0 %v2806, 7
        %v2928 = vpop.permute.xlu0 %2927
        %2929 = vrot.lane.b32.xlu0 %v2808, 7
        %v2930 = vpop.permute.xlu0 %2929
        %2931 = vrot.lane.b32.xlu0 %v2810, 7
        %v2932 = vpop.permute.xlu0 %2931
        %2933 = vrot.lane.b32.xlu0 %v2812, 7
        %v2934 = vpop.permute.xlu0 %2933
        %2935 = vrot.lane.b32.xlu0 %v2814, 7
        %v2936 = vpop.permute.xlu0 %2935
        %2937 = vrot.lane.b32.xlu0 %v2816, 7
        %v2938 = vpop.permute.xlu0 %2937
        %2939 = vrot.lane.b32.xlu0 %v2818, 7
        %v2940 = vpop.permute.xlu0 %2939
        %2941 = vrot.lane.b32.xlu0 %v2820, 7
        %v2942 = vpop.permute.xlu0 %2941
        %2943 = vrot.lane.b32.xlu0 %v2822, 7
        %v2944 = vpop.permute.xlu0 %2943
        %2945 = vrot.lane.b32.xlu0 %v2824, 7
        %v2946 = vpop.permute.xlu0 %2945
        %2947 = vrot.lane.b32.xlu0 %v2826, 7
        %v2948 = vpop.permute.xlu0 %2947
        %2949 = vrot.lane.b32.xlu0 %v2828, 7
        %v2950 = vpop.permute.xlu0 %2949
        %2951 = vrot.lane.b32.xlu0 %v2830, 7
        %v2952 = vpop.permute.xlu0 %2951
        %2953 = vrot.lane.b32.xlu0 %v2832, 7
        %v2954 = vpop.permute.xlu0 %2953
        %2955 = vrot.lane.b32.xlu0 %v2834, 7
        %v2956 = vpop.permute.xlu0 %2955
        %2957 = vrot.lane.b32.xlu0 %v2836, 7
        %v2958 = vpop.permute.xlu0 %2957
        %2959 = vrot.lane.b32.xlu0 %v2838, 7
        %v2960 = vpop.permute.xlu0 %2959
        %2961 = vrot.lane.b32.xlu0 %v2840, 7
        %v2962 = vpop.permute.xlu0 %2961
        %2963 = vrot.lane.b32.xlu0 %v2842, 7
        %v2964 = vpop.permute.xlu0 %2963
        %2965 = vrot.lane.b32.xlu0 %v2844, 7
        %v2966 = vpop.permute.xlu0 %2965
        %2967 = vrot.lane.b32.xlu0 %v2846, 7
        %v2968 = vpop.permute.xlu0 %2967
        %2969 = vrot.lane.b32.xlu0 %v2848, 7
        %v2970 = vpop.permute.xlu0 %2969
        %2971 = vrot.lane.b32.xlu0 %v2850, 7
        %v2972 = vpop.permute.xlu0 %2971
        %2973 = vrot.lane.b32.xlu0 %v2852, 7
        %v2974 = vpop.permute.xlu0 %2973
        %2975 = vrot.lane.b32.xlu0 %v2854, 7
        %v2976 = vpop.permute.xlu0 %2975
        %2977 = vrot.lane.b32.xlu0 %v2856, 7
        %v2978 = vpop.permute.xlu0 %2977
        %2979 = vrot.lane.b32.xlu0 %v2858, 7
        %v2980 = vpop.permute.xlu0 %2979
        %2981 = vrot.lane.b32.xlu0 %v2860, 7
        %v2982 = vpop.permute.xlu0 %2981
        %2983 = vrot.lane.b32.xlu0 %v2862, 7
        %v2984 = vpop.permute.xlu0 %2983
        %2985 = vrot.lane.b32.xlu0 %v2864, 7
        %v2986 = vpop.permute.xlu0 %2985
        %2987 = vrot.lane.b32.xlu0 %v2866, 7
        %v2988 = vpop.permute.xlu0 %2987
        %2989 = vrot.lane.b32.xlu0 %v2868, 7
        %v2990 = vpop.permute.xlu0 %2989
        %2991 = vrot.lane.b32.xlu0 %v2870, 7
        %v2992 = vpop.permute.xlu0 %2991
        %2993 = vrot.lane.b32.xlu0 %v2872, 7
        %v2994 = vpop.permute.xlu0 %2993
        %2995 = vrot.lane.b32.xlu0 %v2874, 7
        %v2996 = vpop.permute.xlu0 %2995
        %2997 = vrot.lane.b32.xlu0 %v2876, 7
        %v2998 = vpop.permute.xlu0 %2997
        %2999 = vrot.lane.b32.xlu0 %v2878, 7
        %v3000 = vpop.permute.xlu0 %2999
        %3001 = vrot.lane.b32.xlu0 %v2880, 7
        %v3002 = vpop.permute.xlu0 %3001
        %3003 = vrot.lane.b32.xlu0 %v2882, 7
        %v3004 = vpop.permute.xlu0 %3003
        %3005 = vrot.lane.b32.xlu0 %v2884, 7
        %v3006 = vpop.permute.xlu0 %3005
        %3007 = vrot.lane.b32.xlu0 %v2886, 7
        %v3008 = vpop.permute.xlu0 %3007
        %3009 = vrot.lane.b32.xlu0 %v2888, 7
        %v3010 = vpop.permute.xlu0 %3009
        %3011 = vrot.lane.b32.xlu0 %v2890, 7
        %v3012 = vpop.permute.xlu0 %3011
        %3013 = vrot.lane.b32.xlu0 %v2892, 7
        %v3014 = vpop.permute.xlu0 %3013
        %3015 = vrot.lane.b32.xlu0 %v2894, 7
        %v3016 = vpop.permute.xlu0 %3015
        %3017 = vrot.lane.b32.xlu0 %v2896, 7
        %v3018 = vpop.permute.xlu0 %3017
        %3019 = vrot.lane.b32.xlu0 %v2898, 7
        %v3020 = vpop.permute.xlu0 %3019
        %3082 = vrot.lane.b32.xlu0 %v807, 8
        %v3083 = vpop.permute.xlu0 %3082
        %3084 = vrot.lane.b32.xlu0 %v808, 8
        %v3085 = vpop.permute.xlu0 %3084
        %3086 = vrot.lane.b32.xlu0 %v809, 8
        %v3087 = vpop.permute.xlu0 %3086
        %3088 = vrot.lane.b32.xlu0 %v810, 8
        %v3089 = vpop.permute.xlu0 %3088
        %3090 = vrot.lane.b32.xlu0 %v811, 8
        %v3091 = vpop.permute.xlu0 %3090
        %3092 = vrot.lane.b32.xlu0 %v812, 8
        %v3093 = vpop.permute.xlu0 %3092
        %3094 = vrot.lane.b32.xlu0 %v813, 8
        %v3095 = vpop.permute.xlu0 %3094
        %3096 = vrot.lane.b32.xlu0 %v814, 8
        %v3097 = vpop.permute.xlu0 %3096
        %3098 = vrot.lane.b32.xlu0 %v815, 8
        %v3099 = vpop.permute.xlu0 %3098
        %3100 = vrot.lane.b32.xlu0 %v816, 8
        %v3101 = vpop.permute.xlu0 %3100
        %3102 = vrot.lane.b32.xlu0 %v817, 8
        %v3103 = vpop.permute.xlu0 %3102
        %3104 = vrot.lane.b32.xlu0 %v818, 8
        %v3105 = vpop.permute.xlu0 %3104
        %3106 = vrot.lane.b32.xlu0 %v819, 8
        %v3107 = vpop.permute.xlu0 %3106
        %3108 = vrot.lane.b32.xlu0 %v820, 8
        %v3109 = vpop.permute.xlu0 %3108
        %3110 = vrot.lane.b32.xlu0 %v821, 8
        %v3111 = vpop.permute.xlu0 %3110
        %3112 = vrot.lane.b32.xlu0 %v822, 8
        %v3113 = vpop.permute.xlu0 %3112
        %3114 = vrot.lane.b32.xlu0 %v823, 8
        %v3115 = vpop.permute.xlu0 %3114
        %3116 = vrot.lane.b32.xlu0 %v824, 8
        %v3117 = vpop.permute.xlu0 %3116
        %3118 = vrot.lane.b32.xlu0 %v825, 8
        %v3119 = vpop.permute.xlu0 %3118
        %3120 = vrot.lane.b32.xlu0 %v826, 8
        %v3121 = vpop.permute.xlu0 %3120
        %3122 = vrot.lane.b32.xlu0 %v827, 8
        %v3123 = vpop.permute.xlu0 %3122
        %3124 = vrot.lane.b32.xlu0 %v828, 8
        %v3125 = vpop.permute.xlu0 %3124
        %3126 = vrot.lane.b32.xlu0 %v829, 8
        %v3127 = vpop.permute.xlu0 %3126
        %3128 = vrot.lane.b32.xlu0 %v830, 8
        %v3129 = vpop.permute.xlu0 %3128
        %3130 = vrot.lane.b32.xlu0 %v831, 8
        %v3131 = vpop.permute.xlu0 %3130
        %3132 = vrot.lane.b32.xlu0 %v832, 8
        %v3133 = vpop.permute.xlu0 %3132
        %3134 = vrot.lane.b32.xlu0 %v833, 8
        %v3135 = vpop.permute.xlu0 %3134
        %3136 = vrot.lane.b32.xlu0 %v834, 8
        %v3137 = vpop.permute.xlu0 %3136
        %3138 = vrot.lane.b32.xlu0 %v835, 8
        %v3139 = vpop.permute.xlu0 %3138
        %3140 = vrot.lane.b32.xlu0 %v836, 8
        %v3141 = vpop.permute.xlu0 %3140
        %3142 = vrot.lane.b32.xlu0 %v837, 8
        %v3143 = vpop.permute.xlu0 %3142
        %3144 = vrot.lane.b32.xlu0 %v838, 8
        %v3145 = vpop.permute.xlu0 %3144
        %3146 = vrot.lane.b32.xlu0 %v839, 8
        %v3147 = vpop.permute.xlu0 %3146
        %3148 = vrot.lane.b32.xlu0 %v840, 8
        %v3149 = vpop.permute.xlu0 %3148
        %3150 = vrot.lane.b32.xlu0 %v841, 8
        %v3151 = vpop.permute.xlu0 %3150
        %3152 = vrot.lane.b32.xlu0 %v842, 8
        %v3153 = vpop.permute.xlu0 %3152
        %3154 = vrot.lane.b32.xlu0 %v843, 8
        %v3155 = vpop.permute.xlu0 %3154
        %3156 = vrot.lane.b32.xlu0 %v844, 8
        %v3157 = vpop.permute.xlu0 %3156
        %3158 = vrot.lane.b32.xlu0 %v845, 8
        %v3159 = vpop.permute.xlu0 %3158
        %3160 = vrot.lane.b32.xlu0 %v846, 8
        %v3161 = vpop.permute.xlu0 %3160
        %3162 = vrot.lane.b32.xlu0 %v847, 8
        %v3163 = vpop.permute.xlu0 %3162
        %3164 = vrot.lane.b32.xlu0 %v848, 8
        %v3165 = vpop.permute.xlu0 %3164
        %3166 = vrot.lane.b32.xlu0 %v849, 8
        %v3167 = vpop.permute.xlu0 %3166
        %3168 = vrot.lane.b32.xlu0 %v850, 8
        %v3169 = vpop.permute.xlu0 %3168
        %3170 = vrot.lane.b32.xlu0 %v851, 8
        %v3171 = vpop.permute.xlu0 %3170
        %3172 = vrot.lane.b32.xlu0 %v852, 8
        %v3173 = vpop.permute.xlu0 %3172
        %3174 = vrot.lane.b32.xlu0 %v853, 8
        %v3175 = vpop.permute.xlu0 %3174
        %3176 = vrot.lane.b32.xlu0 %v854, 8
        %v3177 = vpop.permute.xlu0 %3176
        %3178 = vrot.lane.b32.xlu0 %v855, 8
        %v3179 = vpop.permute.xlu0 %3178
        %3180 = vrot.lane.b32.xlu0 %v856, 8
        %v3181 = vpop.permute.xlu0 %3180
        %3182 = vrot.lane.b32.xlu0 %v857, 8
        %v3183 = vpop.permute.xlu0 %3182
        %3184 = vrot.lane.b32.xlu0 %v858, 8
        %v3185 = vpop.permute.xlu0 %3184
        %3186 = vrot.lane.b32.xlu0 %v859, 8
        %v3187 = vpop.permute.xlu0 %3186
        %3188 = vrot.lane.b32.xlu0 %v860, 8
        %v3189 = vpop.permute.xlu0 %3188
        %3190 = vrot.lane.b32.xlu0 %v861, 8
        %v3191 = vpop.permute.xlu0 %3190
        %3192 = vrot.lane.b32.xlu0 %v862, 8
        %v3193 = vpop.permute.xlu0 %3192
        %3194 = vrot.lane.b32.xlu0 %v863, 8
        %v3195 = vpop.permute.xlu0 %3194
        %3196 = vrot.lane.b32.xlu0 %v864, 8
        %v3197 = vpop.permute.xlu0 %3196
        %3198 = vrot.lane.b32.xlu0 %v865, 8
        %v3199 = vpop.permute.xlu0 %3198
        %3200 = vrot.lane.b32.xlu0 %v866, 8
        %v3201 = vpop.permute.xlu0 %3200
        %3202 = vrot.lane.b32.xlu0 %v867, 8
        %v3203 = vpop.permute.xlu0 %3202
        %v3266 = vrot.slane %v868, 1
        %v3267 = vsel %vm933, %v1055, %v3266
        %3268 = vrot.lane.b32.xlu0 %v938, 9
        %v3269 = vpop.permute.xlu0 %3268
        %3270 = vrot.lane.b32.xlu0 %v940, 9
        %v3271 = vpop.permute.xlu0 %3270
        %3272 = vrot.lane.b32.xlu0 %v942, 9
        %v3273 = vpop.permute.xlu0 %3272
        %3274 = vrot.lane.b32.xlu0 %v944, 9
        %v3275 = vpop.permute.xlu0 %3274
        %3276 = vrot.lane.b32.xlu0 %v946, 9
        %v3277 = vpop.permute.xlu0 %3276
        %3278 = vrot.lane.b32.xlu0 %v948, 9
        %v3279 = vpop.permute.xlu0 %3278
        %3280 = vrot.lane.b32.xlu0 %v950, 9
        %v3281 = vpop.permute.xlu0 %3280
        %3282 = vrot.lane.b32.xlu0 %v952, 9
        %v3283 = vpop.permute.xlu0 %3282
        %3284 = vrot.lane.b32.xlu0 %v954, 9
        %v3285 = vpop.permute.xlu0 %3284
        %3286 = vrot.lane.b32.xlu0 %v956, 9
        %v3287 = vpop.permute.xlu0 %3286
        %3288 = vrot.lane.b32.xlu0 %v958, 9
        %v3289 = vpop.permute.xlu0 %3288
        %3290 = vrot.lane.b32.xlu0 %v960, 9
        %v3291 = vpop.permute.xlu0 %3290
        %3292 = vrot.lane.b32.xlu0 %v962, 9
        %v3293 = vpop.permute.xlu0 %3292
        %3294 = vrot.lane.b32.xlu0 %v964, 9
        %v3295 = vpop.permute.xlu0 %3294
        %3296 = vrot.lane.b32.xlu0 %v966, 9
        %v3297 = vpop.permute.xlu0 %3296
        %3298 = vrot.lane.b32.xlu0 %v968, 9
        %v3299 = vpop.permute.xlu0 %3298
        %3300 = vrot.lane.b32.xlu0 %v970, 9
        %v3301 = vpop.permute.xlu0 %3300
        %3302 = vrot.lane.b32.xlu0 %v972, 9
        %v3303 = vpop.permute.xlu0 %3302
        %3304 = vrot.lane.b32.xlu0 %v974, 9
        %v3305 = vpop.permute.xlu0 %3304
        %3306 = vrot.lane.b32.xlu0 %v976, 9
        %v3307 = vpop.permute.xlu0 %3306
        %3308 = vrot.lane.b32.xlu0 %v978, 9
        %v3309 = vpop.permute.xlu0 %3308
        %3310 = vrot.lane.b32.xlu0 %v980, 9
        %v3311 = vpop.permute.xlu0 %3310
        %3312 = vrot.lane.b32.xlu0 %v982, 9
        %v3313 = vpop.permute.xlu0 %3312
        %3314 = vrot.lane.b32.xlu0 %v984, 9
        %v3315 = vpop.permute.xlu0 %3314
        %3316 = vrot.lane.b32.xlu0 %v986, 9
        %v3317 = vpop.permute.xlu0 %3316
        %3318 = vrot.lane.b32.xlu0 %v988, 9
        %v3319 = vpop.permute.xlu0 %3318
        %3320 = vrot.lane.b32.xlu0 %v990, 9
        %v3321 = vpop.permute.xlu0 %3320
        %3322 = vrot.lane.b32.xlu0 %v992, 9
        %v3323 = vpop.permute.xlu0 %3322
        %3324 = vrot.lane.b32.xlu0 %v994, 9
        %v3325 = vpop.permute.xlu0 %3324
        %3326 = vrot.lane.b32.xlu0 %v996, 9
        %v3327 = vpop.permute.xlu0 %3326
        %3328 = vrot.lane.b32.xlu0 %v998, 9
        %v3329 = vpop.permute.xlu0 %3328
        %3330 = vrot.lane.b32.xlu0 %v1000, 9
        %v3331 = vpop.permute.xlu0 %3330
        %3332 = vrot.lane.b32.xlu0 %v1002, 9
        %v3333 = vpop.permute.xlu0 %3332
        %3334 = vrot.lane.b32.xlu0 %v1004, 9
        %v3335 = vpop.permute.xlu0 %3334
        %3336 = vrot.lane.b32.xlu0 %v1006, 9
        %v3337 = vpop.permute.xlu0 %3336
        %3338 = vrot.lane.b32.xlu0 %v1008, 9
        %v3339 = vpop.permute.xlu0 %3338
        %3340 = vrot.lane.b32.xlu0 %v1010, 9
        %v3341 = vpop.permute.xlu0 %3340
        %3342 = vrot.lane.b32.xlu0 %v1012, 9
        %v3343 = vpop.permute.xlu0 %3342
        %3344 = vrot.lane.b32.xlu0 %v1014, 9
        %v3345 = vpop.permute.xlu0 %3344
        %3346 = vrot.lane.b32.xlu0 %v1016, 9
        %v3347 = vpop.permute.xlu0 %3346
        %3348 = vrot.lane.b32.xlu0 %v1018, 9
        %v3349 = vpop.permute.xlu0 %3348
        %3350 = vrot.lane.b32.xlu0 %v1020, 9
        %v3351 = vpop.permute.xlu0 %3350
        %3352 = vrot.lane.b32.xlu0 %v1022, 9
        %v3353 = vpop.permute.xlu0 %3352
        %3354 = vrot.lane.b32.xlu0 %v1024, 9
        %v3355 = vpop.permute.xlu0 %3354
        %3356 = vrot.lane.b32.xlu0 %v1026, 9
        %v3357 = vpop.permute.xlu0 %3356
        %3358 = vrot.lane.b32.xlu0 %v1028, 9
        %v3359 = vpop.permute.xlu0 %3358
        %3360 = vrot.lane.b32.xlu0 %v1030, 9
        %v3361 = vpop.permute.xlu0 %3360
        %3362 = vrot.lane.b32.xlu0 %v1032, 9
        %v3363 = vpop.permute.xlu0 %3362
        %3364 = vrot.lane.b32.xlu0 %v1034, 9
        %v3365 = vpop.permute.xlu0 %3364
        %3366 = vrot.lane.b32.xlu0 %v1036, 9
        %v3367 = vpop.permute.xlu0 %3366
        %3368 = vrot.lane.b32.xlu0 %v1038, 9
        %v3369 = vpop.permute.xlu0 %3368
        %3370 = vrot.lane.b32.xlu0 %v1040, 9
        %v3371 = vpop.permute.xlu0 %3370
        %3372 = vrot.lane.b32.xlu0 %v1042, 9
        %v3373 = vpop.permute.xlu0 %3372
        %3374 = vrot.lane.b32.xlu0 %v1044, 9
        %v3375 = vpop.permute.xlu0 %3374
        %3376 = vrot.lane.b32.xlu0 %v1046, 9
        %v3377 = vpop.permute.xlu0 %3376
        %3378 = vrot.lane.b32.xlu0 %v1048, 9
        %v3379 = vpop.permute.xlu0 %3378
        %3380 = vrot.lane.b32.xlu0 %v1050, 9
        %v3381 = vpop.permute.xlu0 %3380
        %3382 = vrot.lane.b32.xlu0 %v1052, 9
        %v3383 = vpop.permute.xlu0 %3382
        %3384 = vrot.lane.b32.xlu0 %v1054, 9
        %v3385 = vpop.permute.xlu0 %3384
        %3386 = vrot.lane.b32.xlu0 %v1056, 9
        %v3387 = vpop.permute.xlu0 %3386
        %3388 = vrot.lane.b32.xlu0 %v3267, 9
        %v3389 = vpop.permute.xlu0 %3388
        %v3451 = vrot.slane %v868, 2
        %v3452 = vsel %vm1240, %v1362, %v3451
        %3453 = vrot.lane.b32.xlu0 %v1245, 10
        %v3454 = vpop.permute.xlu0 %3453
        %3455 = vrot.lane.b32.xlu0 %v1247, 10
        %v3456 = vpop.permute.xlu0 %3455
        %3457 = vrot.lane.b32.xlu0 %v1249, 10
        %v3458 = vpop.permute.xlu0 %3457
        %3459 = vrot.lane.b32.xlu0 %v1251, 10
        %v3460 = vpop.permute.xlu0 %3459
        %3461 = vrot.lane.b32.xlu0 %v1253, 10
        %v3462 = vpop.permute.xlu0 %3461
        %3463 = vrot.lane.b32.xlu0 %v1255, 10
        %v3464 = vpop.permute.xlu0 %3463
        %3465 = vrot.lane.b32.xlu0 %v1257, 10
        %v3466 = vpop.permute.xlu0 %3465
        %3467 = vrot.lane.b32.xlu0 %v1259, 10
        %v3468 = vpop.permute.xlu0 %3467
        %3469 = vrot.lane.b32.xlu0 %v1261, 10
        %v3470 = vpop.permute.xlu0 %3469
        %3471 = vrot.lane.b32.xlu0 %v1263, 10
        %v3472 = vpop.permute.xlu0 %3471
        %3473 = vrot.lane.b32.xlu0 %v1265, 10
        %v3474 = vpop.permute.xlu0 %3473
        %3475 = vrot.lane.b32.xlu0 %v1267, 10
        %v3476 = vpop.permute.xlu0 %3475
        %3477 = vrot.lane.b32.xlu0 %v1269, 10
        %v3478 = vpop.permute.xlu0 %3477
        %3479 = vrot.lane.b32.xlu0 %v1271, 10
        %v3480 = vpop.permute.xlu0 %3479
        %3481 = vrot.lane.b32.xlu0 %v1273, 10
        %v3482 = vpop.permute.xlu0 %3481
        %3483 = vrot.lane.b32.xlu0 %v1275, 10
        %v3484 = vpop.permute.xlu0 %3483
        %3485 = vrot.lane.b32.xlu0 %v1277, 10
        %v3486 = vpop.permute.xlu0 %3485
        %3487 = vrot.lane.b32.xlu0 %v1279, 10
        %v3488 = vpop.permute.xlu0 %3487
        %3489 = vrot.lane.b32.xlu0 %v1281, 10
        %v3490 = vpop.permute.xlu0 %3489
        %3491 = vrot.lane.b32.xlu0 %v1283, 10
        %v3492 = vpop.permute.xlu0 %3491
        %3493 = vrot.lane.b32.xlu0 %v1285, 10
        %v3494 = vpop.permute.xlu0 %3493
        %3495 = vrot.lane.b32.xlu0 %v1287, 10
        %v3496 = vpop.permute.xlu0 %3495
        %3497 = vrot.lane.b32.xlu0 %v1289, 10
        %v3498 = vpop.permute.xlu0 %3497
        %3499 = vrot.lane.b32.xlu0 %v1291, 10
        %v3500 = vpop.permute.xlu0 %3499
        %3501 = vrot.lane.b32.xlu0 %v1293, 10
        %v3502 = vpop.permute.xlu0 %3501
        %3503 = vrot.lane.b32.xlu0 %v1295, 10
        %v3504 = vpop.permute.xlu0 %3503
        %3505 = vrot.lane.b32.xlu0 %v1297, 10
        %v3506 = vpop.permute.xlu0 %3505
        %3507 = vrot.lane.b32.xlu0 %v1299, 10
        %v3508 = vpop.permute.xlu0 %3507
        %3509 = vrot.lane.b32.xlu0 %v1301, 10
        %v3510 = vpop.permute.xlu0 %3509
        %3511 = vrot.lane.b32.xlu0 %v1303, 10
        %v3512 = vpop.permute.xlu0 %3511
        %3513 = vrot.lane.b32.xlu0 %v1305, 10
        %v3514 = vpop.permute.xlu0 %3513
        %3515 = vrot.lane.b32.xlu0 %v1307, 10
        %v3516 = vpop.permute.xlu0 %3515
        %3517 = vrot.lane.b32.xlu0 %v1309, 10
        %v3518 = vpop.permute.xlu0 %3517
        %3519 = vrot.lane.b32.xlu0 %v1311, 10
        %v3520 = vpop.permute.xlu0 %3519
        %3521 = vrot.lane.b32.xlu0 %v1313, 10
        %v3522 = vpop.permute.xlu0 %3521
        %3523 = vrot.lane.b32.xlu0 %v1315, 10
        %v3524 = vpop.permute.xlu0 %3523
        %3525 = vrot.lane.b32.xlu0 %v1317, 10
        %v3526 = vpop.permute.xlu0 %3525
        %3527 = vrot.lane.b32.xlu0 %v1319, 10
        %v3528 = vpop.permute.xlu0 %3527
        %3529 = vrot.lane.b32.xlu0 %v1321, 10
        %v3530 = vpop.permute.xlu0 %3529
        %3531 = vrot.lane.b32.xlu0 %v1323, 10
        %v3532 = vpop.permute.xlu0 %3531
        %3533 = vrot.lane.b32.xlu0 %v1325, 10
        %v3534 = vpop.permute.xlu0 %3533
        %3535 = vrot.lane.b32.xlu0 %v1327, 10
        %v3536 = vpop.permute.xlu0 %3535
        %3537 = vrot.lane.b32.xlu0 %v1329, 10
        %v3538 = vpop.permute.xlu0 %3537
        %3539 = vrot.lane.b32.xlu0 %v1331, 10
        %v3540 = vpop.permute.xlu0 %3539
        %3541 = vrot.lane.b32.xlu0 %v1333, 10
        %v3542 = vpop.permute.xlu0 %3541
        %3543 = vrot.lane.b32.xlu0 %v1335, 10
        %v3544 = vpop.permute.xlu0 %3543
        %3545 = vrot.lane.b32.xlu0 %v1337, 10
        %v3546 = vpop.permute.xlu0 %3545
        %3547 = vrot.lane.b32.xlu0 %v1339, 10
        %v3548 = vpop.permute.xlu0 %3547
        %3549 = vrot.lane.b32.xlu0 %v1341, 10
        %v3550 = vpop.permute.xlu0 %3549
        %3551 = vrot.lane.b32.xlu0 %v1343, 10
        %v3552 = vpop.permute.xlu0 %3551
        %3553 = vrot.lane.b32.xlu0 %v1345, 10
        %v3554 = vpop.permute.xlu0 %3553
        %3555 = vrot.lane.b32.xlu0 %v1347, 10
        %v3556 = vpop.permute.xlu0 %3555
        %3557 = vrot.lane.b32.xlu0 %v1349, 10
        %v3558 = vpop.permute.xlu0 %3557
        %3559 = vrot.lane.b32.xlu0 %v1351, 10
        %v3560 = vpop.permute.xlu0 %3559
        %3561 = vrot.lane.b32.xlu0 %v1353, 10
        %v3562 = vpop.permute.xlu0 %3561
        %3563 = vrot.lane.b32.xlu0 %v1355, 10
        %v3564 = vpop.permute.xlu0 %3563
        %3565 = vrot.lane.b32.xlu0 %v1357, 10
        %v3566 = vpop.permute.xlu0 %3565
        %3567 = vrot.lane.b32.xlu0 %v1359, 10
        %v3568 = vpop.permute.xlu0 %3567
        %3569 = vrot.lane.b32.xlu0 %v1361, 10
        %v3570 = vpop.permute.xlu0 %3569
        %3571 = vrot.lane.b32.xlu0 %v1363, 10
        %v3572 = vpop.permute.xlu0 %3571
        %3573 = vrot.lane.b32.xlu0 %v3452, 10
        %v3574 = vpop.permute.xlu0 %3573
        %v3636 = vrot.slane %v868, 3
        %v3637 = vsel %vm1547, %v1669, %v3636
        %3638 = vrot.lane.b32.xlu0 %v1552, 11
        %v3639 = vpop.permute.xlu0 %3638
        %3640 = vrot.lane.b32.xlu0 %v1554, 11
        %v3641 = vpop.permute.xlu0 %3640
        %3642 = vrot.lane.b32.xlu0 %v1556, 11
        %v3643 = vpop.permute.xlu0 %3642
        %3644 = vrot.lane.b32.xlu0 %v1558, 11
        %v3645 = vpop.permute.xlu0 %3644
        %3646 = vrot.lane.b32.xlu0 %v1560, 11
        %v3647 = vpop.permute.xlu0 %3646
        %3648 = vrot.lane.b32.xlu0 %v1562, 11
        %v3649 = vpop.permute.xlu0 %3648
        %3650 = vrot.lane.b32.xlu0 %v1564, 11
        %v3651 = vpop.permute.xlu0 %3650
        %3652 = vrot.lane.b32.xlu0 %v1566, 11
        %v3653 = vpop.permute.xlu0 %3652
        %3654 = vrot.lane.b32.xlu0 %v1568, 11
        %v3655 = vpop.permute.xlu0 %3654
        %3656 = vrot.lane.b32.xlu0 %v1570, 11
        %v3657 = vpop.permute.xlu0 %3656
        %3658 = vrot.lane.b32.xlu0 %v1572, 11
        %v3659 = vpop.permute.xlu0 %3658
        %3660 = vrot.lane.b32.xlu0 %v1574, 11
        %v3661 = vpop.permute.xlu0 %3660
        %3662 = vrot.lane.b32.xlu0 %v1576, 11
        %v3663 = vpop.permute.xlu0 %3662
        %3664 = vrot.lane.b32.xlu0 %v1578, 11
        %v3665 = vpop.permute.xlu0 %3664
        %3666 = vrot.lane.b32.xlu0 %v1580, 11
        %v3667 = vpop.permute.xlu0 %3666
        %3668 = vrot.lane.b32.xlu0 %v1582, 11
        %v3669 = vpop.permute.xlu0 %3668
        %3670 = vrot.lane.b32.xlu0 %v1584, 11
        %v3671 = vpop.permute.xlu0 %3670
        %3672 = vrot.lane.b32.xlu0 %v1586, 11
        %v3673 = vpop.permute.xlu0 %3672
        %3674 = vrot.lane.b32.xlu0 %v1588, 11
        %v3675 = vpop.permute.xlu0 %3674
        %3676 = vrot.lane.b32.xlu0 %v1590, 11
        %v3677 = vpop.permute.xlu0 %3676
        %3678 = vrot.lane.b32.xlu0 %v1592, 11
        %v3679 = vpop.permute.xlu0 %3678
        %3680 = vrot.lane.b32.xlu0 %v1594, 11
        %v3681 = vpop.permute.xlu0 %3680
        %3682 = vrot.lane.b32.xlu0 %v1596, 11
        %v3683 = vpop.permute.xlu0 %3682
        %3684 = vrot.lane.b32.xlu0 %v1598, 11
        %v3685 = vpop.permute.xlu0 %3684
        %3686 = vrot.lane.b32.xlu0 %v1600, 11
        %v3687 = vpop.permute.xlu0 %3686
        %3688 = vrot.lane.b32.xlu0 %v1602, 11
        %v3689 = vpop.permute.xlu0 %3688
        %3690 = vrot.lane.b32.xlu0 %v1604, 11
        %v3691 = vpop.permute.xlu0 %3690
        %3692 = vrot.lane.b32.xlu0 %v1606, 11
        %v3693 = vpop.permute.xlu0 %3692
        %3694 = vrot.lane.b32.xlu0 %v1608, 11
        %v3695 = vpop.permute.xlu0 %3694
        %3696 = vrot.lane.b32.xlu0 %v1610, 11
        %v3697 = vpop.permute.xlu0 %3696
        %3698 = vrot.lane.b32.xlu0 %v1612, 11
        %v3699 = vpop.permute.xlu0 %3698
        %3700 = vrot.lane.b32.xlu0 %v1614, 11
        %v3701 = vpop.permute.xlu0 %3700
        %3702 = vrot.lane.b32.xlu0 %v1616, 11
        %v3703 = vpop.permute.xlu0 %3702
        %3704 = vrot.lane.b32.xlu0 %v1618, 11
        %v3705 = vpop.permute.xlu0 %3704
        %3706 = vrot.lane.b32.xlu0 %v1620, 11
        %v3707 = vpop.permute.xlu0 %3706
        %3708 = vrot.lane.b32.xlu0 %v1622, 11
        %v3709 = vpop.permute.xlu0 %3708
        %3710 = vrot.lane.b32.xlu0 %v1624, 11
        %v3711 = vpop.permute.xlu0 %3710
        %3712 = vrot.lane.b32.xlu0 %v1626, 11
        %v3713 = vpop.permute.xlu0 %3712
        %3714 = vrot.lane.b32.xlu0 %v1628, 11
        %v3715 = vpop.permute.xlu0 %3714
        %3716 = vrot.lane.b32.xlu0 %v1630, 11
        %v3717 = vpop.permute.xlu0 %3716
        %3718 = vrot.lane.b32.xlu0 %v1632, 11
        %v3719 = vpop.permute.xlu0 %3718
        %3720 = vrot.lane.b32.xlu0 %v1634, 11
        %v3721 = vpop.permute.xlu0 %3720
        %3722 = vrot.lane.b32.xlu0 %v1636, 11
        %v3723 = vpop.permute.xlu0 %3722
        %3724 = vrot.lane.b32.xlu0 %v1638, 11
        %v3725 = vpop.permute.xlu0 %3724
        %3726 = vrot.lane.b32.xlu0 %v1640, 11
        %v3727 = vpop.permute.xlu0 %3726
        %3728 = vrot.lane.b32.xlu0 %v1642, 11
        %v3729 = vpop.permute.xlu0 %3728
        %3730 = vrot.lane.b32.xlu0 %v1644, 11
        %v3731 = vpop.permute.xlu0 %3730
        %3732 = vrot.lane.b32.xlu0 %v1646, 11
        %v3733 = vpop.permute.xlu0 %3732
        %3734 = vrot.lane.b32.xlu0 %v1648, 11
        %v3735 = vpop.permute.xlu0 %3734
        %3736 = vrot.lane.b32.xlu0 %v1650, 11
        %v3737 = vpop.permute.xlu0 %3736
        %3738 = vrot.lane.b32.xlu0 %v1652, 11
        %v3739 = vpop.permute.xlu0 %3738
        %3740 = vrot.lane.b32.xlu0 %v1654, 11
        %v3741 = vpop.permute.xlu0 %3740
        %3742 = vrot.lane.b32.xlu0 %v1656, 11
        %v3743 = vpop.permute.xlu0 %3742
        %3744 = vrot.lane.b32.xlu0 %v1658, 11
        %v3745 = vpop.permute.xlu0 %3744
        %3746 = vrot.lane.b32.xlu0 %v1660, 11
        %v3747 = vpop.permute.xlu0 %3746
        %3748 = vrot.lane.b32.xlu0 %v1662, 11
        %v3749 = vpop.permute.xlu0 %3748
        %3750 = vrot.lane.b32.xlu0 %v1664, 11
        %v3751 = vpop.permute.xlu0 %3750
        %3752 = vrot.lane.b32.xlu0 %v1666, 11
        %v3753 = vpop.permute.xlu0 %3752
        %3754 = vrot.lane.b32.xlu0 %v1668, 11
        %v3755 = vpop.permute.xlu0 %3754
        %3756 = vrot.lane.b32.xlu0 %v1670, 11
        %v3757 = vpop.permute.xlu0 %3756
        %3758 = vrot.lane.b32.xlu0 %v3637, 11
        %v3759 = vpop.permute.xlu0 %3758
        %v3821 = vrot.slane %v868, 4
        %v3822 = vsel %vm1854, %v1976, %v3821
        %3823 = vrot.lane.b32.xlu0 %v1859, 12
        %v3824 = vpop.permute.xlu0 %3823
        %3825 = vrot.lane.b32.xlu0 %v1861, 12
        %v3826 = vpop.permute.xlu0 %3825
        %3827 = vrot.lane.b32.xlu0 %v1863, 12
        %v3828 = vpop.permute.xlu0 %3827
        %3829 = vrot.lane.b32.xlu0 %v1865, 12
        %v3830 = vpop.permute.xlu0 %3829
        %3831 = vrot.lane.b32.xlu0 %v1867, 12
        %v3832 = vpop.permute.xlu0 %3831
        %3833 = vrot.lane.b32.xlu0 %v1869, 12
        %v3834 = vpop.permute.xlu0 %3833
        %3835 = vrot.lane.b32.xlu0 %v1871, 12
        %v3836 = vpop.permute.xlu0 %3835
        %3837 = vrot.lane.b32.xlu0 %v1873, 12
        %v3838 = vpop.permute.xlu0 %3837
        %3839 = vrot.lane.b32.xlu0 %v1875, 12
        %v3840 = vpop.permute.xlu0 %3839
        %3841 = vrot.lane.b32.xlu0 %v1877, 12
        %v3842 = vpop.permute.xlu0 %3841
        %3843 = vrot.lane.b32.xlu0 %v1879, 12
        %v3844 = vpop.permute.xlu0 %3843
        %3845 = vrot.lane.b32.xlu0 %v1881, 12
        %v3846 = vpop.permute.xlu0 %3845
        %3847 = vrot.lane.b32.xlu0 %v1883, 12
        %v3848 = vpop.permute.xlu0 %3847
        %3849 = vrot.lane.b32.xlu0 %v1885, 12
        %v3850 = vpop.permute.xlu0 %3849
        %3851 = vrot.lane.b32.xlu0 %v1887, 12
        %v3852 = vpop.permute.xlu0 %3851
        %3853 = vrot.lane.b32.xlu0 %v1889, 12
        %v3854 = vpop.permute.xlu0 %3853
        %3855 = vrot.lane.b32.xlu0 %v1891, 12
        %v3856 = vpop.permute.xlu0 %3855
        %3857 = vrot.lane.b32.xlu0 %v1893, 12
        %v3858 = vpop.permute.xlu0 %3857
        %3859 = vrot.lane.b32.xlu0 %v1895, 12
        %v3860 = vpop.permute.xlu0 %3859
        %3861 = vrot.lane.b32.xlu0 %v1897, 12
        %v3862 = vpop.permute.xlu0 %3861
        %3863 = vrot.lane.b32.xlu0 %v1899, 12
        %v3864 = vpop.permute.xlu0 %3863
        %3865 = vrot.lane.b32.xlu0 %v1901, 12
        %v3866 = vpop.permute.xlu0 %3865
        %3867 = vrot.lane.b32.xlu0 %v1903, 12
        %v3868 = vpop.permute.xlu0 %3867
        %3869 = vrot.lane.b32.xlu0 %v1905, 12
        %v3870 = vpop.permute.xlu0 %3869
        %3871 = vrot.lane.b32.xlu0 %v1907, 12
        %v3872 = vpop.permute.xlu0 %3871
        %3873 = vrot.lane.b32.xlu0 %v1909, 12
        %v3874 = vpop.permute.xlu0 %3873
        %3875 = vrot.lane.b32.xlu0 %v1911, 12
        %v3876 = vpop.permute.xlu0 %3875
        %3877 = vrot.lane.b32.xlu0 %v1913, 12
        %v3878 = vpop.permute.xlu0 %3877
        %3879 = vrot.lane.b32.xlu0 %v1915, 12
        %v3880 = vpop.permute.xlu0 %3879
        %3881 = vrot.lane.b32.xlu0 %v1917, 12
        %v3882 = vpop.permute.xlu0 %3881
        %3883 = vrot.lane.b32.xlu0 %v1919, 12
        %v3884 = vpop.permute.xlu0 %3883
        %3885 = vrot.lane.b32.xlu0 %v1921, 12
        %v3886 = vpop.permute.xlu0 %3885
        %3887 = vrot.lane.b32.xlu0 %v1923, 12
        %v3888 = vpop.permute.xlu0 %3887
        %3889 = vrot.lane.b32.xlu0 %v1925, 12
        %v3890 = vpop.permute.xlu0 %3889
        %3891 = vrot.lane.b32.xlu0 %v1927, 12
        %v3892 = vpop.permute.xlu0 %3891
        %3893 = vrot.lane.b32.xlu0 %v1929, 12
        %v3894 = vpop.permute.xlu0 %3893
        %3895 = vrot.lane.b32.xlu0 %v1931, 12
        %v3896 = vpop.permute.xlu0 %3895
        %3897 = vrot.lane.b32.xlu0 %v1933, 12
        %v3898 = vpop.permute.xlu0 %3897
        %3899 = vrot.lane.b32.xlu0 %v1935, 12
        %v3900 = vpop.permute.xlu0 %3899
        %3901 = vrot.lane.b32.xlu0 %v1937, 12
        %v3902 = vpop.permute.xlu0 %3901
        %3903 = vrot.lane.b32.xlu0 %v1939, 12
        %v3904 = vpop.permute.xlu0 %3903
        %3905 = vrot.lane.b32.xlu0 %v1941, 12
        %v3906 = vpop.permute.xlu0 %3905
        %3907 = vrot.lane.b32.xlu0 %v1943, 12
        %v3908 = vpop.permute.xlu0 %3907
        %3909 = vrot.lane.b32.xlu0 %v1945, 12
        %v3910 = vpop.permute.xlu0 %3909
        %3911 = vrot.lane.b32.xlu0 %v1947, 12
        %v3912 = vpop.permute.xlu0 %3911
        %3913 = vrot.lane.b32.xlu0 %v1949, 12
        %v3914 = vpop.permute.xlu0 %3913
        %3915 = vrot.lane.b32.xlu0 %v1951, 12
        %v3916 = vpop.permute.xlu0 %3915
        %3917 = vrot.lane.b32.xlu0 %v1953, 12
        %v3918 = vpop.permute.xlu0 %3917
        %3919 = vrot.lane.b32.xlu0 %v1955, 12
        %v3920 = vpop.permute.xlu0 %3919
        %3921 = vrot.lane.b32.xlu0 %v1957, 12
        %v3922 = vpop.permute.xlu0 %3921
        %3923 = vrot.lane.b32.xlu0 %v1959, 12
        %v3924 = vpop.permute.xlu0 %3923
        %3925 = vrot.lane.b32.xlu0 %v1961, 12
        %v3926 = vpop.permute.xlu0 %3925
        %3927 = vrot.lane.b32.xlu0 %v1963, 12
        %v3928 = vpop.permute.xlu0 %3927
        %3929 = vrot.lane.b32.xlu0 %v1965, 12
        %v3930 = vpop.permute.xlu0 %3929
        %3931 = vrot.lane.b32.xlu0 %v1967, 12
        %v3932 = vpop.permute.xlu0 %3931
        %3933 = vrot.lane.b32.xlu0 %v1969, 12
        %v3934 = vpop.permute.xlu0 %3933
        %3935 = vrot.lane.b32.xlu0 %v1971, 12
        %v3936 = vpop.permute.xlu0 %3935
        %3937 = vrot.lane.b32.xlu0 %v1973, 12
        %v3938 = vpop.permute.xlu0 %3937
        %3939 = vrot.lane.b32.xlu0 %v1975, 12
        %v3940 = vpop.permute.xlu0 %3939
        %3941 = vrot.lane.b32.xlu0 %v1977, 12
        %v3942 = vpop.permute.xlu0 %3941
        %3943 = vrot.lane.b32.xlu0 %v3822, 12
        %v3944 = vpop.permute.xlu0 %3943
        %v4006 = vrot.slane %v868, 5
        %v4007 = vsel %vm2161, %v2283, %v4006
        %4008 = vrot.lane.b32.xlu0 %v2166, 13
        %v4009 = vpop.permute.xlu0 %4008
        %4010 = vrot.lane.b32.xlu0 %v2168, 13
        %v4011 = vpop.permute.xlu0 %4010
        %4012 = vrot.lane.b32.xlu0 %v2170, 13
        %v4013 = vpop.permute.xlu0 %4012
        %4014 = vrot.lane.b32.xlu0 %v2172, 13
        %v4015 = vpop.permute.xlu0 %4014
        %4016 = vrot.lane.b32.xlu0 %v2174, 13
        %v4017 = vpop.permute.xlu0 %4016
        %4018 = vrot.lane.b32.xlu0 %v2176, 13
        %v4019 = vpop.permute.xlu0 %4018
        %4020 = vrot.lane.b32.xlu0 %v2178, 13
        %v4021 = vpop.permute.xlu0 %4020
        %4022 = vrot.lane.b32.xlu0 %v2180, 13
        %v4023 = vpop.permute.xlu0 %4022
        %4024 = vrot.lane.b32.xlu0 %v2182, 13
        %v4025 = vpop.permute.xlu0 %4024
        %4026 = vrot.lane.b32.xlu0 %v2184, 13
        %v4027 = vpop.permute.xlu0 %4026
        %4028 = vrot.lane.b32.xlu0 %v2186, 13
        %v4029 = vpop.permute.xlu0 %4028
        %4030 = vrot.lane.b32.xlu0 %v2188, 13
        %v4031 = vpop.permute.xlu0 %4030
        %4032 = vrot.lane.b32.xlu0 %v2190, 13
        %v4033 = vpop.permute.xlu0 %4032
        %4034 = vrot.lane.b32.xlu0 %v2192, 13
        %v4035 = vpop.permute.xlu0 %4034
        %4036 = vrot.lane.b32.xlu0 %v2194, 13
        %v4037 = vpop.permute.xlu0 %4036
        %4038 = vrot.lane.b32.xlu0 %v2196, 13
        %v4039 = vpop.permute.xlu0 %4038
        %4040 = vrot.lane.b32.xlu0 %v2198, 13
        %v4041 = vpop.permute.xlu0 %4040
        %4042 = vrot.lane.b32.xlu0 %v2200, 13
        %v4043 = vpop.permute.xlu0 %4042
        %4044 = vrot.lane.b32.xlu0 %v2202, 13
        %v4045 = vpop.permute.xlu0 %4044
        %4046 = vrot.lane.b32.xlu0 %v2204, 13
        %v4047 = vpop.permute.xlu0 %4046
        %4048 = vrot.lane.b32.xlu0 %v2206, 13
        %v4049 = vpop.permute.xlu0 %4048
        %4050 = vrot.lane.b32.xlu0 %v2208, 13
        %v4051 = vpop.permute.xlu0 %4050
        %4052 = vrot.lane.b32.xlu0 %v2210, 13
        %v4053 = vpop.permute.xlu0 %4052
        %4054 = vrot.lane.b32.xlu0 %v2212, 13
        %v4055 = vpop.permute.xlu0 %4054
        %4056 = vrot.lane.b32.xlu0 %v2214, 13
        %v4057 = vpop.permute.xlu0 %4056
        %4058 = vrot.lane.b32.xlu0 %v2216, 13
        %v4059 = vpop.permute.xlu0 %4058
        %4060 = vrot.lane.b32.xlu0 %v2218, 13
        %v4061 = vpop.permute.xlu0 %4060
        %4062 = vrot.lane.b32.xlu0 %v2220, 13
        %v4063 = vpop.permute.xlu0 %4062
        %4064 = vrot.lane.b32.xlu0 %v2222, 13
        %v4065 = vpop.permute.xlu0 %4064
        %4066 = vrot.lane.b32.xlu0 %v2224, 13
        %v4067 = vpop.permute.xlu0 %4066
        %4068 = vrot.lane.b32.xlu0 %v2226, 13
        %v4069 = vpop.permute.xlu0 %4068
        %4070 = vrot.lane.b32.xlu0 %v2228, 13
        %v4071 = vpop.permute.xlu0 %4070
        %4072 = vrot.lane.b32.xlu0 %v2230, 13
        %v4073 = vpop.permute.xlu0 %4072
        %4074 = vrot.lane.b32.xlu0 %v2232, 13
        %v4075 = vpop.permute.xlu0 %4074
        %4076 = vrot.lane.b32.xlu0 %v2234, 13
        %v4077 = vpop.permute.xlu0 %4076
        %4078 = vrot.lane.b32.xlu0 %v2236, 13
        %v4079 = vpop.permute.xlu0 %4078
        %4080 = vrot.lane.b32.xlu0 %v2238, 13
        %v4081 = vpop.permute.xlu0 %4080
        %4082 = vrot.lane.b32.xlu0 %v2240, 13
        %v4083 = vpop.permute.xlu0 %4082
        %4084 = vrot.lane.b32.xlu0 %v2242, 13
        %v4085 = vpop.permute.xlu0 %4084
        %4086 = vrot.lane.b32.xlu0 %v2244, 13
        %v4087 = vpop.permute.xlu0 %4086
        %4088 = vrot.lane.b32.xlu0 %v2246, 13
        %v4089 = vpop.permute.xlu0 %4088
        %4090 = vrot.lane.b32.xlu0 %v2248, 13
        %v4091 = vpop.permute.xlu0 %4090
        %4092 = vrot.lane.b32.xlu0 %v2250, 13
        %v4093 = vpop.permute.xlu0 %4092
        %4094 = vrot.lane.b32.xlu0 %v2252, 13
        %v4095 = vpop.permute.xlu0 %4094
        %4096 = vrot.lane.b32.xlu0 %v2254, 13
        %v4097 = vpop.permute.xlu0 %4096
        %4098 = vrot.lane.b32.xlu0 %v2256, 13
        %v4099 = vpop.permute.xlu0 %4098
        %4100 = vrot.lane.b32.xlu0 %v2258, 13
        %v4101 = vpop.permute.xlu0 %4100
        %4102 = vrot.lane.b32.xlu0 %v2260, 13
        %v4103 = vpop.permute.xlu0 %4102
        %4104 = vrot.lane.b32.xlu0 %v2262, 13
        %v4105 = vpop.permute.xlu0 %4104
        %4106 = vrot.lane.b32.xlu0 %v2264, 13
        %v4107 = vpop.permute.xlu0 %4106
        %4108 = vrot.lane.b32.xlu0 %v2266, 13
        %v4109 = vpop.permute.xlu0 %4108
        %4110 = vrot.lane.b32.xlu0 %v2268, 13
        %v4111 = vpop.permute.xlu0 %4110
        %4112 = vrot.lane.b32.xlu0 %v2270, 13
        %v4113 = vpop.permute.xlu0 %4112
        %4114 = vrot.lane.b32.xlu0 %v2272, 13
        %v4115 = vpop.permute.xlu0 %4114
        %4116 = vrot.lane.b32.xlu0 %v2274, 13
        %v4117 = vpop.permute.xlu0 %4116
        %4118 = vrot.lane.b32.xlu0 %v2276, 13
        %v4119 = vpop.permute.xlu0 %4118
        %4120 = vrot.lane.b32.xlu0 %v2278, 13
        %v4121 = vpop.permute.xlu0 %4120
        %4122 = vrot.lane.b32.xlu0 %v2280, 13
        %v4123 = vpop.permute.xlu0 %4122
        %4124 = vrot.lane.b32.xlu0 %v2282, 13
        %v4125 = vpop.permute.xlu0 %4124
        %4126 = vrot.lane.b32.xlu0 %v2284, 13
        %v4127 = vpop.permute.xlu0 %4126
        %4128 = vrot.lane.b32.xlu0 %v4007, 13
        %v4129 = vpop.permute.xlu0 %4128
        %v4191 = vrot.slane %v868, 6
        %v4192 = vsel %vm2468, %v2590, %v4191
        %4193 = vrot.lane.b32.xlu0 %v2473, 14
        %v4194 = vpop.permute.xlu0 %4193
        %4195 = vrot.lane.b32.xlu0 %v2475, 14
        %v4196 = vpop.permute.xlu0 %4195
        %4197 = vrot.lane.b32.xlu0 %v2477, 14
        %v4198 = vpop.permute.xlu0 %4197
        %4199 = vrot.lane.b32.xlu0 %v2479, 14
        %v4200 = vpop.permute.xlu0 %4199
        %4201 = vrot.lane.b32.xlu0 %v2481, 14
        %v4202 = vpop.permute.xlu0 %4201
        %4203 = vrot.lane.b32.xlu0 %v2483, 14
        %v4204 = vpop.permute.xlu0 %4203
        %4205 = vrot.lane.b32.xlu0 %v2485, 14
        %v4206 = vpop.permute.xlu0 %4205
        %4207 = vrot.lane.b32.xlu0 %v2487, 14
        %v4208 = vpop.permute.xlu0 %4207
        %4209 = vrot.lane.b32.xlu0 %v2489, 14
        %v4210 = vpop.permute.xlu0 %4209
        %4211 = vrot.lane.b32.xlu0 %v2491, 14
        %v4212 = vpop.permute.xlu0 %4211
        %4213 = vrot.lane.b32.xlu0 %v2493, 14
        %v4214 = vpop.permute.xlu0 %4213
        %4215 = vrot.lane.b32.xlu0 %v2495, 14
        %v4216 = vpop.permute.xlu0 %4215
        %4217 = vrot.lane.b32.xlu0 %v2497, 14
        %v4218 = vpop.permute.xlu0 %4217
        %4219 = vrot.lane.b32.xlu0 %v2499, 14
        %v4220 = vpop.permute.xlu0 %4219
        %4221 = vrot.lane.b32.xlu0 %v2501, 14
        %v4222 = vpop.permute.xlu0 %4221
        %4223 = vrot.lane.b32.xlu0 %v2503, 14
        %v4224 = vpop.permute.xlu0 %4223
        %4225 = vrot.lane.b32.xlu0 %v2505, 14
        %v4226 = vpop.permute.xlu0 %4225
        %4227 = vrot.lane.b32.xlu0 %v2507, 14
        %v4228 = vpop.permute.xlu0 %4227
        %4229 = vrot.lane.b32.xlu0 %v2509, 14
        %v4230 = vpop.permute.xlu0 %4229
        %4231 = vrot.lane.b32.xlu0 %v2511, 14
        %v4232 = vpop.permute.xlu0 %4231
        %4233 = vrot.lane.b32.xlu0 %v2513, 14
        %v4234 = vpop.permute.xlu0 %4233
        %4235 = vrot.lane.b32.xlu0 %v2515, 14
        %v4236 = vpop.permute.xlu0 %4235
        %4237 = vrot.lane.b32.xlu0 %v2517, 14
        %v4238 = vpop.permute.xlu0 %4237
        %4239 = vrot.lane.b32.xlu0 %v2519, 14
        %v4240 = vpop.permute.xlu0 %4239
        %4241 = vrot.lane.b32.xlu0 %v2521, 14
        %v4242 = vpop.permute.xlu0 %4241
        %4243 = vrot.lane.b32.xlu0 %v2523, 14
        %v4244 = vpop.permute.xlu0 %4243
        %4245 = vrot.lane.b32.xlu0 %v2525, 14
        %v4246 = vpop.permute.xlu0 %4245
        %4247 = vrot.lane.b32.xlu0 %v2527, 14
        %v4248 = vpop.permute.xlu0 %4247
        %4249 = vrot.lane.b32.xlu0 %v2529, 14
        %v4250 = vpop.permute.xlu0 %4249
        %4251 = vrot.lane.b32.xlu0 %v2531, 14
        %v4252 = vpop.permute.xlu0 %4251
        %4253 = vrot.lane.b32.xlu0 %v2533, 14
        %v4254 = vpop.permute.xlu0 %4253
        %4255 = vrot.lane.b32.xlu0 %v2535, 14
        %v4256 = vpop.permute.xlu0 %4255
        %4257 = vrot.lane.b32.xlu0 %v2537, 14
        %v4258 = vpop.permute.xlu0 %4257
        %4259 = vrot.lane.b32.xlu0 %v2539, 14
        %v4260 = vpop.permute.xlu0 %4259
        %4261 = vrot.lane.b32.xlu0 %v2541, 14
        %v4262 = vpop.permute.xlu0 %4261
        %4263 = vrot.lane.b32.xlu0 %v2543, 14
        %v4264 = vpop.permute.xlu0 %4263
        %4265 = vrot.lane.b32.xlu0 %v2545, 14
        %v4266 = vpop.permute.xlu0 %4265
        %4267 = vrot.lane.b32.xlu0 %v2547, 14
        %v4268 = vpop.permute.xlu0 %4267
        %4269 = vrot.lane.b32.xlu0 %v2549, 14
        %v4270 = vpop.permute.xlu0 %4269
        %4271 = vrot.lane.b32.xlu0 %v2551, 14
        %v4272 = vpop.permute.xlu0 %4271
        %4273 = vrot.lane.b32.xlu0 %v2553, 14
        %v4274 = vpop.permute.xlu0 %4273
        %4275 = vrot.lane.b32.xlu0 %v2555, 14
        %v4276 = vpop.permute.xlu0 %4275
        %4277 = vrot.lane.b32.xlu0 %v2557, 14
        %v4278 = vpop.permute.xlu0 %4277
        %4279 = vrot.lane.b32.xlu0 %v2559, 14
        %v4280 = vpop.permute.xlu0 %4279
        %4281 = vrot.lane.b32.xlu0 %v2561, 14
        %v4282 = vpop.permute.xlu0 %4281
        %4283 = vrot.lane.b32.xlu0 %v2563, 14
        %v4284 = vpop.permute.xlu0 %4283
        %4285 = vrot.lane.b32.xlu0 %v2565, 14
        %v4286 = vpop.permute.xlu0 %4285
        %4287 = vrot.lane.b32.xlu0 %v2567, 14
        %v4288 = vpop.permute.xlu0 %4287
        %4289 = vrot.lane.b32.xlu0 %v2569, 14
        %v4290 = vpop.permute.xlu0 %4289
        %4291 = vrot.lane.b32.xlu0 %v2571, 14
        %v4292 = vpop.permute.xlu0 %4291
        %4293 = vrot.lane.b32.xlu0 %v2573, 14
        %v4294 = vpop.permute.xlu0 %4293
        %4295 = vrot.lane.b32.xlu0 %v2575, 14
        %v4296 = vpop.permute.xlu0 %4295
        %4297 = vrot.lane.b32.xlu0 %v2577, 14
        %v4298 = vpop.permute.xlu0 %4297
        %4299 = vrot.lane.b32.xlu0 %v2579, 14
        %v4300 = vpop.permute.xlu0 %4299
        %4301 = vrot.lane.b32.xlu0 %v2581, 14
        %v4302 = vpop.permute.xlu0 %4301
        %4303 = vrot.lane.b32.xlu0 %v2583, 14
        %v4304 = vpop.permute.xlu0 %4303
        %4305 = vrot.lane.b32.xlu0 %v2585, 14
        %v4306 = vpop.permute.xlu0 %4305
        %4307 = vrot.lane.b32.xlu0 %v2587, 14
        %v4308 = vpop.permute.xlu0 %4307
        %4309 = vrot.lane.b32.xlu0 %v2589, 14
        %v4310 = vpop.permute.xlu0 %4309
        %4311 = vrot.lane.b32.xlu0 %v2591, 14
        %v4312 = vpop.permute.xlu0 %4311
        %4313 = vrot.lane.b32.xlu0 %v4192, 14
        %v4314 = vpop.permute.xlu0 %4313
        %v4376 = vrot.slane %v868, 7
        %v4377 = vsel %vm2775, %v2897, %v4376
        %4378 = vrot.lane.b32.xlu0 %v2780, 15
        %v4379 = vpop.permute.xlu0 %4378
        %4380 = vrot.lane.b32.xlu0 %v2782, 15
        %v4381 = vpop.permute.xlu0 %4380
        %4382 = vrot.lane.b32.xlu0 %v2784, 15
        %v4383 = vpop.permute.xlu0 %4382
        %4384 = vrot.lane.b32.xlu0 %v2786, 15
        %v4385 = vpop.permute.xlu0 %4384
        %4386 = vrot.lane.b32.xlu0 %v2788, 15
        %v4387 = vpop.permute.xlu0 %4386
        %4388 = vrot.lane.b32.xlu0 %v2790, 15
        %v4389 = vpop.permute.xlu0 %4388
        %4390 = vrot.lane.b32.xlu0 %v2792, 15
        %v4391 = vpop.permute.xlu0 %4390
        %4392 = vrot.lane.b32.xlu0 %v2794, 15
        %v4393 = vpop.permute.xlu0 %4392
        %4394 = vrot.lane.b32.xlu0 %v2796, 15
        %v4395 = vpop.permute.xlu0 %4394
        %4396 = vrot.lane.b32.xlu0 %v2798, 15
        %v4397 = vpop.permute.xlu0 %4396
        %4398 = vrot.lane.b32.xlu0 %v2800, 15
        %v4399 = vpop.permute.xlu0 %4398
        %4400 = vrot.lane.b32.xlu0 %v2802, 15
        %v4401 = vpop.permute.xlu0 %4400
        %4402 = vrot.lane.b32.xlu0 %v2804, 15
        %v4403 = vpop.permute.xlu0 %4402
        %4404 = vrot.lane.b32.xlu0 %v2806, 15
        %v4405 = vpop.permute.xlu0 %4404
        %4406 = vrot.lane.b32.xlu0 %v2808, 15
        %v4407 = vpop.permute.xlu0 %4406
        %4408 = vrot.lane.b32.xlu0 %v2810, 15
        %v4409 = vpop.permute.xlu0 %4408
        %4410 = vrot.lane.b32.xlu0 %v2812, 15
        %v4411 = vpop.permute.xlu0 %4410
        %4412 = vrot.lane.b32.xlu0 %v2814, 15
        %v4413 = vpop.permute.xlu0 %4412
        %4414 = vrot.lane.b32.xlu0 %v2816, 15
        %v4415 = vpop.permute.xlu0 %4414
        %4416 = vrot.lane.b32.xlu0 %v2818, 15
        %v4417 = vpop.permute.xlu0 %4416
        %4418 = vrot.lane.b32.xlu0 %v2820, 15
        %v4419 = vpop.permute.xlu0 %4418
        %4420 = vrot.lane.b32.xlu0 %v2822, 15
        %v4421 = vpop.permute.xlu0 %4420
        %4422 = vrot.lane.b32.xlu0 %v2824, 15
        %v4423 = vpop.permute.xlu0 %4422
        %4424 = vrot.lane.b32.xlu0 %v2826, 15
        %v4425 = vpop.permute.xlu0 %4424
        %4426 = vrot.lane.b32.xlu0 %v2828, 15
        %v4427 = vpop.permute.xlu0 %4426
        %4428 = vrot.lane.b32.xlu0 %v2830, 15
        %v4429 = vpop.permute.xlu0 %4428
        %4430 = vrot.lane.b32.xlu0 %v2832, 15
        %v4431 = vpop.permute.xlu0 %4430
        %4432 = vrot.lane.b32.xlu0 %v2834, 15
        %v4433 = vpop.permute.xlu0 %4432
        %4434 = vrot.lane.b32.xlu0 %v2836, 15
        %v4435 = vpop.permute.xlu0 %4434
        %4436 = vrot.lane.b32.xlu0 %v2838, 15
        %v4437 = vpop.permute.xlu0 %4436
        %4438 = vrot.lane.b32.xlu0 %v2840, 15
        %v4439 = vpop.permute.xlu0 %4438
        %4440 = vrot.lane.b32.xlu0 %v2842, 15
        %v4441 = vpop.permute.xlu0 %4440
        %4442 = vrot.lane.b32.xlu0 %v2844, 15
        %v4443 = vpop.permute.xlu0 %4442
        %4444 = vrot.lane.b32.xlu0 %v2846, 15
        %v4445 = vpop.permute.xlu0 %4444
        %4446 = vrot.lane.b32.xlu0 %v2848, 15
        %v4447 = vpop.permute.xlu0 %4446
        %4448 = vrot.lane.b32.xlu0 %v2850, 15
        %v4449 = vpop.permute.xlu0 %4448
        %4450 = vrot.lane.b32.xlu0 %v2852, 15
        %v4451 = vpop.permute.xlu0 %4450
        %4452 = vrot.lane.b32.xlu0 %v2854, 15
        %v4453 = vpop.permute.xlu0 %4452
        %4454 = vrot.lane.b32.xlu0 %v2856, 15
        %v4455 = vpop.permute.xlu0 %4454
        %4456 = vrot.lane.b32.xlu0 %v2858, 15
        %v4457 = vpop.permute.xlu0 %4456
        %4458 = vrot.lane.b32.xlu0 %v2860, 15
        %v4459 = vpop.permute.xlu0 %4458
        %4460 = vrot.lane.b32.xlu0 %v2862, 15
        %v4461 = vpop.permute.xlu0 %4460
        %4462 = vrot.lane.b32.xlu0 %v2864, 15
        %v4463 = vpop.permute.xlu0 %4462
        %4464 = vrot.lane.b32.xlu0 %v2866, 15
        %v4465 = vpop.permute.xlu0 %4464
        %4466 = vrot.lane.b32.xlu0 %v2868, 15
        %v4467 = vpop.permute.xlu0 %4466
        %4468 = vrot.lane.b32.xlu0 %v2870, 15
        %v4469 = vpop.permute.xlu0 %4468
        %4470 = vrot.lane.b32.xlu0 %v2872, 15
        %v4471 = vpop.permute.xlu0 %4470
        %4472 = vrot.lane.b32.xlu0 %v2874, 15
        %v4473 = vpop.permute.xlu0 %4472
        %4474 = vrot.lane.b32.xlu0 %v2876, 15
        %v4475 = vpop.permute.xlu0 %4474
        %4476 = vrot.lane.b32.xlu0 %v2878, 15
        %v4477 = vpop.permute.xlu0 %4476
        %4478 = vrot.lane.b32.xlu0 %v2880, 15
        %v4479 = vpop.permute.xlu0 %4478
        %4480 = vrot.lane.b32.xlu0 %v2882, 15
        %v4481 = vpop.permute.xlu0 %4480
        %4482 = vrot.lane.b32.xlu0 %v2884, 15
        %v4483 = vpop.permute.xlu0 %4482
        %4484 = vrot.lane.b32.xlu0 %v2886, 15
        %v4485 = vpop.permute.xlu0 %4484
        %4486 = vrot.lane.b32.xlu0 %v2888, 15
        %v4487 = vpop.permute.xlu0 %4486
        %4488 = vrot.lane.b32.xlu0 %v2890, 15
        %v4489 = vpop.permute.xlu0 %4488
        %4490 = vrot.lane.b32.xlu0 %v2892, 15
        %v4491 = vpop.permute.xlu0 %4490
        %4492 = vrot.lane.b32.xlu0 %v2894, 15
        %v4493 = vpop.permute.xlu0 %4492
        %4494 = vrot.lane.b32.xlu0 %v2896, 15
        %v4495 = vpop.permute.xlu0 %4494
        %4496 = vrot.lane.b32.xlu0 %v2898, 15
        %v4497 = vpop.permute.xlu0 %4496
        %4498 = vrot.lane.b32.xlu0 %v4377, 15
        %v4499 = vpop.permute.xlu0 %4498
        %vm4561 = vcmask 7168
        %v4562 = vsel %vm4561, %v806, %v1058
        %v4563 = vsel %vm4561, %v807, %v1060
        %v4564 = vsel %vm4561, %v808, %v1062
        %v4565 = vsel %vm4561, %v809, %v1064
        %v4566 = vsel %vm4561, %v810, %v1066
        %v4567 = vsel %vm4561, %v811, %v1068
        %v4568 = vsel %vm4561, %v812, %v1070
        %v4569 = vsel %vm4561, %v813, %v1072
        %v4570 = vsel %vm4561, %v814, %v1074
        %v4571 = vsel %vm4561, %v815, %v1076
        %v4572 = vsel %vm4561, %v816, %v1078
        %v4573 = vsel %vm4561, %v817, %v1080
        %v4574 = vsel %vm4561, %v818, %v1082
        %v4575 = vsel %vm4561, %v819, %v1084
        %v4576 = vsel %vm4561, %v820, %v1086
        %v4577 = vsel %vm4561, %v821, %v1088
        %v4578 = vsel %vm4561, %v822, %v1090
        %v4579 = vsel %vm4561, %v823, %v1092
        %v4580 = vsel %vm4561, %v824, %v1094
        %v4581 = vsel %vm4561, %v825, %v1096
        %v4582 = vsel %vm4561, %v826, %v1098
        %v4583 = vsel %vm4561, %v827, %v1100
        %v4584 = vsel %vm4561, %v828, %v1102
        %v4585 = vsel %vm4561, %v829, %v1104
        %v4586 = vsel %vm4561, %v830, %v1106
        %v4587 = vsel %vm4561, %v831, %v1108
        %v4588 = vsel %vm4561, %v832, %v1110
        %v4589 = vsel %vm4561, %v833, %v1112
        %v4590 = vsel %vm4561, %v834, %v1114
        %v4591 = vsel %vm4561, %v835, %v1116
        %v4592 = vsel %vm4561, %v836, %v1118
        %v4593 = vsel %vm4561, %v837, %v1120
        %v4594 = vsel %vm4561, %v838, %v1122
        %v4595 = vsel %vm4561, %v839, %v1124
        %v4596 = vsel %vm4561, %v840, %v1126
        %v4597 = vsel %vm4561, %v841, %v1128
        %v4598 = vsel %vm4561, %v842, %v1130
        %v4599 = vsel %vm4561, %v843, %v1132
        %v4600 = vsel %vm4561, %v844, %v1134
        %v4601 = vsel %vm4561, %v845, %v1136
        %v4602 = vsel %vm4561, %v846, %v1138
        %v4603 = vsel %vm4561, %v847, %v1140
        %v4604 = vsel %vm4561, %v848, %v1142
        %v4605 = vsel %vm4561, %v849, %v1144
        %v4606 = vsel %vm4561, %v850, %v1146
        %v4607 = vsel %vm4561, %v851, %v1148
        %v4608 = vsel %vm4561, %v852, %v1150
        %v4609 = vsel %vm4561, %v853, %v1152
        %v4610 = vsel %vm4561, %v854, %v1154
        %v4611 = vsel %vm4561, %v855, %v1156
        %v4612 = vsel %vm4561, %v856, %v1158
        %v4613 = vsel %vm4561, %v857, %v1160
        %v4614 = vsel %vm4561, %v858, %v1162
        %v4615 = vsel %vm4561, %v859, %v1164
        %v4616 = vsel %vm4561, %v860, %v1166
        %v4617 = vsel %vm4561, %v861, %v1168
        %v4618 = vsel %vm4561, %v862, %v1170
        %v4619 = vsel %vm4561, %v863, %v1172
        %v4620 = vsel %vm4561, %v864, %v1174
        %v4621 = vsel %vm4561, %v865, %v1176
        %v4622 = vsel %vm4561, %v866, %v1178
        %vm4623 = vcmask 15360
        %v4624 = vsel %vm4623, %v4562, %v1365
        %v4625 = vsel %vm4623, %v4563, %v1367
        %v4626 = vsel %vm4623, %v4564, %v1369
        %v4627 = vsel %vm4623, %v4565, %v1371
        %v4628 = vsel %vm4623, %v4566, %v1373
        %v4629 = vsel %vm4623, %v4567, %v1375
        %v4630 = vsel %vm4623, %v4568, %v1377
        %v4631 = vsel %vm4623, %v4569, %v1379
        %v4632 = vsel %vm4623, %v4570, %v1381
        %v4633 = vsel %vm4623, %v4571, %v1383
        %v4634 = vsel %vm4623, %v4572, %v1385
        %v4635 = vsel %vm4623, %v4573, %v1387
        %v4636 = vsel %vm4623, %v4574, %v1389
        %v4637 = vsel %vm4623, %v4575, %v1391
        %v4638 = vsel %vm4623, %v4576, %v1393
        %v4639 = vsel %vm4623, %v4577, %v1395
        %v4640 = vsel %vm4623, %v4578, %v1397
        %v4641 = vsel %vm4623, %v4579, %v1399
        %v4642 = vsel %vm4623, %v4580, %v1401
        %v4643 = vsel %vm4623, %v4581, %v1403
        %v4644 = vsel %vm4623, %v4582, %v1405
        %v4645 = vsel %vm4623, %v4583, %v1407
        %v4646 = vsel %vm4623, %v4584, %v1409
        %v4647 = vsel %vm4623, %v4585, %v1411
        %v4648 = vsel %vm4623, %v4586, %v1413
        %v4649 = vsel %vm4623, %v4587, %v1415
        %v4650 = vsel %vm4623, %v4588, %v1417
        %v4651 = vsel %vm4623, %v4589, %v1419
        %v4652 = vsel %vm4623, %v4590, %v1421
        %v4653 = vsel %vm4623, %v4591, %v1423
        %v4654 = vsel %vm4623, %v4592, %v1425
        %v4655 = vsel %vm4623, %v4593, %v1427
        %v4656 = vsel %vm4623, %v4594, %v1429
        %v4657 = vsel %vm4623, %v4595, %v1431
        %v4658 = vsel %vm4623, %v4596, %v1433
        %v4659 = vsel %vm4623, %v4597, %v1435
        %v4660 = vsel %vm4623, %v4598, %v1437
        %v4661 = vsel %vm4623, %v4599, %v1439
        %v4662 = vsel %vm4623, %v4600, %v1441
        %v4663 = vsel %vm4623, %v4601, %v1443
        %v4664 = vsel %vm4623, %v4602, %v1445
        %v4665 = vsel %vm4623, %v4603, %v1447
        %v4666 = vsel %vm4623, %v4604, %v1449
        %v4667 = vsel %vm4623, %v4605, %v1451
        %v4668 = vsel %vm4623, %v4606, %v1453
        %v4669 = vsel %vm4623, %v4607, %v1455
        %v4670 = vsel %vm4623, %v4608, %v1457
        %v4671 = vsel %vm4623, %v4609, %v1459
        %v4672 = vsel %vm4623, %v4610, %v1461
        %v4673 = vsel %vm4623, %v4611, %v1463
        %v4674 = vsel %vm4623, %v4612, %v1465
        %v4675 = vsel %vm4623, %v4613, %v1467
        %v4676 = vsel %vm4623, %v4614, %v1469
        %v4677 = vsel %vm4623, %v4615, %v1471
        %v4678 = vsel %vm4623, %v4616, %v1473
        %v4679 = vsel %vm4623, %v4617, %v1475
        %v4680 = vsel %vm4623, %v4618, %v1477
        %v4681 = vsel %vm4623, %v4619, %v1479
        %v4682 = vsel %vm4623, %v4620, %v1481
        %v4683 = vsel %vm4623, %v4621, %v1483
        %v4684 = vsel %vm4623, %v4622, %v1485
        %vm4685 = vcmask 23552
        %v4686 = vsel %vm4685, %v4624, %v1672
        %v4687 = vsel %vm4685, %v4625, %v1674
        %v4688 = vsel %vm4685, %v4626, %v1676
        %v4689 = vsel %vm4685, %v4627, %v1678
        %v4690 = vsel %vm4685, %v4628, %v1680
        %v4691 = vsel %vm4685, %v4629, %v1682
        %v4692 = vsel %vm4685, %v4630, %v1684
        %v4693 = vsel %vm4685, %v4631, %v1686
        %v4694 = vsel %vm4685, %v4632, %v1688
        %v4695 = vsel %vm4685, %v4633, %v1690
        %v4696 = vsel %vm4685, %v4634, %v1692
        %v4697 = vsel %vm4685, %v4635, %v1694
        %v4698 = vsel %vm4685, %v4636, %v1696
        %v4699 = vsel %vm4685, %v4637, %v1698
        %v4700 = vsel %vm4685, %v4638, %v1700
        %v4701 = vsel %vm4685, %v4639, %v1702
        %v4702 = vsel %vm4685, %v4640, %v1704
        %v4703 = vsel %vm4685, %v4641, %v1706
        %v4704 = vsel %vm4685, %v4642, %v1708
        %v4705 = vsel %vm4685, %v4643, %v1710
        %v4706 = vsel %vm4685, %v4644, %v1712
        %v4707 = vsel %vm4685, %v4645, %v1714
        %v4708 = vsel %vm4685, %v4646, %v1716
        %v4709 = vsel %vm4685, %v4647, %v1718
        %v4710 = vsel %vm4685, %v4648, %v1720
        %v4711 = vsel %vm4685, %v4649, %v1722
        %v4712 = vsel %vm4685, %v4650, %v1724
        %v4713 = vsel %vm4685, %v4651, %v1726
        %v4714 = vsel %vm4685, %v4652, %v1728
        %v4715 = vsel %vm4685, %v4653, %v1730
        %v4716 = vsel %vm4685, %v4654, %v1732
        %v4717 = vsel %vm4685, %v4655, %v1734
        %v4718 = vsel %vm4685, %v4656, %v1736
        %v4719 = vsel %vm4685, %v4657, %v1738
        %v4720 = vsel %vm4685, %v4658, %v1740
        %v4721 = vsel %vm4685, %v4659, %v1742
        %v4722 = vsel %vm4685, %v4660, %v1744
        %v4723 = vsel %vm4685, %v4661, %v1746
        %v4724 = vsel %vm4685, %v4662, %v1748
        %v4725 = vsel %vm4685, %v4663, %v1750
        %v4726 = vsel %vm4685, %v4664, %v1752
        %v4727 = vsel %vm4685, %v4665, %v1754
        %v4728 = vsel %vm4685, %v4666, %v1756
        %v4729 = vsel %vm4685, %v4667, %v1758
        %v4730 = vsel %vm4685, %v4668, %v1760
        %v4731 = vsel %vm4685, %v4669, %v1762
        %v4732 = vsel %vm4685, %v4670, %v1764
        %v4733 = vsel %vm4685, %v4671, %v1766
        %v4734 = vsel %vm4685, %v4672, %v1768
        %v4735 = vsel %vm4685, %v4673, %v1770
        %v4736 = vsel %vm4685, %v4674, %v1772
        %v4737 = vsel %vm4685, %v4675, %v1774
        %v4738 = vsel %vm4685, %v4676, %v1776
        %v4739 = vsel %vm4685, %v4677, %v1778
        %v4740 = vsel %vm4685, %v4678, %v1780
        %v4741 = vsel %vm4685, %v4679, %v1782
        %v4742 = vsel %vm4685, %v4680, %v1784
        %v4743 = vsel %vm4685, %v4681, %v1786
        %v4744 = vsel %vm4685, %v4682, %v1788
        %v4745 = vsel %vm4685, %v4683, %v1790
        %v4746 = vsel %vm4685, %v4684, %v1792
        %vm4747 = vcmask 31744
        %v4748 = vsel %vm4747, %v4686, %v1979
        %v4749 = vsel %vm4747, %v4687, %v1981
        %v4750 = vsel %vm4747, %v4688, %v1983
        %v4751 = vsel %vm4747, %v4689, %v1985
        %v4752 = vsel %vm4747, %v4690, %v1987
        %v4753 = vsel %vm4747, %v4691, %v1989
        %v4754 = vsel %vm4747, %v4692, %v1991
        %v4755 = vsel %vm4747, %v4693, %v1993
        %v4756 = vsel %vm4747, %v4694, %v1995
        %v4757 = vsel %vm4747, %v4695, %v1997
        %v4758 = vsel %vm4747, %v4696, %v1999
        %v4759 = vsel %vm4747, %v4697, %v2001
        %v4760 = vsel %vm4747, %v4698, %v2003
        %v4761 = vsel %vm4747, %v4699, %v2005
        %v4762 = vsel %vm4747, %v4700, %v2007
        %v4763 = vsel %vm4747, %v4701, %v2009
        %v4764 = vsel %vm4747, %v4702, %v2011
        %v4765 = vsel %vm4747, %v4703, %v2013
        %v4766 = vsel %vm4747, %v4704, %v2015
        %v4767 = vsel %vm4747, %v4705, %v2017
        %v4768 = vsel %vm4747, %v4706, %v2019
        %v4769 = vsel %vm4747, %v4707, %v2021
        %v4770 = vsel %vm4747, %v4708, %v2023
        %v4771 = vsel %vm4747, %v4709, %v2025
        %v4772 = vsel %vm4747, %v4710, %v2027
        %v4773 = vsel %vm4747, %v4711, %v2029
        %v4774 = vsel %vm4747, %v4712, %v2031
        %v4775 = vsel %vm4747, %v4713, %v2033
        %v4776 = vsel %vm4747, %v4714, %v2035
        %v4777 = vsel %vm4747, %v4715, %v2037
        %v4778 = vsel %vm4747, %v4716, %v2039
        %v4779 = vsel %vm4747, %v4717, %v2041
        %v4780 = vsel %vm4747, %v4718, %v2043
        %v4781 = vsel %vm4747, %v4719, %v2045
        %v4782 = vsel %vm4747, %v4720, %v2047
        %v4783 = vsel %vm4747, %v4721, %v2049
        %v4784 = vsel %vm4747, %v4722, %v2051
        %v4785 = vsel %vm4747, %v4723, %v2053
        %v4786 = vsel %vm4747, %v4724, %v2055
        %v4787 = vsel %vm4747, %v4725, %v2057
        %v4788 = vsel %vm4747, %v4726, %v2059
        %v4789 = vsel %vm4747, %v4727, %v2061
        %v4790 = vsel %vm4747, %v4728, %v2063
        %v4791 = vsel %vm4747, %v4729, %v2065
        %v4792 = vsel %vm4747, %v4730, %v2067
        %v4793 = vsel %vm4747, %v4731, %v2069
        %v4794 = vsel %vm4747, %v4732, %v2071
        %v4795 = vsel %vm4747, %v4733, %v2073
        %v4796 = vsel %vm4747, %v4734, %v2075
        %v4797 = vsel %vm4747, %v4735, %v2077
        %v4798 = vsel %vm4747, %v4736, %v2079
        %v4799 = vsel %vm4747, %v4737, %v2081
        %v4800 = vsel %vm4747, %v4738, %v2083
        %v4801 = vsel %vm4747, %v4739, %v2085
        %v4802 = vsel %vm4747, %v4740, %v2087
        %v4803 = vsel %vm4747, %v4741, %v2089
        %v4804 = vsel %vm4747, %v4742, %v2091
        %v4805 = vsel %vm4747, %v4743, %v2093
        %v4806 = vsel %vm4747, %v4744, %v2095
        %v4807 = vsel %vm4747, %v4745, %v2097
        %v4808 = vsel %vm4747, %v4746, %v2099
        %vm4809 = vcmask 39936
        %v4810 = vsel %vm4809, %v4748, %v2286
        %v4811 = vsel %vm4809, %v4749, %v2288
        %v4812 = vsel %vm4809, %v4750, %v2290
        %v4813 = vsel %vm4809, %v4751, %v2292
        %v4814 = vsel %vm4809, %v4752, %v2294
        %v4815 = vsel %vm4809, %v4753, %v2296
        %v4816 = vsel %vm4809, %v4754, %v2298
        %v4817 = vsel %vm4809, %v4755, %v2300
        %v4818 = vsel %vm4809, %v4756, %v2302
        %v4819 = vsel %vm4809, %v4757, %v2304
        %v4820 = vsel %vm4809, %v4758, %v2306
        %v4821 = vsel %vm4809, %v4759, %v2308
        %v4822 = vsel %vm4809, %v4760, %v2310
        %v4823 = vsel %vm4809, %v4761, %v2312
        %v4824 = vsel %vm4809, %v4762, %v2314
        %v4825 = vsel %vm4809, %v4763, %v2316
        %v4826 = vsel %vm4809, %v4764, %v2318
        %v4827 = vsel %vm4809, %v4765, %v2320
        %v4828 = vsel %vm4809, %v4766, %v2322
        %v4829 = vsel %vm4809, %v4767, %v2324
        %v4830 = vsel %vm4809, %v4768, %v2326
        %v4831 = vsel %vm4809, %v4769, %v2328
        %v4832 = vsel %vm4809, %v4770, %v2330
        %v4833 = vsel %vm4809, %v4771, %v2332
        %v4834 = vsel %vm4809, %v4772, %v2334
        %v4835 = vsel %vm4809, %v4773, %v2336
        %v4836 = vsel %vm4809, %v4774, %v2338
        %v4837 = vsel %vm4809, %v4775, %v2340
        %v4838 = vsel %vm4809, %v4776, %v2342
        %v4839 = vsel %vm4809, %v4777, %v2344
        %v4840 = vsel %vm4809, %v4778, %v2346
        %v4841 = vsel %vm4809, %v4779, %v2348
        %v4842 = vsel %vm4809, %v4780, %v2350
        %v4843 = vsel %vm4809, %v4781, %v2352
        %v4844 = vsel %vm4809, %v4782, %v2354
        %v4845 = vsel %vm4809, %v4783, %v2356
        %v4846 = vsel %vm4809, %v4784, %v2358
        %v4847 = vsel %vm4809, %v4785, %v2360
        %v4848 = vsel %vm4809, %v4786, %v2362
        %v4849 = vsel %vm4809, %v4787, %v2364
        %v4850 = vsel %vm4809, %v4788, %v2366
        %v4851 = vsel %vm4809, %v4789, %v2368
        %v4852 = vsel %vm4809, %v4790, %v2370
        %v4853 = vsel %vm4809, %v4791, %v2372
        %v4854 = vsel %vm4809, %v4792, %v2374
        %v4855 = vsel %vm4809, %v4793, %v2376
        %v4856 = vsel %vm4809, %v4794, %v2378
        %v4857 = vsel %vm4809, %v4795, %v2380
        %v4858 = vsel %vm4809, %v4796, %v2382
        %v4859 = vsel %vm4809, %v4797, %v2384
        %v4860 = vsel %vm4809, %v4798, %v2386
        %v4861 = vsel %vm4809, %v4799, %v2388
        %v4862 = vsel %vm4809, %v4800, %v2390
        %v4863 = vsel %vm4809, %v4801, %v2392
        %v4864 = vsel %vm4809, %v4802, %v2394
        %v4865 = vsel %vm4809, %v4803, %v2396
        %v4866 = vsel %vm4809, %v4804, %v2398
        %v4867 = vsel %vm4809, %v4805, %v2400
        %v4868 = vsel %vm4809, %v4806, %v2402
        %v4869 = vsel %vm4809, %v4807, %v2404
        %v4870 = vsel %vm4809, %v4808, %v2406
        %vm4871 = vcmask 48128
        %v4872 = vsel %vm4871, %v4810, %v2593
        %v4873 = vsel %vm4871, %v4811, %v2595
        %v4874 = vsel %vm4871, %v4812, %v2597
        %v4875 = vsel %vm4871, %v4813, %v2599
        %v4876 = vsel %vm4871, %v4814, %v2601
        %v4877 = vsel %vm4871, %v4815, %v2603
        %v4878 = vsel %vm4871, %v4816, %v2605
        %v4879 = vsel %vm4871, %v4817, %v2607
        %v4880 = vsel %vm4871, %v4818, %v2609
        %v4881 = vsel %vm4871, %v4819, %v2611
        %v4882 = vsel %vm4871, %v4820, %v2613
        %v4883 = vsel %vm4871, %v4821, %v2615
        %v4884 = vsel %vm4871, %v4822, %v2617
        %v4885 = vsel %vm4871, %v4823, %v2619
        %v4886 = vsel %vm4871, %v4824, %v2621
        %v4887 = vsel %vm4871, %v4825, %v2623
        %v4888 = vsel %vm4871, %v4826, %v2625
        %v4889 = vsel %vm4871, %v4827, %v2627
        %v4890 = vsel %vm4871, %v4828, %v2629
        %v4891 = vsel %vm4871, %v4829, %v2631
        %v4892 = vsel %vm4871, %v4830, %v2633
        %v4893 = vsel %vm4871, %v4831, %v2635
        %v4894 = vsel %vm4871, %v4832, %v2637
        %v4895 = vsel %vm4871, %v4833, %v2639
        %v4896 = vsel %vm4871, %v4834, %v2641
        %v4897 = vsel %vm4871, %v4835, %v2643
        %v4898 = vsel %vm4871, %v4836, %v2645
        %v4899 = vsel %vm4871, %v4837, %v2647
        %v4900 = vsel %vm4871, %v4838, %v2649
        %v4901 = vsel %vm4871, %v4839, %v2651
        %v4902 = vsel %vm4871, %v4840, %v2653
        %v4903 = vsel %vm4871, %v4841, %v2655
        %v4904 = vsel %vm4871, %v4842, %v2657
        %v4905 = vsel %vm4871, %v4843, %v2659
        %v4906 = vsel %vm4871, %v4844, %v2661
        %v4907 = vsel %vm4871, %v4845, %v2663
        %v4908 = vsel %vm4871, %v4846, %v2665
        %v4909 = vsel %vm4871, %v4847, %v2667
        %v4910 = vsel %vm4871, %v4848, %v2669
        %v4911 = vsel %vm4871, %v4849, %v2671
        %v4912 = vsel %vm4871, %v4850, %v2673
        %v4913 = vsel %vm4871, %v4851, %v2675
        %v4914 = vsel %vm4871, %v4852, %v2677
        %v4915 = vsel %vm4871, %v4853, %v2679
        %v4916 = vsel %vm4871, %v4854, %v2681
        %v4917 = vsel %vm4871, %v4855, %v2683
        %v4918 = vsel %vm4871, %v4856, %v2685
        %v4919 = vsel %vm4871, %v4857, %v2687
        %v4920 = vsel %vm4871, %v4858, %v2689
        %v4921 = vsel %vm4871, %v4859, %v2691
        %v4922 = vsel %vm4871, %v4860, %v2693
        %v4923 = vsel %vm4871, %v4861, %v2695
        %v4924 = vsel %vm4871, %v4862, %v2697
        %v4925 = vsel %vm4871, %v4863, %v2699
        %v4926 = vsel %vm4871, %v4864, %v2701
        %v4927 = vsel %vm4871, %v4865, %v2703
        %v4928 = vsel %vm4871, %v4866, %v2705
        %v4929 = vsel %vm4871, %v4867, %v2707
        %v4930 = vsel %vm4871, %v4868, %v2709
        %v4931 = vsel %vm4871, %v4869, %v2711
        %v4932 = vsel %vm4871, %v4870, %v2713
        %vm4933 = vcmask 56320
        %v4934 = vsel %vm4933, %v4872, %v2900
        %v4935 = vsel %vm4933, %v4873, %v2902
        %v4936 = vsel %vm4933, %v4874, %v2904
        %v4937 = vsel %vm4933, %v4875, %v2906
        %v4938 = vsel %vm4933, %v4876, %v2908
        %v4939 = vsel %vm4933, %v4877, %v2910
        %v4940 = vsel %vm4933, %v4878, %v2912
        %v4941 = vsel %vm4933, %v4879, %v2914
        %v4942 = vsel %vm4933, %v4880, %v2916
        %v4943 = vsel %vm4933, %v4881, %v2918
        %v4944 = vsel %vm4933, %v4882, %v2920
        %v4945 = vsel %vm4933, %v4883, %v2922
        %v4946 = vsel %vm4933, %v4884, %v2924
        %v4947 = vsel %vm4933, %v4885, %v2926
        %v4948 = vsel %vm4933, %v4886, %v2928
        %v4949 = vsel %vm4933, %v4887, %v2930
        %v4950 = vsel %vm4933, %v4888, %v2932
        %v4951 = vsel %vm4933, %v4889, %v2934
        %v4952 = vsel %vm4933, %v4890, %v2936
        %v4953 = vsel %vm4933, %v4891, %v2938
        %v4954 = vsel %vm4933, %v4892, %v2940
        %v4955 = vsel %vm4933, %v4893, %v2942
        %v4956 = vsel %vm4933, %v4894, %v2944
        %v4957 = vsel %vm4933, %v4895, %v2946
        %v4958 = vsel %vm4933, %v4896, %v2948
        %v4959 = vsel %vm4933, %v4897, %v2950
        %v4960 = vsel %vm4933, %v4898, %v2952
        %v4961 = vsel %vm4933, %v4899, %v2954
        %v4962 = vsel %vm4933, %v4900, %v2956
        %v4963 = vsel %vm4933, %v4901, %v2958
        %v4964 = vsel %vm4933, %v4902, %v2960
        %v4965 = vsel %vm4933, %v4903, %v2962
        %v4966 = vsel %vm4933, %v4904, %v2964
        %v4967 = vsel %vm4933, %v4905, %v2966
        %v4968 = vsel %vm4933, %v4906, %v2968
        %v4969 = vsel %vm4933, %v4907, %v2970
        %v4970 = vsel %vm4933, %v4908, %v2972
        %v4971 = vsel %vm4933, %v4909, %v2974
        %v4972 = vsel %vm4933, %v4910, %v2976
        %v4973 = vsel %vm4933, %v4911, %v2978
        %v4974 = vsel %vm4933, %v4912, %v2980
        %v4975 = vsel %vm4933, %v4913, %v2982
        %v4976 = vsel %vm4933, %v4914, %v2984
        %v4977 = vsel %vm4933, %v4915, %v2986
        %v4978 = vsel %vm4933, %v4916, %v2988
        %v4979 = vsel %vm4933, %v4917, %v2990
        %v4980 = vsel %vm4933, %v4918, %v2992
        %v4981 = vsel %vm4933, %v4919, %v2994
        %v4982 = vsel %vm4933, %v4920, %v2996
        %v4983 = vsel %vm4933, %v4921, %v2998
        %v4984 = vsel %vm4933, %v4922, %v3000
        %v4985 = vsel %vm4933, %v4923, %v3002
        %v4986 = vsel %vm4933, %v4924, %v3004
        %v4987 = vsel %vm4933, %v4925, %v3006
        %v4988 = vsel %vm4933, %v4926, %v3008
        %v4989 = vsel %vm4933, %v4927, %v3010
        %v4990 = vsel %vm4933, %v4928, %v3012
        %v4991 = vsel %vm4933, %v4929, %v3014
        %v4992 = vsel %vm4933, %v4930, %v3016
        %v4993 = vsel %vm4933, %v4931, %v3018
        %v4994 = vsel %vm4933, %v4932, %v3020
        %vm4995 = vcmask 64512
        %v4996 = vsel %vm4995, %v4934, %v3083
        %v4997 = vsel %vm4995, %v4935, %v3085
        %v4998 = vsel %vm4995, %v4936, %v3087
        %v4999 = vsel %vm4995, %v4937, %v3089
        %v5000 = vsel %vm4995, %v4938, %v3091
        %v5001 = vsel %vm4995, %v4939, %v3093
        %v5002 = vsel %vm4995, %v4940, %v3095
        %v5003 = vsel %vm4995, %v4941, %v3097
        %v5004 = vsel %vm4995, %v4942, %v3099
        %v5005 = vsel %vm4995, %v4943, %v3101
        %v5006 = vsel %vm4995, %v4944, %v3103
        %v5007 = vsel %vm4995, %v4945, %v3105
        %v5008 = vsel %vm4995, %v4946, %v3107
        %v5009 = vsel %vm4995, %v4947, %v3109
        %v5010 = vsel %vm4995, %v4948, %v3111
        %v5011 = vsel %vm4995, %v4949, %v3113
        %v5012 = vsel %vm4995, %v4950, %v3115
        %v5013 = vsel %vm4995, %v4951, %v3117
        %v5014 = vsel %vm4995, %v4952, %v3119
        %v5015 = vsel %vm4995, %v4953, %v3121
        %v5016 = vsel %vm4995, %v4954, %v3123
        %v5017 = vsel %vm4995, %v4955, %v3125
        %v5018 = vsel %vm4995, %v4956, %v3127
        %v5019 = vsel %vm4995, %v4957, %v3129
        %v5020 = vsel %vm4995, %v4958, %v3131
        %v5021 = vsel %vm4995, %v4959, %v3133
        %v5022 = vsel %vm4995, %v4960, %v3135
        %v5023 = vsel %vm4995, %v4961, %v3137
        %v5024 = vsel %vm4995, %v4962, %v3139
        %v5025 = vsel %vm4995, %v4963, %v3141
        %v5026 = vsel %vm4995, %v4964, %v3143
        %v5027 = vsel %vm4995, %v4965, %v3145
        %v5028 = vsel %vm4995, %v4966, %v3147
        %v5029 = vsel %vm4995, %v4967, %v3149
        %v5030 = vsel %vm4995, %v4968, %v3151
        %v5031 = vsel %vm4995, %v4969, %v3153
        %v5032 = vsel %vm4995, %v4970, %v3155
        %v5033 = vsel %vm4995, %v4971, %v3157
        %v5034 = vsel %vm4995, %v4972, %v3159
        %v5035 = vsel %vm4995, %v4973, %v3161
        %v5036 = vsel %vm4995, %v4974, %v3163
        %v5037 = vsel %vm4995, %v4975, %v3165
        %v5038 = vsel %vm4995, %v4976, %v3167
        %v5039 = vsel %vm4995, %v4977, %v3169
        %v5040 = vsel %vm4995, %v4978, %v3171
        %v5041 = vsel %vm4995, %v4979, %v3173
        %v5042 = vsel %vm4995, %v4980, %v3175
        %v5043 = vsel %vm4995, %v4981, %v3177
        %v5044 = vsel %vm4995, %v4982, %v3179
        %v5045 = vsel %vm4995, %v4983, %v3181
        %v5046 = vsel %vm4995, %v4984, %v3183
        %v5047 = vsel %vm4995, %v4985, %v3185
        %v5048 = vsel %vm4995, %v4986, %v3187
        %v5049 = vsel %vm4995, %v4987, %v3189
        %v5050 = vsel %vm4995, %v4988, %v3191
        %v5051 = vsel %vm4995, %v4989, %v3193
        %v5052 = vsel %vm4995, %v4990, %v3195
        %v5053 = vsel %vm4995, %v4991, %v3197
        %v5054 = vsel %vm4995, %v4992, %v3199
        %v5055 = vsel %vm4995, %v4993, %v3201
        %v5056 = vsel %vm4995, %v4994, %v3203
        %vm5057 = vcmask 72704
        %v5058 = vsel %vm5057, %v4996, %v3269
        %v5059 = vsel %vm5057, %v4997, %v3271
        %v5060 = vsel %vm5057, %v4998, %v3273
        %v5061 = vsel %vm5057, %v4999, %v3275
        %v5062 = vsel %vm5057, %v5000, %v3277
        %v5063 = vsel %vm5057, %v5001, %v3279
        %v5064 = vsel %vm5057, %v5002, %v3281
        %v5065 = vsel %vm5057, %v5003, %v3283
        %v5066 = vsel %vm5057, %v5004, %v3285
        %v5067 = vsel %vm5057, %v5005, %v3287
        %v5068 = vsel %vm5057, %v5006, %v3289
        %v5069 = vsel %vm5057, %v5007, %v3291
        %v5070 = vsel %vm5057, %v5008, %v3293
        %v5071 = vsel %vm5057, %v5009, %v3295
        %v5072 = vsel %vm5057, %v5010, %v3297
        %v5073 = vsel %vm5057, %v5011, %v3299
        %v5074 = vsel %vm5057, %v5012, %v3301
        %v5075 = vsel %vm5057, %v5013, %v3303
        %v5076 = vsel %vm5057, %v5014, %v3305
        %v5077 = vsel %vm5057, %v5015, %v3307
        %v5078 = vsel %vm5057, %v5016, %v3309
        %v5079 = vsel %vm5057, %v5017, %v3311
        %v5080 = vsel %vm5057, %v5018, %v3313
        %v5081 = vsel %vm5057, %v5019, %v3315
        %v5082 = vsel %vm5057, %v5020, %v3317
        %v5083 = vsel %vm5057, %v5021, %v3319
        %v5084 = vsel %vm5057, %v5022, %v3321
        %v5085 = vsel %vm5057, %v5023, %v3323
        %v5086 = vsel %vm5057, %v5024, %v3325
        %v5087 = vsel %vm5057, %v5025, %v3327
        %v5088 = vsel %vm5057, %v5026, %v3329
        %v5089 = vsel %vm5057, %v5027, %v3331
        %v5090 = vsel %vm5057, %v5028, %v3333
        %v5091 = vsel %vm5057, %v5029, %v3335
        %v5092 = vsel %vm5057, %v5030, %v3337
        %v5093 = vsel %vm5057, %v5031, %v3339
        %v5094 = vsel %vm5057, %v5032, %v3341
        %v5095 = vsel %vm5057, %v5033, %v3343
        %v5096 = vsel %vm5057, %v5034, %v3345
        %v5097 = vsel %vm5057, %v5035, %v3347
        %v5098 = vsel %vm5057, %v5036, %v3349
        %v5099 = vsel %vm5057, %v5037, %v3351
        %v5100 = vsel %vm5057, %v5038, %v3353
        %v5101 = vsel %vm5057, %v5039, %v3355
        %v5102 = vsel %vm5057, %v5040, %v3357
        %v5103 = vsel %vm5057, %v5041, %v3359
        %v5104 = vsel %vm5057, %v5042, %v3361
        %v5105 = vsel %vm5057, %v5043, %v3363
        %v5106 = vsel %vm5057, %v5044, %v3365
        %v5107 = vsel %vm5057, %v5045, %v3367
        %v5108 = vsel %vm5057, %v5046, %v3369
        %v5109 = vsel %vm5057, %v5047, %v3371
        %v5110 = vsel %vm5057, %v5048, %v3373
        %v5111 = vsel %vm5057, %v5049, %v3375
        %v5112 = vsel %vm5057, %v5050, %v3377
        %v5113 = vsel %vm5057, %v5051, %v3379
        %v5114 = vsel %vm5057, %v5052, %v3381
        %v5115 = vsel %vm5057, %v5053, %v3383
        %v5116 = vsel %vm5057, %v5054, %v3385
        %v5117 = vsel %vm5057, %v5055, %v3387
        %v5118 = vsel %vm5057, %v5056, %v3389
        %vm5119 = vcmask 80896
        %v5120 = vsel %vm5119, %v5058, %v3454
        %v5121 = vsel %vm5119, %v5059, %v3456
        %v5122 = vsel %vm5119, %v5060, %v3458
        %v5123 = vsel %vm5119, %v5061, %v3460
        %v5124 = vsel %vm5119, %v5062, %v3462
        %v5125 = vsel %vm5119, %v5063, %v3464
        %v5126 = vsel %vm5119, %v5064, %v3466
        %v5127 = vsel %vm5119, %v5065, %v3468
        %v5128 = vsel %vm5119, %v5066, %v3470
        %v5129 = vsel %vm5119, %v5067, %v3472
        %v5130 = vsel %vm5119, %v5068, %v3474
        %v5131 = vsel %vm5119, %v5069, %v3476
        %v5132 = vsel %vm5119, %v5070, %v3478
        %v5133 = vsel %vm5119, %v5071, %v3480
        %v5134 = vsel %vm5119, %v5072, %v3482
        %v5135 = vsel %vm5119, %v5073, %v3484
        %v5136 = vsel %vm5119, %v5074, %v3486
        %v5137 = vsel %vm5119, %v5075, %v3488
        %v5138 = vsel %vm5119, %v5076, %v3490
        %v5139 = vsel %vm5119, %v5077, %v3492
        %v5140 = vsel %vm5119, %v5078, %v3494
        %v5141 = vsel %vm5119, %v5079, %v3496
        %v5142 = vsel %vm5119, %v5080, %v3498
        %v5143 = vsel %vm5119, %v5081, %v3500
        %v5144 = vsel %vm5119, %v5082, %v3502
        %v5145 = vsel %vm5119, %v5083, %v3504
        %v5146 = vsel %vm5119, %v5084, %v3506
        %v5147 = vsel %vm5119, %v5085, %v3508
        %v5148 = vsel %vm5119, %v5086, %v3510
        %v5149 = vsel %vm5119, %v5087, %v3512
        %v5150 = vsel %vm5119, %v5088, %v3514
        %v5151 = vsel %vm5119, %v5089, %v3516
        %v5152 = vsel %vm5119, %v5090, %v3518
        %v5153 = vsel %vm5119, %v5091, %v3520
        %v5154 = vsel %vm5119, %v5092, %v3522
        %v5155 = vsel %vm5119, %v5093, %v3524
        %v5156 = vsel %vm5119, %v5094, %v3526
        %v5157 = vsel %vm5119, %v5095, %v3528
        %v5158 = vsel %vm5119, %v5096, %v3530
        %v5159 = vsel %vm5119, %v5097, %v3532
        %v5160 = vsel %vm5119, %v5098, %v3534
        %v5161 = vsel %vm5119, %v5099, %v3536
        %v5162 = vsel %vm5119, %v5100, %v3538
        %v5163 = vsel %vm5119, %v5101, %v3540
        %v5164 = vsel %vm5119, %v5102, %v3542
        %v5165 = vsel %vm5119, %v5103, %v3544
        %v5166 = vsel %vm5119, %v5104, %v3546
        %v5167 = vsel %vm5119, %v5105, %v3548
        %v5168 = vsel %vm5119, %v5106, %v3550
        %v5169 = vsel %vm5119, %v5107, %v3552
        %v5170 = vsel %vm5119, %v5108, %v3554
        %v5171 = vsel %vm5119, %v5109, %v3556
        %v5172 = vsel %vm5119, %v5110, %v3558
        %v5173 = vsel %vm5119, %v5111, %v3560
        %v5174 = vsel %vm5119, %v5112, %v3562
        %v5175 = vsel %vm5119, %v5113, %v3564
        %v5176 = vsel %vm5119, %v5114, %v3566
        %v5177 = vsel %vm5119, %v5115, %v3568
        %v5178 = vsel %vm5119, %v5116, %v3570
        %v5179 = vsel %vm5119, %v5117, %v3572
        %v5180 = vsel %vm5119, %v5118, %v3574
        %vm5181 = vcmask 89088
        %v5182 = vsel %vm5181, %v5120, %v3639
        %v5183 = vsel %vm5181, %v5121, %v3641
        %v5184 = vsel %vm5181, %v5122, %v3643
        %v5185 = vsel %vm5181, %v5123, %v3645
        %v5186 = vsel %vm5181, %v5124, %v3647
        %v5187 = vsel %vm5181, %v5125, %v3649
        %v5188 = vsel %vm5181, %v5126, %v3651
        %v5189 = vsel %vm5181, %v5127, %v3653
        %v5190 = vsel %vm5181, %v5128, %v3655
        %v5191 = vsel %vm5181, %v5129, %v3657
        %v5192 = vsel %vm5181, %v5130, %v3659
        %v5193 = vsel %vm5181, %v5131, %v3661
        %v5194 = vsel %vm5181, %v5132, %v3663
        %v5195 = vsel %vm5181, %v5133, %v3665
        %v5196 = vsel %vm5181, %v5134, %v3667
        %v5197 = vsel %vm5181, %v5135, %v3669
        %v5198 = vsel %vm5181, %v5136, %v3671
        %v5199 = vsel %vm5181, %v5137, %v3673
        %v5200 = vsel %vm5181, %v5138, %v3675
        %v5201 = vsel %vm5181, %v5139, %v3677
        %v5202 = vsel %vm5181, %v5140, %v3679
        %v5203 = vsel %vm5181, %v5141, %v3681
        %v5204 = vsel %vm5181, %v5142, %v3683
        %v5205 = vsel %vm5181, %v5143, %v3685
        %v5206 = vsel %vm5181, %v5144, %v3687
        %v5207 = vsel %vm5181, %v5145, %v3689
        %v5208 = vsel %vm5181, %v5146, %v3691
        %v5209 = vsel %vm5181, %v5147, %v3693
        %v5210 = vsel %vm5181, %v5148, %v3695
        %v5211 = vsel %vm5181, %v5149, %v3697
        %v5212 = vsel %vm5181, %v5150, %v3699
        %v5213 = vsel %vm5181, %v5151, %v3701
        %v5214 = vsel %vm5181, %v5152, %v3703
        %v5215 = vsel %vm5181, %v5153, %v3705
        %v5216 = vsel %vm5181, %v5154, %v3707
        %v5217 = vsel %vm5181, %v5155, %v3709
        %v5218 = vsel %vm5181, %v5156, %v3711
        %v5219 = vsel %vm5181, %v5157, %v3713
        %v5220 = vsel %vm5181, %v5158, %v3715
        %v5221 = vsel %vm5181, %v5159, %v3717
        %v5222 = vsel %vm5181, %v5160, %v3719
        %v5223 = vsel %vm5181, %v5161, %v3721
        %v5224 = vsel %vm5181, %v5162, %v3723
        %v5225 = vsel %vm5181, %v5163, %v3725
        %v5226 = vsel %vm5181, %v5164, %v3727
        %v5227 = vsel %vm5181, %v5165, %v3729
        %v5228 = vsel %vm5181, %v5166, %v3731
        %v5229 = vsel %vm5181, %v5167, %v3733
        %v5230 = vsel %vm5181, %v5168, %v3735
        %v5231 = vsel %vm5181, %v5169, %v3737
        %v5232 = vsel %vm5181, %v5170, %v3739
        %v5233 = vsel %vm5181, %v5171, %v3741
        %v5234 = vsel %vm5181, %v5172, %v3743
        %v5235 = vsel %vm5181, %v5173, %v3745
        %v5236 = vsel %vm5181, %v5174, %v3747
        %v5237 = vsel %vm5181, %v5175, %v3749
        %v5238 = vsel %vm5181, %v5176, %v3751
        %v5239 = vsel %vm5181, %v5177, %v3753
        %v5240 = vsel %vm5181, %v5178, %v3755
        %v5241 = vsel %vm5181, %v5179, %v3757
        %v5242 = vsel %vm5181, %v5180, %v3759
        %vm5243 = vcmask 97280
        %v5244 = vsel %vm5243, %v5182, %v3824
        %v5245 = vsel %vm5243, %v5183, %v3826
        %v5246 = vsel %vm5243, %v5184, %v3828
        %v5247 = vsel %vm5243, %v5185, %v3830
        %v5248 = vsel %vm5243, %v5186, %v3832
        %v5249 = vsel %vm5243, %v5187, %v3834
        %v5250 = vsel %vm5243, %v5188, %v3836
        %v5251 = vsel %vm5243, %v5189, %v3838
        %v5252 = vsel %vm5243, %v5190, %v3840
        %v5253 = vsel %vm5243, %v5191, %v3842
        %v5254 = vsel %vm5243, %v5192, %v3844
        %v5255 = vsel %vm5243, %v5193, %v3846
        %v5256 = vsel %vm5243, %v5194, %v3848
        %v5257 = vsel %vm5243, %v5195, %v3850
        %v5258 = vsel %vm5243, %v5196, %v3852
        %v5259 = vsel %vm5243, %v5197, %v3854
        %v5260 = vsel %vm5243, %v5198, %v3856
        %v5261 = vsel %vm5243, %v5199, %v3858
        %v5262 = vsel %vm5243, %v5200, %v3860
        %v5263 = vsel %vm5243, %v5201, %v3862
        %v5264 = vsel %vm5243, %v5202, %v3864
        %v5265 = vsel %vm5243, %v5203, %v3866
        %v5266 = vsel %vm5243, %v5204, %v3868
        %v5267 = vsel %vm5243, %v5205, %v3870
        %v5268 = vsel %vm5243, %v5206, %v3872
        %v5269 = vsel %vm5243, %v5207, %v3874
        %v5270 = vsel %vm5243, %v5208, %v3876
        %v5271 = vsel %vm5243, %v5209, %v3878
        %v5272 = vsel %vm5243, %v5210, %v3880
        %v5273 = vsel %vm5243, %v5211, %v3882
        %v5274 = vsel %vm5243, %v5212, %v3884
        %v5275 = vsel %vm5243, %v5213, %v3886
        %v5276 = vsel %vm5243, %v5214, %v3888
        %v5277 = vsel %vm5243, %v5215, %v3890
        %v5278 = vsel %vm5243, %v5216, %v3892
        %v5279 = vsel %vm5243, %v5217, %v3894
        %v5280 = vsel %vm5243, %v5218, %v3896
        %v5281 = vsel %vm5243, %v5219, %v3898
        %v5282 = vsel %vm5243, %v5220, %v3900
        %v5283 = vsel %vm5243, %v5221, %v3902
        %v5284 = vsel %vm5243, %v5222, %v3904
        %v5285 = vsel %vm5243, %v5223, %v3906
        %v5286 = vsel %vm5243, %v5224, %v3908
        %v5287 = vsel %vm5243, %v5225, %v3910
        %v5288 = vsel %vm5243, %v5226, %v3912
        %v5289 = vsel %vm5243, %v5227, %v3914
        %v5290 = vsel %vm5243, %v5228, %v3916
        %v5291 = vsel %vm5243, %v5229, %v3918
        %v5292 = vsel %vm5243, %v5230, %v3920
        %v5293 = vsel %vm5243, %v5231, %v3922
        %v5294 = vsel %vm5243, %v5232, %v3924
        %v5295 = vsel %vm5243, %v5233, %v3926
        %v5296 = vsel %vm5243, %v5234, %v3928
        %v5297 = vsel %vm5243, %v5235, %v3930
        %v5298 = vsel %vm5243, %v5236, %v3932
        %v5299 = vsel %vm5243, %v5237, %v3934
        %v5300 = vsel %vm5243, %v5238, %v3936
        %v5301 = vsel %vm5243, %v5239, %v3938
        %v5302 = vsel %vm5243, %v5240, %v3940
        %v5303 = vsel %vm5243, %v5241, %v3942
        %v5304 = vsel %vm5243, %v5242, %v3944
        %vm5305 = vcmask 105472
        %v5306 = vsel %vm5305, %v5244, %v4009
        %v5307 = vsel %vm5305, %v5245, %v4011
        %v5308 = vsel %vm5305, %v5246, %v4013
        %v5309 = vsel %vm5305, %v5247, %v4015
        %v5310 = vsel %vm5305, %v5248, %v4017
        %v5311 = vsel %vm5305, %v5249, %v4019
        %v5312 = vsel %vm5305, %v5250, %v4021
        %v5313 = vsel %vm5305, %v5251, %v4023
        %v5314 = vsel %vm5305, %v5252, %v4025
        %v5315 = vsel %vm5305, %v5253, %v4027
        %v5316 = vsel %vm5305, %v5254, %v4029
        %v5317 = vsel %vm5305, %v5255, %v4031
        %v5318 = vsel %vm5305, %v5256, %v4033
        %v5319 = vsel %vm5305, %v5257, %v4035
        %v5320 = vsel %vm5305, %v5258, %v4037
        %v5321 = vsel %vm5305, %v5259, %v4039
        %v5322 = vsel %vm5305, %v5260, %v4041
        %v5323 = vsel %vm5305, %v5261, %v4043
        %v5324 = vsel %vm5305, %v5262, %v4045
        %v5325 = vsel %vm5305, %v5263, %v4047
        %v5326 = vsel %vm5305, %v5264, %v4049
        %v5327 = vsel %vm5305, %v5265, %v4051
        %v5328 = vsel %vm5305, %v5266, %v4053
        %v5329 = vsel %vm5305, %v5267, %v4055
        %v5330 = vsel %vm5305, %v5268, %v4057
        %v5331 = vsel %vm5305, %v5269, %v4059
        %v5332 = vsel %vm5305, %v5270, %v4061
        %v5333 = vsel %vm5305, %v5271, %v4063
        %v5334 = vsel %vm5305, %v5272, %v4065
        %v5335 = vsel %vm5305, %v5273, %v4067
        %v5336 = vsel %vm5305, %v5274, %v4069
        %v5337 = vsel %vm5305, %v5275, %v4071
        %v5338 = vsel %vm5305, %v5276, %v4073
        %v5339 = vsel %vm5305, %v5277, %v4075
        %v5340 = vsel %vm5305, %v5278, %v4077
        %v5341 = vsel %vm5305, %v5279, %v4079
        %v5342 = vsel %vm5305, %v5280, %v4081
        %v5343 = vsel %vm5305, %v5281, %v4083
        %v5344 = vsel %vm5305, %v5282, %v4085
        %v5345 = vsel %vm5305, %v5283, %v4087
        %v5346 = vsel %vm5305, %v5284, %v4089
        %v5347 = vsel %vm5305, %v5285, %v4091
        %v5348 = vsel %vm5305, %v5286, %v4093
        %v5349 = vsel %vm5305, %v5287, %v4095
        %v5350 = vsel %vm5305, %v5288, %v4097
        %v5351 = vsel %vm5305, %v5289, %v4099
        %v5352 = vsel %vm5305, %v5290, %v4101
        %v5353 = vsel %vm5305, %v5291, %v4103
        %v5354 = vsel %vm5305, %v5292, %v4105
        %v5355 = vsel %vm5305, %v5293, %v4107
        %v5356 = vsel %vm5305, %v5294, %v4109
        %v5357 = vsel %vm5305, %v5295, %v4111
        %v5358 = vsel %vm5305, %v5296, %v4113
        %v5359 = vsel %vm5305, %v5297, %v4115
        %v5360 = vsel %vm5305, %v5298, %v4117
        %v5361 = vsel %vm5305, %v5299, %v4119
        %v5362 = vsel %vm5305, %v5300, %v4121
        %v5363 = vsel %vm5305, %v5301, %v4123
        %v5364 = vsel %vm5305, %v5302, %v4125
        %v5365 = vsel %vm5305, %v5303, %v4127
        %v5366 = vsel %vm5305, %v5304, %v4129
        %vm5367 = vcmask 113664
        %v5368 = vsel %vm5367, %v5306, %v4194
        %v5369 = vsel %vm5367, %v5307, %v4196
        %v5370 = vsel %vm5367, %v5308, %v4198
        %v5371 = vsel %vm5367, %v5309, %v4200
        %v5372 = vsel %vm5367, %v5310, %v4202
        %v5373 = vsel %vm5367, %v5311, %v4204
        %v5374 = vsel %vm5367, %v5312, %v4206
        %v5375 = vsel %vm5367, %v5313, %v4208
        %v5376 = vsel %vm5367, %v5314, %v4210
        %v5377 = vsel %vm5367, %v5315, %v4212
        %v5378 = vsel %vm5367, %v5316, %v4214
        %v5379 = vsel %vm5367, %v5317, %v4216
        %v5380 = vsel %vm5367, %v5318, %v4218
        %v5381 = vsel %vm5367, %v5319, %v4220
        %v5382 = vsel %vm5367, %v5320, %v4222
        %v5383 = vsel %vm5367, %v5321, %v4224
        %v5384 = vsel %vm5367, %v5322, %v4226
        %v5385 = vsel %vm5367, %v5323, %v4228
        %v5386 = vsel %vm5367, %v5324, %v4230
        %v5387 = vsel %vm5367, %v5325, %v4232
        %v5388 = vsel %vm5367, %v5326, %v4234
        %v5389 = vsel %vm5367, %v5327, %v4236
        %v5390 = vsel %vm5367, %v5328, %v4238
        %v5391 = vsel %vm5367, %v5329, %v4240
        %v5392 = vsel %vm5367, %v5330, %v4242
        %v5393 = vsel %vm5367, %v5331, %v4244
        %v5394 = vsel %vm5367, %v5332, %v4246
        %v5395 = vsel %vm5367, %v5333, %v4248
        %v5396 = vsel %vm5367, %v5334, %v4250
        %v5397 = vsel %vm5367, %v5335, %v4252
        %v5398 = vsel %vm5367, %v5336, %v4254
        %v5399 = vsel %vm5367, %v5337, %v4256
        %v5400 = vsel %vm5367, %v5338, %v4258
        %v5401 = vsel %vm5367, %v5339, %v4260
        %v5402 = vsel %vm5367, %v5340, %v4262
        %v5403 = vsel %vm5367, %v5341, %v4264
        %v5404 = vsel %vm5367, %v5342, %v4266
        %v5405 = vsel %vm5367, %v5343, %v4268
        %v5406 = vsel %vm5367, %v5344, %v4270
        %v5407 = vsel %vm5367, %v5345, %v4272
        %v5408 = vsel %vm5367, %v5346, %v4274
        %v5409 = vsel %vm5367, %v5347, %v4276
        %v5410 = vsel %vm5367, %v5348, %v4278
        %v5411 = vsel %vm5367, %v5349, %v4280
        %v5412 = vsel %vm5367, %v5350, %v4282
        %v5413 = vsel %vm5367, %v5351, %v4284
        %v5414 = vsel %vm5367, %v5352, %v4286
        %v5415 = vsel %vm5367, %v5353, %v4288
        %v5416 = vsel %vm5367, %v5354, %v4290
        %v5417 = vsel %vm5367, %v5355, %v4292
        %v5418 = vsel %vm5367, %v5356, %v4294
        %v5419 = vsel %vm5367, %v5357, %v4296
        %v5420 = vsel %vm5367, %v5358, %v4298
        %v5421 = vsel %vm5367, %v5359, %v4300
        %v5422 = vsel %vm5367, %v5360, %v4302
        %v5423 = vsel %vm5367, %v5361, %v4304
        %v5424 = vsel %vm5367, %v5362, %v4306
        %v5425 = vsel %vm5367, %v5363, %v4308
        %v5426 = vsel %vm5367, %v5364, %v4310
        %v5427 = vsel %vm5367, %v5365, %v4312
        %v5428 = vsel %vm5367, %v5366, %v4314
        %vm5429 = vcmask 121856
        %v5430 = vsel %vm5429, %v5368, %v4379
        %v5431 = vsel %vm5429, %v5369, %v4381
        %v5432 = vsel %vm5429, %v5370, %v4383
        %v5433 = vsel %vm5429, %v5371, %v4385
        %v5434 = vsel %vm5429, %v5372, %v4387
        %v5435 = vsel %vm5429, %v5373, %v4389
        %v5436 = vsel %vm5429, %v5374, %v4391
        %v5437 = vsel %vm5429, %v5375, %v4393
        %v5438 = vsel %vm5429, %v5376, %v4395
        %v5439 = vsel %vm5429, %v5377, %v4397
        %v5440 = vsel %vm5429, %v5378, %v4399
        %v5441 = vsel %vm5429, %v5379, %v4401
        %v5442 = vsel %vm5429, %v5380, %v4403
        %v5443 = vsel %vm5429, %v5381, %v4405
        %v5444 = vsel %vm5429, %v5382, %v4407
        %v5445 = vsel %vm5429, %v5383, %v4409
        %v5446 = vsel %vm5429, %v5384, %v4411
        %v5447 = vsel %vm5429, %v5385, %v4413
        %v5448 = vsel %vm5429, %v5386, %v4415
        %v5449 = vsel %vm5429, %v5387, %v4417
        %v5450 = vsel %vm5429, %v5388, %v4419
        %v5451 = vsel %vm5429, %v5389, %v4421
        %v5452 = vsel %vm5429, %v5390, %v4423
        %v5453 = vsel %vm5429, %v5391, %v4425
        %v5454 = vsel %vm5429, %v5392, %v4427
        %v5455 = vsel %vm5429, %v5393, %v4429
        %v5456 = vsel %vm5429, %v5394, %v4431
        %v5457 = vsel %vm5429, %v5395, %v4433
        %v5458 = vsel %vm5429, %v5396, %v4435
        %v5459 = vsel %vm5429, %v5397, %v4437
        %v5460 = vsel %vm5429, %v5398, %v4439
        %v5461 = vsel %vm5429, %v5399, %v4441
        %v5462 = vsel %vm5429, %v5400, %v4443
        %v5463 = vsel %vm5429, %v5401, %v4445
        %v5464 = vsel %vm5429, %v5402, %v4447
        %v5465 = vsel %vm5429, %v5403, %v4449
        %v5466 = vsel %vm5429, %v5404, %v4451
        %v5467 = vsel %vm5429, %v5405, %v4453
        %v5468 = vsel %vm5429, %v5406, %v4455
        %v5469 = vsel %vm5429, %v5407, %v4457
        %v5470 = vsel %vm5429, %v5408, %v4459
        %v5471 = vsel %vm5429, %v5409, %v4461
        %v5472 = vsel %vm5429, %v5410, %v4463
        %v5473 = vsel %vm5429, %v5411, %v4465
        %v5474 = vsel %vm5429, %v5412, %v4467
        %v5475 = vsel %vm5429, %v5413, %v4469
        %v5476 = vsel %vm5429, %v5414, %v4471
        %v5477 = vsel %vm5429, %v5415, %v4473
        %v5478 = vsel %vm5429, %v5416, %v4475
        %v5479 = vsel %vm5429, %v5417, %v4477
        %v5480 = vsel %vm5429, %v5418, %v4479
        %v5481 = vsel %vm5429, %v5419, %v4481
        %v5482 = vsel %vm5429, %v5420, %v4483
        %v5483 = vsel %vm5429, %v5421, %v4485
        %v5484 = vsel %vm5429, %v5422, %v4487
        %v5485 = vsel %vm5429, %v5423, %v4489
        %v5486 = vsel %vm5429, %v5424, %v4491
        %v5487 = vsel %vm5429, %v5425, %v4493
        %v5488 = vsel %vm5429, %v5426, %v4495
        %v5489 = vsel %vm5429, %v5427, %v4497
        %v5490 = vsel %vm5429, %v5428, %v4499
        %v5492 = vrot.slane %v869, 1
        %v5493 = vsel %vm933, %v3266, %v5492
        %5494 = vrot.lane.b32.xlu0 %v3267, 1
        %v5495 = vpop.permute.xlu0 %5494
        %5496 = vrot.lane.b32.xlu0 %v5493, 1
        %v5497 = vpop.permute.xlu0 %5496
        %v5500 = vrot.slane %v869, 2
        %v5501 = vsel %vm1240, %v3451, %v5500
        %5502 = vrot.lane.b32.xlu0 %v3452, 2
        %v5503 = vpop.permute.xlu0 %5502
        %5504 = vrot.lane.b32.xlu0 %v5501, 2
        %v5505 = vpop.permute.xlu0 %5504
        %v5508 = vrot.slane %v869, 3
        %v5509 = vsel %vm1547, %v3636, %v5508
        %5510 = vrot.lane.b32.xlu0 %v3637, 3
        %v5511 = vpop.permute.xlu0 %5510
        %5512 = vrot.lane.b32.xlu0 %v5509, 3
        %v5513 = vpop.permute.xlu0 %5512
        %v5516 = vrot.slane %v869, 4
        %v5517 = vsel %vm1854, %v3821, %v5516
        %5518 = vrot.lane.b32.xlu0 %v3822, 4
        %v5519 = vpop.permute.xlu0 %5518
        %5520 = vrot.lane.b32.xlu0 %v5517, 4
        %v5521 = vpop.permute.xlu0 %5520
        %v5524 = vrot.slane %v869, 5
        %v5525 = vsel %vm2161, %v4006, %v5524
        %5526 = vrot.lane.b32.xlu0 %v4007, 5
        %v5527 = vpop.permute.xlu0 %5526
        %5528 = vrot.lane.b32.xlu0 %v5525, 5
        %v5529 = vpop.permute.xlu0 %5528
        %v5532 = vrot.slane %v869, 6
        %v5533 = vsel %vm2468, %v4191, %v5532
        %5534 = vrot.lane.b32.xlu0 %v4192, 6
        %v5535 = vpop.permute.xlu0 %5534
        %5536 = vrot.lane.b32.xlu0 %v5533, 6
        %v5537 = vpop.permute.xlu0 %5536
        %v5540 = vrot.slane %v869, 7
        %v5541 = vsel %vm2775, %v4376, %v5540
        %5542 = vrot.lane.b32.xlu0 %v4377, 7
        %v5543 = vpop.permute.xlu0 %5542
        %5544 = vrot.lane.b32.xlu0 %v5541, 7
        %v5545 = vpop.permute.xlu0 %5544
        %5548 = vrot.lane.b32.xlu0 %v868, 8
        %v5549 = vpop.permute.xlu0 %5548
        %5550 = vrot.lane.b32.xlu0 %v869, 8
        %v5551 = vpop.permute.xlu0 %5550
        %v5555 = vrot.slane %v870, 1
        %v5556 = vsel %vm933, %v5492, %v5555
        %5557 = vrot.lane.b32.xlu0 %v5493, 9
        %v5558 = vpop.permute.xlu0 %5557
        %5559 = vrot.lane.b32.xlu0 %v5556, 9
        %v5560 = vpop.permute.xlu0 %5559
        %v5563 = vrot.slane %v870, 2
        %v5564 = vsel %vm1240, %v5500, %v5563
        %5565 = vrot.lane.b32.xlu0 %v5501, 10
        %v5566 = vpop.permute.xlu0 %5565
        %5567 = vrot.lane.b32.xlu0 %v5564, 10
        %v5568 = vpop.permute.xlu0 %5567
        %v5571 = vsel %vm4561, %v867, %v5495
        %v5572 = vsel %vm4561, %v868, %v5497
        %v5573 = vsel %vm4623, %v5571, %v5503
        %v5574 = vsel %vm4623, %v5572, %v5505
        %v5575 = vsel %vm4685, %v5573, %v5511
        %v5576 = vsel %vm4685, %v5574, %v5513
        %v5577 = vsel %vm4747, %v5575, %v5519
        %v5578 = vsel %vm4747, %v5576, %v5521
        %v5579 = vsel %vm4809, %v5577, %v5527
        %v5580 = vsel %vm4809, %v5578, %v5529
        %v5581 = vsel %vm4871, %v5579, %v5535
        %v5582 = vsel %vm4871, %v5580, %v5537
        %v5583 = vsel %vm4933, %v5581, %v5543
        %v5584 = vsel %vm4933, %v5582, %v5545
        %v5585 = vsel %vm4995, %v5583, %v5549
        %v5586 = vsel %vm4995, %v5584, %v5551
        %v5587 = vsel %vm5057, %v5585, %v5558
        %v5588 = vsel %vm5057, %v5586, %v5560
        %v5589 = vsel %vm5119, %v5587, %v5566
        %v5590 = vsel %vm5119, %v5588, %v5568
        %5652 = vrot.lane.b32.xlu0 %v5122, 16
        %v5653 = vpop.permute.xlu0 %5652
        %5654 = vrot.lane.b32.xlu0 %v5123, 16
        %v5655 = vpop.permute.xlu0 %5654
        %5656 = vrot.lane.b32.xlu0 %v5124, 16
        %v5657 = vpop.permute.xlu0 %5656
        %5658 = vrot.lane.b32.xlu0 %v5125, 16
        %v5659 = vpop.permute.xlu0 %5658
        %5660 = vrot.lane.b32.xlu0 %v5126, 16
        %v5661 = vpop.permute.xlu0 %5660
        %5662 = vrot.lane.b32.xlu0 %v5127, 16
        %v5663 = vpop.permute.xlu0 %5662
        %5664 = vrot.lane.b32.xlu0 %v5128, 16
        %v5665 = vpop.permute.xlu0 %5664
        %5666 = vrot.lane.b32.xlu0 %v5129, 16
        %v5667 = vpop.permute.xlu0 %5666
        %5668 = vrot.lane.b32.xlu0 %v5130, 16
        %v5669 = vpop.permute.xlu0 %5668
        %5670 = vrot.lane.b32.xlu0 %v5131, 16
        %v5671 = vpop.permute.xlu0 %5670
        %5672 = vrot.lane.b32.xlu0 %v5132, 16
        %v5673 = vpop.permute.xlu0 %5672
        %5674 = vrot.lane.b32.xlu0 %v5133, 16
        %v5675 = vpop.permute.xlu0 %5674
        %5676 = vrot.lane.b32.xlu0 %v5134, 16
        %v5677 = vpop.permute.xlu0 %5676
        %5678 = vrot.lane.b32.xlu0 %v5135, 16
        %v5679 = vpop.permute.xlu0 %5678
        %5680 = vrot.lane.b32.xlu0 %v5136, 16
        %v5681 = vpop.permute.xlu0 %5680
        %5682 = vrot.lane.b32.xlu0 %v5137, 16
        %v5683 = vpop.permute.xlu0 %5682
        %5684 = vrot.lane.b32.xlu0 %v5138, 16
        %v5685 = vpop.permute.xlu0 %5684
        %5686 = vrot.lane.b32.xlu0 %v5139, 16
        %v5687 = vpop.permute.xlu0 %5686
        %5688 = vrot.lane.b32.xlu0 %v5140, 16
        %v5689 = vpop.permute.xlu0 %5688
        %5690 = vrot.lane.b32.xlu0 %v5141, 16
        %v5691 = vpop.permute.xlu0 %5690
        %5692 = vrot.lane.b32.xlu0 %v5142, 16
        %v5693 = vpop.permute.xlu0 %5692
        %5694 = vrot.lane.b32.xlu0 %v5143, 16
        %v5695 = vpop.permute.xlu0 %5694
        %5696 = vrot.lane.b32.xlu0 %v5144, 16
        %v5697 = vpop.permute.xlu0 %5696
        %5698 = vrot.lane.b32.xlu0 %v5145, 16
        %v5699 = vpop.permute.xlu0 %5698
        %5700 = vrot.lane.b32.xlu0 %v5146, 16
        %v5701 = vpop.permute.xlu0 %5700
        %5702 = vrot.lane.b32.xlu0 %v5147, 16
        %v5703 = vpop.permute.xlu0 %5702
        %5704 = vrot.lane.b32.xlu0 %v5148, 16
        %v5705 = vpop.permute.xlu0 %5704
        %5706 = vrot.lane.b32.xlu0 %v5149, 16
        %v5707 = vpop.permute.xlu0 %5706
        %5708 = vrot.lane.b32.xlu0 %v5150, 16
        %v5709 = vpop.permute.xlu0 %5708
        %5710 = vrot.lane.b32.xlu0 %v5151, 16
        %v5711 = vpop.permute.xlu0 %5710
        %5712 = vrot.lane.b32.xlu0 %v5152, 16
        %v5713 = vpop.permute.xlu0 %5712
        %5714 = vrot.lane.b32.xlu0 %v5153, 16
        %v5715 = vpop.permute.xlu0 %5714
        %5716 = vrot.lane.b32.xlu0 %v5154, 16
        %v5717 = vpop.permute.xlu0 %5716
        %5718 = vrot.lane.b32.xlu0 %v5155, 16
        %v5719 = vpop.permute.xlu0 %5718
        %5720 = vrot.lane.b32.xlu0 %v5156, 16
        %v5721 = vpop.permute.xlu0 %5720
        %5722 = vrot.lane.b32.xlu0 %v5157, 16
        %v5723 = vpop.permute.xlu0 %5722
        %5724 = vrot.lane.b32.xlu0 %v5158, 16
        %v5725 = vpop.permute.xlu0 %5724
        %5726 = vrot.lane.b32.xlu0 %v5159, 16
        %v5727 = vpop.permute.xlu0 %5726
        %5728 = vrot.lane.b32.xlu0 %v5160, 16
        %v5729 = vpop.permute.xlu0 %5728
        %5730 = vrot.lane.b32.xlu0 %v5161, 16
        %v5731 = vpop.permute.xlu0 %5730
        %5732 = vrot.lane.b32.xlu0 %v5162, 16
        %v5733 = vpop.permute.xlu0 %5732
        %5734 = vrot.lane.b32.xlu0 %v5163, 16
        %v5735 = vpop.permute.xlu0 %5734
        %5736 = vrot.lane.b32.xlu0 %v5164, 16
        %v5737 = vpop.permute.xlu0 %5736
        %5738 = vrot.lane.b32.xlu0 %v5165, 16
        %v5739 = vpop.permute.xlu0 %5738
        %5740 = vrot.lane.b32.xlu0 %v5166, 16
        %v5741 = vpop.permute.xlu0 %5740
        %5742 = vrot.lane.b32.xlu0 %v5167, 16
        %v5743 = vpop.permute.xlu0 %5742
        %5744 = vrot.lane.b32.xlu0 %v5168, 16
        %v5745 = vpop.permute.xlu0 %5744
        %5746 = vrot.lane.b32.xlu0 %v5169, 16
        %v5747 = vpop.permute.xlu0 %5746
        %5748 = vrot.lane.b32.xlu0 %v5170, 16
        %v5749 = vpop.permute.xlu0 %5748
        %5750 = vrot.lane.b32.xlu0 %v5171, 16
        %v5751 = vpop.permute.xlu0 %5750
        %5752 = vrot.lane.b32.xlu0 %v5172, 16
        %v5753 = vpop.permute.xlu0 %5752
        %5754 = vrot.lane.b32.xlu0 %v5173, 16
        %v5755 = vpop.permute.xlu0 %5754
        %5756 = vrot.lane.b32.xlu0 %v5174, 16
        %v5757 = vpop.permute.xlu0 %5756
        %5758 = vrot.lane.b32.xlu0 %v5175, 16
        %v5759 = vpop.permute.xlu0 %5758
        %5760 = vrot.lane.b32.xlu0 %v5176, 16
        %v5761 = vpop.permute.xlu0 %5760
        %5762 = vrot.lane.b32.xlu0 %v5177, 16
        %v5763 = vpop.permute.xlu0 %5762
        %5764 = vrot.lane.b32.xlu0 %v5178, 16
        %v5765 = vpop.permute.xlu0 %5764
        %5766 = vrot.lane.b32.xlu0 %v5179, 16
        %v5767 = vpop.permute.xlu0 %5766
        %5768 = vrot.lane.b32.xlu0 %v5180, 16
        %v5769 = vpop.permute.xlu0 %5768
        %5770 = vrot.lane.b32.xlu0 %v5589, 16
        %v5771 = vpop.permute.xlu0 %5770
        %5772 = vrot.lane.b32.xlu0 %v5590, 16
        %v5773 = vpop.permute.xlu0 %5772
        %vm5835 = vcmask 130048
        %v5836 = vsel %vm5835, %v5430, %v5653
        %v5837 = vsel %vm5835, %v5431, %v5655
        %v5838 = vsel %vm5835, %v5432, %v5657
        %v5839 = vsel %vm5835, %v5433, %v5659
        %v5840 = vsel %vm5835, %v5434, %v5661
        %v5841 = vsel %vm5835, %v5435, %v5663
        %v5842 = vsel %vm5835, %v5436, %v5665
        %v5843 = vsel %vm5835, %v5437, %v5667
        %v5844 = vsel %vm5835, %v5438, %v5669
        %v5845 = vsel %vm5835, %v5439, %v5671
        %v5846 = vsel %vm5835, %v5440, %v5673
        %v5847 = vsel %vm5835, %v5441, %v5675
        %v5848 = vsel %vm5835, %v5442, %v5677
        %v5849 = vsel %vm5835, %v5443, %v5679
        %v5850 = vsel %vm5835, %v5444, %v5681
        %v5851 = vsel %vm5835, %v5445, %v5683
        %v5852 = vsel %vm5835, %v5446, %v5685
        %v5853 = vsel %vm5835, %v5447, %v5687
        %v5854 = vsel %vm5835, %v5448, %v5689
        %v5855 = vsel %vm5835, %v5449, %v5691
        %v5856 = vsel %vm5835, %v5450, %v5693
        %v5857 = vsel %vm5835, %v5451, %v5695
        %v5858 = vsel %vm5835, %v5452, %v5697
        %v5859 = vsel %vm5835, %v5453, %v5699
        %v5860 = vsel %vm5835, %v5454, %v5701
        %v5861 = vsel %vm5835, %v5455, %v5703
        %v5862 = vsel %vm5835, %v5456, %v5705
        %v5863 = vsel %vm5835, %v5457, %v5707
        %v5864 = vsel %vm5835, %v5458, %v5709
        %v5865 = vsel %vm5835, %v5459, %v5711
        %v5866 = vsel %vm5835, %v5460, %v5713
        %v5867 = vsel %vm5835, %v5461, %v5715
        %v5868 = vsel %vm5835, %v5462, %v5717
        %v5869 = vsel %vm5835, %v5463, %v5719
        %v5870 = vsel %vm5835, %v5464, %v5721
        %v5871 = vsel %vm5835, %v5465, %v5723
        %v5872 = vsel %vm5835, %v5466, %v5725
        %v5873 = vsel %vm5835, %v5467, %v5727
        %v5874 = vsel %vm5835, %v5468, %v5729
        %v5875 = vsel %vm5835, %v5469, %v5731
        %v5876 = vsel %vm5835, %v5470, %v5733
        %v5877 = vsel %vm5835, %v5471, %v5735
        %v5878 = vsel %vm5835, %v5472, %v5737
        %v5879 = vsel %vm5835, %v5473, %v5739
        %v5880 = vsel %vm5835, %v5474, %v5741
        %v5881 = vsel %vm5835, %v5475, %v5743
        %v5882 = vsel %vm5835, %v5476, %v5745
        %v5883 = vsel %vm5835, %v5477, %v5747
        %v5884 = vsel %vm5835, %v5478, %v5749
        %v5885 = vsel %vm5835, %v5479, %v5751
        %v5886 = vsel %vm5835, %v5480, %v5753
        %v5887 = vsel %vm5835, %v5481, %v5755
        %v5888 = vsel %vm5835, %v5482, %v5757
        %v5889 = vsel %vm5835, %v5483, %v5759
        %v5890 = vsel %vm5835, %v5484, %v5761
        %v5891 = vsel %vm5835, %v5485, %v5763
        %v5892 = vsel %vm5835, %v5486, %v5765
        %v5893 = vsel %vm5835, %v5487, %v5767
        %v5894 = vsel %vm5835, %v5488, %v5769
        %v5895 = vsel %vm5835, %v5489, %v5771
        %v5896 = vsel %vm5835, %v5490, %v5773
        %v5897 = vld [vmem:[%s3] sm:$0xff]
        %v5898 = vld [vmem:[%s3 + $0x8] sm:$0xff]
        %v5899 = vld [vmem:[%s3 + $0x10] sm:$0xff]
        %v5900 = vld [vmem:[%s3 + $0x18] sm:$0x7]
        %v5901 = vld [vmem:[%s4] sm:$0x1]
        %v5903 = vlaneseq
        %v5904 = vshrl.u32 %v5903, 7
        %v5905 = vsub.s32 0, %v5904
        %v5906 = vrot.slane %v5901, %v5905
        %vm5908 = vcmask 220160
        %v5910 = vsel %vm5908, %v5836, 0
        %v5913 = vsel %vm5908, %v5837, 0
        %v5916 = vsel %vm5908, %v5838, 0
        %v5919 = vsel %vm5908, %v5839, 0
        %v5922 = vsel %vm5908, %v5840, 0
        %v5925 = vsel %vm5908, %v5841, 0
        %v5928 = vsel %vm5908, %v5842, 0
        %v5931 = vsel %vm5908, %v5843, 0
        %v5934 = vsel %vm5908, %v5844, 0
        %v5937 = vsel %vm5908, %v5845, 0
        %v5940 = vsel %vm5908, %v5846, 0
        %v5943 = vsel %vm5908, %v5847, 0
        %v5946 = vsel %vm5908, %v5848, 0
        %v5949 = vsel %vm5908, %v5849, 0
        %v5952 = vsel %vm5908, %v5850, 0
        %v5955 = vsel %vm5908, %v5851, 0
        %v5958 = vsel %vm5908, %v5852, 0
        %v5961 = vsel %vm5908, %v5853, 0
        %v5964 = vsel %vm5908, %v5854, 0
        %v5967 = vsel %vm5908, %v5855, 0
        %v5970 = vsel %vm5908, %v5856, 0
        %v5973 = vsel %vm5908, %v5857, 0
        %v5976 = vsel %vm5908, %v5858, 0
        %v5979 = vsel %vm5908, %v5859, 0
        %v5982 = vsel %vm5908, %v5860, 0
        %v5985 = vsel %vm5908, %v5861, 0
        %v5988 = vsel %vm5908, %v5862, 0
        %v5991 = vsel %vm5908, %v5863, 0
        %v5994 = vsel %vm5908, %v5864, 0
        %v5997 = vsel %vm5908, %v5865, 0
        %v6000 = vsel %vm5908, %v5866, 0
        %v6003 = vsel %vm5908, %v5867, 0
        %v6006 = vsel %vm5908, %v5868, 0
        %v6009 = vsel %vm5908, %v5869, 0
        %v6012 = vsel %vm5908, %v5870, 0
        %v6015 = vsel %vm5908, %v5871, 0
        %v6018 = vsel %vm5908, %v5872, 0
        %v6021 = vsel %vm5908, %v5873, 0
        %v6024 = vsel %vm5908, %v5874, 0
        %v6027 = vsel %vm5908, %v5875, 0
        %v6030 = vsel %vm5908, %v5876, 0
        %v6033 = vsel %vm5908, %v5877, 0
        %v6036 = vsel %vm5908, %v5878, 0
        %v6039 = vsel %vm5908, %v5879, 0
        %v6042 = vsel %vm5908, %v5880, 0
        %v6045 = vsel %vm5908, %v5881, 0
        %v6048 = vsel %vm5908, %v5882, 0
        %v6051 = vsel %vm5908, %v5883, 0
        %v6054 = vsel %vm5908, %v5884, 0
        %v6057 = vsel %vm5908, %v5885, 0
        %v6060 = vsel %vm5908, %v5886, 0
        %v6063 = vsel %vm5908, %v5887, 0
        %v6066 = vsel %vm5908, %v5888, 0
        %v6069 = vsel %vm5908, %v5889, 0
        %v6072 = vsel %vm5908, %v5890, 0
        %v6075 = vsel %vm5908, %v5891, 0
        %v6078 = vsel %vm5908, %v5892, 0
        %v6081 = vsel %vm5908, %v5893, 0
        %v6084 = vsel %vm5908, %v5894, 0
        %v6087 = vsel %vm5908, %v5895, 0
        %v6090 = vsel %vm5908, %v5896, 0
        %v6093 = vsel %vm2161, %v5900, 0
        %6095 = vmatprep.subr.mxu0 0.0
        %6096 = vmatpush1.msra.mxu0 %v5897
        %6097 = vmatprep.subr.mxu0 0.0
        %6098 = vmatpush1.msra.mxu0 %v5898
        %6099 = vmatprep.subr.mxu0 0.0
        %6100 = vmatpush1.msra.mxu0 %v5899
        %6101 = vmatprep.subr.mxu0 0.0
        %6102 = vmatpush1.msra.mxu0 %v6093
        %6103 = vmatprep.subr.mxu0 0.0
        %6104 = vmatpush1.msra.mxu0 0.0
        %6105 = vmatprep.subr.mxu0 0.0
        %6106 = vmatpush1.msra.mxu0 0.0
        %6107 = vmatprep.subr.mxu0 0.0
        %6108 = vmatpush1.msra.mxu0 0.0
        %6109 = vmatprep.subr.mxu0 0.0
        %6110 = vmatpush1.msra.mxu0 0.0
        %6111 = vmatprep.subr.mxu0 0.0
        %6112 = vmatpush1.msra.mxu0 0.0
        %6113 = vmatprep.subr.mxu0 0.0
        %6114 = vmatpush1.msra.mxu0 0.0
        %6115 = vmatprep.subr.mxu0 0.0
        %6116 = vmatpush1.msra.mxu0 0.0
        %6117 = vmatprep.subr.mxu0 0.0
        %6118 = vmatpush1.msra.mxu0 0.0
        %6119 = vmatprep.subr.mxu0 0.0
        %6120 = vmatpush1.msra.mxu0 0.0
        %6121 = vmatprep.subr.mxu0 0.0
        %6122 = vmatpush1.msra.mxu0 0.0
        %6123 = vmatprep.subr.mxu0 0.0
        %6124 = vmatpush1.msra.mxu0 0.0
        %6125 = vmatprep.subr.mxu0 0.0
        %6126 = vmatpush1.msra.mxu0 0.0
        %6127 = vmatprep.subr.mxu0 0.0
        %6128 = vmatpush1.msra.mxu0 0.0
        %6129 = vmatprep.subr.mxu0 0.0
        %6130 = vmatpush1.msra.mxu0 0.0
        %6131 = vmatprep.subr.mxu0 0.0
        %6132 = vmatpush1.msra.mxu0 0.0
        %6133 = vmatprep.subr.mxu0 0.0
        %6134 = vmatpush1.msra.mxu0 0.0
        %6135 = vmatprep.subr.mxu0 0.0
        %6136 = vmatpush1.msra.mxu0 0.0
        %6137 = vmatprep.subr.mxu0 0.0
        %6138 = vmatpush1.msra.mxu0 0.0
        %6139 = vmatprep.subr.mxu0 0.0
        %6140 = vmatpush1.msra.mxu0 0.0
        %6141 = vmatprep.subr.mxu0 0.0
        %6142 = vmatpush1.msra.mxu0 0.0
        %6143 = vmatprep.subr.mxu0 0.0
        %6144 = vmatpush1.msra.mxu0 0.0
        %6145 = vmatprep.subr.mxu0 0.0
        %6146 = vmatpush1.msra.mxu0 0.0
        %6147 = vmatprep.subr.mxu0 0.0
        %6148 = vmatpush1.msra.mxu0 0.0
        %6149 = vmatprep.subr.mxu0 0.0
        %6150 = vmatpush1.msra.mxu0 0.0
        %6151 = vmatprep.subr.mxu0 0.0
        %6152 = vmatpush1.msra.mxu0 0.0
        %6153 = vmatprep.subr.mxu0 0.0
        %6154 = vmatpush1.msra.mxu0 0.0
        %6155 = vmatprep.subr.mxu0 0.0
        %6156 = vmatpush1.msra.mxu0 0.0
        %6157 = vmatprep.subr.mxu0 0.0
        %6158 = vmatpush1.msra.mxu0 0.0
        %6159 = vmatprep.mubr.f32.mxu0 0.0
        %6160 = vmatmul.mubr.f32.gmra.mrb[0].mxu0 %v5910
        %v6161 = vpop.f32.mrb[0].mxu0
        %v6162 = vadd.f32 %v5906, %v6161
        %v6163 = vpop.f32.mrb[0].mxu0
        %6164 = vmatprep.mubr.f32.mxu0 0.0
        %6165 = vmatmul.mubr.f32.gmra.mrb[0].mxu0 %v5913
        %v6166 = vpop.f32.mrb[0].mxu0
        %v6167 = vadd.f32 %v5906, %v6166
        %v6168 = vpop.f32.mrb[0].mxu0
        %6169 = vmatprep.mubr.f32.mxu0 0.0
        %6170 = vmatmul.mubr.f32.gmra.mrb[0].mxu0 %v5916
        %v6171 = vpop.f32.mrb[0].mxu0
        %v6172 = vadd.f32 %v5906, %v6171
        %v6173 = vpop.f32.mrb[0].mxu0
        %6174 = vmatprep.mubr.f32.mxu0 0.0
        %6175 = vmatmul.mubr.f32.gmra.mrb[0].mxu0 %v5919
        %v6176 = vpop.f32.mrb[0].mxu0
        %v6177 = vadd.f32 %v5906, %v6176
        %v6178 = vpop.f32.mrb[0].mxu0
        %6179 = vmatprep.mubr.f32.mxu0 0.0
        %6180 = vmatmul.mubr.f32.gmra.mrb[0].mxu0 %v5922
        %v6181 = vpop.f32.mrb[0].mxu0
        %v6182 = vadd.f32 %v5906, %v6181
        %v6183 = vpop.f32.mrb[0].mxu0
        %6184 = vmatprep.mubr.f32.mxu0 0.0
        %6185 = vmatmul.mubr.f32.gmra.mrb[0].mxu0 %v5925
        %v6186 = vpop.f32.mrb[0].mxu0
        %v6187 = vadd.f32 %v5906, %v6186
        %v6188 = vpop.f32.mrb[0].mxu0
        %6189 = vmatprep.mubr.f32.mxu0 0.0
        %6190 = vmatmul.mubr.f32.gmra.mrb[0].mxu0 %v5928
        %v6191 = vpop.f32.mrb[0].mxu0
        %v6192 = vadd.f32 %v5906, %v6191
        %v6193 = vpop.f32.mrb[0].mxu0
        %6194 = vmatprep.mubr.f32.mxu0 0.0
        %6195 = vmatmul.mubr.f32.gmra.mrb[0].mxu0 %v5931
        %v6196 = vpop.f32.mrb[0].mxu0
        %v6197 = vadd.f32 %v5906, %v6196
        %v6198 = vpop.f32.mrb[0].mxu0
        %6199 = vmatprep.mubr.f32.mxu0 0.0
        %6200 = vmatmul.mubr.f32.gmra.mrb[0].mxu0 %v5934
        %v6201 = vpop.f32.mrb[0].mxu0
        %v6202 = vadd.f32 %v5906, %v6201
        %v6203 = vpop.f32.mrb[0].mxu0
        %6204 = vmatprep.mubr.f32.mxu0 0.0
        %6205 = vmatmul.mubr.f32.gmra.mrb[0].mxu0 %v5937
        %v6206 = vpop.f32.mrb[0].mxu0
        %v6207 = vadd.f32 %v5906, %v6206
        %v6208 = vpop.f32.mrb[0].mxu0
        %6209 = vmatprep.mubr.f32.mxu0 0.0
        %6210 = vmatmul.mubr.f32.gmra.mrb[0].mxu0 %v5940
        %v6211 = vpop.f32.mrb[0].mxu0
        %v6212 = vadd.f32 %v5906, %v6211
        %v6213 = vpop.f32.mrb[0].mxu0
        %6214 = vmatprep.mubr.f32.mxu0 0.0
        %6215 = vmatmul.mubr.f32.gmra.mrb[0].mxu0 %v5943
        %v6216 = vpop.f32.mrb[0].mxu0
        %v6217 = vadd.f32 %v5906, %v6216
        %v6218 = vpop.f32.mrb[0].mxu0
        %6219 = vmatprep.mubr.f32.mxu0 0.0
        %6220 = vmatmul.mubr.f32.gmra.mrb[0].mxu0 %v5946
        %v6221 = vpop.f32.mrb[0].mxu0
        %v6222 = vadd.f32 %v5906, %v6221
        %v6223 = vpop.f32.mrb[0].mxu0
        %6224 = vmatprep.mubr.f32.mxu0 0.0
        %6225 = vmatmul.mubr.f32.gmra.mrb[0].mxu0 %v5949
        %v6226 = vpop.f32.mrb[0].mxu0
        %v6227 = vadd.f32 %v5906, %v6226
        %v6228 = vpop.f32.mrb[0].mxu0
        %6229 = vmatprep.mubr.f32.mxu0 0.0
        %6230 = vmatmul.mubr.f32.gmra.mrb[0].mxu0 %v5952
        %v6231 = vpop.f32.mrb[0].mxu0
        %v6232 = vadd.f32 %v5906, %v6231
        %v6233 = vpop.f32.mrb[0].mxu0
        %6234 = vmatprep.mubr.f32.mxu0 0.0
        %6235 = vmatmul.mubr.f32.gmra.mrb[0].mxu0 %v5955
        %v6236 = vpop.f32.mrb[0].mxu0
        %v6237 = vadd.f32 %v5906, %v6236
        %v6238 = vpop.f32.mrb[0].mxu0
        %6239 = vmatprep.mubr.f32.mxu0 0.0
        %6240 = vmatmul.mubr.f32.gmra.mrb[0].mxu0 %v5958
        %v6241 = vpop.f32.mrb[0].mxu0
        %v6242 = vadd.f32 %v5906, %v6241
        %v6243 = vpop.f32.mrb[0].mxu0
        %6244 = vmatprep.mubr.f32.mxu0 0.0
        %6245 = vmatmul.mubr.f32.gmra.mrb[0].mxu0 %v5961
        %v6246 = vpop.f32.mrb[0].mxu0
        %v6247 = vadd.f32 %v5906, %v6246
        %v6248 = vpop.f32.mrb[0].mxu0
        %6249 = vmatprep.mubr.f32.mxu0 0.0
        %6250 = vmatmul.mubr.f32.gmra.mrb[0].mxu0 %v5964
        %v6251 = vpop.f32.mrb[0].mxu0
        %v6252 = vadd.f32 %v5906, %v6251
        %v6253 = vpop.f32.mrb[0].mxu0
        %6254 = vmatprep.mubr.f32.mxu0 0.0
        %6255 = vmatmul.mubr.f32.gmra.mrb[0].mxu0 %v5967
        %v6256 = vpop.f32.mrb[0].mxu0
        %v6257 = vadd.f32 %v5906, %v6256
        %v6258 = vpop.f32.mrb[0].mxu0
        %6259 = vmatprep.mubr.f32.mxu0 0.0
        %6260 = vmatmul.mubr.f32.gmra.mrb[0].mxu0 %v5970
        %v6261 = vpop.f32.mrb[0].mxu0
        %v6262 = vadd.f32 %v5906, %v6261
        %v6263 = vpop.f32.mrb[0].mxu0
        %6264 = vmatprep.mubr.f32.mxu0 0.0
        %6265 = vmatmul.mubr.f32.gmra.mrb[0].mxu0 %v5973
        %v6266 = vpop.f32.mrb[0].mxu0
        %v6267 = vadd.f32 %v5906, %v6266
        %v6268 = vpop.f32.mrb[0].mxu0
        %6269 = vmatprep.mubr.f32.mxu0 0.0
        %6270 = vmatmul.mubr.f32.gmra.mrb[0].mxu0 %v5976
        %v6271 = vpop.f32.mrb[0].mxu0
        %v6272 = vadd.f32 %v5906, %v6271
        %v6273 = vpop.f32.mrb[0].mxu0
        %6274 = vmatprep.mubr.f32.mxu0 0.0
        %6275 = vmatmul.mubr.f32.gmra.mrb[0].mxu0 %v5979
        %v6276 = vpop.f32.mrb[0].mxu0
        %v6277 = vadd.f32 %v5906, %v6276
        %v6278 = vpop.f32.mrb[0].mxu0
        %6279 = vmatprep.mubr.f32.mxu0 0.0
        %6280 = vmatmul.mubr.f32.gmra.mrb[0].mxu0 %v5982
        %v6281 = vpop.f32.mrb[0].mxu0
        %v6282 = vadd.f32 %v5906, %v6281
        %v6283 = vpop.f32.mrb[0].mxu0
        %6284 = vmatprep.mubr.f32.mxu0 0.0
        %6285 = vmatmul.mubr.f32.gmra.mrb[0].mxu0 %v5985
        %v6286 = vpop.f32.mrb[0].mxu0
        %v6287 = vadd.f32 %v5906, %v6286
        %v6288 = vpop.f32.mrb[0].mxu0
        %6289 = vmatprep.mubr.f32.mxu0 0.0
        %6290 = vmatmul.mubr.f32.gmra.mrb[0].mxu0 %v5988
        %v6291 = vpop.f32.mrb[0].mxu0
        %v6292 = vadd.f32 %v5906, %v6291
        %v6293 = vpop.f32.mrb[0].mxu0
        %6294 = vmatprep.mubr.f32.mxu0 0.0
        %6295 = vmatmul.mubr.f32.gmra.mrb[0].mxu0 %v5991
        %v6296 = vpop.f32.mrb[0].mxu0
        %v6297 = vadd.f32 %v5906, %v6296
        %v6298 = vpop.f32.mrb[0].mxu0
        %6299 = vmatprep.mubr.f32.mxu0 0.0
        %6300 = vmatmul.mubr.f32.gmra.mrb[0].mxu0 %v5994
        %v6301 = vpop.f32.mrb[0].mxu0
        %v6302 = vadd.f32 %v5906, %v6301
        %v6303 = vpop.f32.mrb[0].mxu0
        %6304 = vmatprep.mubr.f32.mxu0 0.0
        %6305 = vmatmul.mubr.f32.gmra.mrb[0].mxu0 %v5997
        %v6306 = vpop.f32.mrb[0].mxu0
        %v6307 = vadd.f32 %v5906, %v6306
        %v6308 = vpop.f32.mrb[0].mxu0
        %6309 = vmatprep.mubr.f32.mxu0 0.0
        %6310 = vmatmul.mubr.f32.gmra.mrb[0].mxu0 %v6000
        %v6311 = vpop.f32.mrb[0].mxu0
        %v6312 = vadd.f32 %v5906, %v6311
        %v6313 = vpop.f32.mrb[0].mxu0
        %6314 = vmatprep.mubr.f32.mxu0 0.0
        %6315 = vmatmul.mubr.f32.gmra.mrb[0].mxu0 %v6003
        %v6316 = vpop.f32.mrb[0].mxu0
        %v6317 = vadd.f32 %v5906, %v6316
        %v6318 = vpop.f32.mrb[0].mxu0
        %6319 = vmatprep.mubr.f32.mxu0 0.0
        %6320 = vmatmul.mubr.f32.gmra.mrb[0].mxu0 %v6006
        %v6321 = vpop.f32.mrb[0].mxu0
        %v6322 = vadd.f32 %v5906, %v6321
        %v6323 = vpop.f32.mrb[0].mxu0
        %6324 = vmatprep.mubr.f32.mxu0 0.0
        %6325 = vmatmul.mubr.f32.gmra.mrb[0].mxu0 %v6009
        %v6326 = vpop.f32.mrb[0].mxu0
        %v6327 = vadd.f32 %v5906, %v6326
        %v6328 = vpop.f32.mrb[0].mxu0
        %6329 = vmatprep.mubr.f32.mxu0 0.0
        %6330 = vmatmul.mubr.f32.gmra.mrb[0].mxu0 %v6012
        %v6331 = vpop.f32.mrb[0].mxu0
        %v6332 = vadd.f32 %v5906, %v6331
        %v6333 = vpop.f32.mrb[0].mxu0
        %6334 = vmatprep.mubr.f32.mxu0 0.0
        %6335 = vmatmul.mubr.f32.gmra.mrb[0].mxu0 %v6015
        %v6336 = vpop.f32.mrb[0].mxu0
        %v6337 = vadd.f32 %v5906, %v6336
        %v6338 = vpop.f32.mrb[0].mxu0
        %6339 = vmatprep.mubr.f32.mxu0 0.0
        %6340 = vmatmul.mubr.f32.gmra.mrb[0].mxu0 %v6018
        %v6341 = vpop.f32.mrb[0].mxu0
        %v6342 = vadd.f32 %v5906, %v6341
        %v6343 = vpop.f32.mrb[0].mxu0
        %6344 = vmatprep.mubr.f32.mxu0 0.0
        %6345 = vmatmul.mubr.f32.gmra.mrb[0].mxu0 %v6021
        %v6346 = vpop.f32.mrb[0].mxu0
        %v6347 = vadd.f32 %v5906, %v6346
        %v6348 = vpop.f32.mrb[0].mxu0
        %6349 = vmatprep.mubr.f32.mxu0 0.0
        %6350 = vmatmul.mubr.f32.gmra.mrb[0].mxu0 %v6024
        %v6351 = vpop.f32.mrb[0].mxu0
        %v6352 = vadd.f32 %v5906, %v6351
        %v6353 = vpop.f32.mrb[0].mxu0
        %6354 = vmatprep.mubr.f32.mxu0 0.0
        %6355 = vmatmul.mubr.f32.gmra.mrb[0].mxu0 %v6027
        %v6356 = vpop.f32.mrb[0].mxu0
        %v6357 = vadd.f32 %v5906, %v6356
        %v6358 = vpop.f32.mrb[0].mxu0
        %6359 = vmatprep.mubr.f32.mxu0 0.0
        %6360 = vmatmul.mubr.f32.gmra.mrb[0].mxu0 %v6030
        %v6361 = vpop.f32.mrb[0].mxu0
        %v6362 = vadd.f32 %v5906, %v6361
        %v6363 = vpop.f32.mrb[0].mxu0
        %6364 = vmatprep.mubr.f32.mxu0 0.0
        %6365 = vmatmul.mubr.f32.gmra.mrb[0].mxu0 %v6033
        %v6366 = vpop.f32.mrb[0].mxu0
        %v6367 = vadd.f32 %v5906, %v6366
        %v6368 = vpop.f32.mrb[0].mxu0
        %6369 = vmatprep.mubr.f32.mxu0 0.0
        %6370 = vmatmul.mubr.f32.gmra.mrb[0].mxu0 %v6036
        %v6371 = vpop.f32.mrb[0].mxu0
        %v6372 = vadd.f32 %v5906, %v6371
        %v6373 = vpop.f32.mrb[0].mxu0
        %6374 = vmatprep.mubr.f32.mxu0 0.0
        %6375 = vmatmul.mubr.f32.gmra.mrb[0].mxu0 %v6039
        %v6376 = vpop.f32.mrb[0].mxu0
        %v6377 = vadd.f32 %v5906, %v6376
        %v6378 = vpop.f32.mrb[0].mxu0
        %6379 = vmatprep.mubr.f32.mxu0 0.0
        %6380 = vmatmul.mubr.f32.gmra.mrb[0].mxu0 %v6042
        %v6381 = vpop.f32.mrb[0].mxu0
        %v6382 = vadd.f32 %v5906, %v6381
        %v6383 = vpop.f32.mrb[0].mxu0
        %6384 = vmatprep.mubr.f32.mxu0 0.0
        %6385 = vmatmul.mubr.f32.gmra.mrb[0].mxu0 %v6045
        %v6386 = vpop.f32.mrb[0].mxu0
        %v6387 = vadd.f32 %v5906, %v6386
        %v6388 = vpop.f32.mrb[0].mxu0
        %6389 = vmatprep.mubr.f32.mxu0 0.0
        %6390 = vmatmul.mubr.f32.gmra.mrb[0].mxu0 %v6048
        %v6391 = vpop.f32.mrb[0].mxu0
        %v6392 = vadd.f32 %v5906, %v6391
        %v6393 = vpop.f32.mrb[0].mxu0
        %6394 = vmatprep.mubr.f32.mxu0 0.0
        %6395 = vmatmul.mubr.f32.gmra.mrb[0].mxu0 %v6051
        %v6396 = vpop.f32.mrb[0].mxu0
        %v6397 = vadd.f32 %v5906, %v6396
        %v6398 = vpop.f32.mrb[0].mxu0
        %6399 = vmatprep.mubr.f32.mxu0 0.0
        %6400 = vmatmul.mubr.f32.gmra.mrb[0].mxu0 %v6054
        %v6401 = vpop.f32.mrb[0].mxu0
        %v6402 = vadd.f32 %v5906, %v6401
        %v6403 = vpop.f32.mrb[0].mxu0
        %6404 = vmatprep.mubr.f32.mxu0 0.0
        %6405 = vmatmul.mubr.f32.gmra.mrb[0].mxu0 %v6057
        %v6406 = vpop.f32.mrb[0].mxu0
        %v6407 = vadd.f32 %v5906, %v6406
        %v6408 = vpop.f32.mrb[0].mxu0
        %6409 = vmatprep.mubr.f32.mxu0 0.0
        %6410 = vmatmul.mubr.f32.gmra.mrb[0].mxu0 %v6060
        %v6411 = vpop.f32.mrb[0].mxu0
        %v6412 = vadd.f32 %v5906, %v6411
        %v6413 = vpop.f32.mrb[0].mxu0
        %6414 = vmatprep.mubr.f32.mxu0 0.0
        %6415 = vmatmul.mubr.f32.gmra.mrb[0].mxu0 %v6063
        %v6416 = vpop.f32.mrb[0].mxu0
        %v6417 = vadd.f32 %v5906, %v6416
        %v6418 = vpop.f32.mrb[0].mxu0
        %6419 = vmatprep.mubr.f32.mxu0 0.0
        %6420 = vmatmul.mubr.f32.gmra.mrb[0].mxu0 %v6066
        %v6421 = vpop.f32.mrb[0].mxu0
        %v6422 = vadd.f32 %v5906, %v6421
        %v6423 = vpop.f32.mrb[0].mxu0
        %6424 = vmatprep.mubr.f32.mxu0 0.0
        %6425 = vmatmul.mubr.f32.gmra.mrb[0].mxu0 %v6069
        %v6426 = vpop.f32.mrb[0].mxu0
        %v6427 = vadd.f32 %v5906, %v6426
        %v6428 = vpop.f32.mrb[0].mxu0
        %6429 = vmatprep.mubr.f32.mxu0 0.0
        %6430 = vmatmul.mubr.f32.gmra.mrb[0].mxu0 %v6072
        %v6431 = vpop.f32.mrb[0].mxu0
        %v6432 = vadd.f32 %v5906, %v6431
        %v6433 = vpop.f32.mrb[0].mxu0
        %6434 = vmatprep.mubr.f32.mxu0 0.0
        %6435 = vmatmul.mubr.f32.gmra.mrb[0].mxu0 %v6075
        %v6436 = vpop.f32.mrb[0].mxu0
        %v6437 = vadd.f32 %v5906, %v6436
        %v6438 = vpop.f32.mrb[0].mxu0
        %6439 = vmatprep.mubr.f32.mxu0 0.0
        %6440 = vmatmul.mubr.f32.gmra.mrb[0].mxu0 %v6078
        %v6441 = vpop.f32.mrb[0].mxu0
        %v6442 = vadd.f32 %v5906, %v6441
        %v6443 = vpop.f32.mrb[0].mxu0
        %6444 = vmatprep.mubr.f32.mxu0 0.0
        %6445 = vmatmul.mubr.f32.gmra.mrb[0].mxu0 %v6081
        %v6446 = vpop.f32.mrb[0].mxu0
        %v6447 = vadd.f32 %v5906, %v6446
        %v6448 = vpop.f32.mrb[0].mxu0
        %6449 = vmatprep.mubr.f32.mxu0 0.0
        %6450 = vmatmul.mubr.f32.gmra.mrb[0].mxu0 %v6084
        %v6451 = vpop.f32.mrb[0].mxu0
        %v6452 = vadd.f32 %v5906, %v6451
        %v6453 = vpop.f32.mrb[0].mxu0
        %6454 = vmatprep.mubr.f32.mxu0 0.0
        %6455 = vmatmul.mubr.f32.gmra.mrb[0].mxu0 %v6087
        %v6456 = vpop.f32.mrb[0].mxu0
        %v6457 = vadd.f32 %v5906, %v6456
        %v6458 = vpop.f32.mrb[0].mxu0
        %6459 = vmatprep.mubr.f32.mxu0 0.0
        %6460 = vmatmul.mubr.f32.gmra.mrb[0].mxu0 %v6090
        %v6461 = vpop.f32.mrb[0].mxu0
        %v6462 = vadd.f32 %v5906, %v6461
        %v6463 = vpop.f32.mrb[0].mxu0
        %6464 = vdwg.mxu0
        %vm6465 = vcmp.gt.f32.partialorder %v6162, 0.0
        %vm6466 = vcmp.gt.f32.partialorder %v6167, 0.0
        %vm6467 = vcmp.gt.f32.partialorder %v6172, 0.0
        %vm6468 = vcmp.gt.f32.partialorder %v6177, 0.0
        %vm6469 = vcmp.gt.f32.partialorder %v6182, 0.0
        %vm6470 = vcmp.gt.f32.partialorder %v6187, 0.0
        %vm6471 = vcmp.gt.f32.partialorder %v6192, 0.0
        %vm6472 = vcmp.gt.f32.partialorder %v6197, 0.0
        %vm6473 = vcmp.gt.f32.partialorder %v6202, 0.0
        %vm6474 = vcmp.gt.f32.partialorder %v6207, 0.0
        %vm6475 = vcmp.gt.f32.partialorder %v6212, 0.0
        %vm6476 = vcmp.gt.f32.partialorder %v6217, 0.0
        %vm6477 = vcmp.gt.f32.partialorder %v6222, 0.0
        %vm6478 = vcmp.gt.f32.partialorder %v6227, 0.0
        %vm6479 = vcmp.gt.f32.partialorder %v6232, 0.0
        %vm6480 = vcmp.gt.f32.partialorder %v6237, 0.0
        %vm6481 = vcmp.gt.f32.partialorder %v6242, 0.0
        %vm6482 = vcmp.gt.f32.partialorder %v6247, 0.0
        %vm6483 = vcmp.gt.f32.partialorder %v6252, 0.0
        %vm6484 = vcmp.gt.f32.partialorder %v6257, 0.0
        %vm6485 = vcmp.gt.f32.partialorder %v6262, 0.0
        %vm6486 = vcmp.gt.f32.partialorder %v6267, 0.0
        %vm6487 = vcmp.gt.f32.partialorder %v6272, 0.0
        %vm6488 = vcmp.gt.f32.partialorder %v6277, 0.0
        %vm6489 = vcmp.gt.f32.partialorder %v6282, 0.0
        %vm6490 = vcmp.gt.f32.partialorder %v6287, 0.0
        %vm6491 = vcmp.gt.f32.partialorder %v6292, 0.0
        %vm6492 = vcmp.gt.f32.partialorder %v6297, 0.0
        %vm6493 = vcmp.gt.f32.partialorder %v6302, 0.0
        %vm6494 = vcmp.gt.f32.partialorder %v6307, 0.0
        %vm6495 = vcmp.gt.f32.partialorder %v6312, 0.0
        %vm6496 = vcmp.gt.f32.partialorder %v6317, 0.0
        %vm6497 = vcmp.gt.f32.partialorder %v6322, 0.0
        %vm6498 = vcmp.gt.f32.partialorder %v6327, 0.0
        %vm6499 = vcmp.gt.f32.partialorder %v6332, 0.0
        %vm6500 = vcmp.gt.f32.partialorder %v6337, 0.0
        %vm6501 = vcmp.gt.f32.partialorder %v6342, 0.0
        %vm6502 = vcmp.gt.f32.partialorder %v6347, 0.0
        %vm6503 = vcmp.gt.f32.partialorder %v6352, 0.0
        %vm6504 = vcmp.gt.f32.partialorder %v6357, 0.0
        %vm6505 = vcmp.gt.f32.partialorder %v6362, 0.0
        %vm6506 = vcmp.gt.f32.partialorder %v6367, 0.0
        %vm6507 = vcmp.gt.f32.partialorder %v6372, 0.0
        %vm6508 = vcmp.gt.f32.partialorder %v6377, 0.0
        %vm6509 = vcmp.gt.f32.partialorder %v6382, 0.0
        %vm6510 = vcmp.gt.f32.partialorder %v6387, 0.0
        %vm6511 = vcmp.gt.f32.partialorder %v6392, 0.0
        %vm6512 = vcmp.gt.f32.partialorder %v6397, 0.0
        %vm6513 = vcmp.gt.f32.partialorder %v6402, 0.0
        %vm6514 = vcmp.gt.f32.partialorder %v6407, 0.0
        %vm6515 = vcmp.gt.f32.partialorder %v6412, 0.0
        %vm6516 = vcmp.gt.f32.partialorder %v6417, 0.0
        %vm6517 = vcmp.gt.f32.partialorder %v6422, 0.0
        %vm6518 = vcmp.gt.f32.partialorder %v6427, 0.0
        %vm6519 = vcmp.gt.f32.partialorder %v6432, 0.0
        %vm6520 = vcmp.gt.f32.partialorder %v6437, 0.0
        %vm6521 = vcmp.gt.f32.partialorder %v6442, 0.0
        %vm6522 = vcmp.gt.f32.partialorder %v6447, 0.0
        %vm6523 = vcmp.gt.f32.partialorder %v6452, 0.0
        %vm6524 = vcmp.gt.f32.partialorder %v6457, 0.0
        %vm6525 = vcmp.gt.f32.partialorder %v6462, 0.0
        %v6526 = vmul.f32 %v6162, 0.01
        %v6527 = vmul.f32 %v6167, 0.01
        %v6528 = vmul.f32 %v6172, 0.01
        %v6529 = vmul.f32 %v6177, 0.01
        %v6530 = vmul.f32 %v6182, 0.01
        %v6531 = vmul.f32 %v6187, 0.01
        %v6532 = vmul.f32 %v6192, 0.01
        %v6533 = vmul.f32 %v6197, 0.01
        %v6534 = vmul.f32 %v6202, 0.01
        %v6535 = vmul.f32 %v6207, 0.01
        %v6536 = vmul.f32 %v6212, 0.01
        %v6537 = vmul.f32 %v6217, 0.01
        %v6538 = vmul.f32 %v6222, 0.01
        %v6539 = vmul.f32 %v6227, 0.01
        %v6540 = vmul.f32 %v6232, 0.01
        %v6541 = vmul.f32 %v6237, 0.01
        %v6542 = vmul.f32 %v6242, 0.01
        %v6543 = vmul.f32 %v6247, 0.01
        %v6544 = vmul.f32 %v6252, 0.01
        %v6545 = vmul.f32 %v6257, 0.01
        %v6546 = vmul.f32 %v6262, 0.01
        %v6547 = vmul.f32 %v6267, 0.01
        %v6548 = vmul.f32 %v6272, 0.01
        %v6549 = vmul.f32 %v6277, 0.01
        %v6550 = vmul.f32 %v6282, 0.01
        %v6551 = vmul.f32 %v6287, 0.01
        %v6552 = vmul.f32 %v6292, 0.01
        %v6553 = vmul.f32 %v6297, 0.01
        %v6554 = vmul.f32 %v6302, 0.01
        %v6555 = vmul.f32 %v6307, 0.01
        %v6556 = vmul.f32 %v6312, 0.01
        %v6557 = vmul.f32 %v6317, 0.01
        %v6558 = vmul.f32 %v6322, 0.01
        %v6559 = vmul.f32 %v6327, 0.01
        %v6560 = vmul.f32 %v6332, 0.01
        %v6561 = vmul.f32 %v6337, 0.01
        %v6562 = vmul.f32 %v6342, 0.01
        %v6563 = vmul.f32 %v6347, 0.01
        %v6564 = vmul.f32 %v6352, 0.01
        %v6565 = vmul.f32 %v6357, 0.01
        %v6566 = vmul.f32 %v6362, 0.01
        %v6567 = vmul.f32 %v6367, 0.01
        %v6568 = vmul.f32 %v6372, 0.01
        %v6569 = vmul.f32 %v6377, 0.01
        %v6570 = vmul.f32 %v6382, 0.01
        %v6571 = vmul.f32 %v6387, 0.01
        %v6572 = vmul.f32 %v6392, 0.01
        %v6573 = vmul.f32 %v6397, 0.01
        %v6574 = vmul.f32 %v6402, 0.01
        %v6575 = vmul.f32 %v6407, 0.01
        %v6576 = vmul.f32 %v6412, 0.01
        %v6577 = vmul.f32 %v6417, 0.01
        %v6578 = vmul.f32 %v6422, 0.01
        %v6579 = vmul.f32 %v6427, 0.01
        %v6580 = vmul.f32 %v6432, 0.01
        %v6581 = vmul.f32 %v6437, 0.01
        %v6582 = vmul.f32 %v6442, 0.01
        %v6583 = vmul.f32 %v6447, 0.01
        %v6584 = vmul.f32 %v6452, 0.01
        %v6585 = vmul.f32 %v6457, 0.01
        %v6586 = vmul.f32 %v6462, 0.01
        %v6587 = vsel %vm6465, %v6162, %v6526
        %v6588 = vsel %vm6466, %v6167, %v6527
        %v6589 = vsel %vm6467, %v6172, %v6528
        %v6590 = vsel %vm6468, %v6177, %v6529
        %v6591 = vsel %vm6469, %v6182, %v6530
        %v6592 = vsel %vm6470, %v6187, %v6531
        %v6593 = vsel %vm6471, %v6192, %v6532
        %v6594 = vsel %vm6472, %v6197, %v6533
        %v6595 = vsel %vm6473, %v6202, %v6534
        %v6596 = vsel %vm6474, %v6207, %v6535
        %v6597 = vsel %vm6475, %v6212, %v6536
        %v6598 = vsel %vm6476, %v6217, %v6537
        %v6599 = vsel %vm6477, %v6222, %v6538
        %v6600 = vsel %vm6478, %v6227, %v6539
        %v6601 = vsel %vm6479, %v6232, %v6540
        %v6602 = vsel %vm6480, %v6237, %v6541
        %v6603 = vsel %vm6481, %v6242, %v6542
        %v6604 = vsel %vm6482, %v6247, %v6543
        %v6605 = vsel %vm6483, %v6252, %v6544
        %v6606 = vsel %vm6484, %v6257, %v6545
        %v6607 = vsel %vm6485, %v6262, %v6546
        %v6608 = vsel %vm6486, %v6267, %v6547
        %v6609 = vsel %vm6487, %v6272, %v6548
        %v6610 = vsel %vm6488, %v6277, %v6549
        %v6611 = vsel %vm6489, %v6282, %v6550
        %v6612 = vsel %vm6490, %v6287, %v6551
        %v6613 = vsel %vm6491, %v6292, %v6552
        %v6614 = vsel %vm6492, %v6297, %v6553
        %v6615 = vsel %vm6493, %v6302, %v6554
        %v6616 = vsel %vm6494, %v6307, %v6555
        %v6617 = vsel %vm6495, %v6312, %v6556
        %v6618 = vsel %vm6496, %v6317, %v6557
        %v6619 = vsel %vm6497, %v6322, %v6558
        %v6620 = vsel %vm6498, %v6327, %v6559
        %v6621 = vsel %vm6499, %v6332, %v6560
        %v6622 = vsel %vm6500, %v6337, %v6561
        %v6623 = vsel %vm6501, %v6342, %v6562
        %v6624 = vsel %vm6502, %v6347, %v6563
        %v6625 = vsel %vm6503, %v6352, %v6564
        %v6626 = vsel %vm6504, %v6357, %v6565
        %v6627 = vsel %vm6505, %v6362, %v6566
        %v6628 = vsel %vm6506, %v6367, %v6567
        %v6629 = vsel %vm6507, %v6372, %v6568
        %v6630 = vsel %vm6508, %v6377, %v6569
        %v6631 = vsel %vm6509, %v6382, %v6570
        %v6632 = vsel %vm6510, %v6387, %v6571
        %v6633 = vsel %vm6511, %v6392, %v6572
        %v6634 = vsel %vm6512, %v6397, %v6573
        %v6635 = vsel %vm6513, %v6402, %v6574
        %v6636 = vsel %vm6514, %v6407, %v6575
        %v6637 = vsel %vm6515, %v6412, %v6576
        %v6638 = vsel %vm6516, %v6417, %v6577
        %v6639 = vsel %vm6517, %v6422, %v6578
        %v6640 = vsel %vm6518, %v6427, %v6579
        %v6641 = vsel %vm6519, %v6432, %v6580
        %v6642 = vsel %vm6520, %v6437, %v6581
        %v6643 = vsel %vm6521, %v6442, %v6582
        %v6644 = vsel %vm6522, %v6447, %v6583
        %v6645 = vsel %vm6523, %v6452, %v6584
        %v6646 = vsel %vm6524, %v6457, %v6585
        %v6647 = vsel %vm6525, %v6462, %v6586
        %6648 = vst.msk [vmem:[#allocation2] sm:$0xff] %vm4809, %v6587
        %6649 = vst.msk [vmem:[#allocation2 + $0x8] sm:$0xff] %vm4809, %v6588
        %6650 = vst.msk [vmem:[#allocation2 + $0x10] sm:$0xff] %vm4809, %v6589
        %6651 = vst.msk [vmem:[#allocation2 + $0x18] sm:$0xff] %vm4809, %v6590
        %6652 = vst.msk [vmem:[#allocation2 + $0x20] sm:$0xff] %vm4809, %v6591
        %6653 = vst.msk [vmem:[#allocation2 + $0x28] sm:$0xff] %vm4809, %v6592
        %6654 = vst.msk [vmem:[#allocation2 + $0x30] sm:$0xff] %vm4809, %v6593
        %6655 = vst.msk [vmem:[#allocation2 + $0x38] sm:$0xff] %vm4809, %v6594
        %6656 = vst.msk [vmem:[#allocation2 + $0x40] sm:$0xff] %vm4809, %v6595
        %6657 = vst.msk [vmem:[#allocation2 + $0x48] sm:$0xff] %vm4809, %v6596
        %6658 = vst.msk [vmem:[#allocation2 + $0x50] sm:$0xff] %vm4809, %v6597
        %6659 = vst.msk [vmem:[#allocation2 + $0x58] sm:$0xff] %vm4809, %v6598
        %6660 = vst.msk [vmem:[#allocation2 + $0x60] sm:$0xff] %vm4809, %v6599
        %6661 = vst.msk [vmem:[#allocation2 + $0x68] sm:$0xff] %vm4809, %v6600
        %6662 = vst.msk [vmem:[#allocation2 + $0x70] sm:$0xff] %vm4809, %v6601
        %6663 = vst.msk [vmem:[#allocation2 + $0x78] sm:$0xff] %vm4809, %v6602
        %6664 = vst.msk [vmem:[#allocation2 + $0x80] sm:$0xff] %vm4809, %v6603
        %6665 = vst.msk [vmem:[#allocation2 + $0x88] sm:$0xff] %vm4809, %v6604
        %6666 = vst.msk [vmem:[#allocation2 + $0x90] sm:$0xff] %vm4809, %v6605
        %6667 = vst.msk [vmem:[#allocation2 + $0x98] sm:$0xff] %vm4809, %v6606
        %6668 = vst.msk [vmem:[#allocation2 + $0xa0] sm:$0xff] %vm4809, %v6607
        %6669 = vst.msk [vmem:[#allocation2 + $0xa8] sm:$0xff] %vm4809, %v6608
        %6670 = vst.msk [vmem:[#allocation2 + $0xb0] sm:$0xff] %vm4809, %v6609
        %6671 = vst.msk [vmem:[#allocation2 + $0xb8] sm:$0xff] %vm4809, %v6610
        %6672 = vst.msk [vmem:[#allocation2 + $0xc0] sm:$0xff] %vm4809, %v6611
        %6673 = vst.msk [vmem:[#allocation2 + $0xc8] sm:$0xff] %vm4809, %v6612
        %6674 = vst.msk [vmem:[#allocation2 + $0xd0] sm:$0xff] %vm4809, %v6613
        %6675 = vst.msk [vmem:[#allocation2 + $0xd8] sm:$0xff] %vm4809, %v6614
        %6676 = vst.msk [vmem:[#allocation2 + $0xe0] sm:$0xff] %vm4809, %v6615
        %6677 = vst.msk [vmem:[#allocation2 + $0xe8] sm:$0xff] %vm4809, %v6616
        %6678 = vst.msk [vmem:[#allocation2 + $0xf0] sm:$0xff] %vm4809, %v6617
        %6679 = vst.msk [vmem:[#allocation2 + $0xf8] sm:$0xff] %vm4809, %v6618
        %6680 = vst.msk [vmem:[#allocation2 + $0x100] sm:$0xff] %vm4809, %v6619
        %6681 = vst.msk [vmem:[#allocation2 + $0x108] sm:$0xff] %vm4809, %v6620
        %6682 = vst.msk [vmem:[#allocation2 + $0x110] sm:$0xff] %vm4809, %v6621
        %6683 = vst.msk [vmem:[#allocation2 + $0x118] sm:$0xff] %vm4809, %v6622
        %6684 = vst.msk [vmem:[#allocation2 + $0x120] sm:$0xff] %vm4809, %v6623
        %6685 = vst.msk [vmem:[#allocation2 + $0x128] sm:$0xff] %vm4809, %v6624
        %6686 = vst.msk [vmem:[#allocation2 + $0x130] sm:$0xff] %vm4809, %v6625
        %6687 = vst.msk [vmem:[#allocation2 + $0x138] sm:$0xff] %vm4809, %v6626
        %6688 = vst.msk [vmem:[#allocation2 + $0x140] sm:$0xff] %vm4809, %v6627
        %6689 = vst.msk [vmem:[#allocation2 + $0x148] sm:$0xff] %vm4809, %v6628
        %6690 = vst.msk [vmem:[#allocation2 + $0x150] sm:$0xff] %vm4809, %v6629
        %6691 = vst.msk [vmem:[#allocation2 + $0x158] sm:$0xff] %vm4809, %v6630
        %6692 = vst.msk [vmem:[#allocation2 + $0x160] sm:$0xff] %vm4809, %v6631
        %6693 = vst.msk [vmem:[#allocation2 + $0x168] sm:$0xff] %vm4809, %v6632
        %6694 = vst.msk [vmem:[#allocation2 + $0x170] sm:$0xff] %vm4809, %v6633
        %6695 = vst.msk [vmem:[#allocation2 + $0x178] sm:$0xff] %vm4809, %v6634
        %6696 = vst.msk [vmem:[#allocation2 + $0x180] sm:$0xff] %vm4809, %v6635
        %6697 = vst.msk [vmem:[#allocation2 + $0x188] sm:$0xff] %vm4809, %v6636
        %6698 = vst.msk [vmem:[#allocation2 + $0x190] sm:$0xff] %vm4809, %v6637
        %6699 = vst.msk [vmem:[#allocation2 + $0x198] sm:$0xff] %vm4809, %v6638
        %6700 = vst.msk [vmem:[#allocation2 + $0x1a0] sm:$0xff] %vm4809, %v6639
        %6701 = vst.msk [vmem:[#allocation2 + $0x1a8] sm:$0xff] %vm4809, %v6640
        %6702 = vst.msk [vmem:[#allocation2 + $0x1b0] sm:$0xff] %vm4809, %v6641
        %6703 = vst.msk [vmem:[#allocation2 + $0x1b8] sm:$0xff] %vm4809, %v6642
        %6704 = vst.msk [vmem:[#allocation2 + $0x1c0] sm:$0xff] %vm4809, %v6643
        %6705 = vst.msk [vmem:[#allocation2 + $0x1c8] sm:$0xff] %vm4809, %v6644
        %6706 = vst.msk [vmem:[#allocation2 + $0x1d0] sm:$0xff] %vm4809, %v6645
        %6707 = vst.msk [vmem:[#allocation2 + $0x1d8] sm:$0xff] %vm4809, %v6646
        %6708 = vst.msk [vmem:[#allocation2 + $0x1e0] sm:$0xff] %vm4809, %v6647
        %v6709 = vld [vmem:[#allocation2] ss:$2 sm:$0xff]
        %s6710 = scalar_lea.vmem [#allocation2], 16
        %v6711 = vld [vmem:[%s6710] ss:$2 sm:$0xff]
        %s6712 = scalar_lea.vmem [#allocation2], 32
        %v6713 = vld [vmem:[%s6712] ss:$2 sm:$0xff]
        %s6714 = scalar_lea.vmem [#allocation2], 48
        %v6715 = vld [vmem:[%s6714] ss:$2 sm:$0xff]
        %s6716 = scalar_lea.vmem [#allocation2], 64
        %v6717 = vld [vmem:[%s6716] ss:$2 sm:$0xff]
        %s6718 = scalar_lea.vmem [#allocation2], 80
        %v6719 = vld [vmem:[%s6718] ss:$2 sm:$0xff]
        %s6720 = scalar_lea.vmem [#allocation2], 96
        %v6721 = vld [vmem:[%s6720] ss:$2 sm:$0xff]
        %s6722 = scalar_lea.vmem [#allocation2], 112
        %v6723 = vld [vmem:[%s6722] ss:$2 sm:$0xff]
        %s6724 = scalar_lea.vmem [#allocation2], 128
        %v6725 = vld [vmem:[%s6724] ss:$2 sm:$0xff]
        %s6726 = scalar_lea.vmem [#allocation2], 144
        %v6727 = vld [vmem:[%s6726] ss:$2 sm:$0xff]
        %s6728 = scalar_lea.vmem [#allocation2], 160
        %v6729 = vld [vmem:[%s6728] ss:$2 sm:$0xff]
        %s6730 = scalar_lea.vmem [#allocation2], 176
        %v6731 = vld [vmem:[%s6730] ss:$2 sm:$0xff]
        %s6732 = scalar_lea.vmem [#allocation2], 192
        %v6733 = vld [vmem:[%s6732] ss:$2 sm:$0xff]
        %s6734 = scalar_lea.vmem [#allocation2], 208
        %v6735 = vld [vmem:[%s6734] ss:$2 sm:$0xff]
        %s6736 = scalar_lea.vmem [#allocation2], 224
        %v6737 = vld [vmem:[%s6736] ss:$2 sm:$0xff]
        %s6738 = scalar_lea.vmem [#allocation2], 240
        %v6739 = vld [vmem:[%s6738] ss:$2 sm:$0xff]
        %s6740 = scalar_lea.vmem [#allocation2], 256
        %v6741 = vld [vmem:[%s6740] ss:$2 sm:$0xff]
        %s6742 = scalar_lea.vmem [#allocation2], 272
        %v6743 = vld [vmem:[%s6742] ss:$2 sm:$0xff]
        %s6744 = scalar_lea.vmem [#allocation2], 288
        %v6745 = vld [vmem:[%s6744] ss:$2 sm:$0xff]
        %s6746 = scalar_lea.vmem [#allocation2], 304
        %v6747 = vld [vmem:[%s6746] ss:$2 sm:$0xff]
        %s6748 = scalar_lea.vmem [#allocation2], 320
        %v6749 = vld [vmem:[%s6748] ss:$2 sm:$0xff]
        %s6750 = scalar_lea.vmem [#allocation2], 336
        %v6751 = vld [vmem:[%s6750] ss:$2 sm:$0xff]
        %s6752 = scalar_lea.vmem [#allocation2], 352
        %v6753 = vld [vmem:[%s6752] ss:$2 sm:$0xff]
        %s6754 = scalar_lea.vmem [#allocation2], 368
        %v6755 = vld [vmem:[%s6754] ss:$2 sm:$0xff]
        %s6756 = scalar_lea.vmem [#allocation2], 384
        %v6757 = vld [vmem:[%s6756] ss:$2 sm:$0xff]
        %s6758 = scalar_lea.vmem [#allocation2], 400
        %v6759 = vld [vmem:[%s6758] ss:$2 sm:$0xff]
        %s6760 = scalar_lea.vmem [#allocation2], 416
        %v6761 = vld [vmem:[%s6760] ss:$2 sm:$0xff]
        %s6762 = scalar_lea.vmem [#allocation2], 432
        %v6763 = vld [vmem:[%s6762] ss:$2 sm:$0xff]
        %s6764 = scalar_lea.vmem [#allocation2], 448
        %v6765 = vld [vmem:[%s6764] ss:$2 sm:$0xff]
        %s6766 = scalar_lea.vmem [#allocation2], 464
        %v6767 = vld [vmem:[%s6766] ss:$2 sm:$0xff]
        %s6768 = scalar_lea.vmem [#allocation2], 480
        %v6769 = vld [vmem:[%s6768] ss:$2 sm:$0xf]
        %s6770 = scalar_lea.vmem [#allocation2], 1
        %v6771 = vld [vmem:[%s6770] ss:$2 sm:$0xff]
        %s6772 = scalar_lea.vmem [#allocation2], 17
        %v6773 = vld [vmem:[%s6772] ss:$2 sm:$0xff]
        %s6774 = scalar_lea.vmem [#allocation2], 33
        %v6775 = vld [vmem:[%s6774] ss:$2 sm:$0xff]
        %s6776 = scalar_lea.vmem [#allocation2], 49
        %v6777 = vld [vmem:[%s6776] ss:$2 sm:$0xff]
        %s6778 = scalar_lea.vmem [#allocation2], 65
        %v6779 = vld [vmem:[%s6778] ss:$2 sm:$0xff]
        %s6780 = scalar_lea.vmem [#allocation2], 81
        %v6781 = vld [vmem:[%s6780] ss:$2 sm:$0xff]
        %s6782 = scalar_lea.vmem [#allocation2], 97
        %v6783 = vld [vmem:[%s6782] ss:$2 sm:$0xff]
        %s6784 = scalar_lea.vmem [#allocation2], 113
        %v6785 = vld [vmem:[%s6784] ss:$2 sm:$0xff]
        %s6786 = scalar_lea.vmem [#allocation2], 129
        %v6787 = vld [vmem:[%s6786] ss:$2 sm:$0xff]
        %s6788 = scalar_lea.vmem [#allocation2], 145
        %v6789 = vld [vmem:[%s6788] ss:$2 sm:$0xff]
        %s6790 = scalar_lea.vmem [#allocation2], 161
        %v6791 = vld [vmem:[%s6790] ss:$2 sm:$0xff]
        %s6792 = scalar_lea.vmem [#allocation2], 177
        %v6793 = vld [vmem:[%s6792] ss:$2 sm:$0xff]
        %s6794 = scalar_lea.vmem [#allocation2], 193
        %v6795 = vld [vmem:[%s6794] ss:$2 sm:$0xff]
        %s6796 = scalar_lea.vmem [#allocation2], 209
        %v6797 = vld [vmem:[%s6796] ss:$2 sm:$0xff]
        %s6798 = scalar_lea.vmem [#allocation2], 225
        %v6799 = vld [vmem:[%s6798] ss:$2 sm:$0xff]
        %s6800 = scalar_lea.vmem [#allocation2], 241
        %v6801 = vld [vmem:[%s6800] ss:$2 sm:$0xff]
        %s6802 = scalar_lea.vmem [#allocation2], 257
        %v6803 = vld [vmem:[%s6802] ss:$2 sm:$0xff]
        %s6804 = scalar_lea.vmem [#allocation2], 273
        %v6805 = vld [vmem:[%s6804] ss:$2 sm:$0xff]
        %s6806 = scalar_lea.vmem [#allocation2], 289
        %v6807 = vld [vmem:[%s6806] ss:$2 sm:$0xff]
        %s6808 = scalar_lea.vmem [#allocation2], 305
        %v6809 = vld [vmem:[%s6808] ss:$2 sm:$0xff]
        %s6810 = scalar_lea.vmem [#allocation2], 321
        %v6811 = vld [vmem:[%s6810] ss:$2 sm:$0xff]
        %s6812 = scalar_lea.vmem [#allocation2], 337
        %v6813 = vld [vmem:[%s6812] ss:$2 sm:$0xff]
        %s6814 = scalar_lea.vmem [#allocation2], 353
        %v6815 = vld [vmem:[%s6814] ss:$2 sm:$0xff]
        %s6816 = scalar_lea.vmem [#allocation2], 369
        %v6817 = vld [vmem:[%s6816] ss:$2 sm:$0xff]
        %s6818 = scalar_lea.vmem [#allocation2], 385
        %v6819 = vld [vmem:[%s6818] ss:$2 sm:$0xff]
        %s6820 = scalar_lea.vmem [#allocation2], 401
        %v6821 = vld [vmem:[%s6820] ss:$2 sm:$0xff]
        %s6822 = scalar_lea.vmem [#allocation2], 417
        %v6823 = vld [vmem:[%s6822] ss:$2 sm:$0xff]
        %s6824 = scalar_lea.vmem [#allocation2], 433
        %v6825 = vld [vmem:[%s6824] ss:$2 sm:$0xff]
        %s6826 = scalar_lea.vmem [#allocation2], 449
        %v6827 = vld [vmem:[%s6826] ss:$2 sm:$0xff]
        %s6828 = scalar_lea.vmem [#allocation2], 465
        %v6829 = vld [vmem:[%s6828] ss:$2 sm:$0xff]
        %s6830 = scalar_lea.vmem [#allocation2], 481
        %v6831 = vld [vmem:[%s6830] ss:$2 sm:$0xf]
        %v6832 = vmax.f32 %v6709, %v6771
        %v6833 = vmax.f32 %v6711, %v6773
        %v6834 = vmax.f32 %v6713, %v6775
        %v6835 = vmax.f32 %v6715, %v6777
        %v6836 = vmax.f32 %v6717, %v6779
        %v6837 = vmax.f32 %v6719, %v6781
        %v6838 = vmax.f32 %v6721, %v6783
        %v6839 = vmax.f32 %v6723, %v6785
        %v6840 = vmax.f32 %v6725, %v6787
        %v6841 = vmax.f32 %v6727, %v6789
        %v6842 = vmax.f32 %v6729, %v6791
        %v6843 = vmax.f32 %v6731, %v6793
        %v6844 = vmax.f32 %v6733, %v6795
        %v6845 = vmax.f32 %v6735, %v6797
        %v6846 = vmax.f32 %v6737, %v6799
        %v6847 = vmax.f32 %v6739, %v6801
        %v6848 = vmax.f32 %v6741, %v6803
        %v6849 = vmax.f32 %v6743, %v6805
        %v6850 = vmax.f32 %v6745, %v6807
        %v6851 = vmax.f32 %v6747, %v6809
        %v6852 = vmax.f32 %v6749, %v6811
        %v6853 = vmax.f32 %v6751, %v6813
        %v6854 = vmax.f32 %v6753, %v6815
        %v6855 = vmax.f32 %v6755, %v6817
        %v6856 = vmax.f32 %v6757, %v6819
        %v6857 = vmax.f32 %v6759, %v6821
        %v6858 = vmax.f32 %v6761, %v6823
        %v6859 = vmax.f32 %v6763, %v6825
        %v6860 = vmax.f32 %v6765, %v6827
        %v6861 = vmax.f32 %v6767, %v6829
        %v6862 = vmax.f32 %v6769, %v6831
        %v6892 = vrot.slane %v6832, 1
        %v6893 = vrot.slane %v6833, 1
        %v6894 = vsel %vm933, %v6892, %v6893
        %v6895 = vrot.slane %v6834, 1
        %v6896 = vsel %vm933, %v6893, %v6895
        %v6897 = vrot.slane %v6835, 1
        %v6898 = vsel %vm933, %v6895, %v6897
        %v6899 = vrot.slane %v6836, 1
        %v6900 = vsel %vm933, %v6897, %v6899
        %v6901 = vrot.slane %v6837, 1
        %v6902 = vsel %vm933, %v6899, %v6901
        %v6903 = vrot.slane %v6838, 1
        %v6904 = vsel %vm933, %v6901, %v6903
        %v6905 = vrot.slane %v6839, 1
        %v6906 = vsel %vm933, %v6903, %v6905
        %v6907 = vrot.slane %v6840, 1
        %v6908 = vsel %vm933, %v6905, %v6907
        %v6909 = vrot.slane %v6841, 1
        %v6910 = vsel %vm933, %v6907, %v6909
        %v6911 = vrot.slane %v6842, 1
        %v6912 = vsel %vm933, %v6909, %v6911
        %v6913 = vrot.slane %v6843, 1
        %v6914 = vsel %vm933, %v6911, %v6913
        %v6915 = vrot.slane %v6844, 1
        %v6916 = vsel %vm933, %v6913, %v6915
        %v6917 = vrot.slane %v6845, 1
        %v6918 = vsel %vm933, %v6915, %v6917
        %v6919 = vrot.slane %v6846, 1
        %v6920 = vsel %vm933, %v6917, %v6919
        %v6921 = vrot.slane %v6847, 1
        %v6922 = vsel %vm933, %v6919, %v6921
        %v6923 = vrot.slane %v6848, 1
        %v6924 = vsel %vm933, %v6921, %v6923
        %v6925 = vrot.slane %v6849, 1
        %v6926 = vsel %vm933, %v6923, %v6925
        %v6927 = vrot.slane %v6850, 1
        %v6928 = vsel %vm933, %v6925, %v6927
        %v6929 = vrot.slane %v6851, 1
        %v6930 = vsel %vm933, %v6927, %v6929
        %v6931 = vrot.slane %v6852, 1
        %v6932 = vsel %vm933, %v6929, %v6931
        %v6933 = vrot.slane %v6853, 1
        %v6934 = vsel %vm933, %v6931, %v6933
        %v6935 = vrot.slane %v6854, 1
        %v6936 = vsel %vm933, %v6933, %v6935
        %v6937 = vrot.slane %v6855, 1
        %v6938 = vsel %vm933, %v6935, %v6937
        %v6939 = vrot.slane %v6856, 1
        %v6940 = vsel %vm933, %v6937, %v6939
        %v6941 = vrot.slane %v6857, 1
        %v6942 = vsel %vm933, %v6939, %v6941
        %v6943 = vrot.slane %v6858, 1
        %v6944 = vsel %vm933, %v6941, %v6943
        %v6945 = vrot.slane %v6859, 1
        %v6946 = vsel %vm933, %v6943, %v6945
        %v6947 = vrot.slane %v6860, 1
        %v6948 = vsel %vm933, %v6945, %v6947
        %6949 = vrot.lane.b32.xlu0 %v6894, 5
        %v6950 = vpop.permute.xlu0 %6949
        %6951 = vrot.lane.b32.xlu0 %v6896, 5
        %v6952 = vpop.permute.xlu0 %6951
        %6953 = vrot.lane.b32.xlu0 %v6898, 5
        %v6954 = vpop.permute.xlu0 %6953
        %6955 = vrot.lane.b32.xlu0 %v6900, 5
        %v6956 = vpop.permute.xlu0 %6955
        %6957 = vrot.lane.b32.xlu0 %v6902, 5
        %v6958 = vpop.permute.xlu0 %6957
        %6959 = vrot.lane.b32.xlu0 %v6904, 5
        %v6960 = vpop.permute.xlu0 %6959
        %6961 = vrot.lane.b32.xlu0 %v6906, 5
        %v6962 = vpop.permute.xlu0 %6961
        %6963 = vrot.lane.b32.xlu0 %v6908, 5
        %v6964 = vpop.permute.xlu0 %6963
        %6965 = vrot.lane.b32.xlu0 %v6910, 5
        %v6966 = vpop.permute.xlu0 %6965
        %6967 = vrot.lane.b32.xlu0 %v6912, 5
        %v6968 = vpop.permute.xlu0 %6967
        %6969 = vrot.lane.b32.xlu0 %v6914, 5
        %v6970 = vpop.permute.xlu0 %6969
        %6971 = vrot.lane.b32.xlu0 %v6916, 5
        %v6972 = vpop.permute.xlu0 %6971
        %6973 = vrot.lane.b32.xlu0 %v6918, 5
        %v6974 = vpop.permute.xlu0 %6973
        %6975 = vrot.lane.b32.xlu0 %v6920, 5
        %v6976 = vpop.permute.xlu0 %6975
        %6977 = vrot.lane.b32.xlu0 %v6922, 5
        %v6978 = vpop.permute.xlu0 %6977
        %6979 = vrot.lane.b32.xlu0 %v6924, 5
        %v6980 = vpop.permute.xlu0 %6979
        %6981 = vrot.lane.b32.xlu0 %v6926, 5
        %v6982 = vpop.permute.xlu0 %6981
        %6983 = vrot.lane.b32.xlu0 %v6928, 5
        %v6984 = vpop.permute.xlu0 %6983
        %6985 = vrot.lane.b32.xlu0 %v6930, 5
        %v6986 = vpop.permute.xlu0 %6985
        %6987 = vrot.lane.b32.xlu0 %v6932, 5
        %v6988 = vpop.permute.xlu0 %6987
        %6989 = vrot.lane.b32.xlu0 %v6934, 5
        %v6990 = vpop.permute.xlu0 %6989
        %6991 = vrot.lane.b32.xlu0 %v6936, 5
        %v6992 = vpop.permute.xlu0 %6991
        %6993 = vrot.lane.b32.xlu0 %v6938, 5
        %v6994 = vpop.permute.xlu0 %6993
        %6995 = vrot.lane.b32.xlu0 %v6940, 5
        %v6996 = vpop.permute.xlu0 %6995
        %6997 = vrot.lane.b32.xlu0 %v6942, 5
        %v6998 = vpop.permute.xlu0 %6997
        %6999 = vrot.lane.b32.xlu0 %v6944, 5
        %v7000 = vpop.permute.xlu0 %6999
        %7001 = vrot.lane.b32.xlu0 %v6946, 5
        %v7002 = vpop.permute.xlu0 %7001
        %7003 = vrot.lane.b32.xlu0 %v6948, 5
        %v7004 = vpop.permute.xlu0 %7003
        %7005 = vrot.lane.b32.xlu0 %v6947, 5
        %v7006 = vpop.permute.xlu0 %7005
        %v7036 = vrot.slane %v6832, 2
        %v7037 = vrot.slane %v6833, 2
        %v7038 = vsel %vm1240, %v7036, %v7037
        %v7039 = vrot.slane %v6834, 2
        %v7040 = vsel %vm1240, %v7037, %v7039
        %v7041 = vrot.slane %v6835, 2
        %v7042 = vsel %vm1240, %v7039, %v7041
        %v7043 = vrot.slane %v6836, 2
        %v7044 = vsel %vm1240, %v7041, %v7043
        %v7045 = vrot.slane %v6837, 2
        %v7046 = vsel %vm1240, %v7043, %v7045
        %v7047 = vrot.slane %v6838, 2
        %v7048 = vsel %vm1240, %v7045, %v7047
        %v7049 = vrot.slane %v6839, 2
        %v7050 = vsel %vm1240, %v7047, %v7049
        %v7051 = vrot.slane %v6840, 2
        %v7052 = vsel %vm1240, %v7049, %v7051
        %v7053 = vrot.slane %v6841, 2
        %v7054 = vsel %vm1240, %v7051, %v7053
        %v7055 = vrot.slane %v6842, 2
        %v7056 = vsel %vm1240, %v7053, %v7055
        %v7057 = vrot.slane %v6843, 2
        %v7058 = vsel %vm1240, %v7055, %v7057
        %v7059 = vrot.slane %v6844, 2
        %v7060 = vsel %vm1240, %v7057, %v7059
        %v7061 = vrot.slane %v6845, 2
        %v7062 = vsel %vm1240, %v7059, %v7061
        %v7063 = vrot.slane %v6846, 2
        %v7064 = vsel %vm1240, %v7061, %v7063
        %v7065 = vrot.slane %v6847, 2
        %v7066 = vsel %vm1240, %v7063, %v7065
        %v7067 = vrot.slane %v6848, 2
        %v7068 = vsel %vm1240, %v7065, %v7067
        %v7069 = vrot.slane %v6849, 2
        %v7070 = vsel %vm1240, %v7067, %v7069
        %v7071 = vrot.slane %v6850, 2
        %v7072 = vsel %vm1240, %v7069, %v7071
        %v7073 = vrot.slane %v6851, 2
        %v7074 = vsel %vm1240, %v7071, %v7073
        %v7075 = vrot.slane %v6852, 2
        %v7076 = vsel %vm1240, %v7073, %v7075
        %v7077 = vrot.slane %v6853, 2
        %v7078 = vsel %vm1240, %v7075, %v7077
        %v7079 = vrot.slane %v6854, 2
        %v7080 = vsel %vm1240, %v7077, %v7079
        %v7081 = vrot.slane %v6855, 2
        %v7082 = vsel %vm1240, %v7079, %v7081
        %v7083 = vrot.slane %v6856, 2
        %v7084 = vsel %vm1240, %v7081, %v7083
        %v7085 = vrot.slane %v6857, 2
        %v7086 = vsel %vm1240, %v7083, %v7085
        %v7087 = vrot.slane %v6858, 2
        %v7088 = vsel %vm1240, %v7085, %v7087
        %v7089 = vrot.slane %v6859, 2
        %v7090 = vsel %vm1240, %v7087, %v7089
        %v7091 = vrot.slane %v6860, 2
        %v7092 = vsel %vm1240, %v7089, %v7091
        %7093 = vrot.lane.b32.xlu0 %v7038, 10
        %v7094 = vpop.permute.xlu0 %7093
        %7095 = vrot.lane.b32.xlu0 %v7040, 10
        %v7096 = vpop.permute.xlu0 %7095
        %7097 = vrot.lane.b32.xlu0 %v7042, 10
        %v7098 = vpop.permute.xlu0 %7097
        %7099 = vrot.lane.b32.xlu0 %v7044, 10
        %v7100 = vpop.permute.xlu0 %7099
        %7101 = vrot.lane.b32.xlu0 %v7046, 10
        %v7102 = vpop.permute.xlu0 %7101
        %7103 = vrot.lane.b32.xlu0 %v7048, 10
        %v7104 = vpop.permute.xlu0 %7103
        %7105 = vrot.lane.b32.xlu0 %v7050, 10
        %v7106 = vpop.permute.xlu0 %7105
        %7107 = vrot.lane.b32.xlu0 %v7052, 10
        %v7108 = vpop.permute.xlu0 %7107
        %7109 = vrot.lane.b32.xlu0 %v7054, 10
        %v7110 = vpop.permute.xlu0 %7109
        %7111 = vrot.lane.b32.xlu0 %v7056, 10
        %v7112 = vpop.permute.xlu0 %7111
        %7113 = vrot.lane.b32.xlu0 %v7058, 10
        %v7114 = vpop.permute.xlu0 %7113
        %7115 = vrot.lane.b32.xlu0 %v7060, 10
        %v7116 = vpop.permute.xlu0 %7115
        %7117 = vrot.lane.b32.xlu0 %v7062, 10
        %v7118 = vpop.permute.xlu0 %7117
        %7119 = vrot.lane.b32.xlu0 %v7064, 10
        %v7120 = vpop.permute.xlu0 %7119
        %7121 = vrot.lane.b32.xlu0 %v7066, 10
        %v7122 = vpop.permute.xlu0 %7121
        %7123 = vrot.lane.b32.xlu0 %v7068, 10
        %v7124 = vpop.permute.xlu0 %7123
        %7125 = vrot.lane.b32.xlu0 %v7070, 10
        %v7126 = vpop.permute.xlu0 %7125
        %7127 = vrot.lane.b32.xlu0 %v7072, 10
        %v7128 = vpop.permute.xlu0 %7127
        %7129 = vrot.lane.b32.xlu0 %v7074, 10
        %v7130 = vpop.permute.xlu0 %7129
        %7131 = vrot.lane.b32.xlu0 %v7076, 10
        %v7132 = vpop.permute.xlu0 %7131
        %7133 = vrot.lane.b32.xlu0 %v7078, 10
        %v7134 = vpop.permute.xlu0 %7133
        %7135 = vrot.lane.b32.xlu0 %v7080, 10
        %v7136 = vpop.permute.xlu0 %7135
        %7137 = vrot.lane.b32.xlu0 %v7082, 10
        %v7138 = vpop.permute.xlu0 %7137
        %7139 = vrot.lane.b32.xlu0 %v7084, 10
        %v7140 = vpop.permute.xlu0 %7139
        %7141 = vrot.lane.b32.xlu0 %v7086, 10
        %v7142 = vpop.permute.xlu0 %7141
        %7143 = vrot.lane.b32.xlu0 %v7088, 10
        %v7144 = vpop.permute.xlu0 %7143
        %7145 = vrot.lane.b32.xlu0 %v7090, 10
        %v7146 = vpop.permute.xlu0 %7145
        %7147 = vrot.lane.b32.xlu0 %v7092, 10
        %v7148 = vpop.permute.xlu0 %7147
        %7149 = vrot.lane.b32.xlu0 %v7091, 10
        %v7150 = vpop.permute.xlu0 %7149
        %v7181 = vrot.slane %v6832, 3
        %v7182 = vrot.slane %v6833, 3
        %v7183 = vsel %vm1547, %v7181, %v7182
        %v7184 = vrot.slane %v6834, 3
        %v7185 = vsel %vm1547, %v7182, %v7184
        %v7186 = vrot.slane %v6835, 3
        %v7187 = vsel %vm1547, %v7184, %v7186
        %v7188 = vrot.slane %v6836, 3
        %v7189 = vsel %vm1547, %v7186, %v7188
        %v7190 = vrot.slane %v6837, 3
        %v7191 = vsel %vm1547, %v7188, %v7190
        %v7192 = vrot.slane %v6838, 3
        %v7193 = vsel %vm1547, %v7190, %v7192
        %v7194 = vrot.slane %v6839, 3
        %v7195 = vsel %vm1547, %v7192, %v7194
        %v7196 = vrot.slane %v6840, 3
        %v7197 = vsel %vm1547, %v7194, %v7196
        %v7198 = vrot.slane %v6841, 3
        %v7199 = vsel %vm1547, %v7196, %v7198
        %v7200 = vrot.slane %v6842, 3
        %v7201 = vsel %vm1547, %v7198, %v7200
        %v7202 = vrot.slane %v6843, 3
        %v7203 = vsel %vm1547, %v7200, %v7202
        %v7204 = vrot.slane %v6844, 3
        %v7205 = vsel %vm1547, %v7202, %v7204
        %v7206 = vrot.slane %v6845, 3
        %v7207 = vsel %vm1547, %v7204, %v7206
        %v7208 = vrot.slane %v6846, 3
        %v7209 = vsel %vm1547, %v7206, %v7208
        %v7210 = vrot.slane %v6847, 3
        %v7211 = vsel %vm1547, %v7208, %v7210
        %v7212 = vrot.slane %v6848, 3
        %v7213 = vsel %vm1547, %v7210, %v7212
        %v7214 = vrot.slane %v6849, 3
        %v7215 = vsel %vm1547, %v7212, %v7214
        %v7216 = vrot.slane %v6850, 3
        %v7217 = vsel %vm1547, %v7214, %v7216
        %v7218 = vrot.slane %v6851, 3
        %v7219 = vsel %vm1547, %v7216, %v7218
        %v7220 = vrot.slane %v6852, 3
        %v7221 = vsel %vm1547, %v7218, %v7220
        %v7222 = vrot.slane %v6853, 3
        %v7223 = vsel %vm1547, %v7220, %v7222
        %v7224 = vrot.slane %v6854, 3
        %v7225 = vsel %vm1547, %v7222, %v7224
        %v7226 = vrot.slane %v6855, 3
        %v7227 = vsel %vm1547, %v7224, %v7226
        %v7228 = vrot.slane %v6856, 3
        %v7229 = vsel %vm1547, %v7226, %v7228
        %v7230 = vrot.slane %v6857, 3
        %v7231 = vsel %vm1547, %v7228, %v7230
        %v7232 = vrot.slane %v6858, 3
        %v7233 = vsel %vm1547, %v7230, %v7232
        %v7234 = vrot.slane %v6859, 3
        %v7235 = vsel %vm1547, %v7232, %v7234
        %v7236 = vrot.slane %v6860, 3
        %v7237 = vsel %vm1547, %v7234, %v7236
        %v7238 = vrot.slane %v6861, 3
        %v7239 = vsel %vm1547, %v7236, %v7238
        %7240 = vrot.lane.b32.xlu0 %v7183, 15
        %v7241 = vpop.permute.xlu0 %7240
        %7242 = vrot.lane.b32.xlu0 %v7185, 15
        %v7243 = vpop.permute.xlu0 %7242
        %7244 = vrot.lane.b32.xlu0 %v7187, 15
        %v7245 = vpop.permute.xlu0 %7244
        %7246 = vrot.lane.b32.xlu0 %v7189, 15
        %v7247 = vpop.permute.xlu0 %7246
        %7248 = vrot.lane.b32.xlu0 %v7191, 15
        %v7249 = vpop.permute.xlu0 %7248
        %7250 = vrot.lane.b32.xlu0 %v7193, 15
        %v7251 = vpop.permute.xlu0 %7250
        %7252 = vrot.lane.b32.xlu0 %v7195, 15
        %v7253 = vpop.permute.xlu0 %7252
        %7254 = vrot.lane.b32.xlu0 %v7197, 15
        %v7255 = vpop.permute.xlu0 %7254
        %7256 = vrot.lane.b32.xlu0 %v7199, 15
        %v7257 = vpop.permute.xlu0 %7256
        %7258 = vrot.lane.b32.xlu0 %v7201, 15
        %v7259 = vpop.permute.xlu0 %7258
        %7260 = vrot.lane.b32.xlu0 %v7203, 15
        %v7261 = vpop.permute.xlu0 %7260
        %7262 = vrot.lane.b32.xlu0 %v7205, 15
        %v7263 = vpop.permute.xlu0 %7262
        %7264 = vrot.lane.b32.xlu0 %v7207, 15
        %v7265 = vpop.permute.xlu0 %7264
        %7266 = vrot.lane.b32.xlu0 %v7209, 15
        %v7267 = vpop.permute.xlu0 %7266
        %7268 = vrot.lane.b32.xlu0 %v7211, 15
        %v7269 = vpop.permute.xlu0 %7268
        %7270 = vrot.lane.b32.xlu0 %v7213, 15
        %v7271 = vpop.permute.xlu0 %7270
        %7272 = vrot.lane.b32.xlu0 %v7215, 15
        %v7273 = vpop.permute.xlu0 %7272
        %7274 = vrot.lane.b32.xlu0 %v7217, 15
        %v7275 = vpop.permute.xlu0 %7274
        %7276 = vrot.lane.b32.xlu0 %v7219, 15
        %v7277 = vpop.permute.xlu0 %7276
        %7278 = vrot.lane.b32.xlu0 %v7221, 15
        %v7279 = vpop.permute.xlu0 %7278
        %7280 = vrot.lane.b32.xlu0 %v7223, 15
        %v7281 = vpop.permute.xlu0 %7280
        %7282 = vrot.lane.b32.xlu0 %v7225, 15
        %v7283 = vpop.permute.xlu0 %7282
        %7284 = vrot.lane.b32.xlu0 %v7227, 15
        %v7285 = vpop.permute.xlu0 %7284
        %7286 = vrot.lane.b32.xlu0 %v7229, 15
        %v7287 = vpop.permute.xlu0 %7286
        %7288 = vrot.lane.b32.xlu0 %v7231, 15
        %v7289 = vpop.permute.xlu0 %7288
        %7290 = vrot.lane.b32.xlu0 %v7233, 15
        %v7291 = vpop.permute.xlu0 %7290
        %7292 = vrot.lane.b32.xlu0 %v7235, 15
        %v7293 = vpop.permute.xlu0 %7292
        %7294 = vrot.lane.b32.xlu0 %v7237, 15
        %v7295 = vpop.permute.xlu0 %7294
        %7296 = vrot.lane.b32.xlu0 %v7239, 15
        %v7297 = vpop.permute.xlu0 %7296
        %v7327 = vrot.slane %v6832, 4
        %v7328 = vrot.slane %v6833, 4
        %v7329 = vsel %vm1854, %v7327, %v7328
        %v7330 = vrot.slane %v6834, 4
        %v7331 = vsel %vm1854, %v7328, %v7330
        %v7332 = vrot.slane %v6835, 4
        %v7333 = vsel %vm1854, %v7330, %v7332
        %v7334 = vrot.slane %v6836, 4
        %v7335 = vsel %vm1854, %v7332, %v7334
        %v7336 = vrot.slane %v6837, 4
        %v7337 = vsel %vm1854, %v7334, %v7336
        %v7338 = vrot.slane %v6838, 4
        %v7339 = vsel %vm1854, %v7336, %v7338
        %v7340 = vrot.slane %v6839, 4
        %v7341 = vsel %vm1854, %v7338, %v7340
        %v7342 = vrot.slane %v6840, 4
        %v7343 = vsel %vm1854, %v7340, %v7342
        %v7344 = vrot.slane %v6841, 4
        %v7345 = vsel %vm1854, %v7342, %v7344
        %v7346 = vrot.slane %v6842, 4
        %v7347 = vsel %vm1854, %v7344, %v7346
        %v7348 = vrot.slane %v6843, 4
        %v7349 = vsel %vm1854, %v7346, %v7348
        %v7350 = vrot.slane %v6844, 4
        %v7351 = vsel %vm1854, %v7348, %v7350
        %v7352 = vrot.slane %v6845, 4
        %v7353 = vsel %vm1854, %v7350, %v7352
        %v7354 = vrot.slane %v6846, 4
        %v7355 = vsel %vm1854, %v7352, %v7354
        %v7356 = vrot.slane %v6847, 4
        %v7357 = vsel %vm1854, %v7354, %v7356
        %v7358 = vrot.slane %v6848, 4
        %v7359 = vsel %vm1854, %v7356, %v7358
        %v7360 = vrot.slane %v6849, 4
        %v7361 = vsel %vm1854, %v7358, %v7360
        %v7362 = vrot.slane %v6850, 4
        %v7363 = vsel %vm1854, %v7360, %v7362
        %v7364 = vrot.slane %v6851, 4
        %v7365 = vsel %vm1854, %v7362, %v7364
        %v7366 = vrot.slane %v6852, 4
        %v7367 = vsel %vm1854, %v7364, %v7366
        %v7368 = vrot.slane %v6853, 4
        %v7369 = vsel %vm1854, %v7366, %v7368
        %v7370 = vrot.slane %v6854, 4
        %v7371 = vsel %vm1854, %v7368, %v7370
        %v7372 = vrot.slane %v6855, 4
        %v7373 = vsel %vm1854, %v7370, %v7372
        %v7374 = vrot.slane %v6856, 4
        %v7375 = vsel %vm1854, %v7372, %v7374
        %v7376 = vrot.slane %v6857, 4
        %v7377 = vsel %vm1854, %v7374, %v7376
        %v7378 = vrot.slane %v6858, 4
        %v7379 = vsel %vm1854, %v7376, %v7378
        %v7380 = vrot.slane %v6859, 4
        %v7381 = vsel %vm1854, %v7378, %v7380
        %v7382 = vrot.slane %v6860, 4
        %v7383 = vsel %vm1854, %v7380, %v7382
        %v7384 = vrot.slane %v6861, 4
        %v7385 = vsel %vm1854, %v7382, %v7384
        %7386 = vrot.lane.b32.xlu0 %v7329, 20
        %v7387 = vpop.permute.xlu0 %7386
        %7388 = vrot.lane.b32.xlu0 %v7331, 20
        %v7389 = vpop.permute.xlu0 %7388
        %7390 = vrot.lane.b32.xlu0 %v7333, 20
        %v7391 = vpop.permute.xlu0 %7390
        %7392 = vrot.lane.b32.xlu0 %v7335, 20
        %v7393 = vpop.permute.xlu0 %7392
        %7394 = vrot.lane.b32.xlu0 %v7337, 20
        %v7395 = vpop.permute.xlu0 %7394
        %7396 = vrot.lane.b32.xlu0 %v7339, 20
        %v7397 = vpop.permute.xlu0 %7396
        %7398 = vrot.lane.b32.xlu0 %v7341, 20
        %v7399 = vpop.permute.xlu0 %7398
        %7400 = vrot.lane.b32.xlu0 %v7343, 20
        %v7401 = vpop.permute.xlu0 %7400
        %7402 = vrot.lane.b32.xlu0 %v7345, 20
        %v7403 = vpop.permute.xlu0 %7402
        %7404 = vrot.lane.b32.xlu0 %v7347, 20
        %v7405 = vpop.permute.xlu0 %7404
        %7406 = vrot.lane.b32.xlu0 %v7349, 20
        %v7407 = vpop.permute.xlu0 %7406
        %7408 = vrot.lane.b32.xlu0 %v7351, 20
        %v7409 = vpop.permute.xlu0 %7408
        %7410 = vrot.lane.b32.xlu0 %v7353, 20
        %v7411 = vpop.permute.xlu0 %7410
        %7412 = vrot.lane.b32.xlu0 %v7355, 20
        %v7413 = vpop.permute.xlu0 %7412
        %7414 = vrot.lane.b32.xlu0 %v7357, 20
        %v7415 = vpop.permute.xlu0 %7414
        %7416 = vrot.lane.b32.xlu0 %v7359, 20
        %v7417 = vpop.permute.xlu0 %7416
        %7418 = vrot.lane.b32.xlu0 %v7361, 20
        %v7419 = vpop.permute.xlu0 %7418
        %7420 = vrot.lane.b32.xlu0 %v7363, 20
        %v7421 = vpop.permute.xlu0 %7420
        %7422 = vrot.lane.b32.xlu0 %v7365, 20
        %v7423 = vpop.permute.xlu0 %7422
        %7424 = vrot.lane.b32.xlu0 %v7367, 20
        %v7425 = vpop.permute.xlu0 %7424
        %7426 = vrot.lane.b32.xlu0 %v7369, 20
        %v7427 = vpop.permute.xlu0 %7426
        %7428 = vrot.lane.b32.xlu0 %v7371, 20
        %v7429 = vpop.permute.xlu0 %7428
        %7430 = vrot.lane.b32.xlu0 %v7373, 20
        %v7431 = vpop.permute.xlu0 %7430
        %7432 = vrot.lane.b32.xlu0 %v7375, 20
        %v7433 = vpop.permute.xlu0 %7432
        %7434 = vrot.lane.b32.xlu0 %v7377, 20
        %v7435 = vpop.permute.xlu0 %7434
        %7436 = vrot.lane.b32.xlu0 %v7379, 20
        %v7437 = vpop.permute.xlu0 %7436
        %7438 = vrot.lane.b32.xlu0 %v7381, 20
        %v7439 = vpop.permute.xlu0 %7438
        %7440 = vrot.lane.b32.xlu0 %v7383, 20
        %v7441 = vpop.permute.xlu0 %7440
        %7442 = vrot.lane.b32.xlu0 %v7385, 20
        %v7443 = vpop.permute.xlu0 %7442
        %v7473 = vrot.slane %v6832, 5
        %v7474 = vrot.slane %v6833, 5
        %v7475 = vsel %vm2161, %v7473, %v7474
        %v7476 = vrot.slane %v6834, 5
        %v7477 = vsel %vm2161, %v7474, %v7476
        %v7478 = vrot.slane %v6835, 5
        %v7479 = vsel %vm2161, %v7476, %v7478
        %v7480 = vrot.slane %v6836, 5
        %v7481 = vsel %vm2161, %v7478, %v7480
        %v7482 = vrot.slane %v6837, 5
        %v7483 = vsel %vm2161, %v7480, %v7482
        %v7484 = vrot.slane %v6838, 5
        %v7485 = vsel %vm2161, %v7482, %v7484
        %v7486 = vrot.slane %v6839, 5
        %v7487 = vsel %vm2161, %v7484, %v7486
        %v7488 = vrot.slane %v6840, 5
        %v7489 = vsel %vm2161, %v7486, %v7488
        %v7490 = vrot.slane %v6841, 5
        %v7491 = vsel %vm2161, %v7488, %v7490
        %v7492 = vrot.slane %v6842, 5
        %v7493 = vsel %vm2161, %v7490, %v7492
        %v7494 = vrot.slane %v6843, 5
        %v7495 = vsel %vm2161, %v7492, %v7494
        %v7496 = vrot.slane %v6844, 5
        %v7497 = vsel %vm2161, %v7494, %v7496
        %v7498 = vrot.slane %v6845, 5
        %v7499 = vsel %vm2161, %v7496, %v7498
        %v7500 = vrot.slane %v6846, 5
        %v7501 = vsel %vm2161, %v7498, %v7500
        %v7502 = vrot.slane %v6847, 5
        %v7503 = vsel %vm2161, %v7500, %v7502
        %v7504 = vrot.slane %v6848, 5
        %v7505 = vsel %vm2161, %v7502, %v7504
        %v7506 = vrot.slane %v6849, 5
        %v7507 = vsel %vm2161, %v7504, %v7506
        %v7508 = vrot.slane %v6850, 5
        %v7509 = vsel %vm2161, %v7506, %v7508
        %v7510 = vrot.slane %v6851, 5
        %v7511 = vsel %vm2161, %v7508, %v7510
        %v7512 = vrot.slane %v6852, 5
        %v7513 = vsel %vm2161, %v7510, %v7512
        %v7514 = vrot.slane %v6853, 5
        %v7515 = vsel %vm2161, %v7512, %v7514
        %v7516 = vrot.slane %v6854, 5
        %v7517 = vsel %vm2161, %v7514, %v7516
        %v7518 = vrot.slane %v6855, 5
        %v7519 = vsel %vm2161, %v7516, %v7518
        %v7520 = vrot.slane %v6856, 5
        %v7521 = vsel %vm2161, %v7518, %v7520
        %v7522 = vrot.slane %v6857, 5
        %v7523 = vsel %vm2161, %v7520, %v7522
        %v7524 = vrot.slane %v6858, 5
        %v7525 = vsel %vm2161, %v7522, %v7524
        %v7526 = vrot.slane %v6859, 5
        %v7527 = vsel %vm2161, %v7524, %v7526
        %v7528 = vrot.slane %v6860, 5
        %v7529 = vsel %vm2161, %v7526, %v7528
        %v7530 = vrot.slane %v6861, 5
        %v7531 = vsel %vm2161, %v7528, %v7530
        %7532 = vrot.lane.b32.xlu0 %v7475, 25
        %v7533 = vpop.permute.xlu0 %7532
        %7534 = vrot.lane.b32.xlu0 %v7477, 25
        %v7535 = vpop.permute.xlu0 %7534
        %7536 = vrot.lane.b32.xlu0 %v7479, 25
        %v7537 = vpop.permute.xlu0 %7536
        %7538 = vrot.lane.b32.xlu0 %v7481, 25
        %v7539 = vpop.permute.xlu0 %7538
        %7540 = vrot.lane.b32.xlu0 %v7483, 25
        %v7541 = vpop.permute.xlu0 %7540
        %7542 = vrot.lane.b32.xlu0 %v7485, 25
        %v7543 = vpop.permute.xlu0 %7542
        %7544 = vrot.lane.b32.xlu0 %v7487, 25
        %v7545 = vpop.permute.xlu0 %7544
        %7546 = vrot.lane.b32.xlu0 %v7489, 25
        %v7547 = vpop.permute.xlu0 %7546
        %7548 = vrot.lane.b32.xlu0 %v7491, 25
        %v7549 = vpop.permute.xlu0 %7548
        %7550 = vrot.lane.b32.xlu0 %v7493, 25
        %v7551 = vpop.permute.xlu0 %7550
        %7552 = vrot.lane.b32.xlu0 %v7495, 25
        %v7553 = vpop.permute.xlu0 %7552
        %7554 = vrot.lane.b32.xlu0 %v7497, 25
        %v7555 = vpop.permute.xlu0 %7554
        %7556 = vrot.lane.b32.xlu0 %v7499, 25
        %v7557 = vpop.permute.xlu0 %7556
        %7558 = vrot.lane.b32.xlu0 %v7501, 25
        %v7559 = vpop.permute.xlu0 %7558
        %7560 = vrot.lane.b32.xlu0 %v7503, 25
        %v7561 = vpop.permute.xlu0 %7560
        %7562 = vrot.lane.b32.xlu0 %v7505, 25
        %v7563 = vpop.permute.xlu0 %7562
        %7564 = vrot.lane.b32.xlu0 %v7507, 25
        %v7565 = vpop.permute.xlu0 %7564
        %7566 = vrot.lane.b32.xlu0 %v7509, 25
        %v7567 = vpop.permute.xlu0 %7566
        %7568 = vrot.lane.b32.xlu0 %v7511, 25
        %v7569 = vpop.permute.xlu0 %7568
        %7570 = vrot.lane.b32.xlu0 %v7513, 25
        %v7571 = vpop.permute.xlu0 %7570
        %7572 = vrot.lane.b32.xlu0 %v7515, 25
        %v7573 = vpop.permute.xlu0 %7572
        %7574 = vrot.lane.b32.xlu0 %v7517, 25
        %v7575 = vpop.permute.xlu0 %7574
        %7576 = vrot.lane.b32.xlu0 %v7519, 25
        %v7577 = vpop.permute.xlu0 %7576
        %7578 = vrot.lane.b32.xlu0 %v7521, 25
        %v7579 = vpop.permute.xlu0 %7578
        %7580 = vrot.lane.b32.xlu0 %v7523, 25
        %v7581 = vpop.permute.xlu0 %7580
        %7582 = vrot.lane.b32.xlu0 %v7525, 25
        %v7583 = vpop.permute.xlu0 %7582
        %7584 = vrot.lane.b32.xlu0 %v7527, 25
        %v7585 = vpop.permute.xlu0 %7584
        %7586 = vrot.lane.b32.xlu0 %v7529, 25
        %v7587 = vpop.permute.xlu0 %7586
        %7588 = vrot.lane.b32.xlu0 %v7531, 25
        %v7589 = vpop.permute.xlu0 %7588
        %v7619 = vrot.slane %v6832, 6
        %v7620 = vrot.slane %v6833, 6
        %v7621 = vsel %vm2468, %v7619, %v7620
        %v7622 = vrot.slane %v6834, 6
        %v7623 = vsel %vm2468, %v7620, %v7622
        %v7624 = vrot.slane %v6835, 6
        %v7625 = vsel %vm2468, %v7622, %v7624
        %v7626 = vrot.slane %v6836, 6
        %v7627 = vsel %vm2468, %v7624, %v7626
        %v7628 = vrot.slane %v6837, 6
        %v7629 = vsel %vm2468, %v7626, %v7628
        %v7630 = vrot.slane %v6838, 6
        %v7631 = vsel %vm2468, %v7628, %v7630
        %v7632 = vrot.slane %v6839, 6
        %v7633 = vsel %vm2468, %v7630, %v7632
        %v7634 = vrot.slane %v6840, 6
        %v7635 = vsel %vm2468, %v7632, %v7634
        %v7636 = vrot.slane %v6841, 6
        %v7637 = vsel %vm2468, %v7634, %v7636
        %v7638 = vrot.slane %v6842, 6
        %v7639 = vsel %vm2468, %v7636, %v7638
        %v7640 = vrot.slane %v6843, 6
        %v7641 = vsel %vm2468, %v7638, %v7640
        %v7642 = vrot.slane %v6844, 6
        %v7643 = vsel %vm2468, %v7640, %v7642
        %v7644 = vrot.slane %v6845, 6
        %v7645 = vsel %vm2468, %v7642, %v7644
        %v7646 = vrot.slane %v6846, 6
        %v7647 = vsel %vm2468, %v7644, %v7646
        %v7648 = vrot.slane %v6847, 6
        %v7649 = vsel %vm2468, %v7646, %v7648
        %v7650 = vrot.slane %v6848, 6
        %v7651 = vsel %vm2468, %v7648, %v7650
        %v7652 = vrot.slane %v6849, 6
        %v7653 = vsel %vm2468, %v7650, %v7652
        %v7654 = vrot.slane %v6850, 6
        %v7655 = vsel %vm2468, %v7652, %v7654
        %v7656 = vrot.slane %v6851, 6
        %v7657 = vsel %vm2468, %v7654, %v7656
        %v7658 = vrot.slane %v6852, 6
        %v7659 = vsel %vm2468, %v7656, %v7658
        %v7660 = vrot.slane %v6853, 6
        %v7661 = vsel %vm2468, %v7658, %v7660
        %v7662 = vrot.slane %v6854, 6
        %v7663 = vsel %vm2468, %v7660, %v7662
        %v7664 = vrot.slane %v6855, 6
        %v7665 = vsel %vm2468, %v7662, %v7664
        %v7666 = vrot.slane %v6856, 6
        %v7667 = vsel %vm2468, %v7664, %v7666
        %v7668 = vrot.slane %v6857, 6
        %v7669 = vsel %vm2468, %v7666, %v7668
        %v7670 = vrot.slane %v6858, 6
        %v7671 = vsel %vm2468, %v7668, %v7670
        %v7672 = vrot.slane %v6859, 6
        %v7673 = vsel %vm2468, %v7670, %v7672
        %v7674 = vrot.slane %v6860, 6
        %v7675 = vsel %vm2468, %v7672, %v7674
        %v7676 = vrot.slane %v6861, 6
        %v7677 = vsel %vm2468, %v7674, %v7676
        %7678 = vrot.lane.b32.xlu0 %v7621, 30
        %v7679 = vpop.permute.xlu0 %7678
        %7680 = vrot.lane.b32.xlu0 %v7623, 30
        %v7681 = vpop.permute.xlu0 %7680
        %7682 = vrot.lane.b32.xlu0 %v7625, 30
        %v7683 = vpop.permute.xlu0 %7682
        %7684 = vrot.lane.b32.xlu0 %v7627, 30
        %v7685 = vpop.permute.xlu0 %7684
        %7686 = vrot.lane.b32.xlu0 %v7629, 30
        %v7687 = vpop.permute.xlu0 %7686
        %7688 = vrot.lane.b32.xlu0 %v7631, 30
        %v7689 = vpop.permute.xlu0 %7688
        %7690 = vrot.lane.b32.xlu0 %v7633, 30
        %v7691 = vpop.permute.xlu0 %7690
        %7692 = vrot.lane.b32.xlu0 %v7635, 30
        %v7693 = vpop.permute.xlu0 %7692
        %7694 = vrot.lane.b32.xlu0 %v7637, 30
        %v7695 = vpop.permute.xlu0 %7694
        %7696 = vrot.lane.b32.xlu0 %v7639, 30
        %v7697 = vpop.permute.xlu0 %7696
        %7698 = vrot.lane.b32.xlu0 %v7641, 30
        %v7699 = vpop.permute.xlu0 %7698
        %7700 = vrot.lane.b32.xlu0 %v7643, 30
        %v7701 = vpop.permute.xlu0 %7700
        %7702 = vrot.lane.b32.xlu0 %v7645, 30
        %v7703 = vpop.permute.xlu0 %7702
        %7704 = vrot.lane.b32.xlu0 %v7647, 30
        %v7705 = vpop.permute.xlu0 %7704
        %7706 = vrot.lane.b32.xlu0 %v7649, 30
        %v7707 = vpop.permute.xlu0 %7706
        %7708 = vrot.lane.b32.xlu0 %v7651, 30
        %v7709 = vpop.permute.xlu0 %7708
        %7710 = vrot.lane.b32.xlu0 %v7653, 30
        %v7711 = vpop.permute.xlu0 %7710
        %7712 = vrot.lane.b32.xlu0 %v7655, 30
        %v7713 = vpop.permute.xlu0 %7712
        %7714 = vrot.lane.b32.xlu0 %v7657, 30
        %v7715 = vpop.permute.xlu0 %7714
        %7716 = vrot.lane.b32.xlu0 %v7659, 30
        %v7717 = vpop.permute.xlu0 %7716
        %7718 = vrot.lane.b32.xlu0 %v7661, 30
        %v7719 = vpop.permute.xlu0 %7718
        %7720 = vrot.lane.b32.xlu0 %v7663, 30
        %v7721 = vpop.permute.xlu0 %7720
        %7722 = vrot.lane.b32.xlu0 %v7665, 30
        %v7723 = vpop.permute.xlu0 %7722
        %7724 = vrot.lane.b32.xlu0 %v7667, 30
        %v7725 = vpop.permute.xlu0 %7724
        %7726 = vrot.lane.b32.xlu0 %v7669, 30
        %v7727 = vpop.permute.xlu0 %7726
        %7728 = vrot.lane.b32.xlu0 %v7671, 30
        %v7729 = vpop.permute.xlu0 %7728
        %7730 = vrot.lane.b32.xlu0 %v7673, 30
        %v7731 = vpop.permute.xlu0 %7730
        %7732 = vrot.lane.b32.xlu0 %v7675, 30
        %v7733 = vpop.permute.xlu0 %7732
        %7734 = vrot.lane.b32.xlu0 %v7677, 30
        %v7735 = vpop.permute.xlu0 %7734
        %v7765 = vrot.slane %v6832, 7
        %v7766 = vrot.slane %v6833, 7
        %v7767 = vsel %vm2775, %v7765, %v7766
        %v7768 = vrot.slane %v6834, 7
        %v7769 = vsel %vm2775, %v7766, %v7768
        %v7770 = vrot.slane %v6835, 7
        %v7771 = vsel %vm2775, %v7768, %v7770
        %v7772 = vrot.slane %v6836, 7
        %v7773 = vsel %vm2775, %v7770, %v7772
        %v7774 = vrot.slane %v6837, 7
        %v7775 = vsel %vm2775, %v7772, %v7774
        %v7776 = vrot.slane %v6838, 7
        %v7777 = vsel %vm2775, %v7774, %v7776
        %v7778 = vrot.slane %v6839, 7
        %v7779 = vsel %vm2775, %v7776, %v7778
        %v7780 = vrot.slane %v6840, 7
        %v7781 = vsel %vm2775, %v7778, %v7780
        %v7782 = vrot.slane %v6841, 7
        %v7783 = vsel %vm2775, %v7780, %v7782
        %v7784 = vrot.slane %v6842, 7
        %v7785 = vsel %vm2775, %v7782, %v7784
        %v7786 = vrot.slane %v6843, 7
        %v7787 = vsel %vm2775, %v7784, %v7786
        %v7788 = vrot.slane %v6844, 7
        %v7789 = vsel %vm2775, %v7786, %v7788
        %v7790 = vrot.slane %v6845, 7
        %v7791 = vsel %vm2775, %v7788, %v7790
        %v7792 = vrot.slane %v6846, 7
        %v7793 = vsel %vm2775, %v7790, %v7792
        %v7794 = vrot.slane %v6847, 7
        %v7795 = vsel %vm2775, %v7792, %v7794
        %v7796 = vrot.slane %v6848, 7
        %v7797 = vsel %vm2775, %v7794, %v7796
        %v7798 = vrot.slane %v6849, 7
        %v7799 = vsel %vm2775, %v7796, %v7798
        %v7800 = vrot.slane %v6850, 7
        %v7801 = vsel %vm2775, %v7798, %v7800
        %v7802 = vrot.slane %v6851, 7
        %v7803 = vsel %vm2775, %v7800, %v7802
        %v7804 = vrot.slane %v6852, 7
        %v7805 = vsel %vm2775, %v7802, %v7804
        %v7806 = vrot.slane %v6853, 7
        %v7807 = vsel %vm2775, %v7804, %v7806
        %v7808 = vrot.slane %v6854, 7
        %v7809 = vsel %vm2775, %v7806, %v7808
        %v7810 = vrot.slane %v6855, 7
        %v7811 = vsel %vm2775, %v7808, %v7810
        %v7812 = vrot.slane %v6856, 7
        %v7813 = vsel %vm2775, %v7810, %v7812
        %v7814 = vrot.slane %v6857, 7
        %v7815 = vsel %vm2775, %v7812, %v7814
        %v7816 = vrot.slane %v6858, 7
        %v7817 = vsel %vm2775, %v7814, %v7816
        %v7818 = vrot.slane %v6859, 7
        %v7819 = vsel %vm2775, %v7816, %v7818
        %v7820 = vrot.slane %v6860, 7
        %v7821 = vsel %vm2775, %v7818, %v7820
        %v7822 = vrot.slane %v6861, 7
        %v7823 = vsel %vm2775, %v7820, %v7822
        %7824 = vrot.lane.b32.xlu0 %v7767, 35
        %v7825 = vpop.permute.xlu0 %7824
        %7826 = vrot.lane.b32.xlu0 %v7769, 35
        %v7827 = vpop.permute.xlu0 %7826
        %7828 = vrot.lane.b32.xlu0 %v7771, 35
        %v7829 = vpop.permute.xlu0 %7828
        %7830 = vrot.lane.b32.xlu0 %v7773, 35
        %v7831 = vpop.permute.xlu0 %7830
        %7832 = vrot.lane.b32.xlu0 %v7775, 35
        %v7833 = vpop.permute.xlu0 %7832
        %7834 = vrot.lane.b32.xlu0 %v7777, 35
        %v7835 = vpop.permute.xlu0 %7834
        %7836 = vrot.lane.b32.xlu0 %v7779, 35
        %v7837 = vpop.permute.xlu0 %7836
        %7838 = vrot.lane.b32.xlu0 %v7781, 35
        %v7839 = vpop.permute.xlu0 %7838
        %7840 = vrot.lane.b32.xlu0 %v7783, 35
        %v7841 = vpop.permute.xlu0 %7840
        %7842 = vrot.lane.b32.xlu0 %v7785, 35
        %v7843 = vpop.permute.xlu0 %7842
        %7844 = vrot.lane.b32.xlu0 %v7787, 35
        %v7845 = vpop.permute.xlu0 %7844
        %7846 = vrot.lane.b32.xlu0 %v7789, 35
        %v7847 = vpop.permute.xlu0 %7846
        %7848 = vrot.lane.b32.xlu0 %v7791, 35
        %v7849 = vpop.permute.xlu0 %7848
        %7850 = vrot.lane.b32.xlu0 %v7793, 35
        %v7851 = vpop.permute.xlu0 %7850
        %7852 = vrot.lane.b32.xlu0 %v7795, 35
        %v7853 = vpop.permute.xlu0 %7852
        %7854 = vrot.lane.b32.xlu0 %v7797, 35
        %v7855 = vpop.permute.xlu0 %7854
        %7856 = vrot.lane.b32.xlu0 %v7799, 35
        %v7857 = vpop.permute.xlu0 %7856
        %7858 = vrot.lane.b32.xlu0 %v7801, 35
        %v7859 = vpop.permute.xlu0 %7858
        %7860 = vrot.lane.b32.xlu0 %v7803, 35
        %v7861 = vpop.permute.xlu0 %7860
        %7862 = vrot.lane.b32.xlu0 %v7805, 35
        %v7863 = vpop.permute.xlu0 %7862
        %7864 = vrot.lane.b32.xlu0 %v7807, 35
        %v7865 = vpop.permute.xlu0 %7864
        %7866 = vrot.lane.b32.xlu0 %v7809, 35
        %v7867 = vpop.permute.xlu0 %7866
        %7868 = vrot.lane.b32.xlu0 %v7811, 35
        %v7869 = vpop.permute.xlu0 %7868
        %7870 = vrot.lane.b32.xlu0 %v7813, 35
        %v7871 = vpop.permute.xlu0 %7870
        %7872 = vrot.lane.b32.xlu0 %v7815, 35
        %v7873 = vpop.permute.xlu0 %7872
        %7874 = vrot.lane.b32.xlu0 %v7817, 35
        %v7875 = vpop.permute.xlu0 %7874
        %7876 = vrot.lane.b32.xlu0 %v7819, 35
        %v7877 = vpop.permute.xlu0 %7876
        %7878 = vrot.lane.b32.xlu0 %v7821, 35
        %v7879 = vpop.permute.xlu0 %7878
        %7880 = vrot.lane.b32.xlu0 %v7823, 35
        %v7881 = vpop.permute.xlu0 %7880
        %7911 = vrot.lane.b32.xlu0 %v6833, 40
        %v7912 = vpop.permute.xlu0 %7911
        %7913 = vrot.lane.b32.xlu0 %v6834, 40
        %v7914 = vpop.permute.xlu0 %7913
        %7915 = vrot.lane.b32.xlu0 %v6835, 40
        %v7916 = vpop.permute.xlu0 %7915
        %7917 = vrot.lane.b32.xlu0 %v6836, 40
        %v7918 = vpop.permute.xlu0 %7917
        %7919 = vrot.lane.b32.xlu0 %v6837, 40
        %v7920 = vpop.permute.xlu0 %7919
        %7921 = vrot.lane.b32.xlu0 %v6838, 40
        %v7922 = vpop.permute.xlu0 %7921
        %7923 = vrot.lane.b32.xlu0 %v6839, 40
        %v7924 = vpop.permute.xlu0 %7923
        %7925 = vrot.lane.b32.xlu0 %v6840, 40
        %v7926 = vpop.permute.xlu0 %7925
        %7927 = vrot.lane.b32.xlu0 %v6841, 40
        %v7928 = vpop.permute.xlu0 %7927
        %7929 = vrot.lane.b32.xlu0 %v6842, 40
        %v7930 = vpop.permute.xlu0 %7929
        %7931 = vrot.lane.b32.xlu0 %v6843, 40
        %v7932 = vpop.permute.xlu0 %7931
        %7933 = vrot.lane.b32.xlu0 %v6844, 40
        %v7934 = vpop.permute.xlu0 %7933
        %7935 = vrot.lane.b32.xlu0 %v6845, 40
        %v7936 = vpop.permute.xlu0 %7935
        %7937 = vrot.lane.b32.xlu0 %v6846, 40
        %v7938 = vpop.permute.xlu0 %7937
        %7939 = vrot.lane.b32.xlu0 %v6847, 40
        %v7940 = vpop.permute.xlu0 %7939
        %7941 = vrot.lane.b32.xlu0 %v6848, 40
        %v7942 = vpop.permute.xlu0 %7941
        %7943 = vrot.lane.b32.xlu0 %v6849, 40
        %v7944 = vpop.permute.xlu0 %7943
        %7945 = vrot.lane.b32.xlu0 %v6850, 40
        %v7946 = vpop.permute.xlu0 %7945
        %7947 = vrot.lane.b32.xlu0 %v6851, 40
        %v7948 = vpop.permute.xlu0 %7947
        %7949 = vrot.lane.b32.xlu0 %v6852, 40
        %v7950 = vpop.permute.xlu0 %7949
        %7951 = vrot.lane.b32.xlu0 %v6853, 40
        %v7952 = vpop.permute.xlu0 %7951
        %7953 = vrot.lane.b32.xlu0 %v6854, 40
        %v7954 = vpop.permute.xlu0 %7953
        %7955 = vrot.lane.b32.xlu0 %v6855, 40
        %v7956 = vpop.permute.xlu0 %7955
        %7957 = vrot.lane.b32.xlu0 %v6856, 40
        %v7958 = vpop.permute.xlu0 %7957
        %7959 = vrot.lane.b32.xlu0 %v6857, 40
        %v7960 = vpop.permute.xlu0 %7959
        %7961 = vrot.lane.b32.xlu0 %v6858, 40
        %v7962 = vpop.permute.xlu0 %7961
        %7963 = vrot.lane.b32.xlu0 %v6859, 40
        %v7964 = vpop.permute.xlu0 %7963
        %7965 = vrot.lane.b32.xlu0 %v6860, 40
        %v7966 = vpop.permute.xlu0 %7965
        %7967 = vrot.lane.b32.xlu0 %v6861, 40
        %v7968 = vpop.permute.xlu0 %7967
        %v7998 = vrot.slane %v6861, 1
        %v7999 = vsel %vm933, %v6947, %v7998
        %8000 = vrot.lane.b32.xlu0 %v6896, 45
        %v8001 = vpop.permute.xlu0 %8000
        %8002 = vrot.lane.b32.xlu0 %v6898, 45
        %v8003 = vpop.permute.xlu0 %8002
        %8004 = vrot.lane.b32.xlu0 %v6900, 45
        %v8005 = vpop.permute.xlu0 %8004
        %8006 = vrot.lane.b32.xlu0 %v6902, 45
        %v8007 = vpop.permute.xlu0 %8006
        %8008 = vrot.lane.b32.xlu0 %v6904, 45
        %v8009 = vpop.permute.xlu0 %8008
        %8010 = vrot.lane.b32.xlu0 %v6906, 45
        %v8011 = vpop.permute.xlu0 %8010
        %8012 = vrot.lane.b32.xlu0 %v6908, 45
        %v8013 = vpop.permute.xlu0 %8012
        %8014 = vrot.lane.b32.xlu0 %v6910, 45
        %v8015 = vpop.permute.xlu0 %8014
        %8016 = vrot.lane.b32.xlu0 %v6912, 45
        %v8017 = vpop.permute.xlu0 %8016
        %8018 = vrot.lane.b32.xlu0 %v6914, 45
        %v8019 = vpop.permute.xlu0 %8018
        %8020 = vrot.lane.b32.xlu0 %v6916, 45
        %v8021 = vpop.permute.xlu0 %8020
        %8022 = vrot.lane.b32.xlu0 %v6918, 45
        %v8023 = vpop.permute.xlu0 %8022
        %8024 = vrot.lane.b32.xlu0 %v6920, 45
        %v8025 = vpop.permute.xlu0 %8024
        %8026 = vrot.lane.b32.xlu0 %v6922, 45
        %v8027 = vpop.permute.xlu0 %8026
        %8028 = vrot.lane.b32.xlu0 %v6924, 45
        %v8029 = vpop.permute.xlu0 %8028
        %8030 = vrot.lane.b32.xlu0 %v6926, 45
        %v8031 = vpop.permute.xlu0 %8030
        %8032 = vrot.lane.b32.xlu0 %v6928, 45
        %v8033 = vpop.permute.xlu0 %8032
        %8034 = vrot.lane.b32.xlu0 %v6930, 45
        %v8035 = vpop.permute.xlu0 %8034
        %8036 = vrot.lane.b32.xlu0 %v6932, 45
        %v8037 = vpop.permute.xlu0 %8036
        %8038 = vrot.lane.b32.xlu0 %v6934, 45
        %v8039 = vpop.permute.xlu0 %8038
        %8040 = vrot.lane.b32.xlu0 %v6936, 45
        %v8041 = vpop.permute.xlu0 %8040
        %8042 = vrot.lane.b32.xlu0 %v6938, 45
        %v8043 = vpop.permute.xlu0 %8042
        %8044 = vrot.lane.b32.xlu0 %v6940, 45
        %v8045 = vpop.permute.xlu0 %8044
        %8046 = vrot.lane.b32.xlu0 %v6942, 45
        %v8047 = vpop.permute.xlu0 %8046
        %8048 = vrot.lane.b32.xlu0 %v6944, 45
        %v8049 = vpop.permute.xlu0 %8048
        %8050 = vrot.lane.b32.xlu0 %v6946, 45
        %v8051 = vpop.permute.xlu0 %8050
        %8052 = vrot.lane.b32.xlu0 %v6948, 45
        %v8053 = vpop.permute.xlu0 %8052
        %8054 = vrot.lane.b32.xlu0 %v7999, 45
        %v8055 = vpop.permute.xlu0 %8054
        %8056 = vrot.lane.b32.xlu0 %v7998, 45
        %v8057 = vpop.permute.xlu0 %8056
        %v8087 = vrot.slane %v6861, 2
        %v8088 = vsel %vm1240, %v7091, %v8087
        %8089 = vrot.lane.b32.xlu0 %v7040, 50
        %v8090 = vpop.permute.xlu0 %8089
        %8091 = vrot.lane.b32.xlu0 %v7042, 50
        %v8092 = vpop.permute.xlu0 %8091
        %8093 = vrot.lane.b32.xlu0 %v7044, 50
        %v8094 = vpop.permute.xlu0 %8093
        %8095 = vrot.lane.b32.xlu0 %v7046, 50
        %v8096 = vpop.permute.xlu0 %8095
        %8097 = vrot.lane.b32.xlu0 %v7048, 50
        %v8098 = vpop.permute.xlu0 %8097
        %8099 = vrot.lane.b32.xlu0 %v7050, 50
        %v8100 = vpop.permute.xlu0 %8099
        %8101 = vrot.lane.b32.xlu0 %v7052, 50
        %v8102 = vpop.permute.xlu0 %8101
        %8103 = vrot.lane.b32.xlu0 %v7054, 50
        %v8104 = vpop.permute.xlu0 %8103
        %8105 = vrot.lane.b32.xlu0 %v7056, 50
        %v8106 = vpop.permute.xlu0 %8105
        %8107 = vrot.lane.b32.xlu0 %v7058, 50
        %v8108 = vpop.permute.xlu0 %8107
        %8109 = vrot.lane.b32.xlu0 %v7060, 50
        %v8110 = vpop.permute.xlu0 %8109
        %8111 = vrot.lane.b32.xlu0 %v7062, 50
        %v8112 = vpop.permute.xlu0 %8111
        %8113 = vrot.lane.b32.xlu0 %v7064, 50
        %v8114 = vpop.permute.xlu0 %8113
        %8115 = vrot.lane.b32.xlu0 %v7066, 50
        %v8116 = vpop.permute.xlu0 %8115
        %8117 = vrot.lane.b32.xlu0 %v7068, 50
        %v8118 = vpop.permute.xlu0 %8117
        %8119 = vrot.lane.b32.xlu0 %v7070, 50
        %v8120 = vpop.permute.xlu0 %8119
        %8121 = vrot.lane.b32.xlu0 %v7072, 50
        %v8122 = vpop.permute.xlu0 %8121
        %8123 = vrot.lane.b32.xlu0 %v7074, 50
        %v8124 = vpop.permute.xlu0 %8123
        %8125 = vrot.lane.b32.xlu0 %v7076, 50
        %v8126 = vpop.permute.xlu0 %8125
        %8127 = vrot.lane.b32.xlu0 %v7078, 50
        %v8128 = vpop.permute.xlu0 %8127
        %8129 = vrot.lane.b32.xlu0 %v7080, 50
        %v8130 = vpop.permute.xlu0 %8129
        %8131 = vrot.lane.b32.xlu0 %v7082, 50
        %v8132 = vpop.permute.xlu0 %8131
        %8133 = vrot.lane.b32.xlu0 %v7084, 50
        %v8134 = vpop.permute.xlu0 %8133
        %8135 = vrot.lane.b32.xlu0 %v7086, 50
        %v8136 = vpop.permute.xlu0 %8135
        %8137 = vrot.lane.b32.xlu0 %v7088, 50
        %v8138 = vpop.permute.xlu0 %8137
        %8139 = vrot.lane.b32.xlu0 %v7090, 50
        %v8140 = vpop.permute.xlu0 %8139
        %8141 = vrot.lane.b32.xlu0 %v7092, 50
        %v8142 = vpop.permute.xlu0 %8141
        %8143 = vrot.lane.b32.xlu0 %v8088, 50
        %v8144 = vpop.permute.xlu0 %8143
        %8145 = vrot.lane.b32.xlu0 %v8087, 50
        %v8146 = vpop.permute.xlu0 %8145
        %v8177 = vrot.slane %v6862, 3
        %v8178 = vsel %vm1547, %v7238, %v8177
        %8179 = vrot.lane.b32.xlu0 %v7185, 55
        %v8180 = vpop.permute.xlu0 %8179
        %8181 = vrot.lane.b32.xlu0 %v7187, 55
        %v8182 = vpop.permute.xlu0 %8181
        %8183 = vrot.lane.b32.xlu0 %v7189, 55
        %v8184 = vpop.permute.xlu0 %8183
        %8185 = vrot.lane.b32.xlu0 %v7191, 55
        %v8186 = vpop.permute.xlu0 %8185
        %8187 = vrot.lane.b32.xlu0 %v7193, 55
        %v8188 = vpop.permute.xlu0 %8187
        %8189 = vrot.lane.b32.xlu0 %v7195, 55
        %v8190 = vpop.permute.xlu0 %8189
        %8191 = vrot.lane.b32.xlu0 %v7197, 55
        %v8192 = vpop.permute.xlu0 %8191
        %8193 = vrot.lane.b32.xlu0 %v7199, 55
        %v8194 = vpop.permute.xlu0 %8193
        %8195 = vrot.lane.b32.xlu0 %v7201, 55
        %v8196 = vpop.permute.xlu0 %8195
        %8197 = vrot.lane.b32.xlu0 %v7203, 55
        %v8198 = vpop.permute.xlu0 %8197
        %8199 = vrot.lane.b32.xlu0 %v7205, 55
        %v8200 = vpop.permute.xlu0 %8199
        %8201 = vrot.lane.b32.xlu0 %v7207, 55
        %v8202 = vpop.permute.xlu0 %8201
        %8203 = vrot.lane.b32.xlu0 %v7209, 55
        %v8204 = vpop.permute.xlu0 %8203
        %8205 = vrot.lane.b32.xlu0 %v7211, 55
        %v8206 = vpop.permute.xlu0 %8205
        %8207 = vrot.lane.b32.xlu0 %v7213, 55
        %v8208 = vpop.permute.xlu0 %8207
        %8209 = vrot.lane.b32.xlu0 %v7215, 55
        %v8210 = vpop.permute.xlu0 %8209
        %8211 = vrot.lane.b32.xlu0 %v7217, 55
        %v8212 = vpop.permute.xlu0 %8211
        %8213 = vrot.lane.b32.xlu0 %v7219, 55
        %v8214 = vpop.permute.xlu0 %8213
        %8215 = vrot.lane.b32.xlu0 %v7221, 55
        %v8216 = vpop.permute.xlu0 %8215
        %8217 = vrot.lane.b32.xlu0 %v7223, 55
        %v8218 = vpop.permute.xlu0 %8217
        %8219 = vrot.lane.b32.xlu0 %v7225, 55
        %v8220 = vpop.permute.xlu0 %8219
        %8221 = vrot.lane.b32.xlu0 %v7227, 55
        %v8222 = vpop.permute.xlu0 %8221
        %8223 = vrot.lane.b32.xlu0 %v7229, 55
        %v8224 = vpop.permute.xlu0 %8223
        %8225 = vrot.lane.b32.xlu0 %v7231, 55
        %v8226 = vpop.permute.xlu0 %8225
        %8227 = vrot.lane.b32.xlu0 %v7233, 55
        %v8228 = vpop.permute.xlu0 %8227
        %8229 = vrot.lane.b32.xlu0 %v7235, 55
        %v8230 = vpop.permute.xlu0 %8229
        %8231 = vrot.lane.b32.xlu0 %v7237, 55
        %v8232 = vpop.permute.xlu0 %8231
        %8233 = vrot.lane.b32.xlu0 %v7239, 55
        %v8234 = vpop.permute.xlu0 %8233
        %8235 = vrot.lane.b32.xlu0 %v8178, 55
        %v8236 = vpop.permute.xlu0 %8235
        %v8266 = vrot.slane %v6862, 4
        %v8267 = vsel %vm1854, %v7384, %v8266
        %8268 = vrot.lane.b32.xlu0 %v7331, 60
        %v8269 = vpop.permute.xlu0 %8268
        %8270 = vrot.lane.b32.xlu0 %v7333, 60
        %v8271 = vpop.permute.xlu0 %8270
        %8272 = vrot.lane.b32.xlu0 %v7335, 60
        %v8273 = vpop.permute.xlu0 %8272
        %8274 = vrot.lane.b32.xlu0 %v7337, 60
        %v8275 = vpop.permute.xlu0 %8274
        %8276 = vrot.lane.b32.xlu0 %v7339, 60
        %v8277 = vpop.permute.xlu0 %8276
        %8278 = vrot.lane.b32.xlu0 %v7341, 60
        %v8279 = vpop.permute.xlu0 %8278
        %8280 = vrot.lane.b32.xlu0 %v7343, 60
        %v8281 = vpop.permute.xlu0 %8280
        %8282 = vrot.lane.b32.xlu0 %v7345, 60
        %v8283 = vpop.permute.xlu0 %8282
        %8284 = vrot.lane.b32.xlu0 %v7347, 60
        %v8285 = vpop.permute.xlu0 %8284
        %8286 = vrot.lane.b32.xlu0 %v7349, 60
        %v8287 = vpop.permute.xlu0 %8286
        %8288 = vrot.lane.b32.xlu0 %v7351, 60
        %v8289 = vpop.permute.xlu0 %8288
        %8290 = vrot.lane.b32.xlu0 %v7353, 60
        %v8291 = vpop.permute.xlu0 %8290
        %8292 = vrot.lane.b32.xlu0 %v7355, 60
        %v8293 = vpop.permute.xlu0 %8292
        %8294 = vrot.lane.b32.xlu0 %v7357, 60
        %v8295 = vpop.permute.xlu0 %8294
        %8296 = vrot.lane.b32.xlu0 %v7359, 60
        %v8297 = vpop.permute.xlu0 %8296
        %8298 = vrot.lane.b32.xlu0 %v7361, 60
        %v8299 = vpop.permute.xlu0 %8298
        %8300 = vrot.lane.b32.xlu0 %v7363, 60
        %v8301 = vpop.permute.xlu0 %8300
        %8302 = vrot.lane.b32.xlu0 %v7365, 60
        %v8303 = vpop.permute.xlu0 %8302
        %8304 = vrot.lane.b32.xlu0 %v7367, 60
        %v8305 = vpop.permute.xlu0 %8304
        %8306 = vrot.lane.b32.xlu0 %v7369, 60
        %v8307 = vpop.permute.xlu0 %8306
        %8308 = vrot.lane.b32.xlu0 %v7371, 60
        %v8309 = vpop.permute.xlu0 %8308
        %8310 = vrot.lane.b32.xlu0 %v7373, 60
        %v8311 = vpop.permute.xlu0 %8310
        %8312 = vrot.lane.b32.xlu0 %v7375, 60
        %v8313 = vpop.permute.xlu0 %8312
        %8314 = vrot.lane.b32.xlu0 %v7377, 60
        %v8315 = vpop.permute.xlu0 %8314
        %8316 = vrot.lane.b32.xlu0 %v7379, 60
        %v8317 = vpop.permute.xlu0 %8316
        %8318 = vrot.lane.b32.xlu0 %v7381, 60
        %v8319 = vpop.permute.xlu0 %8318
        %8320 = vrot.lane.b32.xlu0 %v7383, 60
        %v8321 = vpop.permute.xlu0 %8320
        %8322 = vrot.lane.b32.xlu0 %v7385, 60
        %v8323 = vpop.permute.xlu0 %8322
        %8324 = vrot.lane.b32.xlu0 %v8267, 60
        %v8325 = vpop.permute.xlu0 %8324
        %v8355 = vrot.slane %v6862, 5
        %v8356 = vsel %vm2161, %v7530, %v8355
        %8357 = vrot.lane.b32.xlu0 %v7477, 65
        %v8358 = vpop.permute.xlu0 %8357
        %8359 = vrot.lane.b32.xlu0 %v7479, 65
        %v8360 = vpop.permute.xlu0 %8359
        %8361 = vrot.lane.b32.xlu0 %v7481, 65
        %v8362 = vpop.permute.xlu0 %8361
        %8363 = vrot.lane.b32.xlu0 %v7483, 65
        %v8364 = vpop.permute.xlu0 %8363
        %8365 = vrot.lane.b32.xlu0 %v7485, 65
        %v8366 = vpop.permute.xlu0 %8365
        %8367 = vrot.lane.b32.xlu0 %v7487, 65
        %v8368 = vpop.permute.xlu0 %8367
        %8369 = vrot.lane.b32.xlu0 %v7489, 65
        %v8370 = vpop.permute.xlu0 %8369
        %8371 = vrot.lane.b32.xlu0 %v7491, 65
        %v8372 = vpop.permute.xlu0 %8371
        %8373 = vrot.lane.b32.xlu0 %v7493, 65
        %v8374 = vpop.permute.xlu0 %8373
        %8375 = vrot.lane.b32.xlu0 %v7495, 65
        %v8376 = vpop.permute.xlu0 %8375
        %8377 = vrot.lane.b32.xlu0 %v7497, 65
        %v8378 = vpop.permute.xlu0 %8377
        %8379 = vrot.lane.b32.xlu0 %v7499, 65
        %v8380 = vpop.permute.xlu0 %8379
        %8381 = vrot.lane.b32.xlu0 %v7501, 65
        %v8382 = vpop.permute.xlu0 %8381
        %8383 = vrot.lane.b32.xlu0 %v7503, 65
        %v8384 = vpop.permute.xlu0 %8383
        %8385 = vrot.lane.b32.xlu0 %v7505, 65
        %v8386 = vpop.permute.xlu0 %8385
        %8387 = vrot.lane.b32.xlu0 %v7507, 65
        %v8388 = vpop.permute.xlu0 %8387
        %8389 = vrot.lane.b32.xlu0 %v7509, 65
        %v8390 = vpop.permute.xlu0 %8389
        %8391 = vrot.lane.b32.xlu0 %v7511, 65
        %v8392 = vpop.permute.xlu0 %8391
        %8393 = vrot.lane.b32.xlu0 %v7513, 65
        %v8394 = vpop.permute.xlu0 %8393
        %8395 = vrot.lane.b32.xlu0 %v7515, 65
        %v8396 = vpop.permute.xlu0 %8395
        %8397 = vrot.lane.b32.xlu0 %v7517, 65
        %v8398 = vpop.permute.xlu0 %8397
        %8399 = vrot.lane.b32.xlu0 %v7519, 65
        %v8400 = vpop.permute.xlu0 %8399
        %8401 = vrot.lane.b32.xlu0 %v7521, 65
        %v8402 = vpop.permute.xlu0 %8401
        %8403 = vrot.lane.b32.xlu0 %v7523, 65
        %v8404 = vpop.permute.xlu0 %8403
        %8405 = vrot.lane.b32.xlu0 %v7525, 65
        %v8406 = vpop.permute.xlu0 %8405
        %8407 = vrot.lane.b32.xlu0 %v7527, 65
        %v8408 = vpop.permute.xlu0 %8407
        %8409 = vrot.lane.b32.xlu0 %v7529, 65
        %v8410 = vpop.permute.xlu0 %8409
        %8411 = vrot.lane.b32.xlu0 %v7531, 65
        %v8412 = vpop.permute.xlu0 %8411
        %8413 = vrot.lane.b32.xlu0 %v8356, 65
        %v8414 = vpop.permute.xlu0 %8413
        %v8444 = vrot.slane %v6862, 6
        %v8445 = vsel %vm2468, %v7676, %v8444
        %8446 = vrot.lane.b32.xlu0 %v7623, 70
        %v8447 = vpop.permute.xlu0 %8446
        %8448 = vrot.lane.b32.xlu0 %v7625, 70
        %v8449 = vpop.permute.xlu0 %8448
        %8450 = vrot.lane.b32.xlu0 %v7627, 70
        %v8451 = vpop.permute.xlu0 %8450
        %8452 = vrot.lane.b32.xlu0 %v7629, 70
        %v8453 = vpop.permute.xlu0 %8452
        %8454 = vrot.lane.b32.xlu0 %v7631, 70
        %v8455 = vpop.permute.xlu0 %8454
        %8456 = vrot.lane.b32.xlu0 %v7633, 70
        %v8457 = vpop.permute.xlu0 %8456
        %8458 = vrot.lane.b32.xlu0 %v7635, 70
        %v8459 = vpop.permute.xlu0 %8458
        %8460 = vrot.lane.b32.xlu0 %v7637, 70
        %v8461 = vpop.permute.xlu0 %8460
        %8462 = vrot.lane.b32.xlu0 %v7639, 70
        %v8463 = vpop.permute.xlu0 %8462
        %8464 = vrot.lane.b32.xlu0 %v7641, 70
        %v8465 = vpop.permute.xlu0 %8464
        %8466 = vrot.lane.b32.xlu0 %v7643, 70
        %v8467 = vpop.permute.xlu0 %8466
        %8468 = vrot.lane.b32.xlu0 %v7645, 70
        %v8469 = vpop.permute.xlu0 %8468
        %8470 = vrot.lane.b32.xlu0 %v7647, 70
        %v8471 = vpop.permute.xlu0 %8470
        %8472 = vrot.lane.b32.xlu0 %v7649, 70
        %v8473 = vpop.permute.xlu0 %8472
        %8474 = vrot.lane.b32.xlu0 %v7651, 70
        %v8475 = vpop.permute.xlu0 %8474
        %8476 = vrot.lane.b32.xlu0 %v7653, 70
        %v8477 = vpop.permute.xlu0 %8476
        %8478 = vrot.lane.b32.xlu0 %v7655, 70
        %v8479 = vpop.permute.xlu0 %8478
        %8480 = vrot.lane.b32.xlu0 %v7657, 70
        %v8481 = vpop.permute.xlu0 %8480
        %8482 = vrot.lane.b32.xlu0 %v7659, 70
        %v8483 = vpop.permute.xlu0 %8482
        %8484 = vrot.lane.b32.xlu0 %v7661, 70
        %v8485 = vpop.permute.xlu0 %8484
        %8486 = vrot.lane.b32.xlu0 %v7663, 70
        %v8487 = vpop.permute.xlu0 %8486
        %8488 = vrot.lane.b32.xlu0 %v7665, 70
        %v8489 = vpop.permute.xlu0 %8488
        %8490 = vrot.lane.b32.xlu0 %v7667, 70
        %v8491 = vpop.permute.xlu0 %8490
        %8492 = vrot.lane.b32.xlu0 %v7669, 70
        %v8493 = vpop.permute.xlu0 %8492
        %8494 = vrot.lane.b32.xlu0 %v7671, 70
        %v8495 = vpop.permute.xlu0 %8494
        %8496 = vrot.lane.b32.xlu0 %v7673, 70
        %v8497 = vpop.permute.xlu0 %8496
        %8498 = vrot.lane.b32.xlu0 %v7675, 70
        %v8499 = vpop.permute.xlu0 %8498
        %8500 = vrot.lane.b32.xlu0 %v7677, 70
        %v8501 = vpop.permute.xlu0 %8500
        %8502 = vrot.lane.b32.xlu0 %v8445, 70
        %v8503 = vpop.permute.xlu0 %8502
        %v8533 = vsel %vm4809, %v6832, %v6950
        %v8534 = vsel %vm4809, %v6833, %v6952
        %v8535 = vsel %vm4809, %v6834, %v6954
        %v8536 = vsel %vm4809, %v6835, %v6956
        %v8537 = vsel %vm4809, %v6836, %v6958
        %v8538 = vsel %vm4809, %v6837, %v6960
        %v8539 = vsel %vm4809, %v6838, %v6962
        %v8540 = vsel %vm4809, %v6839, %v6964
        %v8541 = vsel %vm4809, %v6840, %v6966
        %v8542 = vsel %vm4809, %v6841, %v6968
        %v8543 = vsel %vm4809, %v6842, %v6970
        %v8544 = vsel %vm4809, %v6843, %v6972
        %v8545 = vsel %vm4809, %v6844, %v6974
        %v8546 = vsel %vm4809, %v6845, %v6976
        %v8547 = vsel %vm4809, %v6846, %v6978
        %v8548 = vsel %vm4809, %v6847, %v6980
        %v8549 = vsel %vm4809, %v6848, %v6982
        %v8550 = vsel %vm4809, %v6849, %v6984
        %v8551 = vsel %vm4809, %v6850, %v6986
        %v8552 = vsel %vm4809, %v6851, %v6988
        %v8553 = vsel %vm4809, %v6852, %v6990
        %v8554 = vsel %vm4809, %v6853, %v6992
        %v8555 = vsel %vm4809, %v6854, %v6994
        %v8556 = vsel %vm4809, %v6855, %v6996
        %v8557 = vsel %vm4809, %v6856, %v6998
        %v8558 = vsel %vm4809, %v6857, %v7000
        %v8559 = vsel %vm4809, %v6858, %v7002
        %v8560 = vsel %vm4809, %v6859, %v7004
        %v8561 = vsel %vm4809, %v6860, %v7006
        %v8562 = vsel %vm5119, %v8533, %v7094
        %v8563 = vsel %vm5119, %v8534, %v7096
        %v8564 = vsel %vm5119, %v8535, %v7098
        %v8565 = vsel %vm5119, %v8536, %v7100
        %v8566 = vsel %vm5119, %v8537, %v7102
        %v8567 = vsel %vm5119, %v8538, %v7104
        %v8568 = vsel %vm5119, %v8539, %v7106
        %v8569 = vsel %vm5119, %v8540, %v7108
        %v8570 = vsel %vm5119, %v8541, %v7110
        %v8571 = vsel %vm5119, %v8542, %v7112
        %v8572 = vsel %vm5119, %v8543, %v7114
        %v8573 = vsel %vm5119, %v8544, %v7116
        %v8574 = vsel %vm5119, %v8545, %v7118
        %v8575 = vsel %vm5119, %v8546, %v7120
        %v8576 = vsel %vm5119, %v8547, %v7122
        %v8577 = vsel %vm5119, %v8548, %v7124
        %v8578 = vsel %vm5119, %v8549, %v7126
        %v8579 = vsel %vm5119, %v8550, %v7128
        %v8580 = vsel %vm5119, %v8551, %v7130
        %v8581 = vsel %vm5119, %v8552, %v7132
        %v8582 = vsel %vm5119, %v8553, %v7134
        %v8583 = vsel %vm5119, %v8554, %v7136
        %v8584 = vsel %vm5119, %v8555, %v7138
        %v8585 = vsel %vm5119, %v8556, %v7140
        %v8586 = vsel %vm5119, %v8557, %v7142
        %v8587 = vsel %vm5119, %v8558, %v7144
        %v8588 = vsel %vm5119, %v8559, %v7146
        %v8589 = vsel %vm5119, %v8560, %v7148
        %v8590 = vsel %vm5119, %v8561, %v7150
        %v8591 = vsel %vm5429, %v8562, %v7241
        %v8592 = vsel %vm5429, %v8563, %v7243
        %v8593 = vsel %vm5429, %v8564, %v7245
        %v8594 = vsel %vm5429, %v8565, %v7247
        %v8595 = vsel %vm5429, %v8566, %v7249
        %v8596 = vsel %vm5429, %v8567, %v7251
        %v8597 = vsel %vm5429, %v8568, %v7253
        %v8598 = vsel %vm5429, %v8569, %v7255
        %v8599 = vsel %vm5429, %v8570, %v7257
        %v8600 = vsel %vm5429, %v8571, %v7259
        %v8601 = vsel %vm5429, %v8572, %v7261
        %v8602 = vsel %vm5429, %v8573, %v7263
        %v8603 = vsel %vm5429, %v8574, %v7265
        %v8604 = vsel %vm5429, %v8575, %v7267
        %v8605 = vsel %vm5429, %v8576, %v7269
        %v8606 = vsel %vm5429, %v8577, %v7271
        %v8607 = vsel %vm5429, %v8578, %v7273
        %v8608 = vsel %vm5429, %v8579, %v7275
        %v8609 = vsel %vm5429, %v8580, %v7277
        %v8610 = vsel %vm5429, %v8581, %v7279
        %v8611 = vsel %vm5429, %v8582, %v7281
        %v8612 = vsel %vm5429, %v8583, %v7283
        %v8613 = vsel %vm5429, %v8584, %v7285
        %v8614 = vsel %vm5429, %v8585, %v7287
        %v8615 = vsel %vm5429, %v8586, %v7289
        %v8616 = vsel %vm5429, %v8587, %v7291
        %v8617 = vsel %vm5429, %v8588, %v7293
        %v8618 = vsel %vm5429, %v8589, %v7295
        %v8619 = vsel %vm5429, %v8590, %v7297
        %vm8620 = vcmask 162816
        %v8621 = vsel %vm8620, %v8591, %v7387
        %v8622 = vsel %vm8620, %v8592, %v7389
        %v8623 = vsel %vm8620, %v8593, %v7391
        %v8624 = vsel %vm8620, %v8594, %v7393
        %v8625 = vsel %vm8620, %v8595, %v7395
        %v8626 = vsel %vm8620, %v8596, %v7397
        %v8627 = vsel %vm8620, %v8597, %v7399
        %v8628 = vsel %vm8620, %v8598, %v7401
        %v8629 = vsel %vm8620, %v8599, %v7403
        %v8630 = vsel %vm8620, %v8600, %v7405
        %v8631 = vsel %vm8620, %v8601, %v7407
        %v8632 = vsel %vm8620, %v8602, %v7409
        %v8633 = vsel %vm8620, %v8603, %v7411
        %v8634 = vsel %vm8620, %v8604, %v7413
        %v8635 = vsel %vm8620, %v8605, %v7415
        %v8636 = vsel %vm8620, %v8606, %v7417
        %v8637 = vsel %vm8620, %v8607, %v7419
        %v8638 = vsel %vm8620, %v8608, %v7421
        %v8639 = vsel %vm8620, %v8609, %v7423
        %v8640 = vsel %vm8620, %v8610, %v7425
        %v8641 = vsel %vm8620, %v8611, %v7427
        %v8642 = vsel %vm8620, %v8612, %v7429
        %v8643 = vsel %vm8620, %v8613, %v7431
        %v8644 = vsel %vm8620, %v8614, %v7433
        %v8645 = vsel %vm8620, %v8615, %v7435
        %v8646 = vsel %vm8620, %v8616, %v7437
        %v8647 = vsel %vm8620, %v8617, %v7439
        %v8648 = vsel %vm8620, %v8618, %v7441
        %v8649 = vsel %vm8620, %v8619, %v7443
        %vm8650 = vcmask 203776
        %v8651 = vsel %vm8650, %v8621, %v7533
        %v8652 = vsel %vm8650, %v8622, %v7535
        %v8653 = vsel %vm8650, %v8623, %v7537
        %v8654 = vsel %vm8650, %v8624, %v7539
        %v8655 = vsel %vm8650, %v8625, %v7541
        %v8656 = vsel %vm8650, %v8626, %v7543
        %v8657 = vsel %vm8650, %v8627, %v7545
        %v8658 = vsel %vm8650, %v8628, %v7547
        %v8659 = vsel %vm8650, %v8629, %v7549
        %v8660 = vsel %vm8650, %v8630, %v7551
        %v8661 = vsel %vm8650, %v8631, %v7553
        %v8662 = vsel %vm8650, %v8632, %v7555
        %v8663 = vsel %vm8650, %v8633, %v7557
        %v8664 = vsel %vm8650, %v8634, %v7559
        %v8665 = vsel %vm8650, %v8635, %v7561
        %v8666 = vsel %vm8650, %v8636, %v7563
        %v8667 = vsel %vm8650, %v8637, %v7565
        %v8668 = vsel %vm8650, %v8638, %v7567
        %v8669 = vsel %vm8650, %v8639, %v7569
        %v8670 = vsel %vm8650, %v8640, %v7571
        %v8671 = vsel %vm8650, %v8641, %v7573
        %v8672 = vsel %vm8650, %v8642, %v7575
        %v8673 = vsel %vm8650, %v8643, %v7577
        %v8674 = vsel %vm8650, %v8644, %v7579
        %v8675 = vsel %vm8650, %v8645, %v7581
        %v8676 = vsel %vm8650, %v8646, %v7583
        %v8677 = vsel %vm8650, %v8647, %v7585
        %v8678 = vsel %vm8650, %v8648, %v7587
        %v8679 = vsel %vm8650, %v8649, %v7589
        %vm8680 = vcmask 244736
        %v8681 = vsel %vm8680, %v8651, %v7679
        %v8682 = vsel %vm8680, %v8652, %v7681
        %v8683 = vsel %vm8680, %v8653, %v7683
        %v8684 = vsel %vm8680, %v8654, %v7685
        %v8685 = vsel %vm8680, %v8655, %v7687
        %v8686 = vsel %vm8680, %v8656, %v7689
        %v8687 = vsel %vm8680, %v8657, %v7691
        %v8688 = vsel %vm8680, %v8658, %v7693
        %v8689 = vsel %vm8680, %v8659, %v7695
        %v8690 = vsel %vm8680, %v8660, %v7697
        %v8691 = vsel %vm8680, %v8661, %v7699
        %v8692 = vsel %vm8680, %v8662, %v7701
        %v8693 = vsel %vm8680, %v8663, %v7703
        %v8694 = vsel %vm8680, %v8664, %v7705
        %v8695 = vsel %vm8680, %v8665, %v7707
        %v8696 = vsel %vm8680, %v8666, %v7709
        %v8697 = vsel %vm8680, %v8667, %v7711
        %v8698 = vsel %vm8680, %v8668, %v7713
        %v8699 = vsel %vm8680, %v8669, %v7715
        %v8700 = vsel %vm8680, %v8670, %v7717
        %v8701 = vsel %vm8680, %v8671, %v7719
        %v8702 = vsel %vm8680, %v8672, %v7721
        %v8703 = vsel %vm8680, %v8673, %v7723
        %v8704 = vsel %vm8680, %v8674, %v7725
        %v8705 = vsel %vm8680, %v8675, %v7727
        %v8706 = vsel %vm8680, %v8676, %v7729
        %v8707 = vsel %vm8680, %v8677, %v7731
        %v8708 = vsel %vm8680, %v8678, %v7733
        %v8709 = vsel %vm8680, %v8679, %v7735
        %vm8710 = vcmask 285696
        %v8711 = vsel %vm8710, %v8681, %v7825
        %v8712 = vsel %vm8710, %v8682, %v7827
        %v8713 = vsel %vm8710, %v8683, %v7829
        %v8714 = vsel %vm8710, %v8684, %v7831
        %v8715 = vsel %vm8710, %v8685, %v7833
        %v8716 = vsel %vm8710, %v8686, %v7835
        %v8717 = vsel %vm8710, %v8687, %v7837
        %v8718 = vsel %vm8710, %v8688, %v7839
        %v8719 = vsel %vm8710, %v8689, %v7841
        %v8720 = vsel %vm8710, %v8690, %v7843
        %v8721 = vsel %vm8710, %v8691, %v7845
        %v8722 = vsel %vm8710, %v8692, %v7847
        %v8723 = vsel %vm8710, %v8693, %v7849
        %v8724 = vsel %vm8710, %v8694, %v7851
        %v8725 = vsel %vm8710, %v8695, %v7853
        %v8726 = vsel %vm8710, %v8696, %v7855
        %v8727 = vsel %vm8710, %v8697, %v7857
        %v8728 = vsel %vm8710, %v8698, %v7859
        %v8729 = vsel %vm8710, %v8699, %v7861
        %v8730 = vsel %vm8710, %v8700, %v7863
        %v8731 = vsel %vm8710, %v8701, %v7865
        %v8732 = vsel %vm8710, %v8702, %v7867
        %v8733 = vsel %vm8710, %v8703, %v7869
        %v8734 = vsel %vm8710, %v8704, %v7871
        %v8735 = vsel %vm8710, %v8705, %v7873
        %v8736 = vsel %vm8710, %v8706, %v7875
        %v8737 = vsel %vm8710, %v8707, %v7877
        %v8738 = vsel %vm8710, %v8708, %v7879
        %v8739 = vsel %vm8710, %v8709, %v7881
        %vm8740 = vcmask 326656
        %v8741 = vsel %vm8740, %v8711, %v7912
        %v8742 = vsel %vm8740, %v8712, %v7914
        %v8743 = vsel %vm8740, %v8713, %v7916
        %v8744 = vsel %vm8740, %v8714, %v7918
        %v8745 = vsel %vm8740, %v8715, %v7920
        %v8746 = vsel %vm8740, %v8716, %v7922
        %v8747 = vsel %vm8740, %v8717, %v7924
        %v8748 = vsel %vm8740, %v8718, %v7926
        %v8749 = vsel %vm8740, %v8719, %v7928
        %v8750 = vsel %vm8740, %v8720, %v7930
        %v8751 = vsel %vm8740, %v8721, %v7932
        %v8752 = vsel %vm8740, %v8722, %v7934
        %v8753 = vsel %vm8740, %v8723, %v7936
        %v8754 = vsel %vm8740, %v8724, %v7938
        %v8755 = vsel %vm8740, %v8725, %v7940
        %v8756 = vsel %vm8740, %v8726, %v7942
        %v8757 = vsel %vm8740, %v8727, %v7944
        %v8758 = vsel %vm8740, %v8728, %v7946
        %v8759 = vsel %vm8740, %v8729, %v7948
        %v8760 = vsel %vm8740, %v8730, %v7950
        %v8761 = vsel %vm8740, %v8731, %v7952
        %v8762 = vsel %vm8740, %v8732, %v7954
        %v8763 = vsel %vm8740, %v8733, %v7956
        %v8764 = vsel %vm8740, %v8734, %v7958
        %v8765 = vsel %vm8740, %v8735, %v7960
        %v8766 = vsel %vm8740, %v8736, %v7962
        %v8767 = vsel %vm8740, %v8737, %v7964
        %v8768 = vsel %vm8740, %v8738, %v7966
        %v8769 = vsel %vm8740, %v8739, %v7968
        %vm8770 = vcmask 367616
        %v8771 = vsel %vm8770, %v8741, %v8001
        %v8772 = vsel %vm8770, %v8742, %v8003
        %v8773 = vsel %vm8770, %v8743, %v8005
        %v8774 = vsel %vm8770, %v8744, %v8007
        %v8775 = vsel %vm8770, %v8745, %v8009
        %v8776 = vsel %vm8770, %v8746, %v8011
        %v8777 = vsel %vm8770, %v8747, %v8013
        %v8778 = vsel %vm8770, %v8748, %v8015
        %v8779 = vsel %vm8770, %v8749, %v8017
        %v8780 = vsel %vm8770, %v8750, %v8019
        %v8781 = vsel %vm8770, %v8751, %v8021
        %v8782 = vsel %vm8770, %v8752, %v8023
        %v8783 = vsel %vm8770, %v8753, %v8025
        %v8784 = vsel %vm8770, %v8754, %v8027
        %v8785 = vsel %vm8770, %v8755, %v8029
        %v8786 = vsel %vm8770, %v8756, %v8031
        %v8787 = vsel %vm8770, %v8757, %v8033
        %v8788 = vsel %vm8770, %v8758, %v8035
        %v8789 = vsel %vm8770, %v8759, %v8037
        %v8790 = vsel %vm8770, %v8760, %v8039
        %v8791 = vsel %vm8770, %v8761, %v8041
        %v8792 = vsel %vm8770, %v8762, %v8043
        %v8793 = vsel %vm8770, %v8763, %v8045
        %v8794 = vsel %vm8770, %v8764, %v8047
        %v8795 = vsel %vm8770, %v8765, %v8049
        %v8796 = vsel %vm8770, %v8766, %v8051
        %v8797 = vsel %vm8770, %v8767, %v8053
        %v8798 = vsel %vm8770, %v8768, %v8055
        %v8799 = vsel %vm8770, %v8769, %v8057
        %vm8800 = vcmask 408576
        %v8801 = vsel %vm8800, %v8771, %v8090
        %v8802 = vsel %vm8800, %v8772, %v8092
        %v8803 = vsel %vm8800, %v8773, %v8094
        %v8804 = vsel %vm8800, %v8774, %v8096
        %v8805 = vsel %vm8800, %v8775, %v8098
        %v8806 = vsel %vm8800, %v8776, %v8100
        %v8807 = vsel %vm8800, %v8777, %v8102
        %v8808 = vsel %vm8800, %v8778, %v8104
        %v8809 = vsel %vm8800, %v8779, %v8106
        %v8810 = vsel %vm8800, %v8780, %v8108
        %v8811 = vsel %vm8800, %v8781, %v8110
        %v8812 = vsel %vm8800, %v8782, %v8112
        %v8813 = vsel %vm8800, %v8783, %v8114
        %v8814 = vsel %vm8800, %v8784, %v8116
        %v8815 = vsel %vm8800, %v8785, %v8118
        %v8816 = vsel %vm8800, %v8786, %v8120
        %v8817 = vsel %vm8800, %v8787, %v8122
        %v8818 = vsel %vm8800, %v8788, %v8124
        %v8819 = vsel %vm8800, %v8789, %v8126
        %v8820 = vsel %vm8800, %v8790, %v8128
        %v8821 = vsel %vm8800, %v8791, %v8130
        %v8822 = vsel %vm8800, %v8792, %v8132
        %v8823 = vsel %vm8800, %v8793, %v8134
        %v8824 = vsel %vm8800, %v8794, %v8136
        %v8825 = vsel %vm8800, %v8795, %v8138
        %v8826 = vsel %vm8800, %v8796, %v8140
        %v8827 = vsel %vm8800, %v8797, %v8142
        %v8828 = vsel %vm8800, %v8798, %v8144
        %v8829 = vsel %vm8800, %v8799, %v8146
        %vm8830 = vcmask 449536
        %v8831 = vsel %vm8830, %v8801, %v8180
        %v8832 = vsel %vm8830, %v8802, %v8182
        %v8833 = vsel %vm8830, %v8803, %v8184
        %v8834 = vsel %vm8830, %v8804, %v8186
        %v8835 = vsel %vm8830, %v8805, %v8188
        %v8836 = vsel %vm8830, %v8806, %v8190
        %v8837 = vsel %vm8830, %v8807, %v8192
        %v8838 = vsel %vm8830, %v8808, %v8194
        %v8839 = vsel %vm8830, %v8809, %v8196
        %v8840 = vsel %vm8830, %v8810, %v8198
        %v8841 = vsel %vm8830, %v8811, %v8200
        %v8842 = vsel %vm8830, %v8812, %v8202
        %v8843 = vsel %vm8830, %v8813, %v8204
        %v8844 = vsel %vm8830, %v8814, %v8206
        %v8845 = vsel %vm8830, %v8815, %v8208
        %v8846 = vsel %vm8830, %v8816, %v8210
        %v8847 = vsel %vm8830, %v8817, %v8212
        %v8848 = vsel %vm8830, %v8818, %v8214
        %v8849 = vsel %vm8830, %v8819, %v8216
        %v8850 = vsel %vm8830, %v8820, %v8218
        %v8851 = vsel %vm8830, %v8821, %v8220
        %v8852 = vsel %vm8830, %v8822, %v8222
        %v8853 = vsel %vm8830, %v8823, %v8224
        %v8854 = vsel %vm8830, %v8824, %v8226
        %v8855 = vsel %vm8830, %v8825, %v8228
        %v8856 = vsel %vm8830, %v8826, %v8230
        %v8857 = vsel %vm8830, %v8827, %v8232
        %v8858 = vsel %vm8830, %v8828, %v8234
        %v8859 = vsel %vm8830, %v8829, %v8236
        %vm8860 = vcmask 490496
        %v8861 = vsel %vm8860, %v8831, %v8269
        %v8862 = vsel %vm8860, %v8832, %v8271
        %v8863 = vsel %vm8860, %v8833, %v8273
        %v8864 = vsel %vm8860, %v8834, %v8275
        %v8865 = vsel %vm8860, %v8835, %v8277
        %v8866 = vsel %vm8860, %v8836, %v8279
        %v8867 = vsel %vm8860, %v8837, %v8281
        %v8868 = vsel %vm8860, %v8838, %v8283
        %v8869 = vsel %vm8860, %v8839, %v8285
        %v8870 = vsel %vm8860, %v8840, %v8287
        %v8871 = vsel %vm8860, %v8841, %v8289
        %v8872 = vsel %vm8860, %v8842, %v8291
        %v8873 = vsel %vm8860, %v8843, %v8293
        %v8874 = vsel %vm8860, %v8844, %v8295
        %v8875 = vsel %vm8860, %v8845, %v8297
        %v8876 = vsel %vm8860, %v8846, %v8299
        %v8877 = vsel %vm8860, %v8847, %v8301
        %v8878 = vsel %vm8860, %v8848, %v8303
        %v8879 = vsel %vm8860, %v8849, %v8305
        %v8880 = vsel %vm8860, %v8850, %v8307
        %v8881 = vsel %vm8860, %v8851, %v8309
        %v8882 = vsel %vm8860, %v8852, %v8311
        %v8883 = vsel %vm8860, %v8853, %v8313
        %v8884 = vsel %vm8860, %v8854, %v8315
        %v8885 = vsel %vm8860, %v8855, %v8317
        %v8886 = vsel %vm8860, %v8856, %v8319
        %v8887 = vsel %vm8860, %v8857, %v8321
        %v8888 = vsel %vm8860, %v8858, %v8323
        %v8889 = vsel %vm8860, %v8859, %v8325
        %vm8890 = vcmask 531456
        %v8891 = vsel %vm8890, %v8861, %v8358
        %v8892 = vsel %vm8890, %v8862, %v8360
        %v8893 = vsel %vm8890, %v8863, %v8362
        %v8894 = vsel %vm8890, %v8864, %v8364
        %v8895 = vsel %vm8890, %v8865, %v8366
        %v8896 = vsel %vm8890, %v8866, %v8368
        %v8897 = vsel %vm8890, %v8867, %v8370
        %v8898 = vsel %vm8890, %v8868, %v8372
        %v8899 = vsel %vm8890, %v8869, %v8374
        %v8900 = vsel %vm8890, %v8870, %v8376
        %v8901 = vsel %vm8890, %v8871, %v8378
        %v8902 = vsel %vm8890, %v8872, %v8380
        %v8903 = vsel %vm8890, %v8873, %v8382
        %v8904 = vsel %vm8890, %v8874, %v8384
        %v8905 = vsel %vm8890, %v8875, %v8386
        %v8906 = vsel %vm8890, %v8876, %v8388
        %v8907 = vsel %vm8890, %v8877, %v8390
        %v8908 = vsel %vm8890, %v8878, %v8392
        %v8909 = vsel %vm8890, %v8879, %v8394
        %v8910 = vsel %vm8890, %v8880, %v8396
        %v8911 = vsel %vm8890, %v8881, %v8398
        %v8912 = vsel %vm8890, %v8882, %v8400
        %v8913 = vsel %vm8890, %v8883, %v8402
        %v8914 = vsel %vm8890, %v8884, %v8404
        %v8915 = vsel %vm8890, %v8885, %v8406
        %v8916 = vsel %vm8890, %v8886, %v8408
        %v8917 = vsel %vm8890, %v8887, %v8410
        %v8918 = vsel %vm8890, %v8888, %v8412
        %v8919 = vsel %vm8890, %v8889, %v8414
        %vm8920 = vcmask 572416
        %v8921 = vsel %vm8920, %v8891, %v8447
        %v8922 = vsel %vm8920, %v8892, %v8449
        %v8923 = vsel %vm8920, %v8893, %v8451
        %v8924 = vsel %vm8920, %v8894, %v8453
        %v8925 = vsel %vm8920, %v8895, %v8455
        %v8926 = vsel %vm8920, %v8896, %v8457
        %v8927 = vsel %vm8920, %v8897, %v8459
        %v8928 = vsel %vm8920, %v8898, %v8461
        %v8929 = vsel %vm8920, %v8899, %v8463
        %v8930 = vsel %vm8920, %v8900, %v8465
        %v8931 = vsel %vm8920, %v8901, %v8467
        %v8932 = vsel %vm8920, %v8902, %v8469
        %v8933 = vsel %vm8920, %v8903, %v8471
        %v8934 = vsel %vm8920, %v8904, %v8473
        %v8935 = vsel %vm8920, %v8905, %v8475
        %v8936 = vsel %vm8920, %v8906, %v8477
        %v8937 = vsel %vm8920, %v8907, %v8479
        %v8938 = vsel %vm8920, %v8908, %v8481
        %v8939 = vsel %vm8920, %v8909, %v8483
        %v8940 = vsel %vm8920, %v8910, %v8485
        %v8941 = vsel %vm8920, %v8911, %v8487
        %v8942 = vsel %vm8920, %v8912, %v8489
        %v8943 = vsel %vm8920, %v8913, %v8491
        %v8944 = vsel %vm8920, %v8914, %v8493
        %v8945 = vsel %vm8920, %v8915, %v8495
        %v8946 = vsel %vm8920, %v8916, %v8497
        %v8947 = vsel %vm8920, %v8917, %v8499
        %v8948 = vsel %vm8920, %v8918, %v8501
        %v8949 = vsel %vm8920, %v8919, %v8503
        %v8950 = vld [vmem:[%s5] sm:$0xff]
        %v8951 = vld [vmem:[%s5 + $0x8] sm:$0xff]
        %v8952 = vld [vmem:[%s5 + $0x10] sm:$0xff]
        %v8953 = vld [vmem:[%s5 + $0x18] sm:$0xff]
        %v8954 = vld [vmem:[%s5 + $0x20] sm:$0xff]
        %v8955 = vld [vmem:[%s5 + $0x28] sm:$0xff]
        %v8956 = vld [vmem:[%s5 + $0x30] sm:$0xff]
        %v8957 = vld [vmem:[%s5 + $0x38] sm:$0xff]
        %v8958 = vld [vmem:[%s5 + $0x40] sm:$0xff]
        %v8959 = vld [vmem:[%s5 + $0x48] sm:$0x7]
        %v8960 = vld [vmem:[%s6] sm:$0x1]
        %v8962 = vlaneseq
        %v8963 = vshrl.u32 %v8962, 7
        %v8964 = vsub.s32 0, %v8963
        %v8965 = vrot.slane %v8960, %v8964
        %vm8967 = vcmask 613376
        %v8969 = vsel %vm8967, %v8921, 0
        %v8972 = vsel %vm8967, %v8922, 0
        %v8975 = vsel %vm8967, %v8923, 0
        %v8978 = vsel %vm8967, %v8924, 0
        %v8981 = vsel %vm8967, %v8925, 0
        %v8984 = vsel %vm8967, %v8926, 0
        %v8987 = vsel %vm8967, %v8927, 0
        %v8990 = vsel %vm8967, %v8928, 0
        %v8993 = vsel %vm8967, %v8929, 0
        %v8996 = vsel %vm8967, %v8930, 0
        %v8999 = vsel %vm8967, %v8931, 0
        %v9002 = vsel %vm8967, %v8932, 0
        %v9005 = vsel %vm8967, %v8933, 0
        %v9008 = vsel %vm8967, %v8934, 0
        %v9011 = vsel %vm8967, %v8935, 0
        %v9014 = vsel %vm8967, %v8936, 0
        %v9017 = vsel %vm8967, %v8937, 0
        %v9020 = vsel %vm8967, %v8938, 0
        %v9023 = vsel %vm8967, %v8939, 0
        %v9026 = vsel %vm8967, %v8940, 0
        %v9029 = vsel %vm8967, %v8941, 0
        %v9032 = vsel %vm8967, %v8942, 0
        %v9035 = vsel %vm8967, %v8943, 0
        %v9038 = vsel %vm8967, %v8944, 0
        %v9041 = vsel %vm8967, %v8945, 0
        %v9044 = vsel %vm8967, %v8946, 0
        %v9047 = vsel %vm8967, %v8947, 0
        %v9050 = vsel %vm8967, %v8948, 0
        %v9053 = vsel %vm8967, %v8949, 0
        %v9056 = vsel %vm2161, %v8959, 0
        %9058 = vmatprep.subr.mxu0 0.0
        %9059 = vmatpush1.msra.mxu0 %v8950
        %9060 = vmatprep.subr.mxu0 0.0
        %9061 = vmatpush1.msra.mxu0 %v8951
        %9062 = vmatprep.subr.mxu0 0.0
        %9063 = vmatpush1.msra.mxu0 %v8952
        %9064 = vmatprep.subr.mxu0 0.0
        %9065 = vmatpush1.msra.mxu0 %v8953
        %9066 = vmatprep.subr.mxu0 0.0
        %9067 = vmatpush1.msra.mxu0 %v8954
        %9068 = vmatprep.subr.mxu0 0.0
        %9069 = vmatpush1.msra.mxu0 %v8955
        %9070 = vmatprep.subr.mxu0 0.0
        %9071 = vmatpush1.msra.mxu0 %v8956
        %9072 = vmatprep.subr.mxu0 0.0
        %9073 = vmatpush1.msra.mxu0 %v8957
        %9074 = vmatprep.subr.mxu0 0.0
        %9075 = vmatpush1.msra.mxu0 %v8958
        %9076 = vmatprep.subr.mxu0 0.0
        %9077 = vmatpush1.msra.mxu0 %v9056
        %9078 = vmatprep.subr.mxu0 0.0
        %9079 = vmatpush1.msra.mxu0 0.0
        %9080 = vmatprep.subr.mxu0 0.0
        %9081 = vmatpush1.msra.mxu0 0.0
        %9082 = vmatprep.subr.mxu0 0.0
        %9083 = vmatpush1.msra.mxu0 0.0
        %9084 = vmatprep.subr.mxu0 0.0
        %9085 = vmatpush1.msra.mxu0 0.0
        %9086 = vmatprep.subr.mxu0 0.0
        %9087 = vmatpush1.msra.mxu0 0.0
        %9088 = vmatprep.subr.mxu0 0.0
        %9089 = vmatpush1.msra.mxu0 0.0
        %9090 = vmatprep.subr.mxu0 0.0
        %9091 = vmatpush1.msra.mxu0 0.0
        %9092 = vmatprep.subr.mxu0 0.0
        %9093 = vmatpush1.msra.mxu0 0.0
        %9094 = vmatprep.subr.mxu0 0.0
        %9095 = vmatpush1.msra.mxu0 0.0
        %9096 = vmatprep.subr.mxu0 0.0
        %9097 = vmatpush1.msra.mxu0 0.0
        %9098 = vmatprep.subr.mxu0 0.0
        %9099 = vmatpush1.msra.mxu0 0.0
        %9100 = vmatprep.subr.mxu0 0.0
        %9101 = vmatpush1.msra.mxu0 0.0
        %9102 = vmatprep.subr.mxu0 0.0
        %9103 = vmatpush1.msra.mxu0 0.0
        %9104 = vmatprep.subr.mxu0 0.0
        %9105 = vmatpush1.msra.mxu0 0.0
        %9106 = vmatprep.subr.mxu0 0.0
        %9107 = vmatpush1.msra.mxu0 0.0
        %9108 = vmatprep.subr.mxu0 0.0
        %9109 = vmatpush1.msra.mxu0 0.0
        %9110 = vmatprep.subr.mxu0 0.0
        %9111 = vmatpush1.msra.mxu0 0.0
        %9112 = vmatprep.subr.mxu0 0.0
        %9113 = vmatpush1.msra.mxu0 0.0
        %9114 = vmatprep.subr.mxu0 0.0
        %9115 = vmatpush1.msra.mxu0 0.0
        %9116 = vmatprep.subr.mxu0 0.0
        %9117 = vmatpush1.msra.mxu0 0.0
        %9118 = vmatprep.subr.mxu0 0.0
        %9119 = vmatpush1.msra.mxu0 0.0
        %9120 = vmatprep.subr.mxu0 0.0
        %9121 = vmatpush1.msra.mxu0 0.0
        %9122 = vmatprep.mubr.f32.mxu0 0.0
        %9123 = vmatmul.mubr.f32.gmra.mrb[0].mxu0 %v8969
        %v9124 = vpop.f32.mrb[0].mxu0
        %v9125 = vadd.f32 %v8965, %v9124
        %v9126 = vpop.f32.mrb[0].mxu0
        %9127 = vmatprep.mubr.f32.mxu0 0.0
        %9128 = vmatmul.mubr.f32.gmra.mrb[0].mxu0 %v8972
        %v9129 = vpop.f32.mrb[0].mxu0
        %v9130 = vadd.f32 %v8965, %v9129
        %v9131 = vpop.f32.mrb[0].mxu0
        %9132 = vmatprep.mubr.f32.mxu0 0.0
        %9133 = vmatmul.mubr.f32.gmra.mrb[0].mxu0 %v8975
        %v9134 = vpop.f32.mrb[0].mxu0
        %v9135 = vadd.f32 %v8965, %v9134
        %v9136 = vpop.f32.mrb[0].mxu0
        %9137 = vmatprep.mubr.f32.mxu0 0.0
        %9138 = vmatmul.mubr.f32.gmra.mrb[0].mxu0 %v8978
        %v9139 = vpop.f32.mrb[0].mxu0
        %v9140 = vadd.f32 %v8965, %v9139
        %v9141 = vpop.f32.mrb[0].mxu0
        %9142 = vmatprep.mubr.f32.mxu0 0.0
        %9143 = vmatmul.mubr.f32.gmra.mrb[0].mxu0 %v8981
        %v9144 = vpop.f32.mrb[0].mxu0
        %v9145 = vadd.f32 %v8965, %v9144
        %v9146 = vpop.f32.mrb[0].mxu0
        %9147 = vmatprep.mubr.f32.mxu0 0.0
        %9148 = vmatmul.mubr.f32.gmra.mrb[0].mxu0 %v8984
        %v9149 = vpop.f32.mrb[0].mxu0
        %v9150 = vadd.f32 %v8965, %v9149
        %v9151 = vpop.f32.mrb[0].mxu0
        %9152 = vmatprep.mubr.f32.mxu0 0.0
        %9153 = vmatmul.mubr.f32.gmra.mrb[0].mxu0 %v8987
        %v9154 = vpop.f32.mrb[0].mxu0
        %v9155 = vadd.f32 %v8965, %v9154
        %v9156 = vpop.f32.mrb[0].mxu0
        %9157 = vmatprep.mubr.f32.mxu0 0.0
        %9158 = vmatmul.mubr.f32.gmra.mrb[0].mxu0 %v8990
        %v9159 = vpop.f32.mrb[0].mxu0
        %v9160 = vadd.f32 %v8965, %v9159
        %v9161 = vpop.f32.mrb[0].mxu0
        %9162 = vmatprep.mubr.f32.mxu0 0.0
        %9163 = vmatmul.mubr.f32.gmra.mrb[0].mxu0 %v8993
        %v9164 = vpop.f32.mrb[0].mxu0
        %v9165 = vadd.f32 %v8965, %v9164
        %v9166 = vpop.f32.mrb[0].mxu0
        %9167 = vmatprep.mubr.f32.mxu0 0.0
        %9168 = vmatmul.mubr.f32.gmra.mrb[0].mxu0 %v8996
        %v9169 = vpop.f32.mrb[0].mxu0
        %v9170 = vadd.f32 %v8965, %v9169
        %v9171 = vpop.f32.mrb[0].mxu0
        %9172 = vmatprep.mubr.f32.mxu0 0.0
        %9173 = vmatmul.mubr.f32.gmra.mrb[0].mxu0 %v8999
        %v9174 = vpop.f32.mrb[0].mxu0
        %v9175 = vadd.f32 %v8965, %v9174
        %v9176 = vpop.f32.mrb[0].mxu0
        %9177 = vmatprep.mubr.f32.mxu0 0.0
        %9178 = vmatmul.mubr.f32.gmra.mrb[0].mxu0 %v9002
        %v9179 = vpop.f32.mrb[0].mxu0
        %v9180 = vadd.f32 %v8965, %v9179
        %v9181 = vpop.f32.mrb[0].mxu0
        %9182 = vmatprep.mubr.f32.mxu0 0.0
        %9183 = vmatmul.mubr.f32.gmra.mrb[0].mxu0 %v9005
        %v9184 = vpop.f32.mrb[0].mxu0
        %v9185 = vadd.f32 %v8965, %v9184
        %v9186 = vpop.f32.mrb[0].mxu0
        %9187 = vmatprep.mubr.f32.mxu0 0.0
        %9188 = vmatmul.mubr.f32.gmra.mrb[0].mxu0 %v9008
        %v9189 = vpop.f32.mrb[0].mxu0
        %v9190 = vadd.f32 %v8965, %v9189
        %v9191 = vpop.f32.mrb[0].mxu0
        %9192 = vmatprep.mubr.f32.mxu0 0.0
        %9193 = vmatmul.mubr.f32.gmra.mrb[0].mxu0 %v9011
        %v9194 = vpop.f32.mrb[0].mxu0
        %v9195 = vadd.f32 %v8965, %v9194
        %v9196 = vpop.f32.mrb[0].mxu0
        %9197 = vmatprep.mubr.f32.mxu0 0.0
        %9198 = vmatmul.mubr.f32.gmra.mrb[0].mxu0 %v9014
        %v9199 = vpop.f32.mrb[0].mxu0
        %v9200 = vadd.f32 %v8965, %v9199
        %v9201 = vpop.f32.mrb[0].mxu0
        %9202 = vmatprep.mubr.f32.mxu0 0.0
        %9203 = vmatmul.mubr.f32.gmra.mrb[0].mxu0 %v9017
        %v9204 = vpop.f32.mrb[0].mxu0
        %v9205 = vadd.f32 %v8965, %v9204
        %v9206 = vpop.f32.mrb[0].mxu0
        %9207 = vmatprep.mubr.f32.mxu0 0.0
        %9208 = vmatmul.mubr.f32.gmra.mrb[0].mxu0 %v9020
        %v9209 = vpop.f32.mrb[0].mxu0
        %v9210 = vadd.f32 %v8965, %v9209
        %v9211 = vpop.f32.mrb[0].mxu0
        %9212 = vmatprep.mubr.f32.mxu0 0.0
        %9213 = vmatmul.mubr.f32.gmra.mrb[0].mxu0 %v9023
        %v9214 = vpop.f32.mrb[0].mxu0
        %v9215 = vadd.f32 %v8965, %v9214
        %v9216 = vpop.f32.mrb[0].mxu0
        %9217 = vmatprep.mubr.f32.mxu0 0.0
        %9218 = vmatmul.mubr.f32.gmra.mrb[0].mxu0 %v9026
        %v9219 = vpop.f32.mrb[0].mxu0
        %v9220 = vadd.f32 %v8965, %v9219
        %v9221 = vpop.f32.mrb[0].mxu0
        %9222 = vmatprep.mubr.f32.mxu0 0.0
        %9223 = vmatmul.mubr.f32.gmra.mrb[0].mxu0 %v9029
        %v9224 = vpop.f32.mrb[0].mxu0
        %v9225 = vadd.f32 %v8965, %v9224
        %v9226 = vpop.f32.mrb[0].mxu0
        %9227 = vmatprep.mubr.f32.mxu0 0.0
        %9228 = vmatmul.mubr.f32.gmra.mrb[0].mxu0 %v9032
        %v9229 = vpop.f32.mrb[0].mxu0
        %v9230 = vadd.f32 %v8965, %v9229
        %v9231 = vpop.f32.mrb[0].mxu0
        %9232 = vmatprep.mubr.f32.mxu0 0.0
        %9233 = vmatmul.mubr.f32.gmra.mrb[0].mxu0 %v9035
        %v9234 = vpop.f32.mrb[0].mxu0
        %v9235 = vadd.f32 %v8965, %v9234
        %v9236 = vpop.f32.mrb[0].mxu0
        %9237 = vmatprep.mubr.f32.mxu0 0.0
        %9238 = vmatmul.mubr.f32.gmra.mrb[0].mxu0 %v9038
        %v9239 = vpop.f32.mrb[0].mxu0
        %v9240 = vadd.f32 %v8965, %v9239
        %v9241 = vpop.f32.mrb[0].mxu0
        %9242 = vmatprep.mubr.f32.mxu0 0.0
        %9243 = vmatmul.mubr.f32.gmra.mrb[0].mxu0 %v9041
        %v9244 = vpop.f32.mrb[0].mxu0
        %v9245 = vadd.f32 %v8965, %v9244
        %v9246 = vpop.f32.mrb[0].mxu0
        %9247 = vmatprep.mubr.f32.mxu0 0.0
        %9248 = vmatmul.mubr.f32.gmra.mrb[0].mxu0 %v9044
        %v9249 = vpop.f32.mrb[0].mxu0
        %v9250 = vadd.f32 %v8965, %v9249
        %v9251 = vpop.f32.mrb[0].mxu0
        %9252 = vmatprep.mubr.f32.mxu0 0.0
        %9253 = vmatmul.mubr.f32.gmra.mrb[0].mxu0 %v9047
        %v9254 = vpop.f32.mrb[0].mxu0
        %v9255 = vadd.f32 %v8965, %v9254
        %v9256 = vpop.f32.mrb[0].mxu0
        %9257 = vmatprep.mubr.f32.mxu0 0.0
        %9258 = vmatmul.mubr.f32.gmra.mrb[0].mxu0 %v9050
        %v9259 = vpop.f32.mrb[0].mxu0
        %v9260 = vadd.f32 %v8965, %v9259
        %v9261 = vpop.f32.mrb[0].mxu0
        %9262 = vmatprep.mubr.f32.mxu0 0.0
        %9263 = vmatmul.mubr.f32.gmra.mrb[0].mxu0 %v9053
        %v9264 = vpop.f32.mrb[0].mxu0
        %v9265 = vadd.f32 %v8965, %v9264
        %v9266 = vpop.f32.mrb[0].mxu0
        %9267 = vdwg.mxu0
        %vm9268 = vcmp.gt.f32.partialorder %v9125, 0.0
        %vm9269 = vcmp.gt.f32.partialorder %v9130, 0.0
        %vm9270 = vcmp.gt.f32.partialorder %v9135, 0.0
        %vm9271 = vcmp.gt.f32.partialorder %v9140, 0.0
        %vm9272 = vcmp.gt.f32.partialorder %v9145, 0.0
        %vm9273 = vcmp.gt.f32.partialorder %v9150, 0.0
        %vm9274 = vcmp.gt.f32.partialorder %v9155, 0.0
        %vm9275 = vcmp.gt.f32.partialorder %v9160, 0.0
        %vm9276 = vcmp.gt.f32.partialorder %v9165, 0.0
        %vm9277 = vcmp.gt.f32.partialorder %v9170, 0.0
        %vm9278 = vcmp.gt.f32.partialorder %v9175, 0.0
        %vm9279 = vcmp.gt.f32.partialorder %v9180, 0.0
        %vm9280 = vcmp.gt.f32.partialorder %v9185, 0.0
        %vm9281 = vcmp.gt.f32.partialorder %v9190, 0.0
        %vm9282 = vcmp.gt.f32.partialorder %v9195, 0.0
        %vm9283 = vcmp.gt.f32.partialorder %v9200, 0.0
        %vm9284 = vcmp.gt.f32.partialorder %v9205, 0.0
        %vm9285 = vcmp.gt.f32.partialorder %v9210, 0.0
        %vm9286 = vcmp.gt.f32.partialorder %v9215, 0.0
        %vm9287 = vcmp.gt.f32.partialorder %v9220, 0.0
        %vm9288 = vcmp.gt.f32.partialorder %v9225, 0.0
        %vm9289 = vcmp.gt.f32.partialorder %v9230, 0.0
        %vm9290 = vcmp.gt.f32.partialorder %v9235, 0.0
        %vm9291 = vcmp.gt.f32.partialorder %v9240, 0.0
        %vm9292 = vcmp.gt.f32.partialorder %v9245, 0.0
        %vm9293 = vcmp.gt.f32.partialorder %v9250, 0.0
        %vm9294 = vcmp.gt.f32.partialorder %v9255, 0.0
        %vm9295 = vcmp.gt.f32.partialorder %v9260, 0.0
        %vm9296 = vcmp.gt.f32.partialorder %v9265, 0.0
        %v9297 = vmul.f32 %v9125, 0.01
        %v9298 = vmul.f32 %v9130, 0.01
        %v9299 = vmul.f32 %v9135, 0.01
        %v9300 = vmul.f32 %v9140, 0.01
        %v9301 = vmul.f32 %v9145, 0.01
        %v9302 = vmul.f32 %v9150, 0.01
        %v9303 = vmul.f32 %v9155, 0.01
        %v9304 = vmul.f32 %v9160, 0.01
        %v9305 = vmul.f32 %v9165, 0.01
        %v9306 = vmul.f32 %v9170, 0.01
        %v9307 = vmul.f32 %v9175, 0.01
        %v9308 = vmul.f32 %v9180, 0.01
        %v9309 = vmul.f32 %v9185, 0.01
        %v9310 = vmul.f32 %v9190, 0.01
        %v9311 = vmul.f32 %v9195, 0.01
        %v9312 = vmul.f32 %v9200, 0.01
        %v9313 = vmul.f32 %v9205, 0.01
        %v9314 = vmul.f32 %v9210, 0.01
        %v9315 = vmul.f32 %v9215, 0.01
        %v9316 = vmul.f32 %v9220, 0.01
        %v9317 = vmul.f32 %v9225, 0.01
        %v9318 = vmul.f32 %v9230, 0.01
        %v9319 = vmul.f32 %v9235, 0.01
        %v9320 = vmul.f32 %v9240, 0.01
        %v9321 = vmul.f32 %v9245, 0.01
        %v9322 = vmul.f32 %v9250, 0.01
        %v9323 = vmul.f32 %v9255, 0.01
        %v9324 = vmul.f32 %v9260, 0.01
        %v9325 = vmul.f32 %v9265, 0.01
        %v9326 = vsel %vm9268, %v9125, %v9297
        %v9327 = vsel %vm9269, %v9130, %v9298
        %v9328 = vsel %vm9270, %v9135, %v9299
        %v9329 = vsel %vm9271, %v9140, %v9300
        %v9330 = vsel %vm9272, %v9145, %v9301
        %v9331 = vsel %vm9273, %v9150, %v9302
        %v9332 = vsel %vm9274, %v9155, %v9303
        %v9333 = vsel %vm9275, %v9160, %v9304
        %v9334 = vsel %vm9276, %v9165, %v9305
        %v9335 = vsel %vm9277, %v9170, %v9306
        %v9336 = vsel %vm9278, %v9175, %v9307
        %v9337 = vsel %vm9279, %v9180, %v9308
        %v9338 = vsel %vm9280, %v9185, %v9309
        %v9339 = vsel %vm9281, %v9190, %v9310
        %v9340 = vsel %vm9282, %v9195, %v9311
        %v9341 = vsel %vm9283, %v9200, %v9312
        %v9342 = vsel %vm9284, %v9205, %v9313
        %v9343 = vsel %vm9285, %v9210, %v9314
        %v9344 = vsel %vm9286, %v9215, %v9315
        %v9345 = vsel %vm9287, %v9220, %v9316
        %v9346 = vsel %vm9288, %v9225, %v9317
        %v9347 = vsel %vm9289, %v9230, %v9318
        %v9348 = vsel %vm9290, %v9235, %v9319
        %v9349 = vsel %vm9291, %v9240, %v9320
        %v9350 = vsel %vm9292, %v9245, %v9321
        %v9351 = vsel %vm9293, %v9250, %v9322
        %v9352 = vsel %vm9294, %v9255, %v9323
        %v9353 = vsel %vm9295, %v9260, %v9324
        %v9354 = vsel %vm9296, %v9265, %v9325
        %9355 = vst.msk [vmem:[#allocation2] sm:$0xff] %vm5119, %v9326
        %9356 = vst.msk [vmem:[#allocation2 + $0x8] sm:$0xff] %vm5119, %v9327
        %9357 = vst.msk [vmem:[#allocation2 + $0x10] sm:$0xff] %vm5119, %v9328
        %9358 = vst.msk [vmem:[#allocation2 + $0x18] sm:$0xff] %vm5119, %v9329
        %9359 = vst.msk [vmem:[#allocation2 + $0x20] sm:$0xff] %vm5119, %v9330
        %9360 = vst.msk [vmem:[#allocation2 + $0x28] sm:$0xff] %vm5119, %v9331
        %9361 = vst.msk [vmem:[#allocation2 + $0x30] sm:$0xff] %vm5119, %v9332
        %9362 = vst.msk [vmem:[#allocation2 + $0x38] sm:$0xff] %vm5119, %v9333
        %9363 = vst.msk [vmem:[#allocation2 + $0x40] sm:$0xff] %vm5119, %v9334
        %9364 = vst.msk [vmem:[#allocation2 + $0x48] sm:$0xff] %vm5119, %v9335
        %9365 = vst.msk [vmem:[#allocation2 + $0x50] sm:$0xff] %vm5119, %v9336
        %9366 = vst.msk [vmem:[#allocation2 + $0x58] sm:$0xff] %vm5119, %v9337
        %9367 = vst.msk [vmem:[#allocation2 + $0x60] sm:$0xff] %vm5119, %v9338
        %9368 = vst.msk [vmem:[#allocation2 + $0x68] sm:$0xff] %vm5119, %v9339
        %9369 = vst.msk [vmem:[#allocation2 + $0x70] sm:$0xff] %vm5119, %v9340
        %9370 = vst.msk [vmem:[#allocation2 + $0x78] sm:$0xff] %vm5119, %v9341
        %9371 = vst.msk [vmem:[#allocation2 + $0x80] sm:$0xff] %vm5119, %v9342
        %9372 = vst.msk [vmem:[#allocation2 + $0x88] sm:$0xff] %vm5119, %v9343
        %9373 = vst.msk [vmem:[#allocation2 + $0x90] sm:$0xff] %vm5119, %v9344
        %9374 = vst.msk [vmem:[#allocation2 + $0x98] sm:$0xff] %vm5119, %v9345
        %9375 = vst.msk [vmem:[#allocation2 + $0xa0] sm:$0xff] %vm5119, %v9346
        %9376 = vst.msk [vmem:[#allocation2 + $0xa8] sm:$0xff] %vm5119, %v9347
        %9377 = vst.msk [vmem:[#allocation2 + $0xb0] sm:$0xff] %vm5119, %v9348
        %9378 = vst.msk [vmem:[#allocation2 + $0xb8] sm:$0xff] %vm5119, %v9349
        %9379 = vst.msk [vmem:[#allocation2 + $0xc0] sm:$0xff] %vm5119, %v9350
        %9380 = vst.msk [vmem:[#allocation2 + $0xc8] sm:$0xff] %vm5119, %v9351
        %9381 = vst.msk [vmem:[#allocation2 + $0xd0] sm:$0xff] %vm5119, %v9352
        %9382 = vst.msk [vmem:[#allocation2 + $0xd8] sm:$0xff] %vm5119, %v9353
        %vm9383 = vcmask 78848
        %9384 = vst.msk [vmem:[#allocation2 + $0xe0] sm:$0x3f] %vm9383, %v9354
        %v9385 = vld [vmem:[#allocation2] ss:$2 sm:$0xff]
        %v9386 = vld [vmem:[%s6710] ss:$2 sm:$0xff]
        %v9387 = vld [vmem:[%s6712] ss:$2 sm:$0xff]
        %v9388 = vld [vmem:[%s6714] ss:$2 sm:$0xff]
        %v9389 = vld [vmem:[%s6716] ss:$2 sm:$0xff]
        %v9390 = vld [vmem:[%s6718] ss:$2 sm:$0xff]
        %v9391 = vld [vmem:[%s6720] ss:$2 sm:$0xff]
        %v9392 = vld [vmem:[%s6722] ss:$2 sm:$0xff]
        %v9393 = vld [vmem:[%s6724] ss:$2 sm:$0xff]
        %v9394 = vld [vmem:[%s6726] ss:$2 sm:$0xff]
        %v9395 = vld [vmem:[%s6728] ss:$2 sm:$0xff]
        %v9396 = vld [vmem:[%s6730] ss:$2 sm:$0xff]
        %v9397 = vld [vmem:[%s6732] ss:$2 sm:$0xff]
        %v9398 = vld [vmem:[%s6734] ss:$2 sm:$0xff]
        %v9399 = vld [vmem:[%s6736] ss:$2 sm:$0x7]
        %v9400 = vld [vmem:[%s6770] ss:$2 sm:$0xff]
        %v9401 = vld [vmem:[%s6772] ss:$2 sm:$0xff]
        %v9402 = vld [vmem:[%s6774] ss:$2 sm:$0xff]
        %v9403 = vld [vmem:[%s6776] ss:$2 sm:$0xff]
        %v9404 = vld [vmem:[%s6778] ss:$2 sm:$0xff]
        %v9405 = vld [vmem:[%s6780] ss:$2 sm:$0xff]
        %v9406 = vld [vmem:[%s6782] ss:$2 sm:$0xff]
        %v9407 = vld [vmem:[%s6784] ss:$2 sm:$0xff]
        %v9408 = vld [vmem:[%s6786] ss:$2 sm:$0xff]
        %v9409 = vld [vmem:[%s6788] ss:$2 sm:$0xff]
        %v9410 = vld [vmem:[%s6790] ss:$2 sm:$0xff]
        %v9411 = vld [vmem:[%s6792] ss:$2 sm:$0xff]
        %v9412 = vld [vmem:[%s6794] ss:$2 sm:$0xff]
        %v9413 = vld [vmem:[%s6796] ss:$2 sm:$0xff]
        %v9414 = vld [vmem:[%s6798] ss:$2 sm:$0x7]
        %v9415 = vmax.f32 %v9385, %v9400
        %v9416 = vmax.f32 %v9386, %v9401
        %v9417 = vmax.f32 %v9387, %v9402
        %v9418 = vmax.f32 %v9388, %v9403
        %v9419 = vmax.f32 %v9389, %v9404
        %v9420 = vmax.f32 %v9390, %v9405
        %v9421 = vmax.f32 %v9391, %v9406
        %v9422 = vmax.f32 %v9392, %v9407
        %v9423 = vmax.f32 %v9393, %v9408
        %v9424 = vmax.f32 %v9394, %v9409
        %v9425 = vmax.f32 %v9395, %v9410
        %v9426 = vmax.f32 %v9396, %v9411
        %v9427 = vmax.f32 %v9397, %v9412
        %v9428 = vmax.f32 %v9398, %v9413
        %v9429 = vmax.f32 %v9399, %v9414
        %v9445 = vrot.slane %v9415, 1
        %v9446 = vrot.slane %v9416, 1
        %v9447 = vsel %vm933, %v9445, %v9446
        %v9448 = vrot.slane %v9417, 1
        %v9449 = vsel %vm933, %v9446, %v9448
        %v9450 = vrot.slane %v9418, 1
        %v9451 = vsel %vm933, %v9448, %v9450
        %v9452 = vrot.slane %v9419, 1
        %v9453 = vsel %vm933, %v9450, %v9452
        %v9454 = vrot.slane %v9420, 1
        %v9455 = vsel %vm933, %v9452, %v9454
        %v9456 = vrot.slane %v9421, 1
        %v9457 = vsel %vm933, %v9454, %v9456
        %v9458 = vrot.slane %v9422, 1
        %v9459 = vsel %vm933, %v9456, %v9458
        %v9460 = vrot.slane %v9423, 1
        %v9461 = vsel %vm933, %v9458, %v9460
        %v9462 = vrot.slane %v9424, 1
        %v9463 = vsel %vm933, %v9460, %v9462
        %v9464 = vrot.slane %v9425, 1
        %v9465 = vsel %vm933, %v9462, %v9464
        %v9466 = vrot.slane %v9426, 1
        %v9467 = vsel %vm933, %v9464, %v9466
        %v9468 = vrot.slane %v9427, 1
        %v9469 = vsel %vm933, %v9466, %v9468
        %v9470 = vrot.slane %v9428, 1
        %v9471 = vsel %vm933, %v9468, %v9470
        %v9472 = vrot.slane %v9429, 1
        %v9473 = vsel %vm933, %v9470, %v9472
        %9474 = vrot.lane.b32.xlu0 %v9447, 10
        %v9475 = vpop.permute.xlu0 %9474
        %9476 = vrot.lane.b32.xlu0 %v9449, 10
        %v9477 = vpop.permute.xlu0 %9476
        %9478 = vrot.lane.b32.xlu0 %v9451, 10
        %v9479 = vpop.permute.xlu0 %9478
        %9480 = vrot.lane.b32.xlu0 %v9453, 10
        %v9481 = vpop.permute.xlu0 %9480
        %9482 = vrot.lane.b32.xlu0 %v9455, 10
        %v9483 = vpop.permute.xlu0 %9482
        %9484 = vrot.lane.b32.xlu0 %v9457, 10
        %v9485 = vpop.permute.xlu0 %9484
        %9486 = vrot.lane.b32.xlu0 %v9459, 10
        %v9487 = vpop.permute.xlu0 %9486
        %9488 = vrot.lane.b32.xlu0 %v9461, 10
        %v9489 = vpop.permute.xlu0 %9488
        %9490 = vrot.lane.b32.xlu0 %v9463, 10
        %v9491 = vpop.permute.xlu0 %9490
        %9492 = vrot.lane.b32.xlu0 %v9465, 10
        %v9493 = vpop.permute.xlu0 %9492
        %9494 = vrot.lane.b32.xlu0 %v9467, 10
        %v9495 = vpop.permute.xlu0 %9494
        %9496 = vrot.lane.b32.xlu0 %v9469, 10
        %v9497 = vpop.permute.xlu0 %9496
        %9498 = vrot.lane.b32.xlu0 %v9471, 10
        %v9499 = vpop.permute.xlu0 %9498
        %9500 = vrot.lane.b32.xlu0 %v9473, 10
        %v9501 = vpop.permute.xlu0 %9500
        %v9516 = vrot.slane %v9415, 2
        %v9517 = vrot.slane %v9416, 2
        %v9518 = vsel %vm1240, %v9516, %v9517
        %v9519 = vrot.slane %v9417, 2
        %v9520 = vsel %vm1240, %v9517, %v9519
        %v9521 = vrot.slane %v9418, 2
        %v9522 = vsel %vm1240, %v9519, %v9521
        %v9523 = vrot.slane %v9419, 2
        %v9524 = vsel %vm1240, %v9521, %v9523
        %v9525 = vrot.slane %v9420, 2
        %v9526 = vsel %vm1240, %v9523, %v9525
        %v9527 = vrot.slane %v9421, 2
        %v9528 = vsel %vm1240, %v9525, %v9527
        %v9529 = vrot.slane %v9422, 2
        %v9530 = vsel %vm1240, %v9527, %v9529
        %v9531 = vrot.slane %v9423, 2
        %v9532 = vsel %vm1240, %v9529, %v9531
        %v9533 = vrot.slane %v9424, 2
        %v9534 = vsel %vm1240, %v9531, %v9533
        %v9535 = vrot.slane %v9425, 2
        %v9536 = vsel %vm1240, %v9533, %v9535
        %v9537 = vrot.slane %v9426, 2
        %v9538 = vsel %vm1240, %v9535, %v9537
        %v9539 = vrot.slane %v9427, 2
        %v9540 = vsel %vm1240, %v9537, %v9539
        %v9541 = vrot.slane %v9428, 2
        %v9542 = vsel %vm1240, %v9539, %v9541
        %v9543 = vrot.slane %v9429, 2
        %v9544 = vsel %vm1240, %v9541, %v9543
        %9545 = vrot.lane.b32.xlu0 %v9518, 20
        %v9546 = vpop.permute.xlu0 %9545
        %9547 = vrot.lane.b32.xlu0 %v9520, 20
        %v9548 = vpop.permute.xlu0 %9547
        %9549 = vrot.lane.b32.xlu0 %v9522, 20
        %v9550 = vpop.permute.xlu0 %9549
        %9551 = vrot.lane.b32.xlu0 %v9524, 20
        %v9552 = vpop.permute.xlu0 %9551
        %9553 = vrot.lane.b32.xlu0 %v9526, 20
        %v9554 = vpop.permute.xlu0 %9553
        %9555 = vrot.lane.b32.xlu0 %v9528, 20
        %v9556 = vpop.permute.xlu0 %9555
        %9557 = vrot.lane.b32.xlu0 %v9530, 20
        %v9558 = vpop.permute.xlu0 %9557
        %9559 = vrot.lane.b32.xlu0 %v9532, 20
        %v9560 = vpop.permute.xlu0 %9559
        %9561 = vrot.lane.b32.xlu0 %v9534, 20
        %v9562 = vpop.permute.xlu0 %9561
        %9563 = vrot.lane.b32.xlu0 %v9536, 20
        %v9564 = vpop.permute.xlu0 %9563
        %9565 = vrot.lane.b32.xlu0 %v9538, 20
        %v9566 = vpop.permute.xlu0 %9565
        %9567 = vrot.lane.b32.xlu0 %v9540, 20
        %v9568 = vpop.permute.xlu0 %9567
        %9569 = vrot.lane.b32.xlu0 %v9542, 20
        %v9570 = vpop.permute.xlu0 %9569
        %9571 = vrot.lane.b32.xlu0 %v9544, 20
        %v9572 = vpop.permute.xlu0 %9571
        %v9587 = vrot.slane %v9415, 3
        %v9588 = vrot.slane %v9416, 3
        %v9589 = vsel %vm1547, %v9587, %v9588
        %v9590 = vrot.slane %v9417, 3
        %v9591 = vsel %vm1547, %v9588, %v9590
        %v9592 = vrot.slane %v9418, 3
        %v9593 = vsel %vm1547, %v9590, %v9592
        %v9594 = vrot.slane %v9419, 3
        %v9595 = vsel %vm1547, %v9592, %v9594
        %v9596 = vrot.slane %v9420, 3
        %v9597 = vsel %vm1547, %v9594, %v9596
        %v9598 = vrot.slane %v9421, 3
        %v9599 = vsel %vm1547, %v9596, %v9598
        %v9600 = vrot.slane %v9422, 3
        %v9601 = vsel %vm1547, %v9598, %v9600
        %v9602 = vrot.slane %v9423, 3
        %v9603 = vsel %vm1547, %v9600, %v9602
        %v9604 = vrot.slane %v9424, 3
        %v9605 = vsel %vm1547, %v9602, %v9604
        %v9606 = vrot.slane %v9425, 3
        %v9607 = vsel %vm1547, %v9604, %v9606
        %v9608 = vrot.slane %v9426, 3
        %v9609 = vsel %vm1547, %v9606, %v9608
        %v9610 = vrot.slane %v9427, 3
        %v9611 = vsel %vm1547, %v9608, %v9610
        %v9612 = vrot.slane %v9428, 3
        %v9613 = vsel %vm1547, %v9610, %v9612
        %v9614 = vrot.slane %v9429, 3
        %v9615 = vsel %vm1547, %v9612, %v9614
        %9616 = vrot.lane.b32.xlu0 %v9589, 30
        %v9617 = vpop.permute.xlu0 %9616
        %9618 = vrot.lane.b32.xlu0 %v9591, 30
        %v9619 = vpop.permute.xlu0 %9618
        %9620 = vrot.lane.b32.xlu0 %v9593, 30
        %v9621 = vpop.permute.xlu0 %9620
        %9622 = vrot.lane.b32.xlu0 %v9595, 30
        %v9623 = vpop.permute.xlu0 %9622
        %9624 = vrot.lane.b32.xlu0 %v9597, 30
        %v9625 = vpop.permute.xlu0 %9624
        %9626 = vrot.lane.b32.xlu0 %v9599, 30
        %v9627 = vpop.permute.xlu0 %9626
        %9628 = vrot.lane.b32.xlu0 %v9601, 30
        %v9629 = vpop.permute.xlu0 %9628
        %9630 = vrot.lane.b32.xlu0 %v9603, 30
        %v9631 = vpop.permute.xlu0 %9630
        %9632 = vrot.lane.b32.xlu0 %v9605, 30
        %v9633 = vpop.permute.xlu0 %9632
        %9634 = vrot.lane.b32.xlu0 %v9607, 30
        %v9635 = vpop.permute.xlu0 %9634
        %9636 = vrot.lane.b32.xlu0 %v9609, 30
        %v9637 = vpop.permute.xlu0 %9636
        %9638 = vrot.lane.b32.xlu0 %v9611, 30
        %v9639 = vpop.permute.xlu0 %9638
        %9640 = vrot.lane.b32.xlu0 %v9613, 30
        %v9641 = vpop.permute.xlu0 %9640
        %9642 = vrot.lane.b32.xlu0 %v9615, 30
        %v9643 = vpop.permute.xlu0 %9642
        %v9658 = vsel %vm5119, %v9415, %v9475
        %v9659 = vsel %vm5119, %v9416, %v9477
        %v9660 = vsel %vm5119, %v9417, %v9479
        %v9661 = vsel %vm5119, %v9418, %v9481
        %v9662 = vsel %vm5119, %v9419, %v9483
        %v9663 = vsel %vm5119, %v9420, %v9485
        %v9664 = vsel %vm5119, %v9421, %v9487
        %v9665 = vsel %vm5119, %v9422, %v9489
        %v9666 = vsel %vm5119, %v9423, %v9491
        %v9667 = vsel %vm5119, %v9424, %v9493
        %v9668 = vsel %vm5119, %v9425, %v9495
        %v9669 = vsel %vm5119, %v9426, %v9497
        %v9670 = vsel %vm5119, %v9427, %v9499
        %v9671 = vsel %vm5119, %v9428, %v9501
        %v9672 = vsel %vm8620, %v9658, %v9546
        %v9673 = vsel %vm8620, %v9659, %v9548
        %v9674 = vsel %vm8620, %v9660, %v9550
        %v9675 = vsel %vm8620, %v9661, %v9552
        %v9676 = vsel %vm8620, %v9662, %v9554
        %v9677 = vsel %vm8620, %v9663, %v9556
        %v9678 = vsel %vm8620, %v9664, %v9558
        %v9679 = vsel %vm8620, %v9665, %v9560
        %v9680 = vsel %vm8620, %v9666, %v9562
        %v9681 = vsel %vm8620, %v9667, %v9564
        %v9682 = vsel %vm8620, %v9668, %v9566
        %v9683 = vsel %vm8620, %v9669, %v9568
        %v9684 = vsel %vm8620, %v9670, %v9570
        %v9685 = vsel %vm8620, %v9671, %v9572
        %v9686 = vsel %vm8680, %v9672, %v9617
        %v9687 = vsel %vm8680, %v9673, %v9619
        %v9688 = vsel %vm8680, %v9674, %v9621
        %v9689 = vsel %vm8680, %v9675, %v9623
        %v9690 = vsel %vm8680, %v9676, %v9625
        %v9691 = vsel %vm8680, %v9677, %v9627
        %v9692 = vsel %vm8680, %v9678, %v9629
        %v9693 = vsel %vm8680, %v9679, %v9631
        %v9694 = vsel %vm8680, %v9680, %v9633
        %v9695 = vsel %vm8680, %v9681, %v9635
        %v9696 = vsel %vm8680, %v9682, %v9637
        %v9697 = vsel %vm8680, %v9683, %v9639
        %v9698 = vsel %vm8680, %v9684, %v9641
        %v9699 = vsel %vm8680, %v9685, %v9643
        %v9700 = vld [vmem:[%s7] sm:$0xff]
        %v9701 = vld [vmem:[%s7 + $0x8] sm:$0xff]
        %v9702 = vld [vmem:[%s7 + $0x10] sm:$0xff]
        %v9703 = vld [vmem:[%s7 + $0x18] sm:$0xff]
        %v9704 = vld [vmem:[%s7 + $0x20] sm:$0xff]
        %v9705 = vld [vmem:[%s8] sm:$0x1]
        %v9707 = vlaneseq
        %v9708 = vshrl.u32 %v9707, 7
        %v9709 = vsub.s32 0, %v9708
        %v9710 = vrot.slane %v9705, %v9709
        %v9713 = vsel %vm8740, %v9686, 0
        %v9716 = vsel %vm8740, %v9687, 0
        %v9719 = vsel %vm8740, %v9688, 0
        %v9722 = vsel %vm8740, %v9689, 0
        %v9725 = vsel %vm8740, %v9690, 0
        %v9728 = vsel %vm8740, %v9691, 0
        %v9731 = vsel %vm8740, %v9692, 0
        %v9734 = vsel %vm8740, %v9693, 0
        %v9737 = vsel %vm8740, %v9694, 0
        %v9740 = vsel %vm8740, %v9695, 0
        %v9743 = vsel %vm8740, %v9696, 0
        %v9746 = vsel %vm8740, %v9697, 0
        %v9749 = vsel %vm8740, %v9698, 0
        %v9752 = vsel %vm8740, %v9699, 0
        %9754 = vmatprep.subr.mxu0 0.0
        %9755 = vmatpush1.msra.mxu0 %v9700
        %9756 = vmatprep.subr.mxu0 0.0
        %9757 = vmatpush1.msra.mxu0 %v9701
        %9758 = vmatprep.subr.mxu0 0.0
        %9759 = vmatpush1.msra.mxu0 %v9702
        %9760 = vmatprep.subr.mxu0 0.0
        %9761 = vmatpush1.msra.mxu0 %v9703
        %9762 = vmatprep.subr.mxu0 0.0
        %9763 = vmatpush1.msra.mxu0 %v9704
        %9764 = vmatprep.subr.mxu0 0.0
        %9765 = vmatpush1.msra.mxu0 0.0
        %9766 = vmatprep.subr.mxu0 0.0
        %9767 = vmatpush1.msra.mxu0 0.0
        %9768 = vmatprep.subr.mxu0 0.0
        %9769 = vmatpush1.msra.mxu0 0.0
        %9770 = vmatprep.subr.mxu0 0.0
        %9771 = vmatpush1.msra.mxu0 0.0
        %9772 = vmatprep.subr.mxu0 0.0
        %9773 = vmatpush1.msra.mxu0 0.0
        %9774 = vmatprep.subr.mxu0 0.0
        %9775 = vmatpush1.msra.mxu0 0.0
        %9776 = vmatprep.subr.mxu0 0.0
        %9777 = vmatpush1.msra.mxu0 0.0
        %9778 = vmatprep.subr.mxu0 0.0
        %9779 = vmatpush1.msra.mxu0 0.0
        %9780 = vmatprep.subr.mxu0 0.0
        %9781 = vmatpush1.msra.mxu0 0.0
        %9782 = vmatprep.subr.mxu0 0.0
        %9783 = vmatpush1.msra.mxu0 0.0
        %9784 = vmatprep.subr.mxu0 0.0
        %9785 = vmatpush1.msra.mxu0 0.0
        %9786 = vmatprep.subr.mxu0 0.0
        %9787 = vmatpush1.msra.mxu0 0.0
        %9788 = vmatprep.subr.mxu0 0.0
        %9789 = vmatpush1.msra.mxu0 0.0
        %9790 = vmatprep.subr.mxu0 0.0
        %9791 = vmatpush1.msra.mxu0 0.0
        %9792 = vmatprep.subr.mxu0 0.0
        %9793 = vmatpush1.msra.mxu0 0.0
        %9794 = vmatprep.subr.mxu0 0.0
        %9795 = vmatpush1.msra.mxu0 0.0
        %9796 = vmatprep.subr.mxu0 0.0
        %9797 = vmatpush1.msra.mxu0 0.0
        %9798 = vmatprep.subr.mxu0 0.0
        %9799 = vmatpush1.msra.mxu0 0.0
        %9800 = vmatprep.subr.mxu0 0.0
        %9801 = vmatpush1.msra.mxu0 0.0
        %9802 = vmatprep.subr.mxu0 0.0
        %9803 = vmatpush1.msra.mxu0 0.0
        %9804 = vmatprep.subr.mxu0 0.0
        %9805 = vmatpush1.msra.mxu0 0.0
        %9806 = vmatprep.subr.mxu0 0.0
        %9807 = vmatpush1.msra.mxu0 0.0
        %9808 = vmatprep.subr.mxu0 0.0
        %9809 = vmatpush1.msra.mxu0 0.0
        %9810 = vmatprep.subr.mxu0 0.0
        %9811 = vmatpush1.msra.mxu0 0.0
        %9812 = vmatprep.subr.mxu0 0.0
        %9813 = vmatpush1.msra.mxu0 0.0
        %9814 = vmatprep.subr.mxu0 0.0
        %9815 = vmatpush1.msra.mxu0 0.0
        %9816 = vmatprep.subr.mxu0 0.0
        %9817 = vmatpush1.msra.mxu0 0.0
        %9818 = vmatprep.mubr.f32.mxu0 0.0
        %9819 = vmatmul.mubr.f32.gmra.mrb[0].mxu0 %v9713
        %v9820 = vpop.f32.mrb[0].mxu0
        %v9821 = vadd.f32 %v9710, %v9820
        %v9822 = vpop.f32.mrb[0].mxu0
        %9823 = vmatprep.mubr.f32.mxu0 0.0
        %9824 = vmatmul.mubr.f32.gmra.mrb[0].mxu0 %v9716
        %v9825 = vpop.f32.mrb[0].mxu0
        %v9826 = vadd.f32 %v9710, %v9825
        %v9827 = vpop.f32.mrb[0].mxu0
        %9828 = vmatprep.mubr.f32.mxu0 0.0
        %9829 = vmatmul.mubr.f32.gmra.mrb[0].mxu0 %v9719
        %v9830 = vpop.f32.mrb[0].mxu0
        %v9831 = vadd.f32 %v9710, %v9830
        %v9832 = vpop.f32.mrb[0].mxu0
        %9833 = vmatprep.mubr.f32.mxu0 0.0
        %9834 = vmatmul.mubr.f32.gmra.mrb[0].mxu0 %v9722
        %v9835 = vpop.f32.mrb[0].mxu0
        %v9836 = vadd.f32 %v9710, %v9835
        %v9837 = vpop.f32.mrb[0].mxu0
        %9838 = vmatprep.mubr.f32.mxu0 0.0
        %9839 = vmatmul.mubr.f32.gmra.mrb[0].mxu0 %v9725
        %v9840 = vpop.f32.mrb[0].mxu0
        %v9841 = vadd.f32 %v9710, %v9840
        %v9842 = vpop.f32.mrb[0].mxu0
        %9843 = vmatprep.mubr.f32.mxu0 0.0
        %9844 = vmatmul.mubr.f32.gmra.mrb[0].mxu0 %v9728
        %v9845 = vpop.f32.mrb[0].mxu0
        %v9846 = vadd.f32 %v9710, %v9845
        %v9847 = vpop.f32.mrb[0].mxu0
        %9848 = vmatprep.mubr.f32.mxu0 0.0
        %9849 = vmatmul.mubr.f32.gmra.mrb[0].mxu0 %v9731
        %v9850 = vpop.f32.mrb[0].mxu0
        %v9851 = vadd.f32 %v9710, %v9850
        %v9852 = vpop.f32.mrb[0].mxu0
        %9853 = vmatprep.mubr.f32.mxu0 0.0
        %9854 = vmatmul.mubr.f32.gmra.mrb[0].mxu0 %v9734
        %v9855 = vpop.f32.mrb[0].mxu0
        %v9856 = vadd.f32 %v9710, %v9855
        %v9857 = vpop.f32.mrb[0].mxu0
        %9858 = vmatprep.mubr.f32.mxu0 0.0
        %9859 = vmatmul.mubr.f32.gmra.mrb[0].mxu0 %v9737
        %v9860 = vpop.f32.mrb[0].mxu0
        %v9861 = vadd.f32 %v9710, %v9860
        %v9862 = vpop.f32.mrb[0].mxu0
        %9863 = vmatprep.mubr.f32.mxu0 0.0
        %9864 = vmatmul.mubr.f32.gmra.mrb[0].mxu0 %v9740
        %v9865 = vpop.f32.mrb[0].mxu0
        %v9866 = vadd.f32 %v9710, %v9865
        %v9867 = vpop.f32.mrb[0].mxu0
        %9868 = vmatprep.mubr.f32.mxu0 0.0
        %9869 = vmatmul.mubr.f32.gmra.mrb[0].mxu0 %v9743
        %v9870 = vpop.f32.mrb[0].mxu0
        %v9871 = vadd.f32 %v9710, %v9870
        %v9872 = vpop.f32.mrb[0].mxu0
        %9873 = vmatprep.mubr.f32.mxu0 0.0
        %9874 = vmatmul.mubr.f32.gmra.mrb[0].mxu0 %v9746
        %v9875 = vpop.f32.mrb[0].mxu0
        %v9876 = vadd.f32 %v9710, %v9875
        %v9877 = vpop.f32.mrb[0].mxu0
        %9878 = vmatprep.mubr.f32.mxu0 0.0
        %9879 = vmatmul.mubr.f32.gmra.mrb[0].mxu0 %v9749
        %v9880 = vpop.f32.mrb[0].mxu0
        %v9881 = vadd.f32 %v9710, %v9880
        %v9882 = vpop.f32.mrb[0].mxu0
        %9883 = vmatprep.mubr.f32.mxu0 0.0
        %9884 = vmatmul.mubr.f32.gmra.mrb[0].mxu0 %v9752
        %v9885 = vpop.f32.mrb[0].mxu0
        %v9886 = vadd.f32 %v9710, %v9885
        %v9887 = vpop.f32.mrb[0].mxu0
        %9888 = vdwg.mxu0
        %vm9889 = vcmp.gt.f32.partialorder %v9821, 0.0
        %vm9890 = vcmp.gt.f32.partialorder %v9826, 0.0
        %vm9891 = vcmp.gt.f32.partialorder %v9831, 0.0
        %vm9892 = vcmp.gt.f32.partialorder %v9836, 0.0
        %vm9893 = vcmp.gt.f32.partialorder %v9841, 0.0
        %vm9894 = vcmp.gt.f32.partialorder %v9846, 0.0
        %vm9895 = vcmp.gt.f32.partialorder %v9851, 0.0
        %vm9896 = vcmp.gt.f32.partialorder %v9856, 0.0
        %vm9897 = vcmp.gt.f32.partialorder %v9861, 0.0
        %vm9898 = vcmp.gt.f32.partialorder %v9866, 0.0
        %vm9899 = vcmp.gt.f32.partialorder %v9871, 0.0
        %vm9900 = vcmp.gt.f32.partialorder %v9876, 0.0
        %vm9901 = vcmp.gt.f32.partialorder %v9881, 0.0
        %vm9902 = vcmp.gt.f32.partialorder %v9886, 0.0
        %v9903 = vmul.f32 %v9821, 0.01
        %v9904 = vmul.f32 %v9826, 0.01
        %v9905 = vmul.f32 %v9831, 0.01
        %v9906 = vmul.f32 %v9836, 0.01
        %v9907 = vmul.f32 %v9841, 0.01
        %v9908 = vmul.f32 %v9846, 0.01
        %v9909 = vmul.f32 %v9851, 0.01
        %v9910 = vmul.f32 %v9856, 0.01
        %v9911 = vmul.f32 %v9861, 0.01
        %v9912 = vmul.f32 %v9866, 0.01
        %v9913 = vmul.f32 %v9871, 0.01
        %v9914 = vmul.f32 %v9876, 0.01
        %v9915 = vmul.f32 %v9881, 0.01
        %v9916 = vmul.f32 %v9886, 0.01
        %v9917 = vsel %vm9889, %v9821, %v9903
        %v9918 = vsel %vm9890, %v9826, %v9904
        %v9919 = vsel %vm9891, %v9831, %v9905
        %v9920 = vsel %vm9892, %v9836, %v9906
        %v9921 = vsel %vm9893, %v9841, %v9907
        %v9922 = vsel %vm9894, %v9846, %v9908
        %v9923 = vsel %vm9895, %v9851, %v9909
        %v9924 = vsel %vm9896, %v9856, %v9910
        %v9925 = vsel %vm9897, %v9861, %v9911
        %v9926 = vsel %vm9898, %v9866, %v9912
        %v9927 = vsel %vm9899, %v9871, %v9913
        %v9928 = vsel %vm9900, %v9876, %v9914
        %v9929 = vsel %vm9901, %v9881, %v9915
        %v9930 = vsel %vm9902, %v9886, %v9916
        %9931 = vst.msk [vmem:[#allocation2] sm:$0xff] %vm5119, %v9917
        %9932 = vst.msk [vmem:[#allocation2 + $0x8] sm:$0xff] %vm5119, %v9918
        %9933 = vst.msk [vmem:[#allocation2 + $0x10] sm:$0xff] %vm5119, %v9919
        %9934 = vst.msk [vmem:[#allocation2 + $0x18] sm:$0xff] %vm5119, %v9920
        %9935 = vst.msk [vmem:[#allocation2 + $0x20] sm:$0xff] %vm5119, %v9921
        %9936 = vst.msk [vmem:[#allocation2 + $0x28] sm:$0xff] %vm5119, %v9922
        %9937 = vst.msk [vmem:[#allocation2 + $0x30] sm:$0xff] %vm5119, %v9923
        %9938 = vst.msk [vmem:[#allocation2 + $0x38] sm:$0xff] %vm5119, %v9924
        %9939 = vst.msk [vmem:[#allocation2 + $0x40] sm:$0xff] %vm5119, %v9925
        %9940 = vst.msk [vmem:[#allocation2 + $0x48] sm:$0xff] %vm5119, %v9926
        %9941 = vst.msk [vmem:[#allocation2 + $0x50] sm:$0xff] %vm5119, %v9927
        %9942 = vst.msk [vmem:[#allocation2 + $0x58] sm:$0xff] %vm5119, %v9928
        %9943 = vst.msk [vmem:[#allocation2 + $0x60] sm:$0xff] %vm5119, %v9929
        %9944 = vst.msk [vmem:[#allocation2 + $0x68] sm:$0xff] %vm5119, %v9930
        %v9945 = vld [vmem:[#allocation2] ss:$2 sm:$0xff]
        %v9946 = vld [vmem:[%s6710] ss:$2 sm:$0xff]
        %v9947 = vld [vmem:[%s6712] ss:$2 sm:$0xff]
        %v9948 = vld [vmem:[%s6714] ss:$2 sm:$0xff]
        %v9949 = vld [vmem:[%s6716] ss:$2 sm:$0xff]
        %v9950 = vld [vmem:[%s6718] ss:$2 sm:$0xff]
        %v9951 = vld [vmem:[%s6720] ss:$2 sm:$0xff]
        %v9952 = vld [vmem:[%s6770] ss:$2 sm:$0xff]
        %v9953 = vld [vmem:[%s6772] ss:$2 sm:$0xff]
        %v9954 = vld [vmem:[%s6774] ss:$2 sm:$0xff]
        %v9955 = vld [vmem:[%s6776] ss:$2 sm:$0xff]
        %v9956 = vld [vmem:[%s6778] ss:$2 sm:$0xff]
        %v9957 = vld [vmem:[%s6780] ss:$2 sm:$0xff]
        %v9958 = vld [vmem:[%s6782] ss:$2 sm:$0xff]
        %v9959 = vmax.f32 %v9945, %v9952
        %v9960 = vmax.f32 %v9946, %v9953
        %v9961 = vmax.f32 %v9947, %v9954
        %v9962 = vmax.f32 %v9948, %v9955
        %v9963 = vmax.f32 %v9949, %v9956
        %v9964 = vmax.f32 %v9950, %v9957
        %v9965 = vmax.f32 %v9951, %v9958
        %v9973 = vrot.slane %v9959, 1
        %v9974 = vrot.slane %v9960, 1
        %v9975 = vsel %vm933, %v9973, %v9974
        %v9976 = vrot.slane %v9961, 1
        %v9977 = vsel %vm933, %v9974, %v9976
        %v9978 = vrot.slane %v9962, 1
        %v9979 = vsel %vm933, %v9976, %v9978
        %v9980 = vrot.slane %v9963, 1
        %v9981 = vsel %vm933, %v9978, %v9980
        %v9982 = vrot.slane %v9964, 1
        %v9983 = vsel %vm933, %v9980, %v9982
        %v9984 = vrot.slane %v9965, 1
        %v9985 = vsel %vm933, %v9982, %v9984
        %9986 = vrot.lane.b32.xlu0 %v9975, 10
        %v9987 = vpop.permute.xlu0 %9986
        %9988 = vrot.lane.b32.xlu0 %v9977, 10
        %v9989 = vpop.permute.xlu0 %9988
        %9990 = vrot.lane.b32.xlu0 %v9979, 10
        %v9991 = vpop.permute.xlu0 %9990
        %9992 = vrot.lane.b32.xlu0 %v9981, 10
        %v9993 = vpop.permute.xlu0 %9992
        %9994 = vrot.lane.b32.xlu0 %v9983, 10
        %v9995 = vpop.permute.xlu0 %9994
        %9996 = vrot.lane.b32.xlu0 %v9985, 10
        %v9997 = vpop.permute.xlu0 %9996
        %9998 = vrot.lane.b32.xlu0 %v9984, 10
        %v9999 = vpop.permute.xlu0 %9998
        %v10007 = vrot.slane %v9959, 2
        %v10008 = vrot.slane %v9960, 2
        %v10009 = vsel %vm1240, %v10007, %v10008
        %v10010 = vrot.slane %v9961, 2
        %v10011 = vsel %vm1240, %v10008, %v10010
        %v10012 = vrot.slane %v9962, 2
        %v10013 = vsel %vm1240, %v10010, %v10012
        %v10014 = vrot.slane %v9963, 2
        %v10015 = vsel %vm1240, %v10012, %v10014
        %v10016 = vrot.slane %v9964, 2
        %v10017 = vsel %vm1240, %v10014, %v10016
        %v10018 = vrot.slane %v9965, 2
        %v10019 = vsel %vm1240, %v10016, %v10018
        %10020 = vrot.lane.b32.xlu0 %v10009, 20
        %v10021 = vpop.permute.xlu0 %10020
        %10022 = vrot.lane.b32.xlu0 %v10011, 20
        %v10023 = vpop.permute.xlu0 %10022
        %10024 = vrot.lane.b32.xlu0 %v10013, 20
        %v10025 = vpop.permute.xlu0 %10024
        %10026 = vrot.lane.b32.xlu0 %v10015, 20
        %v10027 = vpop.permute.xlu0 %10026
        %10028 = vrot.lane.b32.xlu0 %v10017, 20
        %v10029 = vpop.permute.xlu0 %10028
        %10030 = vrot.lane.b32.xlu0 %v10019, 20
        %v10031 = vpop.permute.xlu0 %10030
        %10032 = vrot.lane.b32.xlu0 %v10018, 20
        %v10033 = vpop.permute.xlu0 %10032
        %v10041 = vsel %vm5119, %v9959, %v9987
        %v10042 = vsel %vm5119, %v9960, %v9989
        %v10043 = vsel %vm5119, %v9961, %v9991
        %v10044 = vsel %vm5119, %v9962, %v9993
        %v10045 = vsel %vm5119, %v9963, %v9995
        %v10046 = vsel %vm5119, %v9964, %v9997
        %v10047 = vsel %vm5119, %v9965, %v9999
        %v10048 = vsel %vm8620, %v10041, %v10021
        %v10049 = vsel %vm8620, %v10042, %v10023
        %v10050 = vsel %vm8620, %v10043, %v10025
        %v10051 = vsel %vm8620, %v10044, %v10027
        %v10052 = vsel %vm8620, %v10045, %v10029
        %v10053 = vsel %vm8620, %v10046, %v10031
        %v10054 = vsel %vm8620, %v10047, %v10033
        %v10055 = vld [vmem:[%s9] sm:$0xff]
        %v10056 = vld [vmem:[%s9 + $0x8] sm:$0xff]
        %v10057 = vld [vmem:[%s9 + $0x10] sm:$0xff]
        %v10058 = vld [vmem:[%s9 + $0x18] sm:$0x3f]
        %v10059 = vld [vmem:[%s10] sm:$0x1]
        %v10061 = vlaneseq
        %v10062 = vshrl.u32 %v10061, 7
        %v10063 = vsub.s32 0, %v10062
        %v10064 = vrot.slane %v10059, %v10063
        %v10067 = vsel %vm8680, %v10048, 0
        %v10070 = vsel %vm8680, %v10049, 0
        %v10073 = vsel %vm8680, %v10050, 0
        %v10076 = vsel %vm8680, %v10051, 0
        %v10079 = vsel %vm8680, %v10052, 0
        %v10082 = vsel %vm8680, %v10053, 0
        %v10085 = vsel %vm8680, %v10054, 0
        %v10088 = vsel %vm1240, %v10058, 0
        %10090 = vmatprep.subr.mxu0 0.0
        %10091 = vmatpush1.msra.mxu0 %v10055
        %10092 = vmatprep.subr.mxu0 0.0
        %10093 = vmatpush1.msra.mxu0 %v10056
        %10094 = vmatprep.subr.mxu0 0.0
        %10095 = vmatpush1.msra.mxu0 %v10057
        %10096 = vmatprep.subr.mxu0 0.0
        %10097 = vmatpush1.msra.mxu0 %v10088
        %10098 = vmatprep.subr.mxu0 0.0
        %10099 = vmatpush1.msra.mxu0 0.0
        %10100 = vmatprep.subr.mxu0 0.0
        %10101 = vmatpush1.msra.mxu0 0.0
        %10102 = vmatprep.subr.mxu0 0.0
        %10103 = vmatpush1.msra.mxu0 0.0
        %10104 = vmatprep.subr.mxu0 0.0
        %10105 = vmatpush1.msra.mxu0 0.0
        %10106 = vmatprep.subr.mxu0 0.0
        %10107 = vmatpush1.msra.mxu0 0.0
        %10108 = vmatprep.subr.mxu0 0.0
        %10109 = vmatpush1.msra.mxu0 0.0
        %10110 = vmatprep.subr.mxu0 0.0
        %10111 = vmatpush1.msra.mxu0 0.0
        %10112 = vmatprep.subr.mxu0 0.0
        %10113 = vmatpush1.msra.mxu0 0.0
        %10114 = vmatprep.subr.mxu0 0.0
        %10115 = vmatpush1.msra.mxu0 0.0
        %10116 = vmatprep.subr.mxu0 0.0
        %10117 = vmatpush1.msra.mxu0 0.0
        %10118 = vmatprep.subr.mxu0 0.0
        %10119 = vmatpush1.msra.mxu0 0.0
        %10120 = vmatprep.subr.mxu0 0.0
        %10121 = vmatpush1.msra.mxu0 0.0
        %10122 = vmatprep.subr.mxu0 0.0
        %10123 = vmatpush1.msra.mxu0 0.0
        %10124 = vmatprep.subr.mxu0 0.0
        %10125 = vmatpush1.msra.mxu0 0.0
        %10126 = vmatprep.subr.mxu0 0.0
        %10127 = vmatpush1.msra.mxu0 0.0
        %10128 = vmatprep.subr.mxu0 0.0
        %10129 = vmatpush1.msra.mxu0 0.0
        %10130 = vmatprep.subr.mxu0 0.0
        %10131 = vmatpush1.msra.mxu0 0.0
        %10132 = vmatprep.subr.mxu0 0.0
        %10133 = vmatpush1.msra.mxu0 0.0
        %10134 = vmatprep.subr.mxu0 0.0
        %10135 = vmatpush1.msra.mxu0 0.0
        %10136 = vmatprep.subr.mxu0 0.0
        %10137 = vmatpush1.msra.mxu0 0.0
        %10138 = vmatprep.subr.mxu0 0.0
        %10139 = vmatpush1.msra.mxu0 0.0
        %10140 = vmatprep.subr.mxu0 0.0
        %10141 = vmatpush1.msra.mxu0 0.0
        %10142 = vmatprep.subr.mxu0 0.0
        %10143 = vmatpush1.msra.mxu0 0.0
        %10144 = vmatprep.subr.mxu0 0.0
        %10145 = vmatpush1.msra.mxu0 0.0
        %10146 = vmatprep.subr.mxu0 0.0
        %10147 = vmatpush1.msra.mxu0 0.0
        %10148 = vmatprep.subr.mxu0 0.0
        %10149 = vmatpush1.msra.mxu0 0.0
        %10150 = vmatprep.subr.mxu0 0.0
        %10151 = vmatpush1.msra.mxu0 0.0
        %10152 = vmatprep.subr.mxu0 0.0
        %10153 = vmatpush1.msra.mxu0 0.0
        %10154 = vmatprep.mubr.f32.mxu0 0.0
        %10155 = vmatmul.mubr.f32.gmra.mrb[0].mxu0 %v10067
        %v10156 = vpop.f32.mrb[0].mxu0
        %v10157 = vadd.f32 %v10064, %v10156
        %v10158 = vpop.f32.mrb[0].mxu0
        %10159 = vmatprep.mubr.f32.mxu0 0.0
        %10160 = vmatmul.mubr.f32.gmra.mrb[0].mxu0 %v10070
        %v10161 = vpop.f32.mrb[0].mxu0
        %v10162 = vadd.f32 %v10064, %v10161
        %v10163 = vpop.f32.mrb[0].mxu0
        %10164 = vmatprep.mubr.f32.mxu0 0.0
        %10165 = vmatmul.mubr.f32.gmra.mrb[0].mxu0 %v10073
        %v10166 = vpop.f32.mrb[0].mxu0
        %v10167 = vadd.f32 %v10064, %v10166
        %v10168 = vpop.f32.mrb[0].mxu0
        %10169 = vmatprep.mubr.f32.mxu0 0.0
        %10170 = vmatmul.mubr.f32.gmra.mrb[0].mxu0 %v10076
        %v10171 = vpop.f32.mrb[0].mxu0
        %v10172 = vadd.f32 %v10064, %v10171
        %v10173 = vpop.f32.mrb[0].mxu0
        %10174 = vmatprep.mubr.f32.mxu0 0.0
        %10175 = vmatmul.mubr.f32.gmra.mrb[0].mxu0 %v10079
        %v10176 = vpop.f32.mrb[0].mxu0
        %v10177 = vadd.f32 %v10064, %v10176
        %v10178 = vpop.f32.mrb[0].mxu0
        %10179 = vmatprep.mubr.f32.mxu0 0.0
        %10180 = vmatmul.mubr.f32.gmra.mrb[0].mxu0 %v10082
        %v10181 = vpop.f32.mrb[0].mxu0
        %v10182 = vadd.f32 %v10064, %v10181
        %v10183 = vpop.f32.mrb[0].mxu0
        %10184 = vmatprep.mubr.f32.mxu0 0.0
        %10185 = vmatmul.mubr.f32.gmra.mrb[0].mxu0 %v10085
        %v10186 = vpop.f32.mrb[0].mxu0
        %v10187 = vadd.f32 %v10064, %v10186
        %v10188 = vpop.f32.mrb[0].mxu0
        %10189 = vdwg.mxu0
        %vm10190 = vcmp.gt.f32.partialorder %v10157, 0.0
        %vm10191 = vcmp.gt.f32.partialorder %v10162, 0.0
        %vm10192 = vcmp.gt.f32.partialorder %v10167, 0.0
        %vm10193 = vcmp.gt.f32.partialorder %v10172, 0.0
        %vm10194 = vcmp.gt.f32.partialorder %v10177, 0.0
        %vm10195 = vcmp.gt.f32.partialorder %v10182, 0.0
        %vm10196 = vcmp.gt.f32.partialorder %v10187, 0.0
        %v10197 = vmul.f32 %v10157, 0.01
        %v10198 = vmul.f32 %v10162, 0.01
        %v10199 = vmul.f32 %v10167, 0.01
        %v10200 = vmul.f32 %v10172, 0.01
        %v10201 = vmul.f32 %v10177, 0.01
        %v10202 = vmul.f32 %v10182, 0.01
        %v10203 = vmul.f32 %v10187, 0.01
        %v10204 = vsel %vm10190, %v10157, %v10197
        %v10205 = vsel %vm10191, %v10162, %v10198
        %v10206 = vsel %vm10192, %v10167, %v10199
        %v10207 = vsel %vm10193, %v10172, %v10200
        %v10208 = vsel %vm10194, %v10177, %v10201
        %v10209 = vsel %vm10195, %v10182, %v10202
        %v10210 = vsel %vm10196, %v10187, %v10203
        %10211 = vst.msk [vmem:[#allocation2] sm:$0xff] %vm5119, %v10204
        %10212 = vst.msk [vmem:[#allocation2 + $0x8] sm:$0xff] %vm5119, %v10205
        %10213 = vst.msk [vmem:[#allocation2 + $0x10] sm:$0xff] %vm5119, %v10206
        %10214 = vst.msk [vmem:[#allocation2 + $0x18] sm:$0xff] %vm5119, %v10207
        %10215 = vst.msk [vmem:[#allocation2 + $0x20] sm:$0xff] %vm5119, %v10208
        %10216 = vst.msk [vmem:[#allocation2 + $0x28] sm:$0xff] %vm5119, %v10209
        %10217 = vst.msk [vmem:[#allocation2 + $0x30] sm:$0x3f] %vm9383, %v10210
        %v10218 = vld [vmem:[#allocation2] ss:$2 sm:$0xff]
        %v10219 = vld [vmem:[%s6710] ss:$2 sm:$0xff]
        %v10220 = vld [vmem:[%s6712] ss:$2 sm:$0xff]
        %v10221 = vld [vmem:[%s6714] ss:$2 sm:$0x7]
        %v10222 = vld [vmem:[%s6770] ss:$2 sm:$0xff]
        %v10223 = vld [vmem:[%s6772] ss:$2 sm:$0xff]
        %v10224 = vld [vmem:[%s6774] ss:$2 sm:$0xff]
        %v10225 = vld [vmem:[%s6776] ss:$2 sm:$0x7]
        %v10226 = vmax.f32 %v10218, %v10222
        %v10227 = vmax.f32 %v10219, %v10223
        %v10228 = vmax.f32 %v10220, %v10224
        %v10229 = vmax.f32 %v10221, %v10225
        %v10231 = vrot.slane %v10226, 1
        %10232 = vrot.lane.b32.xlu0 %v10231, 10
        %v10233 = vpop.permute.xlu0 %10232
        %v10235 = vrot.slane %v10226, 2
        %10236 = vrot.lane.b32.xlu0 %v10235, 20
        %v10237 = vpop.permute.xlu0 %10236
        %v10239 = vrot.slane %v10226, 3
        %10240 = vrot.lane.b32.xlu0 %v10239, 30
        %v10241 = vpop.permute.xlu0 %10240
        %v10243 = vrot.slane %v10226, 4
        %10244 = vrot.lane.b32.xlu0 %v10243, 40
        %v10245 = vpop.permute.xlu0 %10244
        %v10247 = vrot.slane %v10226, 5
        %10248 = vrot.lane.b32.xlu0 %v10247, 50
        %v10249 = vpop.permute.xlu0 %10248
        %v10251 = vrot.slane %v10226, 6
        %10252 = vrot.lane.b32.xlu0 %v10251, 60
        %v10253 = vpop.permute.xlu0 %10252
        %v10255 = vrot.slane %v10226, 7
        %10256 = vrot.lane.b32.xlu0 %v10255, 70
        %v10257 = vpop.permute.xlu0 %10256
        %10260 = vrot.lane.b32.xlu0 %v10227, 80
        %v10261 = vpop.permute.xlu0 %10260
        %v10263 = vrot.slane %v10227, 1
        %10264 = vrot.lane.b32.xlu0 %v10263, 90
        %v10265 = vpop.permute.xlu0 %10264
        %v10267 = vrot.slane %v10227, 2
        %10268 = vrot.lane.b32.xlu0 %v10267, 100
        %v10269 = vpop.permute.xlu0 %10268
        %v10271 = vrot.slane %v10227, 3
        %10272 = vrot.lane.b32.xlu0 %v10271, 110
        %v10273 = vpop.permute.xlu0 %10272
        %v10275 = vrot.slane %v10227, 4
        %10276 = vrot.lane.b32.xlu0 %v10275, 120
        %v10277 = vpop.permute.xlu0 %10276
        %v10279 = vrot.slane %v10227, 5
        %10280 = vrot.lane.b32.xlu0 %v10279, 2
        %v10281 = vpop.permute.xlu0 %10280
        %v10283 = vrot.slane %v10227, 6
        %10284 = vrot.lane.b32.xlu0 %v10283, 12
        %v10285 = vpop.permute.xlu0 %10284
        %v10287 = vrot.slane %v10227, 7
        %10288 = vrot.lane.b32.xlu0 %v10287, 22
        %v10289 = vpop.permute.xlu0 %10288
        %v10291 = vsel %vm5119, %v10226, %v10233
        %v10292 = vsel %vm8620, %v10291, %v10237
        %v10293 = vsel %vm8680, %v10292, %v10241
        %v10294 = vsel %vm8740, %v10293, %v10245
        %v10295 = vsel %vm8800, %v10294, %v10249
        %v10296 = vsel %vm8860, %v10295, %v10253
        %v10297 = vsel %vm8920, %v10296, %v10257
        %vm10298 = vcmask 654336
        %v10299 = vsel %vm10298, %v10297, %v10261
        %vm10300 = vcmask 736256
        %v10301 = vsel %vm10300, %v10299, %v10265
        %vm10302 = vcmask 818176
        %v10303 = vsel %vm10302, %v10301, %v10269
        %vm10304 = vcmask 900096
        %v10305 = vsel %vm10304, %v10303, %v10273
        %vm10306 = vcmask 982016
        %v10307 = vsel %vm10306, %v10305, %v10277
        %v10308 = vsel %vm4623, %v10277, %v10281
        %v10309 = vsel %vm5243, %v10308, %v10285
        %vm10310 = vcmask 179200
        %v10311 = vsel %vm10310, %v10309, %v10289
        %v10313 = vrot.slane %v10228, 1
        %10314 = vrot.lane.b32.xlu0 %v10313, 10
        %v10315 = vpop.permute.xlu0 %10314
        %v10317 = vrot.slane %v10228, 2
        %10318 = vrot.lane.b32.xlu0 %v10317, 20
        %v10319 = vpop.permute.xlu0 %10318
        %v10321 = vrot.slane %v10228, 3
        %10322 = vrot.lane.b32.xlu0 %v10321, 30
        %v10323 = vpop.permute.xlu0 %10322
        %v10325 = vrot.slane %v10228, 4
        %10326 = vrot.lane.b32.xlu0 %v10325, 40
        %v10327 = vpop.permute.xlu0 %10326
        %v10329 = vrot.slane %v10228, 5
        %10330 = vrot.lane.b32.xlu0 %v10329, 50
        %v10331 = vpop.permute.xlu0 %10330
        %v10333 = vrot.slane %v10228, 6
        %10334 = vrot.lane.b32.xlu0 %v10333, 60
        %v10335 = vpop.permute.xlu0 %10334
        %v10337 = vrot.slane %v10228, 7
        %10338 = vrot.lane.b32.xlu0 %v10337, 70
        %v10339 = vpop.permute.xlu0 %10338
        %10342 = vrot.lane.b32.xlu0 %v10229, 80
        %v10343 = vpop.permute.xlu0 %10342
        %v10345 = vrot.slane %v10229, 1
        %10346 = vrot.lane.b32.xlu0 %v10345, 90
        %v10347 = vpop.permute.xlu0 %10346
        %v10349 = vrot.slane %v10229, 2
        %10350 = vrot.lane.b32.xlu0 %v10349, 100
        %v10351 = vpop.permute.xlu0 %10350
        %v10353 = vsel %vm5119, %v10228, %v10315
        %v10354 = vsel %vm8620, %v10353, %v10319
        %v10355 = vsel %vm8680, %v10354, %v10323
        %v10356 = vsel %vm8740, %v10355, %v10327
        %v10357 = vsel %vm8800, %v10356, %v10331
        %v10358 = vsel %vm8860, %v10357, %v10335
        %v10359 = vsel %vm8920, %v10358, %v10339
        %v10360 = vsel %vm10298, %v10359, %v10343
        %v10361 = vsel %vm10300, %v10360, %v10347
        %v10362 = vsel %vm10302, %v10361, %v10351
        %10364 = vrot.lane.b32.xlu0 %v10362, 32
        %v10365 = vpop.permute.xlu0 %10364
        %vm10367 = vcmask 261120
        %v10368 = vsel %vm10367, %v10311, %v10365
        %v10369 = vld [vmem:[%s11] sm:$0xff]
        %v10370 = vld [vmem:[%s11 + $0x8] sm:$0xff]
        %v10371 = vld [vmem:[%s11 + $0x10] sm:$0xff]
        %v10372 = vld [vmem:[%s11 + $0x18] sm:$0xff]
        %v10373 = vld [vmem:[%s11 + $0x20] sm:$0xff]
        %v10374 = vld [vmem:[%s11 + $0x28] sm:$0xff]
        %v10375 = vld [vmem:[%s11 + $0x30] sm:$0xff]
        %v10376 = vld [vmem:[%s11 + $0x38] sm:$0xff]
        %v10377 = vld [vmem:[%s11 + $0x40] sm:$0xff]
        %v10378 = vld [vmem:[%s11 + $0x48] sm:$0xff]
        %v10379 = vld [vmem:[%s11 + $0x50] sm:$0xff]
        %v10380 = vld [vmem:[%s11 + $0x58] sm:$0xff]
        %v10381 = vld [vmem:[%s11 + $0x60] sm:$0xff]
        %v10382 = vld [vmem:[%s11 + $0x68] sm:$0xff]
        %v10383 = vld [vmem:[%s11 + $0x70] sm:$0xff]
        %v10384 = vld [vmem:[%s11 + $0x78] sm:$0xff]
        %v10385 = vld [vmem:[%s11 + $0x80] sm:$0xff]
        %v10386 = vld [vmem:[%s11 + $0x88] sm:$0xff]
        %v10387 = vld [vmem:[%s11 + $0x90] sm:$0xff]
        %v10388 = vld [vmem:[%s11 + $0x98] sm:$0xff]
        %v10389 = vld [vmem:[%s11 + $0xa0] sm:$0xff]
        %v10390 = vld [vmem:[%s11 + $0xa8] sm:$0xff]
        %v10391 = vld [vmem:[%s11 + $0xb0] sm:$0xff]
        %v10392 = vld [vmem:[%s11 + $0xb8] sm:$0xff]
        %v10393 = vld [vmem:[%s11 + $0xc0] sm:$0xff]
        %v10394 = vld [vmem:[%s11 + $0xc8] sm:$0xff]
        %v10395 = vld [vmem:[%s11 + $0xd0] sm:$0xff]
        %v10396 = vld [vmem:[%s11 + $0xd8] sm:$0xff]
        %v10397 = vld [vmem:[%s11 + $0xe0] sm:$0xff]
        %v10398 = vld [vmem:[%s11 + $0xe8] sm:$0xff]
        %v10399 = vld [vmem:[%s11 + $0xf0] sm:$0xff]
        %v10400 = vld [vmem:[%s11 + $0xf8] sm:$0xff]
        %v10401 = vld [vmem:[%s11 + $0x100] sm:$0xff]
        %v10402 = vld [vmem:[%s11 + $0x108] sm:$0x3f]
        %v10403 = vld [vmem:[%s12] sm:$0x1]
        %v10404 = vsel %vm5367, %v10365, 0
        %v10407 = vsel %vm1240, %v10402, 0
        %10409 = vmatprep.subr.mxu0 0.0
        %10410 = vmatpush1.msra.mxu0 %v10369
        %10411 = vmatprep.subr.mxu0 0.0
        %10412 = vmatpush1.msra.mxu0 %v10370
        %10413 = vmatprep.subr.mxu0 0.0
        %10414 = vmatpush1.msra.mxu0 %v10371
        %10415 = vmatprep.subr.mxu0 0.0
        %10416 = vmatpush1.msra.mxu0 %v10372
        %10417 = vmatprep.subr.mxu0 0.0
        %10418 = vmatpush1.msra.mxu0 %v10373
        %10419 = vmatprep.subr.mxu0 0.0
        %10420 = vmatpush1.msra.mxu0 %v10374
        %10421 = vmatprep.subr.mxu0 0.0
        %10422 = vmatpush1.msra.mxu0 %v10375
        %10423 = vmatprep.subr.mxu0 0.0
        %10424 = vmatpush1.msra.mxu0 %v10376
        %10425 = vmatprep.subr.mxu0 0.0
        %10426 = vmatpush1.msra.mxu0 %v10377
        %10427 = vmatprep.subr.mxu0 0.0
        %10428 = vmatpush1.msra.mxu0 %v10378
        %10429 = vmatprep.subr.mxu0 0.0
        %10430 = vmatpush1.msra.mxu0 %v10379
        %10431 = vmatprep.subr.mxu0 0.0
        %10432 = vmatpush1.msra.mxu0 %v10380
        %10433 = vmatprep.subr.mxu0 0.0
        %10434 = vmatpush1.msra.mxu0 %v10381
        %10435 = vmatprep.subr.mxu0 0.0
        %10436 = vmatpush1.msra.mxu0 %v10382
        %10437 = vmatprep.subr.mxu0 0.0
        %10438 = vmatpush1.msra.mxu0 %v10383
        %10439 = vmatprep.subr.mxu0 0.0
        %10440 = vmatpush1.msra.mxu0 %v10384
        %10441 = vmatprep.subr.mxu0 0.0
        %10442 = vmatpush1.msra.mxu0 %v10385
        %10443 = vmatprep.subr.mxu0 0.0
        %10444 = vmatpush1.msra.mxu0 %v10386
        %10445 = vmatprep.subr.mxu0 0.0
        %10446 = vmatpush1.msra.mxu0 %v10387
        %10447 = vmatprep.subr.mxu0 0.0
        %10448 = vmatpush1.msra.mxu0 %v10388
        %10449 = vmatprep.subr.mxu0 0.0
        %10450 = vmatpush1.msra.mxu0 %v10389
        %10451 = vmatprep.subr.mxu0 0.0
        %10452 = vmatpush1.msra.mxu0 %v10390
        %10453 = vmatprep.subr.mxu0 0.0
        %10454 = vmatpush1.msra.mxu0 %v10391
        %10455 = vmatprep.subr.mxu0 0.0
        %10456 = vmatpush1.msra.mxu0 %v10392
        %10457 = vmatprep.subr.mxu0 0.0
        %10458 = vmatpush1.msra.mxu0 %v10393
        %10459 = vmatprep.subr.mxu0 0.0
        %10460 = vmatpush1.msra.mxu0 %v10394
        %10461 = vmatprep.subr.mxu0 0.0
        %10462 = vmatpush1.msra.mxu0 %v10395
        %10463 = vmatprep.subr.mxu0 0.0
        %10464 = vmatpush1.msra.mxu0 %v10396
        %10465 = vmatprep.subr.mxu0 0.0
        %10466 = vmatpush1.msra.mxu0 %v10397
        %10467 = vmatprep.subr.mxu0 0.0
        %10468 = vmatpush1.msra.mxu0 %v10398
        %10469 = vmatprep.subr.mxu0 0.0
        %10470 = vmatpush1.msra.mxu0 %v10399
        %10471 = vmatprep.subr.mxu0 0.0
        %10472 = vmatpush1.msra.mxu0 %v10400
        %10473 = vmatprep.mubr.f32.mxu0 %v10368
        %10474 = vmatmul.mubr.f32.gmra.mrb[0].mxu0 %v10307
        %v10475 = vpop.f32.mrb[0].mxu0
        %v10476 = vadd.f32 %v10403, %v10475
        %v10477 = vpop.f32.mrb[0].mxu0
        %10478 = vdwg.mxu0
        %10479 = vmatprep.subr.mxu0 0.0
        %10480 = vmatpush1.msra.mxu0 %v10401
        %10481 = vmatprep.subr.mxu0 0.0
        %10482 = vmatpush1.msra.mxu0 %v10407
        %10483 = vmatprep.subr.mxu0 0.0
        %10484 = vmatpush1.msra.mxu0 0.0
        %10485 = vmatprep.subr.mxu0 0.0
        %10486 = vmatpush1.msra.mxu0 0.0
        %10487 = vmatprep.subr.mxu0 0.0
        %10488 = vmatpush1.msra.mxu0 0.0
        %10489 = vmatprep.subr.mxu0 0.0
        %10490 = vmatpush1.msra.mxu0 0.0
        %10491 = vmatprep.subr.mxu0 0.0
        %10492 = vmatpush1.msra.mxu0 0.0
        %10493 = vmatprep.subr.mxu0 0.0
        %10494 = vmatpush1.msra.mxu0 0.0
        %10495 = vmatprep.subr.mxu0 0.0
        %10496 = vmatpush1.msra.mxu0 0.0
        %10497 = vmatprep.subr.mxu0 0.0
        %10498 = vmatpush1.msra.mxu0 0.0
        %10499 = vmatprep.subr.mxu0 0.0
        %10500 = vmatpush1.msra.mxu0 0.0
        %10501 = vmatprep.subr.mxu0 0.0
        %10502 = vmatpush1.msra.mxu0 0.0
        %10503 = vmatprep.subr.mxu0 0.0
        %10504 = vmatpush1.msra.mxu0 0.0
        %10505 = vmatprep.subr.mxu0 0.0
        %10506 = vmatpush1.msra.mxu0 0.0
        %10507 = vmatprep.subr.mxu0 0.0
        %10508 = vmatpush1.msra.mxu0 0.0
        %10509 = vmatprep.subr.mxu0 0.0
        %10510 = vmatpush1.msra.mxu0 0.0
        %10511 = vmatprep.subr.mxu0 0.0
        %10512 = vmatpush1.msra.mxu0 0.0
        %10513 = vmatprep.subr.mxu0 0.0
        %10514 = vmatpush1.msra.mxu0 0.0
        %10515 = vmatprep.subr.mxu0 0.0
        %10516 = vmatpush1.msra.mxu0 0.0
        %10517 = vmatprep.subr.mxu0 0.0
        %10518 = vmatpush1.msra.mxu0 0.0
        %10519 = vmatprep.subr.mxu0 0.0
        %10520 = vmatpush1.msra.mxu0 0.0
        %10521 = vmatprep.subr.mxu0 0.0
        %10522 = vmatpush1.msra.mxu0 0.0
        %10523 = vmatprep.subr.mxu0 0.0
        %10524 = vmatpush1.msra.mxu0 0.0
        %10525 = vmatprep.subr.mxu0 0.0
        %10526 = vmatpush1.msra.mxu0 0.0
        %10527 = vmatprep.subr.mxu0 0.0
        %10528 = vmatpush1.msra.mxu0 0.0
        %10529 = vmatprep.subr.mxu0 0.0
        %10530 = vmatpush1.msra.mxu0 0.0
        %10531 = vmatprep.subr.mxu0 0.0
        %10532 = vmatpush1.msra.mxu0 0.0
        %10533 = vmatprep.subr.mxu0 0.0
        %10534 = vmatpush1.msra.mxu0 0.0
        %10535 = vmatprep.subr.mxu0 0.0
        %10536 = vmatpush1.msra.mxu0 0.0
        %10537 = vmatprep.subr.mxu0 0.0
        %10538 = vmatpush1.msra.mxu0 0.0
        %10539 = vmatprep.subr.mxu0 0.0
        %10540 = vmatpush1.msra.mxu0 0.0
        %10541 = vmatprep.subr.mxu0 0.0
        %10542 = vmatpush1.msra.mxu0 0.0
        %10543 = vmatprep.mubr.f32.mxu0 0.0
        %10544 = vmatmul.mubr.f32.gmra.mrb[0].mxu0 %v10404
        %v10545 = vpop.f32.mrb[0].mxu0
        %v10546 = vadd.f32 %v10476, %v10545
        %v10547 = vpop.f32.mrb[0].mxu0
        %10548 = vdwg.mxu0
        %vm10549 = vcmp.gt.f32.partialorder %v10546, 0.0
        %v10550 = vmul.f32 %v10546, 0.01
        %v10551 = vsel %vm10549, %v10546, %v10550
        %v10552 = vld [vmem:[%s13] sm:$0xff]
        %v10553 = vld [vmem:[%s13 + $0x8] sm:$0xff]
        %v10554 = vld [vmem:[%s13 + $0x10] sm:$0xff]
        %v10555 = vld [vmem:[%s13 + $0x18] sm:$0x3f]
        %v10556 = vld [vmem:[%s14] sm:$0x1]
        %v10558 = vsel %vm8680, %v10551, 0
        %v10561 = vsel %vm1240, %v10555, 0
        %10563 = vmatprep.subr.mxu0 0.0
        %10564 = vmatpush1.msra.mxu0 %v10552
        %10565 = vmatprep.subr.mxu0 0.0
        %10566 = vmatpush1.msra.mxu0 %v10553
        %10567 = vmatprep.subr.mxu0 0.0
        %10568 = vmatpush1.msra.mxu0 %v10554
        %10569 = vmatprep.subr.mxu0 0.0
        %10570 = vmatpush1.msra.mxu0 %v10561
        %10571 = vmatprep.subr.mxu0 0.0
        %10572 = vmatpush1.msra.mxu0 0.0
        %10573 = vmatprep.subr.mxu0 0.0
        %10574 = vmatpush1.msra.mxu0 0.0
        %10575 = vmatprep.subr.mxu0 0.0
        %10576 = vmatpush1.msra.mxu0 0.0
        %10577 = vmatprep.subr.mxu0 0.0
        %10578 = vmatpush1.msra.mxu0 0.0
        %10579 = vmatprep.subr.mxu0 0.0
        %10580 = vmatpush1.msra.mxu0 0.0
        %10581 = vmatprep.subr.mxu0 0.0
        %10582 = vmatpush1.msra.mxu0 0.0
        %10583 = vmatprep.subr.mxu0 0.0
        %10584 = vmatpush1.msra.mxu0 0.0
        %10585 = vmatprep.subr.mxu0 0.0
        %10586 = vmatpush1.msra.mxu0 0.0
        %10587 = vmatprep.subr.mxu0 0.0
        %10588 = vmatpush1.msra.mxu0 0.0
        %10589 = vmatprep.subr.mxu0 0.0
        %10590 = vmatpush1.msra.mxu0 0.0
        %10591 = vmatprep.subr.mxu0 0.0
        %10592 = vmatpush1.msra.mxu0 0.0
        %10593 = vmatprep.subr.mxu0 0.0
        %10594 = vmatpush1.msra.mxu0 0.0
        %10595 = vmatprep.subr.mxu0 0.0
        %10596 = vmatpush1.msra.mxu0 0.0
        %10597 = vmatprep.subr.mxu0 0.0
        %10598 = vmatpush1.msra.mxu0 0.0
        %10599 = vmatprep.subr.mxu0 0.0
        %10600 = vmatpush1.msra.mxu0 0.0
        %10601 = vmatprep.subr.mxu0 0.0
        %10602 = vmatpush1.msra.mxu0 0.0
        %10603 = vmatprep.subr.mxu0 0.0
        %10604 = vmatpush1.msra.mxu0 0.0
        %10605 = vmatprep.subr.mxu0 0.0
        %10606 = vmatpush1.msra.mxu0 0.0
        %10607 = vmatprep.subr.mxu0 0.0
        %10608 = vmatpush1.msra.mxu0 0.0
        %10609 = vmatprep.subr.mxu0 0.0
        %10610 = vmatpush1.msra.mxu0 0.0
        %10611 = vmatprep.subr.mxu0 0.0
        %10612 = vmatpush1.msra.mxu0 0.0
        %10613 = vmatprep.subr.mxu0 0.0
        %10614 = vmatpush1.msra.mxu0 0.0
        %10615 = vmatprep.subr.mxu0 0.0
        %10616 = vmatpush1.msra.mxu0 0.0
        %10617 = vmatprep.subr.mxu0 0.0
        %10618 = vmatpush1.msra.mxu0 0.0
        %10619 = vmatprep.subr.mxu0 0.0
        %10620 = vmatpush1.msra.mxu0 0.0
        %10621 = vmatprep.subr.mxu0 0.0
        %10622 = vmatpush1.msra.mxu0 0.0
        %10623 = vmatprep.subr.mxu0 0.0
        %10624 = vmatpush1.msra.mxu0 0.0
        %10625 = vmatprep.subr.mxu0 0.0
        %10626 = vmatpush1.msra.mxu0 0.0
        %10627 = vmatprep.mubr.f32.mxu0 0.0
        %10628 = vmatmul.mubr.f32.gmra.mrb[0].mxu0 %v10558
        %v10629 = vpop.f32.mrb[0].mxu0
        %v10630 = vadd.f32 %v10556, %v10629
        %v10631 = vpop.f32.mrb[0].mxu0
        %10632 = vdwg.mxu0
        %vm10633 = vcmp.gt.f32.partialorder %v10630, 0.0
        %v10634 = vmul.f32 %v10630, 0.01
        %v10635 = vsel %vm10633, %v10630, %v10634
        %v10636 = vld [vmem:[%s15] sm:$0xff]
        %v10637 = vld [vmem:[%s15 + $0x8] sm:$0x3]
        %v10638 = vld [vmem:[%s16] sm:$0x1]
        %v10640 = vsel %vm5119, %v10635, 0
        %v10643 = vsel %vm2468, %v10637, 0
        %10645 = vmatprep.subr.mxu0 0.0
        %10646 = vmatpush1.msra.mxu0 %v10636
        %10647 = vmatprep.subr.mxu0 0.0
        %10648 = vmatpush1.msra.mxu0 %v10643
        %10649 = vmatprep.subr.mxu0 0.0
        %10650 = vmatpush1.msra.mxu0 0.0
        %10651 = vmatprep.subr.mxu0 0.0
        %10652 = vmatpush1.msra.mxu0 0.0
        %10653 = vmatprep.subr.mxu0 0.0
        %10654 = vmatpush1.msra.mxu0 0.0
        %10655 = vmatprep.subr.mxu0 0.0
        %10656 = vmatpush1.msra.mxu0 0.0
        %10657 = vmatprep.subr.mxu0 0.0
        %10658 = vmatpush1.msra.mxu0 0.0
        %10659 = vmatprep.subr.mxu0 0.0
        %10660 = vmatpush1.msra.mxu0 0.0
        %10661 = vmatprep.subr.mxu0 0.0
        %10662 = vmatpush1.msra.mxu0 0.0
        %10663 = vmatprep.subr.mxu0 0.0
        %10664 = vmatpush1.msra.mxu0 0.0
        %10665 = vmatprep.subr.mxu0 0.0
        %10666 = vmatpush1.msra.mxu0 0.0
        %10667 = vmatprep.subr.mxu0 0.0
        %10668 = vmatpush1.msra.mxu0 0.0
        %10669 = vmatprep.subr.mxu0 0.0
        %10670 = vmatpush1.msra.mxu0 0.0
        %10671 = vmatprep.subr.mxu0 0.0
        %10672 = vmatpush1.msra.mxu0 0.0
        %10673 = vmatprep.subr.mxu0 0.0
        %10674 = vmatpush1.msra.mxu0 0.0
        %10675 = vmatprep.subr.mxu0 0.0
        %10676 = vmatpush1.msra.mxu0 0.0
        %10677 = vmatprep.subr.mxu0 0.0
        %10678 = vmatpush1.msra.mxu0 0.0
        %10679 = vmatprep.subr.mxu0 0.0
        %10680 = vmatpush1.msra.mxu0 0.0
        %10681 = vmatprep.subr.mxu0 0.0
        %10682 = vmatpush1.msra.mxu0 0.0
        %10683 = vmatprep.subr.mxu0 0.0
        %10684 = vmatpush1.msra.mxu0 0.0
        %10685 = vmatprep.subr.mxu0 0.0
        %10686 = vmatpush1.msra.mxu0 0.0
        %10687 = vmatprep.subr.mxu0 0.0
        %10688 = vmatpush1.msra.mxu0 0.0
        %10689 = vmatprep.subr.mxu0 0.0
        %10690 = vmatpush1.msra.mxu0 0.0
        %10691 = vmatprep.subr.mxu0 0.0
        %10692 = vmatpush1.msra.mxu0 0.0
        %10693 = vmatprep.subr.mxu0 0.0
        %10694 = vmatpush1.msra.mxu0 0.0
        %10695 = vmatprep.subr.mxu0 0.0
        %10696 = vmatpush1.msra.mxu0 0.0
        %10697 = vmatprep.subr.mxu0 0.0
        %10698 = vmatpush1.msra.mxu0 0.0
        %10699 = vmatprep.subr.mxu0 0.0
        %10700 = vmatpush1.msra.mxu0 0.0
        %10701 = vmatprep.subr.mxu0 0.0
        %10702 = vmatpush1.msra.mxu0 0.0
        %10703 = vmatprep.subr.mxu0 0.0
        %10704 = vmatpush1.msra.mxu0 0.0
        %10705 = vmatprep.subr.mxu0 0.0
        %10706 = vmatpush1.msra.mxu0 0.0
        %10707 = vmatprep.subr.mxu0 0.0
        %10708 = vmatpush1.msra.mxu0 0.0
        %10709 = vmatprep.mubr.f32.mxu0 0.0
        %10710 = vmatmul.mubr.f32.gmra.mrb[0].mxu0 %v10640
        %v10711 = vpop.f32.mrb[0].mxu0
        %v10712 = vadd.f32 %v10638, %v10711
        %v10713 = vpop.f32.mrb[0].mxu0
        %10714 = vdwg.mxu0
        %vm10715 = vcmask 8192
        %v10716 = vsel %vm10715, %v10712, -inf
        %10717 = vmax.xlane.f32.xlu0 %v10716
        %v10718 = vpop.xlane.xlu0 %10717
        %v10719 = vsub.f32 %v10712, %v10718
        %v10720 = vmul.f32 %v10719, 1.442695
        %v10721 = vpow.pop %v10720
        %v10722 = vsel %vm10715, %v10721, 0.0
        %10723 = vadd.xlane.f32.xlu0 %v10722
        %v10724 = vpop.xlane.xlu0 %10723
        %v10725 = vrcp.pop %v10724
        %v10726 = vmul.f32 %v10721, %v10725
        %10727 = vst.msk [vmem:[%s540] sm:$0x1] %vm10715, %v10726
        %s10728 = sand.u32 %s401, 1
        %s10729 = scalar_lea.sflag [#allocation4], %s10728
        %s10730 = sand.u32 %s401, 1
        %s10731 = scalar_lea.vmem [#allocation3], %s10730
        // Predicated region
        $region89: #{tpu_custom_call.1} parent=87 // pred_check
          %p10732 = pneg %p411
        $region90: #{tpu_custom_call.1} parent=87 // pred_check_branch
          %10734 = sbr.rel (%p10732) target = $region92
        $region91: #{tpu_custom_call.1} parent=87 // pred_region
          %s10736 = ssub.s32 16, 16
          %10737 = vsyncadd %s10729, %s10736
          %s10738 = smul.addr %s31, 16
          %s10739 = scalar_lea.hbm %s17, %s10738
          %s10741 = sshll.u32 %s10731, 4
          %s10742 = int_to_ptr.vmem [resolvable:$true] %s10741
          %10744 = dma.vmem_to_hbm [thread:$0]  %s10742, 16, %s10739, %s10729
        $region92: #{tpu_custom_call.1} parent=87 // pred_fallthru
          _
      $region88: #{tpu_custom_call.1} parent=5 // pred_fallthru
        _
      %p10745 = scmp.le.s32.totalorder 2, %s26
      // Predicated region
      $region93: #{tpu_custom_call.1} parent=5 // pred_check
        %p10746 = pneg %p10745
      $region94: #{tpu_custom_call.1} parent=5 // pred_check_branch
        %10748 = sbr.rel (%p10746) target = $region96
      $region95: #{tpu_custom_call.1} parent=5 // pred_region
        %s10749 = ssub.s32 %s26, 2
        // Predicated region
        $region97: #{tpu_custom_call.1} parent=95 // pred_check
          %p10750 = pneg %p417
        $region98: #{tpu_custom_call.1} parent=95 // pred_check_branch
          %10752 = sbr.rel (%p10750) target = $region100
        $region99: #{tpu_custom_call.1} parent=95 // pred_region
          %s10753 = sand.u32 %s402, 1
          %s10754 = scalar_lea.sflag [#allocation4], %s10753
          %s10755 = sand.u32 %s402, 1
          %s10756 = scalar_lea.vmem [#allocation3], %s10755
          %10757 = dma.done %s10754, 16
        $region100: #{tpu_custom_call.1} parent=95 // pred_fallthru
          _
      $region96: #{tpu_custom_call.1} parent=5 // pred_fallthru
        _
    $region6: #{tpu_custom_call.1} parent=1 // loop_footer
      %s30 = sadd.s32 1, %s26
    $region7: #{tpu_custom_call.1} parent=1 // loop_footer_branch
      %25 = sbr.rel target = $region3
    $region8: #{tpu_custom_call.1} parent=1 // loop_exit
      _
    %10758 = vsyncpa [#allocation4], 1
    %s10759 = scalar_lea.sflag [#allocation4], 1
    %10760 = vsyncpa %s10759, 1

</llo_original>
